<compile_context>
chip_gen: v7x
topology: tpu7x:2x2x1
jax: 0.10.0
libtpu: 0.0.40
codegen_flags: <defaults>
</compile_context>

<pallas_src>
import functools
import math

import jax
import jax.numpy as jnp
from jax import lax
from jax.experimental import pallas as pl
from jax.experimental.pallas import tpu as pltpu

ROW_TILE = 1024  # max row tile for channel-last feature MLPs


def _default_vmem_limit():
    # Generation-aware: ~48 MiB on v7x (64 MiB physical), ~96 MiB on v5e/v6e.
    try:
        cap = int(pltpu.get_tpu_info().vmem_capacity_bytes)
    except Exception:
        cap = 64 * 1024 * 1024
    return max(32 * 1024 * 1024, min((cap * 3) // 4, 96 * 1024 * 1024))


VMEM_LIMIT = _default_vmem_limit()


def _round_up(x, m):
    return (x + m - 1) // m * m


def _pick_row_tile(r, max_tile):
    rp = _round_up(r, 8)
    n_tiles = max(1, -(-rp // max_tile))
    tr = _round_up(-(-rp // n_tiles), 8)
    return tr, _round_up(rp, tr)


def _mosaic(n_grid):
    return pltpu.CompilerParams(
        dimension_semantics=("parallel",) * n_grid,
        vmem_limit_bytes=VMEM_LIMIT)


def _elu(h):
    return jnp.where(h > 0, h, jnp.exp(h) - 1.0)


# ----------------------------- Pallas kernels -----------------------------

def _rows_mlp_kernel(x_ref, *refs, acts):
    """Fused feature MLP over a row tile: bf16 MXU dots, f32 accumulation."""
    o_ref = refs[-1]
    wb = refs[:-1]
    h = x_ref[...]
    for li, act in enumerate(acts):
        w = wb[2 * li][...]                       # bf16, pre-cast at init
        b = wb[2 * li + 1][...]                   # (1, dout) f32
        h = jnp.dot(h.astype(jnp.bfloat16), w,
                    preferred_element_type=jnp.float32) + b
        if act == "elu":
            h = _elu(h)
        elif act == "tanh":
            h = jnp.tanh(h)
    o_ref[...] = h


def rows_mlp(x2d, layers, acts):
    """x2d: (R, K) -> (R, dout); whole MLP chain in one row-tiled pallas_call."""
    R, K = x2d.shape
    TR, Rp = _pick_row_tile(R, ROW_TILE)
    if Rp != R:
        x2d = jnp.pad(x2d, ((0, Rp - R), (0, 0)))
    out_dim = layers[-1][0].shape[1]

    args = [x2d]
    in_specs = [pl.BlockSpec((TR, K), lambda r: (r, 0))]
    for (w, b) in layers:
        args += [w, b]
        in_specs += [pl.BlockSpec(w.shape, lambda r: (0, 0)),
                     pl.BlockSpec(b.shape, lambda r: (0, 0))]

    y = pl.pallas_call(
        functools.partial(_rows_mlp_kernel, acts=tuple(acts)),
        out_shape=jax.ShapeDtypeStruct((Rp, out_dim), jnp.float32),
        grid=(Rp // TR,),
        in_specs=in_specs,
        out_specs=pl.BlockSpec((TR, out_dim), lambda r: (r, 0)),
        compiler_params=_mosaic(1),
    )(*args)
    return y[:R] if Rp != R else y


def _chan_mlp_kernel(*refs, n_in, acts):
    """Lane-dense channel MLP on a (Cin, L=N*N) slab; contraction on the MXU.

    Inputs are concatenated along the channel (sublane) axis inside the kernel,
    so no XLA-level concat / transpose of the (B, C, N, N) tensors is needed.
    """
    out_ref = refs[-1]
    xs = [refs[i][0] for i in range(n_in)]                 # each (C_k, L)
    h = xs[0] if n_in == 1 else jnp.concatenate(xs, axis=0)
    for li, act in enumerate(acts):
        w = refs[n_in + 2 * li][...]                        # (Cout, Cin) f32
        b = refs[n_in + 2 * li + 1][...]                    # (Cout, 1)  f32
        h = jnp.dot(w, h, preferred_element_type=jnp.float32) + b
        if act == "elu":
            h = _elu(h)
        elif act == "tanh":
            h = jnp.tanh(h)
    out_ref[0] = h


def channel_mlp(xs, layers, acts):
    """xs: list of (B, C_k, L) slabs -> (B, Cout, L); one pallas_call, grid=(B,)."""
    # TODO(synk): for very large N tile the L = N*N lane axis (128-aligned chunks).
    B, _, L = xs[0].shape
    cout = layers[-1][0].shape[0]
    n_in = len(xs)

    args = list(xs)
    in_specs = [pl.BlockSpec((1, xk.shape[1], L), lambda b: (b, 0, 0)) for xk in xs]
    for (wT, b) in layers:
        args += [wT, b]
        in_specs += [pl.BlockSpec(wT.shape, lambda b: (0, 0)),
                     pl.BlockSpec(b.shape, lambda b: (0, 0))]

    return pl.pallas_call(
        functools.partial(_chan_mlp_kernel, n_in=n_in, acts=tuple(acts)),
        out_shape=jax.ShapeDtypeStruct((B, cout, L), jnp.float32),
        grid=(B,),
        in_specs=in_specs,
        out_specs=pl.BlockSpec((1, cout, L), lambda b: (b, 0, 0)),
        compiler_params=_mosaic(1),
    )(*args)


def _attn_layer_kernel(x_ref, adj_ref, w_ref, b_ref, flg_ref, a_ref, v_ref, *,
                       C, adim, conv_out, num_heads, scale):
    """Per-batch fused: linear -> per-channel GCN tail -> attention -> V concat.

    adj block: (1, C, N, N); x block: (1, N, Fin). Outputs: symmetrized attention
    stack (1, C, N, N) and flag-masked V concat (1, N, C*conv_out).
    """
    F3 = 2 * adim + conv_out
    n = x_ref.shape[1]
    x = x_ref[0]                                             # (N, Fin)
    hlin = jnp.dot(x.astype(jnp.bfloat16), w_ref[...],
                   preferred_element_type=jnp.float32)       # (N, C*F3)

    row = lax.broadcasted_iota(jnp.int32, (n, n), 0)
    col = lax.broadcasted_iota(jnp.int32, (n, n), 1)
    eye = (row == col).astype(jnp.float32)
    ds = adim // num_heads
    flags = flg_ref[0]                                       # (N, 1)

    v_parts = []
    for c in range(C):
        a = adj_ref[0, c]                                    # (N, N) f32
        a = a * (1.0 - eye) + eye                            # self loops (diag := 1)
        deg = jnp.sum(a, axis=-1, keepdims=True)             # (N, 1)
        dis = lax.rsqrt(jnp.maximum(deg, 1.0))               # clamp(min=1)^-0.5
        # D^-1/2 A D^-1/2 @ H == dis * (A @ (dis * H))
        hs = hlin[:, c * F3:(c + 1) * F3] * dis              # (N, F3)
        agg = jnp.dot(a, hs, preferred_element_type=jnp.float32) * dis \
            + b_ref[c:c + 1, :]                              # (N, F3)
        q = agg[:, :adim]
        k = agg[:, adim:2 * adim]
        # mean over heads of tanh(Q_h K_h^T / sqrt(out_dim)), fused symmetrization:
        # (S + S^T)/2 computed as the pair of MXU dots QK^T and KQ^T (MXU is idle).
        att = None
        for hh in range(num_heads):
            qh = q[:, hh * ds:(hh + 1) * ds]
            kh = k[:, hh * ds:(hh + 1) * ds]
            s_qk = lax.dot_general(qh, kh, (((1,), (1,)), ((), ())),
                                   preferred_element_type=jnp.float32)
            s_kq = lax.dot_general(kh, qh, (((1,), (1,)), ((), ())),
                                   preferred_element_type=jnp.float32)
            t = jnp.tanh(s_qk * scale) + jnp.tanh(s_kq * scale)
            att = t if att is None else att + t
        a_ref[0, c] = att * (0.5 / num_heads)
        v_parts.append(agg[:, 2 * adim:])

    v_cat = v_parts[0] if C == 1 else jnp.concatenate(v_parts, axis=-1)
    v_ref[0] = v_cat * flags                                 # mask_x before multi MLP


def gcn_attention(x, adj, w_all, b_all, flags3, *, adim, conv_out, num_heads):
    """x: (B,N,Fin), adj: (B,C,N,N) -> A: (B,C,N,N), V concat: (B,N,C*conv_out)."""
    # TODO(synk): for N >~ 1k, row-tile the (N, N) blocks instead of full-(C,N,N).
    B, C, N, _ = adj.shape
    Fin = x.shape[-1]
    F3 = 2 * adim + conv_out
    scale = 1.0 / math.sqrt(conv_out)
    kern = functools.partial(_attn_layer_kernel, C=C, adim=adim,
                             conv_out=conv_out, num_heads=num_heads, scale=scale)
    return pl.pallas_call(
        kern,
        out_shape=(jax.ShapeDtypeStruct((B, C, N, N), jnp.float32),
                   jax.ShapeDtypeStruct((B, N, C * conv_out), jnp.float32)),
        grid=(B,),
        in_specs=[pl.BlockSpec((1, N, Fin), lambda b: (b, 0, 0)),
                  pl.BlockSpec((1, C, N, N), lambda b: (b, 0, 0, 0)),
                  pl.BlockSpec((Fin, C * F3), lambda b: (0, 0)),
                  pl.BlockSpec((C, F3), lambda b: (0, 0)),
                  pl.BlockSpec((1, N, 1), lambda b: (b, 0, 0))],
        out_specs=(pl.BlockSpec((1, C, N, N), lambda b: (b, 0, 0, 0)),
                   pl.BlockSpec((1, N, C * conv_out), lambda b: (b, 0, 0))),
        compiler_params=_mosaic(1),
    )(x, adj, w_all, b_all, flags3)


def _pow_kernel(adj_ref, out_ref, *, cnum):
    a = adj_ref[0]                                           # (N, N) f32
    out_ref[0, 0] = a
    p = a
    for k in range(1, cnum):
        p = jnp.dot(p, a, preferred_element_type=jnp.float32)   # f32: exact powers
        out_ref[0, k] = p


def pow_tensor(adj, cnum):
    """adj: (B, N, N) -> (B, cnum, N, N); all powers in one kernel, adj read once."""
    B, N, _ = adj.shape
    return pl.pallas_call(
        functools.partial(_pow_kernel, cnum=cnum),
        out_shape=jax.ShapeDtypeStruct((B, cnum, N, N), jnp.float32),
        grid=(B,),
        in_specs=[pl.BlockSpec((1, N, N), lambda b: (b, 0, 0))],
        out_specs=pl.BlockSpec((1, cnum, N, N), lambda b: (b, 0, 0, 0)),
        compiler_params=_mosaic(1),
    )(adj)


# ----------------------------- model components -----------------------------

def mask_x(x, flags):
    return x * flags[:, :, None]


def mask_adjs(adjs, flags):
    if adjs.ndim == 4:
        f = flags[:, None, :]
        return adjs * f[..., None] * f[..., None, :]
    return adjs * flags[:, :, None] * flags[:, None, :]


def attention_layer_forward(lp, x, adj, flags, num_heads):
    """x: (B,N,F_in), adj: (B,C_in,N,N) -> (B,N,conv_out), (B,C_out,N,N)."""
    B, C, N, _ = adj.shape
    conv_out = lp["multi"][-1][0].shape[1]      # static (from weight shape)
    F3 = lp["b_all"].shape[1]
    adim = (F3 - conv_out) // 2
    flags3 = flags[:, :, None]                  # (B, N, 1)

    # 1) fused: linear -> per-channel GCN -> attention heads -> symmetrize -> V cat.
    A, v_cat = gcn_attention(x, adj, lp["w_all"], lp["b_all"], flags3,
                             adim=adim, conv_out=conv_out, num_heads=num_heads)

    # 2) node features: multi_channel MLP (elu) + final tanh, fused row-tiled.
    acts = ("elu",) * (len(lp["multi"]) - 1) + ("tanh",)
    x_out = rows_mlp(v_cat.reshape(B * N, C * conv_out), lp["multi"], acts)
    x_out = x_out.reshape(B, N, conv_out)

    # 3) adjacency update: lane-dense channel MLP on (B, 2C, N*N) slabs; the
    #    [A channels, adj channels] concat happens inside the kernel.
    L = N * N
    acts = ("elu",) * (len(lp["mlp"]) - 1) + ("none",)
    adj_mlp = channel_mlp([A.reshape(B, C, L), adj.reshape(B, C, L)],
                          lp["mlp"], acts)                   # (B, C_out, L)
    C_out = adj_mlp.shape[1]
    _adj = adj_mlp.reshape(B, C_out, N, N)
    _adj = _adj + jnp.swapaxes(_adj, -1, -2)
    adj_out = mask_adjs(_adj, flags)
    return x_out, adj_out


def score_network_a_forward(params, cfg, x, adj, flags):
    B, N, _ = adj.shape
    adjc = pow_tensor(adj, cfg["c_init"])                    # (B, c_init, N, N)
    adj_list = [adjc]
    h = x
    for lp in params["layers"]:
        h, adjc = attention_layer_forward(lp, h, adjc, flags, cfg["num_heads"])
        adj_list.append(adjc)

    # final MLP: lane-dense (B, fdim, N*N); per-layer stacks are concatenated
    # inside the kernel (no (B, fdim, N, N) HBM concat).
    L = N * N
    xs = [a.reshape(B, a.shape[1], L) for a in adj_list]
    acts = ("elu",) * (len(params["final"]) - 1) + ("none",)
    score = channel_mlp(xs, params["final"], acts).reshape(B, N, N)

    diag_mask = 1.0 - jnp.eye(N, dtype=jnp.float32)
    score = score * diag_mask[None]
    score = mask_adjs(score, flags)
    return score


# ----------------------------- parameter init -----------------------------

class ParamGen:
    def __init__(self, seed=0):
        self.key = jax.random.PRNGKey(seed)

    def normal(self, shape, scale=0.1):
        self.key, sub = jax.random.split(self.key)
        return (scale * jax.random.normal(sub, shape)).astype(jnp.float32)


def _mlp_dims(num_layers, din, dhid, dout):
    return [din, dout] if num_layers == 1 else [din] + [dhid] * (num_layers - 1) + [dout]


def init_mlp_rows(pg, num_layers, din, dhid, dout):
    """Layers for rows_mlp: (w (din,dout) bf16, b (1,dout) f32)."""
    dims = _mlp_dims(num_layers, din, dhid, dout)
    return [(pg.normal((dims[i], dims[i + 1])).astype(jnp.bfloat16),
             pg.normal((dims[i + 1],)).reshape(1, -1))
            for i in range(len(dims) - 1)]


def init_mlp_chan(pg, num_layers, din, dhid, dout):
    """Layers for channel_mlp: (w^T (dout,din) f32, b (dout,1) f32)."""
    dims = _mlp_dims(num_layers, din, dhid, dout)
    return [(jnp.transpose(pg.normal((dims[i], dims[i + 1]))),
             pg.normal((dims[i + 1],)).reshape(-1, 1))
            for i in range(len(dims) - 1)]


def init_attention_layer(pg, num_linears, conv_in, attn_dim, conv_out, c_in, c_out):
    # Per-channel q/k/v GCN linears, stacked once into a single weight/bias.
    w_cols, b_rows = [], []
    for _ in range(c_in):
        wq, bq = pg.normal((conv_in, attn_dim)), pg.normal((attn_dim,))
        wk, bk = pg.normal((conv_in, attn_dim)), pg.normal((attn_dim,))
        wv, bv = pg.normal((conv_in, conv_out)), pg.normal((conv_out,))
        w_cols.append(jnp.concatenate([wq, wk, wv], axis=1))
        b_rows.append(jnp.concatenate([bq, bk, bv], axis=0))
    hidden = 2 * max(c_in, c_out)
    # NOTE: only arrays in this dict (no python ints) so jit never traces shapes.
    return {
        "w_all": jnp.concatenate(w_cols, axis=1).astype(jnp.bfloat16),  # (conv_in, c_in*F3)
        "b_all": jnp.stack(b_rows, axis=0),                              # (c_in, F3) f32
        "multi": init_mlp_rows(pg, 2, c_in * conv_out, hidden, conv_out),
        "mlp": init_mlp_chan(pg, num_linears, 2 * c_in, hidden, c_out),
    }


def init_score_network_a(pg, cfg):
    layers = []
    for i in range(cfg["num_layers"]):
        if i == 0:
            layers.append(init_attention_layer(pg, cfg["num_linears"], cfg["nfeat"],
                                               cfg["nhid"], cfg["nhid"],
                                               cfg["c_init"], cfg["c_hid"]))
        elif i == cfg["num_layers"] - 1:
            layers.append(init_attention_layer(pg, cfg["num_linears"], cfg["nhid"],
                                               cfg["adim"], cfg["nhid"],
                                               cfg["c_hid"], cfg["c_final"]))
        else:
            layers.append(init_attention_layer(pg, cfg["num_linears"], cfg["nhid"],
                                               cfg["adim"], cfg["nhid"],
                                               cfg["c_hid"], cfg["c_hid"]))
    fdim = cfg["c_hid"] * (cfg["num_layers"] - 1) + cfg["c_final"] + cfg["c_init"]
    final = init_mlp_chan(pg, 3, fdim, 2 * fdim, 1)
    return {"layers": layers, "final": final}


# ----------------------------- main -----------------------------

if __name__ == "__main__":
    cfg = dict(nfeat=4, max_node_num=8, nhid=8, num_layers=3, num_linears=2,
               c_init=2, c_hid=4, c_final=2, adim=8, num_heads=2)
    B, N, F = 2, cfg["max_node_num"], cfg["nfeat"]

    key = jax.random.PRNGKey(0)
    kx, ka = jax.random.split(key)
    x = jax.random.normal(kx, (B, N, F), dtype=jnp.float32)
    a_raw = jax.random.uniform(ka, (B, N, N), dtype=jnp.float32)
    adj = (((a_raw + jnp.swapaxes(a_raw, 1, 2)) / 2.0) > 0.5).astype(jnp.float32)
    adj = adj * (1.0 - jnp.eye(N, dtype=jnp.float32))
    flags = jnp.ones((B, N), dtype=jnp.float32).at[1, N - 2:].set(0.0)
    x = mask_x(x, flags)
    adj = mask_adjs(adj, flags)

    params = init_score_network_a(ParamGen(seed=0), cfg)

    fwd = jax.jit(lambda p, xx, aa, ff: score_network_a_forward(p, cfg, xx, aa, ff))
    score = jax.block_until_ready(fwd(params, x, adj, flags))

    assert score.shape == (B, N, N)
    assert bool(jnp.all(jnp.isfinite(score)))
    print("KERNEL_OK")
</pallas_src>

<mosaic_0001>
module attributes {stable_mosaic.version = 11 : i64} {
  func.func @_attn_layer_kernel(%arg0: i32, %arg1: memref<1x8x4xf32, #tpu.memory_space<vmem>>, %arg2: memref<1x2x8x8xf32, #tpu.memory_space<vmem>>, %arg3: memref<4x48xbf16, #tpu.memory_space<vmem>>, %arg4: memref<2x24xf32, #tpu.memory_space<vmem>>, %arg5: memref<1x8x1xf32, #tpu.memory_space<vmem>>, %arg6: memref<1x2x8x8xf32, #tpu.memory_space<vmem>>, %arg7: memref<1x8x16xf32, #tpu.memory_space<vmem>>) attributes {dimension_semantics = [#tpu.dimension_semantics<parallel>], iteration_bounds = array<i64: 2>, scalar_prefetch = 0 : i64, scratch_operands = 0 : i64, tpu.core_type = #tpu.core_type<tc>, window_params = [{transform_indices = @transform_0, window_bounds = array<i64: 1, 8, 4>}, {transform_indices = @transform_1, window_bounds = array<i64: 1, 2, 8, 8>}, {pipeline_mode = #tpu.pipeline_mode<synchronous>, transform_indices = @transform_2, window_bounds = array<i64: 4, 48>}, {pipeline_mode = #tpu.pipeline_mode<synchronous>, transform_indices = @transform_3, window_bounds = array<i64: 2, 24>}, {transform_indices = @transform_4, window_bounds = array<i64: 1, 8, 1>}, {transform_indices = @transform_5, window_bounds = array<i64: 1, 2, 8, 8>}, {transform_indices = @transform_6, window_bounds = array<i64: 1, 8, 16>}]} {
    %c0 = arith.constant 0 : index
    %c0_0 = arith.constant 0 : index
    %c0_1 = arith.constant 0 : index
    %0 = vector.load %arg1[%c0, %c0_0, %c0_1] : memref<1x8x4xf32, #tpu.memory_space<vmem>>, vector<1x8x4xf32>
    %1 = vector.shape_cast %0 : vector<1x8x4xf32> to vector<8x4xf32>
    %2 = arith.truncf %1 : vector<8x4xf32> to vector<8x4xbf16>
    %c0_2 = arith.constant 0 : index
    %c0_3 = arith.constant 0 : index
    %3 = vector.load %arg3[%c0_2, %c0_3] : memref<4x48xbf16, #tpu.memory_space<vmem>>, vector<4x48xbf16>
    %cst = arith.constant dense<0.000000e+00> : vector<8x48xf32>
    %4 = tpu.matmul %2, %3, %cst {dimension_numbers = #tpu.dot_dimension_numbers<[1], [0], [0], [1], [0, 0, 1, 1], [], []>} : vector<8x4xbf16>, vector<4x48xbf16>, vector<8x48xf32> -> vector<8x48xf32>
    %5 = tpu.iota {dimensions = array<i32: 0>} : vector<8x8xi32>
    %6 = tpu.iota {dimensions = array<i32: 1>} : vector<8x8xi32>
    %7 = arith.cmpi eq, %5, %6 : vector<8x8xi32>
    %8 = arith.extui %7 : vector<8x8xi1> to vector<8x8xi32>
    %9 = arith.sitofp %8 : vector<8x8xi32> to vector<8x8xf32>
    %c0_4 = arith.constant 0 : index
    %c0_5 = arith.constant 0 : index
    %c0_6 = arith.constant 0 : index
    %10 = vector.load %arg5[%c0_4, %c0_5, %c0_6] : memref<1x8x1xf32, #tpu.memory_space<vmem>>, vector<1x8x1xf32>
    %11 = vector.shape_cast %10 : vector<1x8x1xf32> to vector<8x1xf32>
    %c0_7 = arith.constant 0 : index
    %c0_8 = arith.constant 0 : index
    %c0_9 = arith.constant 0 : index
    %c0_10 = arith.constant 0 : index
    %12 = vector.load %arg2[%c0_7, %c0_8, %c0_9, %c0_10] : memref<1x2x8x8xf32, #tpu.memory_space<vmem>>, vector<1x1x8x8xf32>
    %13 = vector.shape_cast %12 : vector<1x1x8x8xf32> to vector<8x8xf32>
    %cst_11 = arith.constant 1.000000e+00 : f32
    %14 = vector.broadcast %cst_11 : f32 to vector<8x8xf32>
    %15 = arith.subf %14, %9 : vector<8x8xf32>
    %16 = arith.mulf %13, %15 : vector<8x8xf32>
    %17 = arith.addf %16, %9 : vector<8x8xf32>
    %cst_12 = arith.constant dense<0.000000e+00> : vector<8xf32>
    %18 = vector.multi_reduction <add>, %17, %cst_12 [1] : vector<8x8xf32> to vector<8xf32>
    %19 = vector.shape_cast %18 : vector<8xf32> to vector<8x1xf32>
    %cst_13 = arith.constant 1.000000e+00 : f32
    %20 = vector.broadcast %cst_13 : f32 to vector<8x1xf32>
    %21 = arith.maximumf %19, %20 : vector<8x1xf32>
    %22 = math.rsqrt %21 : vector<8x1xf32>
    %23 = vector.extract_strided_slice %4 {offsets = [0, 0], sizes = [8, 24], strides = [1, 1]} : vector<8x48xf32> to vector<8x24xf32>
    %24 = vector.broadcast %22 : vector<8x1xf32> to vector<8x24xf32>
    %25 = arith.mulf %23, %24 : vector<8x24xf32>
    %cst_14 = arith.constant dense<0.000000e+00> : vector<8x24xf32>
    %26 = tpu.matmul %17, %25, %cst_14 {dimension_numbers = #tpu.dot_dimension_numbers<[1], [0], [0], [1], [0, 0, 1, 1], [], []>} : vector<8x8xf32>, vector<8x24xf32>, vector<8x24xf32> -> vector<8x24xf32>
    %27 = vector.broadcast %22 : vector<8x1xf32> to vector<8x24xf32>
    %28 = arith.mulf %26, %27 : vector<8x24xf32>
    %c0_15 = arith.constant 0 : index
    %c0_16 = arith.constant 0 : index
    %29 = vector.load %arg4[%c0_15, %c0_16] : memref<2x24xf32, #tpu.memory_space<vmem>>, vector<1x24xf32>
    %30 = vector.broadcast %29 : vector<1x24xf32> to vector<8x24xf32>
    %31 = arith.addf %28, %30 : vector<8x24xf32>
    %32 = vector.extract_strided_slice %31 {offsets = [0, 0], sizes = [8, 8], strides = [1, 1]} : vector<8x24xf32> to vector<8x8xf32>
    %33 = vector.extract_strided_slice %31 {offsets = [0, 8], sizes = [8, 8], strides = [1, 1]} : vector<8x24xf32> to vector<8x8xf32>
    %34 = vector.extract_strided_slice %32 {offsets = [0, 0], sizes = [8, 4], strides = [1, 1]} : vector<8x8xf32> to vector<8x4xf32>
    %35 = vector.extract_strided_slice %33 {offsets = [0, 0], sizes = [8, 4], strides = [1, 1]} : vector<8x8xf32> to vector<8x4xf32>
    %cst_17 = arith.constant dense<0.000000e+00> : vector<8x8xf32>
    %36 = tpu.matmul %34, %35, %cst_17 {dimension_numbers = #tpu.dot_dimension_numbers<[1], [1], [0], [0], [0, 0, 1, 0], [], []>} : vector<8x4xf32>, vector<8x4xf32>, vector<8x8xf32> -> vector<8x8xf32>
    %cst_18 = arith.constant dense<0.000000e+00> : vector<8x8xf32>
    %37 = tpu.matmul %35, %34, %cst_18 {dimension_numbers = #tpu.dot_dimension_numbers<[1], [1], [0], [0], [0, 0, 1, 0], [], []>} : vector<8x4xf32>, vector<8x4xf32>, vector<8x8xf32> -> vector<8x8xf32>
    %cst_19 = arith.constant 0.353553385 : f32
    %38 = vector.broadcast %cst_19 : f32 to vector<8x8xf32>
    %39 = arith.mulf %36, %38 : vector<8x8xf32>
    %40 = math.tanh %39 : vector<8x8xf32>
    %cst_20 = arith.constant 0.353553385 : f32
    %41 = vector.broadcast %cst_20 : f32 to vector<8x8xf32>
    %42 = arith.mulf %37, %41 : vector<8x8xf32>
    %43 = math.tanh %42 : vector<8x8xf32>
    %44 = arith.addf %40, %43 : vector<8x8xf32>
    %45 = vector.extract_strided_slice %32 {offsets = [0, 4], sizes = [8, 4], strides = [1, 1]} : vector<8x8xf32> to vector<8x4xf32>
    %46 = vector.extract_strided_slice %33 {offsets = [0, 4], sizes = [8, 4], strides = [1, 1]} : vector<8x8xf32> to vector<8x4xf32>
    %cst_21 = arith.constant dense<0.000000e+00> : vector<8x8xf32>
    %47 = tpu.matmul %45, %46, %cst_21 {dimension_numbers = #tpu.dot_dimension_numbers<[1], [1], [0], [0], [0, 0, 1, 0], [], []>} : vector<8x4xf32>, vector<8x4xf32>, vector<8x8xf32> -> vector<8x8xf32>
    %cst_22 = arith.constant dense<0.000000e+00> : vector<8x8xf32>
    %48 = tpu.matmul %46, %45, %cst_22 {dimension_numbers = #tpu.dot_dimension_numbers<[1], [1], [0], [0], [0, 0, 1, 0], [], []>} : vector<8x4xf32>, vector<8x4xf32>, vector<8x8xf32> -> vector<8x8xf32>
    %cst_23 = arith.constant 0.353553385 : f32
    %49 = vector.broadcast %cst_23 : f32 to vector<8x8xf32>
    %50 = arith.mulf %47, %49 : vector<8x8xf32>
    %51 = math.tanh %50 : vector<8x8xf32>
    %cst_24 = arith.constant 0.353553385 : f32
    %52 = vector.broadcast %cst_24 : f32 to vector<8x8xf32>
    %53 = arith.mulf %48, %52 : vector<8x8xf32>
    %54 = math.tanh %53 : vector<8x8xf32>
    %55 = arith.addf %51, %54 : vector<8x8xf32>
    %56 = arith.addf %44, %55 : vector<8x8xf32>
    %cst_25 = arith.constant 2.500000e-01 : f32
    %57 = vector.broadcast %cst_25 : f32 to vector<8x8xf32>
    %58 = arith.mulf %56, %57 : vector<8x8xf32>
    %c0_26 = arith.constant 0 : index
    %c0_27 = arith.constant 0 : index
    %c0_28 = arith.constant 0 : index
    %c0_29 = arith.constant 0 : index
    %59 = vector.load %arg6[%c0_26, %c0_27, %c0_28, %c0_29] : memref<1x2x8x8xf32, #tpu.memory_space<vmem>>, vector<1x1x8x8xf32>
    %60 = vector.shape_cast %59 : vector<1x1x8x8xf32> to vector<8x8xf32>
    %61 = vector.shape_cast %58 : vector<8x8xf32> to vector<1x1x8x8xf32>
    tpu.vector_store %arg6[%c0_26, %c0_27, %c0_28, %c0_29], %61 {strides = array<i32>} : memref<1x2x8x8xf32, #tpu.memory_space<vmem>>, vector<1x1x8x8xf32>,
    %62 = vector.extract_strided_slice %31 {offsets = [0, 16], sizes = [8, 8], strides = [1, 1]} : vector<8x24xf32> to vector<8x8xf32>
    %c0_30 = arith.constant 0 : index
    %c1 = arith.constant 1 : index
    %c0_31 = arith.constant 0 : index
    %c0_32 = arith.constant 0 : index
    %63 = vector.load %arg2[%c0_30, %c1, %c0_31, %c0_32] : memref<1x2x8x8xf32, #tpu.memory_space<vmem>>, vector<1x1x8x8xf32>
    %64 = vector.shape_cast %63 : vector<1x1x8x8xf32> to vector<8x8xf32>
    %cst_33 = arith.constant 1.000000e+00 : f32
    %65 = vector.broadcast %cst_33 : f32 to vector<8x8xf32>
    %66 = arith.subf %65, %9 : vector<8x8xf32>
    %67 = arith.mulf %64, %66 : vector<8x8xf32>
    %68 = arith.addf %67, %9 : vector<8x8xf32>
    %cst_34 = arith.constant dense<0.000000e+00> : vector<8xf32>
    %69 = vector.multi_reduction <add>, %68, %cst_34 [1] : vector<8x8xf32> to vector<8xf32>
    %70 = vector.shape_cast %69 : vector<8xf32> to vector<8x1xf32>
    %cst_35 = arith.constant 1.000000e+00 : f32
    %71 = vector.broadcast %cst_35 : f32 to vector<8x1xf32>
    %72 = arith.maximumf %70, %71 : vector<8x1xf32>
    %73 = math.rsqrt %72 : vector<8x1xf32>
    %74 = vector.extract_strided_slice %4 {offsets = [0, 24], sizes = [8, 24], strides = [1, 1]} : vector<8x48xf32> to vector<8x24xf32>
    %75 = vector.broadcast %73 : vector<8x1xf32> to vector<8x24xf32>
    %76 = arith.mulf %74, %75 : vector<8x24xf32>
    %cst_36 = arith.constant dense<0.000000e+00> : vector<8x24xf32>
    %77 = tpu.matmul %68, %76, %cst_36 {dimension_numbers = #tpu.dot_dimension_numbers<[1], [0], [0], [1], [0, 0, 1, 1], [], []>} : vector<8x8xf32>, vector<8x24xf32>, vector<8x24xf32> -> vector<8x24xf32>
    %78 = vector.broadcast %73 : vector<8x1xf32> to vector<8x24xf32>
    %79 = arith.mulf %77, %78 : vector<8x24xf32>
    %c1_37 = arith.constant 1 : index
    %c0_38 = arith.constant 0 : index
    %80 = vector.load %arg4[%c1_37, %c0_38] : memref<2x24xf32, #tpu.memory_space<vmem>>, vector<1x24xf32>
    %81 = vector.broadcast %80 : vector<1x24xf32> to vector<8x24xf32>
    %82 = arith.addf %79, %81 : vector<8x24xf32>
    %83 = vector.extract_strided_slice %82 {offsets = [0, 0], sizes = [8, 8], strides = [1, 1]} : vector<8x24xf32> to vector<8x8xf32>
    %84 = vector.extract_strided_slice %82 {offsets = [0, 8], sizes = [8, 8], strides = [1, 1]} : vector<8x24xf32> to vector<8x8xf32>
    %85 = vector.extract_strided_slice %83 {offsets = [0, 0], sizes = [8, 4], strides = [1, 1]} : vector<8x8xf32> to vector<8x4xf32>
    %86 = vector.extract_strided_slice %84 {offsets = [0, 0], sizes = [8, 4], strides = [1, 1]} : vector<8x8xf32> to vector<8x4xf32>
    %cst_39 = arith.constant dense<0.000000e+00> : vector<8x8xf32>
    %87 = tpu.matmul %85, %86, %cst_39 {dimension_numbers = #tpu.dot_dimension_numbers<[1], [1], [0], [0], [0, 0, 1, 0], [], []>} : vector<8x4xf32>, vector<8x4xf32>, vector<8x8xf32> -> vector<8x8xf32>
    %cst_40 = arith.constant dense<0.000000e+00> : vector<8x8xf32>
    %88 = tpu.matmul %86, %85, %cst_40 {dimension_numbers = #tpu.dot_dimension_numbers<[1], [1], [0], [0], [0, 0, 1, 0], [], []>} : vector<8x4xf32>, vector<8x4xf32>, vector<8x8xf32> -> vector<8x8xf32>
    %cst_41 = arith.constant 0.353553385 : f32
    %89 = vector.broadcast %cst_41 : f32 to vector<8x8xf32>
    %90 = arith.mulf %87, %89 : vector<8x8xf32>
    %91 = math.tanh %90 : vector<8x8xf32>
    %cst_42 = arith.constant 0.353553385 : f32
    %92 = vector.broadcast %cst_42 : f32 to vector<8x8xf32>
    %93 = arith.mulf %88, %92 : vector<8x8xf32>
    %94 = math.tanh %93 : vector<8x8xf32>
    %95 = arith.addf %91, %94 : vector<8x8xf32>
    %96 = vector.extract_strided_slice %83 {offsets = [0, 4], sizes = [8, 4], strides = [1, 1]} : vector<8x8xf32> to vector<8x4xf32>
    %97 = vector.extract_strided_slice %84 {offsets = [0, 4], sizes = [8, 4], strides = [1, 1]} : vector<8x8xf32> to vector<8x4xf32>
    %cst_43 = arith.constant dense<0.000000e+00> : vector<8x8xf32>
    %98 = tpu.matmul %96, %97, %cst_43 {dimension_numbers = #tpu.dot_dimension_numbers<[1], [1], [0], [0], [0, 0, 1, 0], [], []>} : vector<8x4xf32>, vector<8x4xf32>, vector<8x8xf32> -> vector<8x8xf32>
    %cst_44 = arith.constant dense<0.000000e+00> : vector<8x8xf32>
    %99 = tpu.matmul %97, %96, %cst_44 {dimension_numbers = #tpu.dot_dimension_numbers<[1], [1], [0], [0], [0, 0, 1, 0], [], []>} : vector<8x4xf32>, vector<8x4xf32>, vector<8x8xf32> -> vector<8x8xf32>
    %cst_45 = arith.constant 0.353553385 : f32
    %100 = vector.broadcast %cst_45 : f32 to vector<8x8xf32>
    %101 = arith.mulf %98, %100 : vector<8x8xf32>
    %102 = math.tanh %101 : vector<8x8xf32>
    %cst_46 = arith.constant 0.353553385 : f32
    %103 = vector.broadcast %cst_46 : f32 to vector<8x8xf32>
    %104 = arith.mulf %99, %103 : vector<8x8xf32>
    %105 = math.tanh %104 : vector<8x8xf32>
    %106 = arith.addf %102, %105 : vector<8x8xf32>
    %107 = arith.addf %95, %106 : vector<8x8xf32>
    %cst_47 = arith.constant 2.500000e-01 : f32
    %108 = vector.broadcast %cst_47 : f32 to vector<8x8xf32>
    %109 = arith.mulf %107, %108 : vector<8x8xf32>
    %c0_48 = arith.constant 0 : index
    %c1_49 = arith.constant 1 : index
    %c0_50 = arith.constant 0 : index
    %c0_51 = arith.constant 0 : index
    %110 = vector.load %arg6[%c0_48, %c1_49, %c0_50, %c0_51] : memref<1x2x8x8xf32, #tpu.memory_space<vmem>>, vector<1x1x8x8xf32>
    %111 = vector.shape_cast %110 : vector<1x1x8x8xf32> to vector<8x8xf32>
    %112 = vector.shape_cast %109 : vector<8x8xf32> to vector<1x1x8x8xf32>
    tpu.vector_store %arg6[%c0_48, %c1_49, %c0_50, %c0_51], %112 {strides = array<i32>} : memref<1x2x8x8xf32, #tpu.memory_space<vmem>>, vector<1x1x8x8xf32>,
    %113 = vector.extract_strided_slice %82 {offsets = [0, 16], sizes = [8, 8], strides = [1, 1]} : vector<8x24xf32> to vector<8x8xf32>
    %114 = tpu.concatenate %62, %113 in 1 : vector<8x8xf32>, vector<8x8xf32> -> vector<8x16xf32>
    %115 = vector.broadcast %11 : vector<8x1xf32> to vector<8x16xf32>
    %116 = arith.mulf %114, %115 : vector<8x16xf32>
    %c0_52 = arith.constant 0 : index
    %c0_53 = arith.constant 0 : index
    %c0_54 = arith.constant 0 : index
    %117 = vector.load %arg7[%c0_52, %c0_53, %c0_54] : memref<1x8x16xf32, #tpu.memory_space<vmem>>, vector<1x8x16xf32>
    %118 = vector.shape_cast %117 : vector<1x8x16xf32> to vector<8x16xf32>
    %119 = vector.shape_cast %116 : vector<8x16xf32> to vector<1x8x16xf32>
    tpu.vector_store %arg7[%c0_52, %c0_53, %c0_54], %119 {strides = array<i32>} : memref<1x8x16xf32, #tpu.memory_space<vmem>>, vector<1x8x16xf32>,
    return
  }
  func.func @transform_0(%arg0: i32) -> (i32, i32, i32) {
    %c0_i32 = arith.constant 0 : i32
    %c0_i32_0 = arith.constant 0 : i32
    %c0_i32_1 = arith.constant 0 : i32
    return %arg0, %c0_i32, %c0_i32_0 : i32, i32, i32
  }
  func.func @transform_1(%arg0: i32) -> (i32, i32, i32, i32) {
    %c0_i32 = arith.constant 0 : i32
    %c0_i32_0 = arith.constant 0 : i32
    %c0_i32_1 = arith.constant 0 : i32
    %c0_i32_2 = arith.constant 0 : i32
    return %arg0, %c0_i32, %c0_i32_0, %c0_i32_1 : i32, i32, i32, i32
  }
  func.func @transform_2(%arg0: i32) -> (i32, i32) {
    %c0_i32 = arith.constant 0 : i32
    %c0_i32_0 = arith.constant 0 : i32
    %c0_i32_1 = arith.constant 0 : i32
    return %c0_i32, %c0_i32_0 : i32, i32
  }
  func.func @transform_3(%arg0: i32) -> (i32, i32) {
    %c0_i32 = arith.constant 0 : i32
    %c0_i32_0 = arith.constant 0 : i32
    %c0_i32_1 = arith.constant 0 : i32
    return %c0_i32, %c0_i32_0 : i32, i32
  }
  func.func @transform_4(%arg0: i32) -> (i32, i32, i32) {
    %c0_i32 = arith.constant 0 : i32
    %c0_i32_0 = arith.constant 0 : i32
    %c0_i32_1 = arith.constant 0 : i32
    return %arg0, %c0_i32, %c0_i32_0 : i32, i32, i32
  }
  func.func @transform_5(%arg0: i32) -> (i32, i32, i32, i32) {
    %c0_i32 = arith.constant 0 : i32
    %c0_i32_0 = arith.constant 0 : i32
    %c0_i32_1 = arith.constant 0 : i32
    %c0_i32_2 = arith.constant 0 : i32
    return %arg0, %c0_i32, %c0_i32_0, %c0_i32_1 : i32, i32, i32, i32
  }
  func.func @transform_6(%arg0: i32) -> (i32, i32, i32) {
    %c0_i32 = arith.constant 0 : i32
    %c0_i32_0 = arith.constant 0 : i32
    %c0_i32_1 = arith.constant 0 : i32
    return %arg0, %c0_i32, %c0_i32_0 : i32, i32, i32
  }
}

module attributes {stable_mosaic.version = 11 : i64} {
  func.func @_pow_kernel(%arg0: i32, %arg1: memref<1x8x8xf32, #tpu.memory_space<vmem>>, %arg2: memref<1x2x8x8xf32, #tpu.memory_space<vmem>>) attributes {dimension_semantics = [#tpu.dimension_semantics<parallel>], iteration_bounds = array<i64: 2>, scalar_prefetch = 0 : i64, scratch_operands = 0 : i64, tpu.core_type = #tpu.core_type<tc>, window_params = [{transform_indices = @transform_0, window_bounds = array<i64: 1, 8, 8>}, {transform_indices = @transform_1, window_bounds = array<i64: 1, 2, 8, 8>}]} {
    %c0 = arith.constant 0 : index
    %c0_0 = arith.constant 0 : index
    %c0_1 = arith.constant 0 : index
    %0 = vector.load %arg1[%c0, %c0_0, %c0_1] : memref<1x8x8xf32, #tpu.memory_space<vmem>>, vector<1x8x8xf32>
    %1 = vector.shape_cast %0 : vector<1x8x8xf32> to vector<8x8xf32>
    %c0_2 = arith.constant 0 : index
    %c0_3 = arith.constant 0 : index
    %c0_4 = arith.constant 0 : index
    %c0_5 = arith.constant 0 : index
    %2 = vector.load %arg2[%c0_2, %c0_3, %c0_4, %c0_5] : memref<1x2x8x8xf32, #tpu.memory_space<vmem>>, vector<1x1x8x8xf32>
    %3 = vector.shape_cast %2 : vector<1x1x8x8xf32> to vector<8x8xf32>
    %4 = vector.shape_cast %1 : vector<8x8xf32> to vector<1x1x8x8xf32>
    tpu.vector_store %arg2[%c0_2, %c0_3, %c0_4, %c0_5], %4 {strides = array<i32>} : memref<1x2x8x8xf32, #tpu.memory_space<vmem>>, vector<1x1x8x8xf32>,
    %cst = arith.constant dense<0.000000e+00> : vector<8x8xf32>
    %5 = tpu.matmul %1, %1, %cst {dimension_numbers = #tpu.dot_dimension_numbers<[1], [0], [0], [1], [0, 0, 1, 1], [], []>} : vector<8x8xf32>, vector<8x8xf32>, vector<8x8xf32> -> vector<8x8xf32>
    %c0_6 = arith.constant 0 : index
    %c1 = arith.constant 1 : index
    %c0_7 = arith.constant 0 : index
    %c0_8 = arith.constant 0 : index
    %6 = vector.load %arg2[%c0_6, %c1, %c0_7, %c0_8] : memref<1x2x8x8xf32, #tpu.memory_space<vmem>>, vector<1x1x8x8xf32>
    %7 = vector.shape_cast %6 : vector<1x1x8x8xf32> to vector<8x8xf32>
    %8 = vector.shape_cast %5 : vector<8x8xf32> to vector<1x1x8x8xf32>
    tpu.vector_store %arg2[%c0_6, %c1, %c0_7, %c0_8], %8 {strides = array<i32>} : memref<1x2x8x8xf32, #tpu.memory_space<vmem>>, vector<1x1x8x8xf32>,
    return
  }
  func.func @transform_0(%arg0: i32) -> (i32, i32, i32) {
    %c0_i32 = arith.constant 0 : i32
    %c0_i32_0 = arith.constant 0 : i32
    %c0_i32_1 = arith.constant 0 : i32
    return %arg0, %c0_i32, %c0_i32_0 : i32, i32, i32
  }
  func.func @transform_1(%arg0: i32) -> (i32, i32, i32, i32) {
    %c0_i32 = arith.constant 0 : i32
    %c0_i32_0 = arith.constant 0 : i32
    %c0_i32_1 = arith.constant 0 : i32
    %c0_i32_2 = arith.constant 0 : i32
    return %arg0, %c0_i32, %c0_i32_0, %c0_i32_1 : i32, i32, i32, i32
  }
}

module attributes {stable_mosaic.version = 11 : i64} {
  func.func @_chan_mlp_kernel(%arg0: i32, %arg1: memref<1x2x64xf32, #tpu.memory_space<vmem>>, %arg2: memref<1x2x64xf32, #tpu.memory_space<vmem>>, %arg3: memref<8x4xf32, #tpu.memory_space<vmem>>, %arg4: memref<8x1xf32, #tpu.memory_space<vmem>>, %arg5: memref<4x8xf32, #tpu.memory_space<vmem>>, %arg6: memref<4x1xf32, #tpu.memory_space<vmem>>, %arg7: memref<1x4x64xf32, #tpu.memory_space<vmem>>) attributes {dimension_semantics = [#tpu.dimension_semantics<parallel>], iteration_bounds = array<i64: 2>, scalar_prefetch = 0 : i64, scratch_operands = 0 : i64, tpu.core_type = #tpu.core_type<tc>, window_params = [{transform_indices = @transform_0, window_bounds = array<i64: 1, 2, 64>}, {transform_indices = @transform_1, window_bounds = array<i64: 1, 2, 64>}, {pipeline_mode = #tpu.pipeline_mode<synchronous>, transform_indices = @transform_2, window_bounds = array<i64: 8, 4>}, {pipeline_mode = #tpu.pipeline_mode<synchronous>, transform_indices = @transform_3, window_bounds = array<i64: 8, 1>}, {pipeline_mode = #tpu.pipeline_mode<synchronous>, transform_indices = @transform_4, window_bounds = array<i64: 4, 8>}, {pipeline_mode = #tpu.pipeline_mode<synchronous>, transform_indices = @transform_5, window_bounds = array<i64: 4, 1>}, {transform_indices = @transform_6, window_bounds = array<i64: 1, 4, 64>}]} {
    %c0 = arith.constant 0 : index
    %c0_0 = arith.constant 0 : index
    %c0_1 = arith.constant 0 : index
    %0 = vector.load %arg1[%c0, %c0_0, %c0_1] : memref<1x2x64xf32, #tpu.memory_space<vmem>>, vector<1x2x64xf32>
    %1 = vector.shape_cast %0 : vector<1x2x64xf32> to vector<2x64xf32>
    %c0_2 = arith.constant 0 : index
    %c0_3 = arith.constant 0 : index
    %c0_4 = arith.constant 0 : index
    %2 = vector.load %arg2[%c0_2, %c0_3, %c0_4] : memref<1x2x64xf32, #tpu.memory_space<vmem>>, vector<1x2x64xf32>
    %3 = vector.shape_cast %2 : vector<1x2x64xf32> to vector<2x64xf32>
    %4 = tpu.concatenate %1, %3 in 0 : vector<2x64xf32>, vector<2x64xf32> -> vector<4x64xf32>
    %c0_5 = arith.constant 0 : index
    %c0_6 = arith.constant 0 : index
    %5 = vector.load %arg3[%c0_5, %c0_6] : memref<8x4xf32, #tpu.memory_space<vmem>>, vector<8x4xf32>
    %c0_7 = arith.constant 0 : index
    %c0_8 = arith.constant 0 : index
    %6 = vector.load %arg4[%c0_7, %c0_8] : memref<8x1xf32, #tpu.memory_space<vmem>>, vector<8x1xf32>
    %cst = arith.constant dense<0.000000e+00> : vector<8x64xf32>
    %7 = tpu.matmul %5, %4, %cst {dimension_numbers = #tpu.dot_dimension_numbers<[1], [0], [0], [1], [0, 0, 1, 1], [], []>} : vector<8x4xf32>, vector<4x64xf32>, vector<8x64xf32> -> vector<8x64xf32>
    %8 = vector.broadcast %6 : vector<8x1xf32> to vector<8x64xf32>
    %9 = arith.addf %7, %8 : vector<8x64xf32>
    %cst_9 = arith.constant 0.000000e+00 : f32
    %10 = vector.broadcast %cst_9 : f32 to vector<8x64xf32>
    %11 = arith.cmpf ogt, %9, %10 : vector<8x64xf32>
    %12 = math.exp %9 : vector<8x64xf32>
    %cst_10 = arith.constant 1.000000e+00 : f32
    %13 = vector.broadcast %cst_10 : f32 to vector<8x64xf32>
    %14 = arith.subf %12, %13 : vector<8x64xf32>
    %15 = arith.select %11, %9, %14 : vector<8x64xi1>, vector<8x64xf32>
    %c0_11 = arith.constant 0 : index
    %c0_12 = arith.constant 0 : index
    %16 = vector.load %arg5[%c0_11, %c0_12] : memref<4x8xf32, #tpu.memory_space<vmem>>, vector<4x8xf32>
    %c0_13 = arith.constant 0 : index
    %c0_14 = arith.constant 0 : index
    %17 = vector.load %arg6[%c0_13, %c0_14] : memref<4x1xf32, #tpu.memory_space<vmem>>, vector<4x1xf32>
    %cst_15 = arith.constant dense<0.000000e+00> : vector<4x64xf32>
    %18 = tpu.matmul %16, %15, %cst_15 {dimension_numbers = #tpu.dot_dimension_numbers<[1], [0], [0], [1], [0, 0, 1, 1], [], []>} : vector<4x8xf32>, vector<8x64xf32>, vector<4x64xf32> -> vector<4x64xf32>
    %19 = vector.broadcast %17 : vector<4x1xf32> to vector<4x64xf32>
    %20 = arith.addf %18, %19 : vector<4x64xf32>
    %c0_16 = arith.constant 0 : index
    %c0_17 = arith.constant 0 : index
    %c0_18 = arith.constant 0 : index
    %21 = vector.load %arg7[%c0_16, %c0_17, %c0_18] : memref<1x4x64xf32, #tpu.memory_space<vmem>>, vector<1x4x64xf32>
    %22 = vector.shape_cast %21 : vector<1x4x64xf32> to vector<4x64xf32>
    %23 = vector.shape_cast %20 : vector<4x64xf32> to vector<1x4x64xf32>
    tpu.vector_store %arg7[%c0_16, %c0_17, %c0_18], %23 {strides = array<i32>} : memref<1x4x64xf32, #tpu.memory_space<vmem>>, vector<1x4x64xf32>,
    return
  }
  func.func @transform_0(%arg0: i32) -> (i32, i32, i32) {
    %c0_i32 = arith.constant 0 : i32
    %c0_i32_0 = arith.constant 0 : i32
    %c0_i32_1 = arith.constant 0 : i32
    return %arg0, %c0_i32, %c0_i32_0 : i32, i32, i32
  }
  func.func @transform_1(%arg0: i32) -> (i32, i32, i32) {
    %c0_i32 = arith.constant 0 : i32
    %c0_i32_0 = arith.constant 0 : i32
    %c0_i32_1 = arith.constant 0 : i32
    return %arg0, %c0_i32, %c0_i32_0 : i32, i32, i32
  }
  func.func @transform_2(%arg0: i32) -> (i32, i32) {
    %c0_i32 = arith.constant 0 : i32
    %c0_i32_0 = arith.constant 0 : i32
    %c0_i32_1 = arith.constant 0 : i32
    return %c0_i32, %c0_i32_0 : i32, i32
  }
  func.func @transform_3(%arg0: i32) -> (i32, i32) {
    %c0_i32 = arith.constant 0 : i32
    %c0_i32_0 = arith.constant 0 : i32
    %c0_i32_1 = arith.constant 0 : i32
    return %c0_i32, %c0_i32_0 : i32, i32
  }
  func.func @transform_4(%arg0: i32) -> (i32, i32) {
    %c0_i32 = arith.constant 0 : i32
    %c0_i32_0 = arith.constant 0 : i32
    %c0_i32_1 = arith.constant 0 : i32
    return %c0_i32, %c0_i32_0 : i32, i32
  }
  func.func @transform_5(%arg0: i32) -> (i32, i32) {
    %c0_i32 = arith.constant 0 : i32
    %c0_i32_0 = arith.constant 0 : i32
    %c0_i32_1 = arith.constant 0 : i32
    return %c0_i32, %c0_i32_0 : i32, i32
  }
  func.func @transform_6(%arg0: i32) -> (i32, i32, i32) {
    %c0_i32 = arith.constant 0 : i32
    %c0_i32_0 = arith.constant 0 : i32
    %c0_i32_1 = arith.constant 0 : i32
    return %arg0, %c0_i32, %c0_i32_0 : i32, i32, i32
  }
}

module attributes {stable_mosaic.version = 11 : i64} {
  func.func @_attn_layer_kernel(%arg0: i32, %arg1: memref<1x8x8xf32, #tpu.memory_space<vmem>>, %arg2: memref<1x4x8x8xf32, #tpu.memory_space<vmem>>, %arg3: memref<8x96xbf16, #tpu.memory_space<vmem>>, %arg4: memref<4x24xf32, #tpu.memory_space<vmem>>, %arg5: memref<1x8x1xf32, #tpu.memory_space<vmem>>, %arg6: memref<1x4x8x8xf32, #tpu.memory_space<vmem>>, %arg7: memref<1x8x32xf32, #tpu.memory_space<vmem>>) attributes {dimension_semantics = [#tpu.dimension_semantics<parallel>], iteration_bounds = array<i64: 2>, scalar_prefetch = 0 : i64, scratch_operands = 0 : i64, tpu.core_type = #tpu.core_type<tc>, window_params = [{transform_indices = @transform_0, window_bounds = array<i64: 1, 8, 8>}, {transform_indices = @transform_1, window_bounds = array<i64: 1, 4, 8, 8>}, {pipeline_mode = #tpu.pipeline_mode<synchronous>, transform_indices = @transform_2, window_bounds = array<i64: 8, 96>}, {pipeline_mode = #tpu.pipeline_mode<synchronous>, transform_indices = @transform_3, window_bounds = array<i64: 4, 24>}, {transform_indices = @transform_4, window_bounds = array<i64: 1, 8, 1>}, {transform_indices = @transform_5, window_bounds = array<i64: 1, 4, 8, 8>}, {transform_indices = @transform_6, window_bounds = array<i64: 1, 8, 32>}]} {
    %c0 = arith.constant 0 : index
    %c0_0 = arith.constant 0 : index
    %c0_1 = arith.constant 0 : index
    %0 = vector.load %arg1[%c0, %c0_0, %c0_1] : memref<1x8x8xf32, #tpu.memory_space<vmem>>, vector<1x8x8xf32>
    %1 = vector.shape_cast %0 : vector<1x8x8xf32> to vector<8x8xf32>
    %2 = arith.truncf %1 : vector<8x8xf32> to vector<8x8xbf16>
    %c0_2 = arith.constant 0 : index
    %c0_3 = arith.constant 0 : index
    %3 = vector.load %arg3[%c0_2, %c0_3] : memref<8x96xbf16, #tpu.memory_space<vmem>>, vector<8x96xbf16>
    %cst = arith.constant dense<0.000000e+00> : vector<8x96xf32>
    %4 = tpu.matmul %2, %3, %cst {dimension_numbers = #tpu.dot_dimension_numbers<[1], [0], [0], [1], [0, 0, 1, 1], [], []>} : vector<8x8xbf16>, vector<8x96xbf16>, vector<8x96xf32> -> vector<8x96xf32>
    %5 = tpu.iota {dimensions = array<i32: 0>} : vector<8x8xi32>
    %6 = tpu.iota {dimensions = array<i32: 1>} : vector<8x8xi32>
    %7 = arith.cmpi eq, %5, %6 : vector<8x8xi32>
    %8 = arith.extui %7 : vector<8x8xi1> to vector<8x8xi32>
    %9 = arith.sitofp %8 : vector<8x8xi32> to vector<8x8xf32>
    %c0_4 = arith.constant 0 : index
    %c0_5 = arith.constant 0 : index
    %c0_6 = arith.constant 0 : index
    %10 = vector.load %arg5[%c0_4, %c0_5, %c0_6] : memref<1x8x1xf32, #tpu.memory_space<vmem>>, vector<1x8x1xf32>
    %11 = vector.shape_cast %10 : vector<1x8x1xf32> to vector<8x1xf32>
    %c0_7 = arith.constant 0 : index
    %c0_8 = arith.constant 0 : index
    %c0_9 = arith.constant 0 : index
    %c0_10 = arith.constant 0 : index
    %12 = vector.load %arg2[%c0_7, %c0_8, %c0_9, %c0_10] : memref<1x4x8x8xf32, #tpu.memory_space<vmem>>, vector<1x1x8x8xf32>
    %13 = vector.shape_cast %12 : vector<1x1x8x8xf32> to vector<8x8xf32>
    %cst_11 = arith.constant 1.000000e+00 : f32
    %14 = vector.broadcast %cst_11 : f32 to vector<8x8xf32>
    %15 = arith.subf %14, %9 : vector<8x8xf32>
    %16 = arith.mulf %13, %15 : vector<8x8xf32>
    %17 = arith.addf %16, %9 : vector<8x8xf32>
    %cst_12 = arith.constant dense<0.000000e+00> : vector<8xf32>
    %18 = vector.multi_reduction <add>, %17, %cst_12 [1] : vector<8x8xf32> to vector<8xf32>
    %19 = vector.shape_cast %18 : vector<8xf32> to vector<8x1xf32>
    %cst_13 = arith.constant 1.000000e+00 : f32
    %20 = vector.broadcast %cst_13 : f32 to vector<8x1xf32>
    %21 = arith.maximumf %19, %20 : vector<8x1xf32>
    %22 = math.rsqrt %21 : vector<8x1xf32>
    %23 = vector.extract_strided_slice %4 {offsets = [0, 0], sizes = [8, 24], strides = [1, 1]} : vector<8x96xf32> to vector<8x24xf32>
    %24 = vector.broadcast %22 : vector<8x1xf32> to vector<8x24xf32>
    %25 = arith.mulf %23, %24 : vector<8x24xf32>
    %cst_14 = arith.constant dense<0.000000e+00> : vector<8x24xf32>
    %26 = tpu.matmul %17, %25, %cst_14 {dimension_numbers = #tpu.dot_dimension_numbers<[1], [0], [0], [1], [0, 0, 1, 1], [], []>} : vector<8x8xf32>, vector<8x24xf32>, vector<8x24xf32> -> vector<8x24xf32>
    %27 = vector.broadcast %22 : vector<8x1xf32> to vector<8x24xf32>
    %28 = arith.mulf %26, %27 : vector<8x24xf32>
    %c0_15 = arith.constant 0 : index
    %c0_16 = arith.constant 0 : index
    %29 = vector.load %arg4[%c0_15, %c0_16] : memref<4x24xf32, #tpu.memory_space<vmem>>, vector<1x24xf32>
    %30 = vector.broadcast %29 : vector<1x24xf32> to vector<8x24xf32>
    %31 = arith.addf %28, %30 : vector<8x24xf32>
    %32 = vector.extract_strided_slice %31 {offsets = [0, 0], sizes = [8, 8], strides = [1, 1]} : vector<8x24xf32> to vector<8x8xf32>
    %33 = vector.extract_strided_slice %31 {offsets = [0, 8], sizes = [8, 8], strides = [1, 1]} : vector<8x24xf32> to vector<8x8xf32>
    %34 = vector.extract_strided_slice %32 {offsets = [0, 0], sizes = [8, 4], strides = [1, 1]} : vector<8x8xf32> to vector<8x4xf32>
    %35 = vector.extract_strided_slice %33 {offsets = [0, 0], sizes = [8, 4], strides = [1, 1]} : vector<8x8xf32> to vector<8x4xf32>
    %cst_17 = arith.constant dense<0.000000e+00> : vector<8x8xf32>
    %36 = tpu.matmul %34, %35, %cst_17 {dimension_numbers = #tpu.dot_dimension_numbers<[1], [1], [0], [0], [0, 0, 1, 0], [], []>} : vector<8x4xf32>, vector<8x4xf32>, vector<8x8xf32> -> vector<8x8xf32>
    %cst_18 = arith.constant dense<0.000000e+00> : vector<8x8xf32>
    %37 = tpu.matmul %35, %34, %cst_18 {dimension_numbers = #tpu.dot_dimension_numbers<[1], [1], [0], [0], [0, 0, 1, 0], [], []>} : vector<8x4xf32>, vector<8x4xf32>, vector<8x8xf32> -> vector<8x8xf32>
    %cst_19 = arith.constant 0.353553385 : f32
    %38 = vector.broadcast %cst_19 : f32 to vector<8x8xf32>
    %39 = arith.mulf %36, %38 : vector<8x8xf32>
    %40 = math.tanh %39 : vector<8x8xf32>
    %cst_20 = arith.constant 0.353553385 : f32
    %41 = vector.broadcast %cst_20 : f32 to vector<8x8xf32>
    %42 = arith.mulf %37, %41 : vector<8x8xf32>
    %43 = math.tanh %42 : vector<8x8xf32>
    %44 = arith.addf %40, %43 : vector<8x8xf32>
    %45 = vector.extract_strided_slice %32 {offsets = [0, 4], sizes = [8, 4], strides = [1, 1]} : vector<8x8xf32> to vector<8x4xf32>
    %46 = vector.extract_strided_slice %33 {offsets = [0, 4], sizes = [8, 4], strides = [1, 1]} : vector<8x8xf32> to vector<8x4xf32>
    %cst_21 = arith.constant dense<0.000000e+00> : vector<8x8xf32>
    %47 = tpu.matmul %45, %46, %cst_21 {dimension_numbers = #tpu.dot_dimension_numbers<[1], [1], [0], [0], [0, 0, 1, 0], [], []>} : vector<8x4xf32>, vector<8x4xf32>, vector<8x8xf32> -> vector<8x8xf32>
    %cst_22 = arith.constant dense<0.000000e+00> : vector<8x8xf32>
    %48 = tpu.matmul %46, %45, %cst_22 {dimension_numbers = #tpu.dot_dimension_numbers<[1], [1], [0], [0], [0, 0, 1, 0], [], []>} : vector<8x4xf32>, vector<8x4xf32>, vector<8x8xf32> -> vector<8x8xf32>
    %cst_23 = arith.constant 0.353553385 : f32
    %49 = vector.broadcast %cst_23 : f32 to vector<8x8xf32>
    %50 = arith.mulf %47, %49 : vector<8x8xf32>
    %51 = math.tanh %50 : vector<8x8xf32>
    %cst_24 = arith.constant 0.353553385 : f32
    %52 = vector.broadcast %cst_24 : f32 to vector<8x8xf32>
    %53 = arith.mulf %48, %52 : vector<8x8xf32>
    %54 = math.tanh %53 : vector<8x8xf32>
    %55 = arith.addf %51, %54 : vector<8x8xf32>
    %56 = arith.addf %44, %55 : vector<8x8xf32>
    %cst_25 = arith.constant 2.500000e-01 : f32
    %57 = vector.broadcast %cst_25 : f32 to vector<8x8xf32>
    %58 = arith.mulf %56, %57 : vector<8x8xf32>
    %c0_26 = arith.constant 0 : index
    %c0_27 = arith.constant 0 : index
    %c0_28 = arith.constant 0 : index
    %c0_29 = arith.constant 0 : index
    %59 = vector.load %arg6[%c0_26, %c0_27, %c0_28, %c0_29] : memref<1x4x8x8xf32, #tpu.memory_space<vmem>>, vector<1x1x8x8xf32>
    %60 = vector.shape_cast %59 : vector<1x1x8x8xf32> to vector<8x8xf32>
    %61 = vector.shape_cast %58 : vector<8x8xf32> to vector<1x1x8x8xf32>
    tpu.vector_store %arg6[%c0_26, %c0_27, %c0_28, %c0_29], %61 {strides = array<i32>} : memref<1x4x8x8xf32, #tpu.memory_space<vmem>>, vector<1x1x8x8xf32>,
    %62 = vector.extract_strided_slice %31 {offsets = [0, 16], sizes = [8, 8], strides = [1, 1]} : vector<8x24xf32> to vector<8x8xf32>
    %c0_30 = arith.constant 0 : index
    %c1 = arith.constant 1 : index
    %c0_31 = arith.constant 0 : index
    %c0_32 = arith.constant 0 : index
    %63 = vector.load %arg2[%c0_30, %c1, %c0_31, %c0_32] : memref<1x4x8x8xf32, #tpu.memory_space<vmem>>, vector<1x1x8x8xf32>
    %64 = vector.shape_cast %63 : vector<1x1x8x8xf32> to vector<8x8xf32>
    %cst_33 = arith.constant 1.000000e+00 : f32
    %65 = vector.broadcast %cst_33 : f32 to vector<8x8xf32>
    %66 = arith.subf %65, %9 : vector<8x8xf32>
    %67 = arith.mulf %64, %66 : vector<8x8xf32>
    %68 = arith.addf %67, %9 : vector<8x8xf32>
    %cst_34 = arith.constant dense<0.000000e+00> : vector<8xf32>
    %69 = vector.multi_reduction <add>, %68, %cst_34 [1] : vector<8x8xf32> to vector<8xf32>
    %70 = vector.shape_cast %69 : vector<8xf32> to vector<8x1xf32>
    %cst_35 = arith.constant 1.000000e+00 : f32
    %71 = vector.broadcast %cst_35 : f32 to vector<8x1xf32>
    %72 = arith.maximumf %70, %71 : vector<8x1xf32>
    %73 = math.rsqrt %72 : vector<8x1xf32>
    %74 = vector.extract_strided_slice %4 {offsets = [0, 24], sizes = [8, 24], strides = [1, 1]} : vector<8x96xf32> to vector<8x24xf32>
    %75 = vector.broadcast %73 : vector<8x1xf32> to vector<8x24xf32>
    %76 = arith.mulf %74, %75 : vector<8x24xf32>
    %cst_36 = arith.constant dense<0.000000e+00> : vector<8x24xf32>
    %77 = tpu.matmul %68, %76, %cst_36 {dimension_numbers = #tpu.dot_dimension_numbers<[1], [0], [0], [1], [0, 0, 1, 1], [], []>} : vector<8x8xf32>, vector<8x24xf32>, vector<8x24xf32> -> vector<8x24xf32>
    %78 = vector.broadcast %73 : vector<8x1xf32> to vector<8x24xf32>
    %79 = arith.mulf %77, %78 : vector<8x24xf32>
    %c1_37 = arith.constant 1 : index
    %c0_38 = arith.constant 0 : index
    %80 = vector.load %arg4[%c1_37, %c0_38] : memref<4x24xf32, #tpu.memory_space<vmem>>, vector<1x24xf32>
    %81 = vector.broadcast %80 : vector<1x24xf32> to vector<8x24xf32>
    %82 = arith.addf %79, %81 : vector<8x24xf32>
    %83 = vector.extract_strided_slice %82 {offsets = [0, 0], sizes = [8, 8], strides = [1, 1]} : vector<8x24xf32> to vector<8x8xf32>
    %84 = vector.extract_strided_slice %82 {offsets = [0, 8], sizes = [8, 8], strides = [1, 1]} : vector<8x24xf32> to vector<8x8xf32>
    %85 = vector.extract_strided_slice %83 {offsets = [0, 0], sizes = [8, 4], strides = [1, 1]} : vector<8x8xf32> to vector<8x4xf32>
    %86 = vector.extract_strided_slice %84 {offsets = [0, 0], sizes = [8, 4], strides = [1, 1]} : vector<8x8xf32> to vector<8x4xf32>
    %cst_39 = arith.constant dense<0.000000e+00> : vector<8x8xf32>
    %87 = tpu.matmul %85, %86, %cst_39 {dimension_numbers = #tpu.dot_dimension_numbers<[1], [1], [0], [0], [0, 0, 1, 0], [], []>} : vector<8x4xf32>, vector<8x4xf32>, vector<8x8xf32> -> vector<8x8xf32>
    %cst_40 = arith.constant dense<0.000000e+00> : vector<8x8xf32>
    %88 = tpu.matmul %86, %85, %cst_40 {dimension_numbers = #tpu.dot_dimension_numbers<[1], [1], [0], [0], [0, 0, 1, 0], [], []>} : vector<8x4xf32>, vector<8x4xf32>, vector<8x8xf32> -> vector<8x8xf32>
    %cst_41 = arith.constant 0.353553385 : f32
    %89 = vector.broadcast %cst_41 : f32 to vector<8x8xf32>
    %90 = arith.mulf %87, %89 : vector<8x8xf32>
    %91 = math.tanh %90 : vector<8x8xf32>
    %cst_42 = arith.constant 0.353553385 : f32
    %92 = vector.broadcast %cst_42 : f32 to vector<8x8xf32>
    %93 = arith.mulf %88, %92 : vector<8x8xf32>
    %94 = math.tanh %93 : vector<8x8xf32>
    %95 = arith.addf %91, %94 : vector<8x8xf32>
    %96 = vector.extract_strided_slice %83 {offsets = [0, 4], sizes = [8, 4], strides = [1, 1]} : vector<8x8xf32> to vector<8x4xf32>
    %97 = vector.extract_strided_slice %84 {offsets = [0, 4], sizes = [8, 4], strides = [1, 1]} : vector<8x8xf32> to vector<8x4xf32>
    %cst_43 = arith.constant dense<0.000000e+00> : vector<8x8xf32>
    %98 = tpu.matmul %96, %97, %cst_43 {dimension_numbers = #tpu.dot_dimension_numbers<[1], [1], [0], [0], [0, 0, 1, 0], [], []>} : vector<8x4xf32>, vector<8x4xf32>, vector<8x8xf32> -> vector<8x8xf32>
    %cst_44 = arith.constant dense<0.000000e+00> : vector<8x8xf32>
    %99 = tpu.matmul %97, %96, %cst_44 {dimension_numbers = #tpu.dot_dimension_numbers<[1], [1], [0], [0], [0, 0, 1, 0], [], []>} : vector<8x4xf32>, vector<8x4xf32>, vector<8x8xf32> -> vector<8x8xf32>
    %cst_45 = arith.constant 0.353553385 : f32
    %100 = vector.broadcast %cst_45 : f32 to vector<8x8xf32>
    %101 = arith.mulf %98, %100 : vector<8x8xf32>
    %102 = math.tanh %101 : vector<8x8xf32>
    %cst_46 = arith.constant 0.353553385 : f32
    %103 = vector.broadcast %cst_46 : f32 to vector<8x8xf32>
    %104 = arith.mulf %99, %103 : vector<8x8xf32>
    %105 = math.tanh %104 : vector<8x8xf32>
    %106 = arith.addf %102, %105 : vector<8x8xf32>
    %107 = arith.addf %95, %106 : vector<8x8xf32>
    %cst_47 = arith.constant 2.500000e-01 : f32
    %108 = vector.broadcast %cst_47 : f32 to vector<8x8xf32>
    %109 = arith.mulf %107, %108 : vector<8x8xf32>
    %c0_48 = arith.constant 0 : index
    %c1_49 = arith.constant 1 : index
    %c0_50 = arith.constant 0 : index
    %c0_51 = arith.constant 0 : index
    %110 = vector.load %arg6[%c0_48, %c1_49, %c0_50, %c0_51] : memref<1x4x8x8xf32, #tpu.memory_space<vmem>>, vector<1x1x8x8xf32>
    %111 = vector.shape_cast %110 : vector<1x1x8x8xf32> to vector<8x8xf32>
    %112 = vector.shape_cast %109 : vector<8x8xf32> to vector<1x1x8x8xf32>
    tpu.vector_store %arg6[%c0_48, %c1_49, %c0_50, %c0_51], %112 {strides = array<i32>} : memref<1x4x8x8xf32, #tpu.memory_space<vmem>>, vector<1x1x8x8xf32>,
    %113 = vector.extract_strided_slice %82 {offsets = [0, 16], sizes = [8, 8], strides = [1, 1]} : vector<8x24xf32> to vector<8x8xf32>
    %c0_52 = arith.constant 0 : index
    %c2 = arith.constant 2 : index
    %c0_53 = arith.constant 0 : index
    %c0_54 = arith.constant 0 : index
    %114 = vector.load %arg2[%c0_52, %c2, %c0_53, %c0_54] : memref<1x4x8x8xf32, #tpu.memory_space<vmem>>, vector<1x1x8x8xf32>
    %115 = vector.shape_cast %114 : vector<1x1x8x8xf32> to vector<8x8xf32>
    %cst_55 = arith.constant 1.000000e+00 : f32
    %116 = vector.broadcast %cst_55 : f32 to vector<8x8xf32>
    %117 = arith.subf %116, %9 : vector<8x8xf32>
    %118 = arith.mulf %115, %117 : vector<8x8xf32>
    %119 = arith.addf %118, %9 : vector<8x8xf32>
    %cst_56 = arith.constant dense<0.000000e+00> : vector<8xf32>
    %120 = vector.multi_reduction <add>, %119, %cst_56 [1] : vector<8x8xf32> to vector<8xf32>
    %121 = vector.shape_cast %120 : vector<8xf32> to vector<8x1xf32>
    %cst_57 = arith.constant 1.000000e+00 : f32
    %122 = vector.broadcast %cst_57 : f32 to vector<8x1xf32>
    %123 = arith.maximumf %121, %122 : vector<8x1xf32>
    %124 = math.rsqrt %123 : vector<8x1xf32>
    %125 = vector.extract_strided_slice %4 {offsets = [0, 48], sizes = [8, 24], strides = [1, 1]} : vector<8x96xf32> to vector<8x24xf32>
    %126 = vector.broadcast %124 : vector<8x1xf32> to vector<8x24xf32>
    %127 = arith.mulf %125, %126 : vector<8x24xf32>
    %cst_58 = arith.constant dense<0.000000e+00> : vector<8x24xf32>
    %128 = tpu.matmul %119, %127, %cst_58 {dimension_numbers = #tpu.dot_dimension_numbers<[1], [0], [0], [1], [0, 0, 1, 1], [], []>} : vector<8x8xf32>, vector<8x24xf32>, vector<8x24xf32> -> vector<8x24xf32>
    %129 = vector.broadcast %124 : vector<8x1xf32> to vector<8x24xf32>
    %130 = arith.mulf %128, %129 : vector<8x24xf32>
    %c2_59 = arith.constant 2 : index
    %c0_60 = arith.constant 0 : index
    %131 = vector.load %arg4[%c2_59, %c0_60] : memref<4x24xf32, #tpu.memory_space<vmem>>, vector<1x24xf32>
    %132 = vector.broadcast %131 : vector<1x24xf32> to vector<8x24xf32>
    %133 = arith.addf %130, %132 : vector<8x24xf32>
    %134 = vector.extract_strided_slice %133 {offsets = [0, 0], sizes = [8, 8], strides = [1, 1]} : vector<8x24xf32> to vector<8x8xf32>
    %135 = vector.extract_strided_slice %133 {offsets = [0, 8], sizes = [8, 8], strides = [1, 1]} : vector<8x24xf32> to vector<8x8xf32>
    %136 = vector.extract_strided_slice %134 {offsets = [0, 0], sizes = [8, 4], strides = [1, 1]} : vector<8x8xf32> to vector<8x4xf32>
    %137 = vector.extract_strided_slice %135 {offsets = [0, 0], sizes = [8, 4], strides = [1, 1]} : vector<8x8xf32> to vector<8x4xf32>
    %cst_61 = arith.constant dense<0.000000e+00> : vector<8x8xf32>
    %138 = tpu.matmul %136, %137, %cst_61 {dimension_numbers = #tpu.dot_dimension_numbers<[1], [1], [0], [0], [0, 0, 1, 0], [], []>} : vector<8x4xf32>, vector<8x4xf32>, vector<8x8xf32> -> vector<8x8xf32>
    %cst_62 = arith.constant dense<0.000000e+00> : vector<8x8xf32>
    %139 = tpu.matmul %137, %136, %cst_62 {dimension_numbers = #tpu.dot_dimension_numbers<[1], [1], [0], [0], [0, 0, 1, 0], [], []>} : vector<8x4xf32>, vector<8x4xf32>, vector<8x8xf32> -> vector<8x8xf32>
    %cst_63 = arith.constant 0.353553385 : f32
    %140 = vector.broadcast %cst_63 : f32 to vector<8x8xf32>
    %141 = arith.mulf %138, %140 : vector<8x8xf32>
    %142 = math.tanh %141 : vector<8x8xf32>
    %cst_64 = arith.constant 0.353553385 : f32
    %143 = vector.broadcast %cst_64 : f32 to vector<8x8xf32>
    %144 = arith.mulf %139, %143 : vector<8x8xf32>
    %145 = math.tanh %144 : vector<8x8xf32>
    %146 = arith.addf %142, %145 : vector<8x8xf32>
    %147 = vector.extract_strided_slice %134 {offsets = [0, 4], sizes = [8, 4], strides = [1, 1]} : vector<8x8xf32> to vector<8x4xf32>
    %148 = vector.extract_strided_slice %135 {offsets = [0, 4], sizes = [8, 4], strides = [1, 1]} : vector<8x8xf32> to vector<8x4xf32>
    %cst_65 = arith.constant dense<0.000000e+00> : vector<8x8xf32>
    %149 = tpu.matmul %147, %148, %cst_65 {dimension_numbers = #tpu.dot_dimension_numbers<[1], [1], [0], [0], [0, 0, 1, 0], [], []>} : vector<8x4xf32>, vector<8x4xf32>, vector<8x8xf32> -> vector<8x8xf32>
    %cst_66 = arith.constant dense<0.000000e+00> : vector<8x8xf32>
    %150 = tpu.matmul %148, %147, %cst_66 {dimension_numbers = #tpu.dot_dimension_numbers<[1], [1], [0], [0], [0, 0, 1, 0], [], []>} : vector<8x4xf32>, vector<8x4xf32>, vector<8x8xf32> -> vector<8x8xf32>
    %cst_67 = arith.constant 0.353553385 : f32
    %151 = vector.broadcast %cst_67 : f32 to vector<8x8xf32>
    %152 = arith.mulf %149, %151 : vector<8x8xf32>
    %153 = math.tanh %152 : vector<8x8xf32>
    %cst_68 = arith.constant 0.353553385 : f32
    %154 = vector.broadcast %cst_68 : f32 to vector<8x8xf32>
    %155 = arith.mulf %150, %154 : vector<8x8xf32>
    %156 = math.tanh %155 : vector<8x8xf32>
    %157 = arith.addf %153, %156 : vector<8x8xf32>
    %158 = arith.addf %146, %157 : vector<8x8xf32>
    %cst_69 = arith.constant 2.500000e-01 : f32
    %159 = vector.broadcast %cst_69 : f32 to vector<8x8xf32>
    %160 = arith.mulf %158, %159 : vector<8x8xf32>
    %c0_70 = arith.constant 0 : index
    %c2_71 = arith.constant 2 : index
    %c0_72 = arith.constant 0 : index
    %c0_73 = arith.constant 0 : index
    %161 = vector.load %arg6[%c0_70, %c2_71, %c0_72, %c0_73] : memref<1x4x8x8xf32, #tpu.memory_space<vmem>>, vector<1x1x8x8xf32>
    %162 = vector.shape_cast %161 : vector<1x1x8x8xf32> to vector<8x8xf32>
    %163 = vector.shape_cast %160 : vector<8x8xf32> to vector<1x1x8x8xf32>
    tpu.vector_store %arg6[%c0_70, %c2_71, %c0_72, %c0_73], %163 {strides = array<i32>} : memref<1x4x8x8xf32, #tpu.memory_space<vmem>>, vector<1x1x8x8xf32>,
    %164 = vector.extract_strided_slice %133 {offsets = [0, 16], sizes = [8, 8], strides = [1, 1]} : vector<8x24xf32> to vector<8x8xf32>
    %c0_74 = arith.constant 0 : index
    %c3 = arith.constant 3 : index
    %c0_75 = arith.constant 0 : index
    %c0_76 = arith.constant 0 : index
    %165 = vector.load %arg2[%c0_74, %c3, %c0_75, %c0_76] : memref<1x4x8x8xf32, #tpu.memory_space<vmem>>, vector<1x1x8x8xf32>
    %166 = vector.shape_cast %165 : vector<1x1x8x8xf32> to vector<8x8xf32>
    %cst_77 = arith.constant 1.000000e+00 : f32
    %167 = vector.broadcast %cst_77 : f32 to vector<8x8xf32>
    %168 = arith.subf %167, %9 : vector<8x8xf32>
    %169 = arith.mulf %166, %168 : vector<8x8xf32>
    %170 = arith.addf %169, %9 : vector<8x8xf32>
    %cst_78 = arith.constant dense<0.000000e+00> : vector<8xf32>
    %171 = vector.multi_reduction <add>, %170, %cst_78 [1] : vector<8x8xf32> to vector<8xf32>
    %172 = vector.shape_cast %171 : vector<8xf32> to vector<8x1xf32>
    %cst_79 = arith.constant 1.000000e+00 : f32
    %173 = vector.broadcast %cst_79 : f32 to vector<8x1xf32>
    %174 = arith.maximumf %172, %173 : vector<8x1xf32>
    %175 = math.rsqrt %174 : vector<8x1xf32>
    %176 = vector.extract_strided_slice %4 {offsets = [0, 72], sizes = [8, 24], strides = [1, 1]} : vector<8x96xf32> to vector<8x24xf32>
    %177 = vector.broadcast %175 : vector<8x1xf32> to vector<8x24xf32>
    %178 = arith.mulf %176, %177 : vector<8x24xf32>
    %cst_80 = arith.constant dense<0.000000e+00> : vector<8x24xf32>
    %179 = tpu.matmul %170, %178, %cst_80 {dimension_numbers = #tpu.dot_dimension_numbers<[1], [0], [0], [1], [0, 0, 1, 1], [], []>} : vector<8x8xf32>, vector<8x24xf32>, vector<8x24xf32> -> vector<8x24xf32>
    %180 = vector.broadcast %175 : vector<8x1xf32> to vector<8x24xf32>
    %181 = arith.mulf %179, %180 : vector<8x24xf32>
    %c3_81 = arith.constant 3 : index
    %c0_82 = arith.constant 0 : index
    %182 = vector.load %arg4[%c3_81, %c0_82] : memref<4x24xf32, #tpu.memory_space<vmem>>, vector<1x24xf32>
    %183 = vector.broadcast %182 : vector<1x24xf32> to vector<8x24xf32>
    %184 = arith.addf %181, %183 : vector<8x24xf32>
    %185 = vector.extract_strided_slice %184 {offsets = [0, 0], sizes = [8, 8], strides = [1, 1]} : vector<8x24xf32> to vector<8x8xf32>
    %186 = vector.extract_strided_slice %184 {offsets = [0, 8], sizes = [8, 8], strides = [1, 1]} : vector<8x24xf32> to vector<8x8xf32>
    %187 = vector.extract_strided_slice %185 {offsets = [0, 0], sizes = [8, 4], strides = [1, 1]} : vector<8x8xf32> to vector<8x4xf32>
    %188 = vector.extract_strided_slice %186 {offsets = [0, 0], sizes = [8, 4], strides = [1, 1]} : vector<8x8xf32> to vector<8x4xf32>
    %cst_83 = arith.constant dense<0.000000e+00> : vector<8x8xf32>
    %189 = tpu.matmul %187, %188, %cst_83 {dimension_numbers = #tpu.dot_dimension_numbers<[1], [1], [0], [0], [0, 0, 1, 0], [], []>} : vector<8x4xf32>, vector<8x4xf32>, vector<8x8xf32> -> vector<8x8xf32>
    %cst_84 = arith.constant dense<0.000000e+00> : vector<8x8xf32>
    %190 = tpu.matmul %188, %187, %cst_84 {dimension_numbers = #tpu.dot_dimension_numbers<[1], [1], [0], [0], [0, 0, 1, 0], [], []>} : vector<8x4xf32>, vector<8x4xf32>, vector<8x8xf32> -> vector<8x8xf32>
    %cst_85 = arith.constant 0.353553385 : f32
    %191 = vector.broadcast %cst_85 : f32 to vector<8x8xf32>
    %192 = arith.mulf %189, %191 : vector<8x8xf32>
    %193 = math.tanh %192 : vector<8x8xf32>
    %cst_86 = arith.constant 0.353553385 : f32
    %194 = vector.broadcast %cst_86 : f32 to vector<8x8xf32>
    %195 = arith.mulf %190, %194 : vector<8x8xf32>
    %196 = math.tanh %195 : vector<8x8xf32>
    %197 = arith.addf %193, %196 : vector<8x8xf32>
    %198 = vector.extract_strided_slice %185 {offsets = [0, 4], sizes = [8, 4], strides = [1, 1]} : vector<8x8xf32> to vector<8x4xf32>
    %199 = vector.extract_strided_slice %186 {offsets = [0, 4], sizes = [8, 4], strides = [1, 1]} : vector<8x8xf32> to vector<8x4xf32>
    %cst_87 = arith.constant dense<0.000000e+00> : vector<8x8xf32>
    %200 = tpu.matmul %198, %199, %cst_87 {dimension_numbers = #tpu.dot_dimension_numbers<[1], [1], [0], [0], [0, 0, 1, 0], [], []>} : vector<8x4xf32>, vector<8x4xf32>, vector<8x8xf32> -> vector<8x8xf32>
    %cst_88 = arith.constant dense<0.000000e+00> : vector<8x8xf32>
    %201 = tpu.matmul %199, %198, %cst_88 {dimension_numbers = #tpu.dot_dimension_numbers<[1], [1], [0], [0], [0, 0, 1, 0], [], []>} : vector<8x4xf32>, vector<8x4xf32>, vector<8x8xf32> -> vector<8x8xf32>
    %cst_89 = arith.constant 0.353553385 : f32
    %202 = vector.broadcast %cst_89 : f32 to vector<8x8xf32>
    %203 = arith.mulf %200, %202 : vector<8x8xf32>
    %204 = math.tanh %203 : vector<8x8xf32>
    %cst_90 = arith.constant 0.353553385 : f32
    %205 = vector.broadcast %cst_90 : f32 to vector<8x8xf32>
    %206 = arith.mulf %201, %205 : vector<8x8xf32>
    %207 = math.tanh %206 : vector<8x8xf32>
    %208 = arith.addf %204, %207 : vector<8x8xf32>
    %209 = arith.addf %197, %208 : vector<8x8xf32>
    %cst_91 = arith.constant 2.500000e-01 : f32
    %210 = vector.broadcast %cst_91 : f32 to vector<8x8xf32>
    %211 = arith.mulf %209, %210 : vector<8x8xf32>
    %c0_92 = arith.constant 0 : index
    %c3_93 = arith.constant 3 : index
    %c0_94 = arith.constant 0 : index
    %c0_95 = arith.constant 0 : index
    %212 = vector.load %arg6[%c0_92, %c3_93, %c0_94, %c0_95] : memref<1x4x8x8xf32, #tpu.memory_space<vmem>>, vector<1x1x8x8xf32>
    %213 = vector.shape_cast %212 : vector<1x1x8x8xf32> to vector<8x8xf32>
    %214 = vector.shape_cast %211 : vector<8x8xf32> to vector<1x1x8x8xf32>
    tpu.vector_store %arg6[%c0_92, %c3_93, %c0_94, %c0_95], %214 {strides = array<i32>} : memref<1x4x8x8xf32, #tpu.memory_space<vmem>>, vector<1x1x8x8xf32>,
    %215 = vector.extract_strided_slice %184 {offsets = [0, 16], sizes = [8, 8], strides = [1, 1]} : vector<8x24xf32> to vector<8x8xf32>
    %216 = tpu.concatenate %62, %113, %164, %215 in 1 : vector<8x8xf32>, vector<8x8xf32>, vector<8x8xf32>, vector<8x8xf32> -> vector<8x32xf32>
    %217 = vector.broadcast %11 : vector<8x1xf32> to vector<8x32xf32>
    %218 = arith.mulf %216, %217 : vector<8x32xf32>
    %c0_96 = arith.constant 0 : index
    %c0_97 = arith.constant 0 : index
    %c0_98 = arith.constant 0 : index
    %219 = vector.load %arg7[%c0_96, %c0_97, %c0_98] : memref<1x8x32xf32, #tpu.memory_space<vmem>>, vector<1x8x32xf32>
    %220 = vector.shape_cast %219 : vector<1x8x32xf32> to vector<8x32xf32>
    %221 = vector.shape_cast %218 : vector<8x32xf32> to vector<1x8x32xf32>
    tpu.vector_store %arg7[%c0_96, %c0_97, %c0_98], %221 {strides = array<i32>} : memref<1x8x32xf32, #tpu.memory_space<vmem>>, vector<1x8x32xf32>,
    return
  }
  func.func @transform_0(%arg0: i32) -> (i32, i32, i32) {
    %c0_i32 = arith.constant 0 : i32
    %c0_i32_0 = arith.constant 0 : i32
    %c0_i32_1 = arith.constant 0 : i32
    return %arg0, %c0_i32, %c0_i32_0 : i32, i32, i32
  }
  func.func @transform_1(%arg0: i32) -> (i32, i32, i32, i32) {
    %c0_i32 = arith.constant 0 : i32
    %c0_i32_0 = arith.constant 0 : i32
    %c0_i32_1 = arith.constant 0 : i32
    %c0_i32_2 = arith.constant 0 : i32
    return %arg0, %c0_i32, %c0_i32_0, %c0_i32_1 : i32, i32, i32, i32
  }
  func.func @transform_2(%arg0: i32) -> (i32, i32) {
    %c0_i32 = arith.constant 0 : i32
    %c0_i32_0 = arith.constant 0 : i32
    %c0_i32_1 = arith.constant 0 : i32
    return %c0_i32, %c0_i32_0 : i32, i32
  }
  func.func @transform_3(%arg0: i32) -> (i32, i32) {
    %c0_i32 = arith.constant 0 : i32
    %c0_i32_0 = arith.constant 0 : i32
    %c0_i32_1 = arith.constant 0 : i32
    return %c0_i32, %c0_i32_0 : i32, i32
  }
  func.func @transform_4(%arg0: i32) -> (i32, i32, i32) {
    %c0_i32 = arith.constant 0 : i32
    %c0_i32_0 = arith.constant 0 : i32
    %c0_i32_1 = arith.constant 0 : i32
    return %arg0, %c0_i32, %c0_i32_0 : i32, i32, i32
  }
  func.func @transform_5(%arg0: i32) -> (i32, i32, i32, i32) {
    %c0_i32 = arith.constant 0 : i32
    %c0_i32_0 = arith.constant 0 : i32
    %c0_i32_1 = arith.constant 0 : i32
    %c0_i32_2 = arith.constant 0 : i32
    return %arg0, %c0_i32, %c0_i32_0, %c0_i32_1 : i32, i32, i32, i32
  }
  func.func @transform_6(%arg0: i32) -> (i32, i32, i32) {
    %c0_i32 = arith.constant 0 : i32
    %c0_i32_0 = arith.constant 0 : i32
    %c0_i32_1 = arith.constant 0 : i32
    return %arg0, %c0_i32, %c0_i32_0 : i32, i32, i32
  }
}

module attributes {stable_mosaic.version = 11 : i64} {
  func.func @_rows_mlp_kernel(%arg0: i32, %arg1: memref<16x16xf32, #tpu.memory_space<vmem>>, %arg2: memref<16x8xbf16, #tpu.memory_space<vmem>>, %arg3: memref<1x8xf32, #tpu.memory_space<vmem>>, %arg4: memref<8x8xbf16, #tpu.memory_space<vmem>>, %arg5: memref<1x8xf32, #tpu.memory_space<vmem>>, %arg6: memref<16x8xf32, #tpu.memory_space<vmem>>) attributes {dimension_semantics = [#tpu.dimension_semantics<parallel>], iteration_bounds = array<i64: 1>, scalar_prefetch = 0 : i64, scratch_operands = 0 : i64, tpu.core_type = #tpu.core_type<tc>, window_params = [{transform_indices = @transform_0, window_bounds = array<i64: 16, 16>}, {pipeline_mode = #tpu.pipeline_mode<synchronous>, transform_indices = @transform_1, window_bounds = array<i64: 16, 8>}, {pipeline_mode = #tpu.pipeline_mode<synchronous>, transform_indices = @transform_2, window_bounds = array<i64: 1, 8>}, {pipeline_mode = #tpu.pipeline_mode<synchronous>, transform_indices = @transform_3, window_bounds = array<i64: 8, 8>}, {pipeline_mode = #tpu.pipeline_mode<synchronous>, transform_indices = @transform_4, window_bounds = array<i64: 1, 8>}, {transform_indices = @transform_5, window_bounds = array<i64: 16, 8>}]} {
    %c0 = arith.constant 0 : index
    %c0_0 = arith.constant 0 : index
    %0 = vector.load %arg1[%c0, %c0_0] : memref<16x16xf32, #tpu.memory_space<vmem>>, vector<16x16xf32>
    %c0_1 = arith.constant 0 : index
    %c0_2 = arith.constant 0 : index
    %1 = vector.load %arg2[%c0_1, %c0_2] : memref<16x8xbf16, #tpu.memory_space<vmem>>, vector<16x8xbf16>
    %c0_3 = arith.constant 0 : index
    %c0_4 = arith.constant 0 : index
    %2 = vector.load %arg3[%c0_3, %c0_4] : memref<1x8xf32, #tpu.memory_space<vmem>>, vector<1x8xf32>
    %3 = arith.truncf %0 : vector<16x16xf32> to vector<16x16xbf16>
    %cst = arith.constant dense<0.000000e+00> : vector<16x8xf32>
    %4 = tpu.matmul %3, %1, %cst {dimension_numbers = #tpu.dot_dimension_numbers<[1], [0], [0], [1], [0, 0, 1, 1], [], []>} : vector<16x16xbf16>, vector<16x8xbf16>, vector<16x8xf32> -> vector<16x8xf32>
    %5 = vector.broadcast %2 : vector<1x8xf32> to vector<16x8xf32>
    %6 = arith.addf %4, %5 : vector<16x8xf32>
    %cst_5 = arith.constant 0.000000e+00 : f32
    %7 = vector.broadcast %cst_5 : f32 to vector<16x8xf32>
    %8 = arith.cmpf ogt, %6, %7 : vector<16x8xf32>
    %9 = math.exp %6 : vector<16x8xf32>
    %cst_6 = arith.constant 1.000000e+00 : f32
    %10 = vector.broadcast %cst_6 : f32 to vector<16x8xf32>
    %11 = arith.subf %9, %10 : vector<16x8xf32>
    %12 = arith.select %8, %6, %11 : vector<16x8xi1>, vector<16x8xf32>
    %c0_7 = arith.constant 0 : index
    %c0_8 = arith.constant 0 : index
    %13 = vector.load %arg4[%c0_7, %c0_8] : memref<8x8xbf16, #tpu.memory_space<vmem>>, vector<8x8xbf16>
    %c0_9 = arith.constant 0 : index
    %c0_10 = arith.constant 0 : index
    %14 = vector.load %arg5[%c0_9, %c0_10] : memref<1x8xf32, #tpu.memory_space<vmem>>, vector<1x8xf32>
    %15 = arith.truncf %12 : vector<16x8xf32> to vector<16x8xbf16>
    %cst_11 = arith.constant dense<0.000000e+00> : vector<16x8xf32>
    %16 = tpu.matmul %15, %13, %cst_11 {dimension_numbers = #tpu.dot_dimension_numbers<[1], [0], [0], [1], [0, 0, 1, 1], [], []>} : vector<16x8xbf16>, vector<8x8xbf16>, vector<16x8xf32> -> vector<16x8xf32>
    %17 = vector.broadcast %14 : vector<1x8xf32> to vector<16x8xf32>
    %18 = arith.addf %16, %17 : vector<16x8xf32>
    %19 = math.tanh %18 : vector<16x8xf32>
    %c0_12 = arith.constant 0 : index
    %c0_13 = arith.constant 0 : index
    %20 = vector.load %arg6[%c0_12, %c0_13] : memref<16x8xf32, #tpu.memory_space<vmem>>, vector<16x8xf32>
    tpu.vector_store %arg6[%c0_12, %c0_13], %19 {strides = array<i32>} : memref<16x8xf32, #tpu.memory_space<vmem>>, vector<16x8xf32>,
    return
  }
  func.func @transform_0(%arg0: i32) -> (i32, i32) {
    %c0_i32 = arith.constant 0 : i32
    %c0_i32_0 = arith.constant 0 : i32
    return %arg0, %c0_i32 : i32, i32
  }
  func.func @transform_1(%arg0: i32) -> (i32, i32) {
    %c0_i32 = arith.constant 0 : i32
    %c0_i32_0 = arith.constant 0 : i32
    %c0_i32_1 = arith.constant 0 : i32
    return %c0_i32, %c0_i32_0 : i32, i32
  }
  func.func @transform_2(%arg0: i32) -> (i32, i32) {
    %c0_i32 = arith.constant 0 : i32
    %c0_i32_0 = arith.constant 0 : i32
    %c0_i32_1 = arith.constant 0 : i32
    return %c0_i32, %c0_i32_0 : i32, i32
  }
  func.func @transform_3(%arg0: i32) -> (i32, i32) {
    %c0_i32 = arith.constant 0 : i32
    %c0_i32_0 = arith.constant 0 : i32
    %c0_i32_1 = arith.constant 0 : i32
    return %c0_i32, %c0_i32_0 : i32, i32
  }
  func.func @transform_4(%arg0: i32) -> (i32, i32) {
    %c0_i32 = arith.constant 0 : i32
    %c0_i32_0 = arith.constant 0 : i32
    %c0_i32_1 = arith.constant 0 : i32
    return %c0_i32, %c0_i32_0 : i32, i32
  }
  func.func @transform_5(%arg0: i32) -> (i32, i32) {
    %c0_i32 = arith.constant 0 : i32
    %c0_i32_0 = arith.constant 0 : i32
    return %arg0, %c0_i32 : i32, i32
  }
}

module attributes {stable_mosaic.version = 11 : i64} {
  func.func @_rows_mlp_kernel(%arg0: i32, %arg1: memref<16x32xf32, #tpu.memory_space<vmem>>, %arg2: memref<32x8xbf16, #tpu.memory_space<vmem>>, %arg3: memref<1x8xf32, #tpu.memory_space<vmem>>, %arg4: memref<8x8xbf16, #tpu.memory_space<vmem>>, %arg5: memref<1x8xf32, #tpu.memory_space<vmem>>, %arg6: memref<16x8xf32, #tpu.memory_space<vmem>>) attributes {dimension_semantics = [#tpu.dimension_semantics<parallel>], iteration_bounds = array<i64: 1>, scalar_prefetch = 0 : i64, scratch_operands = 0 : i64, tpu.core_type = #tpu.core_type<tc>, window_params = [{transform_indices = @transform_0, window_bounds = array<i64: 16, 32>}, {pipeline_mode = #tpu.pipeline_mode<synchronous>, transform_indices = @transform_1, window_bounds = array<i64: 32, 8>}, {pipeline_mode = #tpu.pipeline_mode<synchronous>, transform_indices = @transform_2, window_bounds = array<i64: 1, 8>}, {pipeline_mode = #tpu.pipeline_mode<synchronous>, transform_indices = @transform_3, window_bounds = array<i64: 8, 8>}, {pipeline_mode = #tpu.pipeline_mode<synchronous>, transform_indices = @transform_4, window_bounds = array<i64: 1, 8>}, {transform_indices = @transform_5, window_bounds = array<i64: 16, 8>}]} {
    %c0 = arith.constant 0 : index
    %c0_0 = arith.constant 0 : index
    %0 = vector.load %arg1[%c0, %c0_0] : memref<16x32xf32, #tpu.memory_space<vmem>>, vector<16x32xf32>
    %c0_1 = arith.constant 0 : index
    %c0_2 = arith.constant 0 : index
    %1 = vector.load %arg2[%c0_1, %c0_2] : memref<32x8xbf16, #tpu.memory_space<vmem>>, vector<32x8xbf16>
    %c0_3 = arith.constant 0 : index
    %c0_4 = arith.constant 0 : index
    %2 = vector.load %arg3[%c0_3, %c0_4] : memref<1x8xf32, #tpu.memory_space<vmem>>, vector<1x8xf32>
    %3 = arith.truncf %0 : vector<16x32xf32> to vector<16x32xbf16>
    %cst = arith.constant dense<0.000000e+00> : vector<16x8xf32>
    %4 = tpu.matmul %3, %1, %cst {dimension_numbers = #tpu.dot_dimension_numbers<[1], [0], [0], [1], [0, 0, 1, 1], [], []>} : vector<16x32xbf16>, vector<32x8xbf16>, vector<16x8xf32> -> vector<16x8xf32>
    %5 = vector.broadcast %2 : vector<1x8xf32> to vector<16x8xf32>
    %6 = arith.addf %4, %5 : vector<16x8xf32>
    %cst_5 = arith.constant 0.000000e+00 : f32
    %7 = vector.broadcast %cst_5 : f32 to vector<16x8xf32>
    %8 = arith.cmpf ogt, %6, %7 : vector<16x8xf32>
    %9 = math.exp %6 : vector<16x8xf32>
    %cst_6 = arith.constant 1.000000e+00 : f32
    %10 = vector.broadcast %cst_6 : f32 to vector<16x8xf32>
    %11 = arith.subf %9, %10 : vector<16x8xf32>
    %12 = arith.select %8, %6, %11 : vector<16x8xi1>, vector<16x8xf32>
    %c0_7 = arith.constant 0 : index
    %c0_8 = arith.constant 0 : index
    %13 = vector.load %arg4[%c0_7, %c0_8] : memref<8x8xbf16, #tpu.memory_space<vmem>>, vector<8x8xbf16>
    %c0_9 = arith.constant 0 : index
    %c0_10 = arith.constant 0 : index
    %14 = vector.load %arg5[%c0_9, %c0_10] : memref<1x8xf32, #tpu.memory_space<vmem>>, vector<1x8xf32>
    %15 = arith.truncf %12 : vector<16x8xf32> to vector<16x8xbf16>
    %cst_11 = arith.constant dense<0.000000e+00> : vector<16x8xf32>
    %16 = tpu.matmul %15, %13, %cst_11 {dimension_numbers = #tpu.dot_dimension_numbers<[1], [0], [0], [1], [0, 0, 1, 1], [], []>} : vector<16x8xbf16>, vector<8x8xbf16>, vector<16x8xf32> -> vector<16x8xf32>
    %17 = vector.broadcast %14 : vector<1x8xf32> to vector<16x8xf32>
    %18 = arith.addf %16, %17 : vector<16x8xf32>
    %19 = math.tanh %18 : vector<16x8xf32>
    %c0_12 = arith.constant 0 : index
    %c0_13 = arith.constant 0 : index
    %20 = vector.load %arg6[%c0_12, %c0_13] : memref<16x8xf32, #tpu.memory_space<vmem>>, vector<16x8xf32>
    tpu.vector_store %arg6[%c0_12, %c0_13], %19 {strides = array<i32>} : memref<16x8xf32, #tpu.memory_space<vmem>>, vector<16x8xf32>,
    return
  }
  func.func @transform_0(%arg0: i32) -> (i32, i32) {
    %c0_i32 = arith.constant 0 : i32
    %c0_i32_0 = arith.constant 0 : i32
    return %arg0, %c0_i32 : i32, i32
  }
  func.func @transform_1(%arg0: i32) -> (i32, i32) {
    %c0_i32 = arith.constant 0 : i32
    %c0_i32_0 = arith.constant 0 : i32
    %c0_i32_1 = arith.constant 0 : i32
    return %c0_i32, %c0_i32_0 : i32, i32
  }
  func.func @transform_2(%arg0: i32) -> (i32, i32) {
    %c0_i32 = arith.constant 0 : i32
    %c0_i32_0 = arith.constant 0 : i32
    %c0_i32_1 = arith.constant 0 : i32
    return %c0_i32, %c0_i32_0 : i32, i32
  }
  func.func @transform_3(%arg0: i32) -> (i32, i32) {
    %c0_i32 = arith.constant 0 : i32
    %c0_i32_0 = arith.constant 0 : i32
    %c0_i32_1 = arith.constant 0 : i32
    return %c0_i32, %c0_i32_0 : i32, i32
  }
  func.func @transform_4(%arg0: i32) -> (i32, i32) {
    %c0_i32 = arith.constant 0 : i32
    %c0_i32_0 = arith.constant 0 : i32
    %c0_i32_1 = arith.constant 0 : i32
    return %c0_i32, %c0_i32_0 : i32, i32
  }
  func.func @transform_5(%arg0: i32) -> (i32, i32) {
    %c0_i32 = arith.constant 0 : i32
    %c0_i32_0 = arith.constant 0 : i32
    return %arg0, %c0_i32 : i32, i32
  }
}

module attributes {stable_mosaic.version = 11 : i64} {
  func.func @_chan_mlp_kernel(%arg0: i32, %arg1: memref<1x4x64xf32, #tpu.memory_space<vmem>>, %arg2: memref<1x4x64xf32, #tpu.memory_space<vmem>>, %arg3: memref<8x8xf32, #tpu.memory_space<vmem>>, %arg4: memref<8x1xf32, #tpu.memory_space<vmem>>, %arg5: memref<4x8xf32, #tpu.memory_space<vmem>>, %arg6: memref<4x1xf32, #tpu.memory_space<vmem>>, %arg7: memref<1x4x64xf32, #tpu.memory_space<vmem>>) attributes {dimension_semantics = [#tpu.dimension_semantics<parallel>], iteration_bounds = array<i64: 2>, scalar_prefetch = 0 : i64, scratch_operands = 0 : i64, tpu.core_type = #tpu.core_type<tc>, window_params = [{transform_indices = @transform_0, window_bounds = array<i64: 1, 4, 64>}, {transform_indices = @transform_1, window_bounds = array<i64: 1, 4, 64>}, {pipeline_mode = #tpu.pipeline_mode<synchronous>, transform_indices = @transform_2, window_bounds = array<i64: 8, 8>}, {pipeline_mode = #tpu.pipeline_mode<synchronous>, transform_indices = @transform_3, window_bounds = array<i64: 8, 1>}, {pipeline_mode = #tpu.pipeline_mode<synchronous>, transform_indices = @transform_4, window_bounds = array<i64: 4, 8>}, {pipeline_mode = #tpu.pipeline_mode<synchronous>, transform_indices = @transform_5, window_bounds = array<i64: 4, 1>}, {transform_indices = @transform_6, window_bounds = array<i64: 1, 4, 64>}]} {
    %c0 = arith.constant 0 : index
    %c0_0 = arith.constant 0 : index
    %c0_1 = arith.constant 0 : index
    %0 = vector.load %arg1[%c0, %c0_0, %c0_1] : memref<1x4x64xf32, #tpu.memory_space<vmem>>, vector<1x4x64xf32>
    %1 = vector.shape_cast %0 : vector<1x4x64xf32> to vector<4x64xf32>
    %c0_2 = arith.constant 0 : index
    %c0_3 = arith.constant 0 : index
    %c0_4 = arith.constant 0 : index
    %2 = vector.load %arg2[%c0_2, %c0_3, %c0_4] : memref<1x4x64xf32, #tpu.memory_space<vmem>>, vector<1x4x64xf32>
    %3 = vector.shape_cast %2 : vector<1x4x64xf32> to vector<4x64xf32>
    %4 = tpu.concatenate %1, %3 in 0 : vector<4x64xf32>, vector<4x64xf32> -> vector<8x64xf32>
    %c0_5 = arith.constant 0 : index
    %c0_6 = arith.constant 0 : index
    %5 = vector.load %arg3[%c0_5, %c0_6] : memref<8x8xf32, #tpu.memory_space<vmem>>, vector<8x8xf32>
    %c0_7 = arith.constant 0 : index
    %c0_8 = arith.constant 0 : index
    %6 = vector.load %arg4[%c0_7, %c0_8] : memref<8x1xf32, #tpu.memory_space<vmem>>, vector<8x1xf32>
    %cst = arith.constant dense<0.000000e+00> : vector<8x64xf32>
    %7 = tpu.matmul %5, %4, %cst {dimension_numbers = #tpu.dot_dimension_numbers<[1], [0], [0], [1], [0, 0, 1, 1], [], []>} : vector<8x8xf32>, vector<8x64xf32>, vector<8x64xf32> -> vector<8x64xf32>
    %8 = vector.broadcast %6 : vector<8x1xf32> to vector<8x64xf32>
    %9 = arith.addf %7, %8 : vector<8x64xf32>
    %cst_9 = arith.constant 0.000000e+00 : f32
    %10 = vector.broadcast %cst_9 : f32 to vector<8x64xf32>
    %11 = arith.cmpf ogt, %9, %10 : vector<8x64xf32>
    %12 = math.exp %9 : vector<8x64xf32>
    %cst_10 = arith.constant 1.000000e+00 : f32
    %13 = vector.broadcast %cst_10 : f32 to vector<8x64xf32>
    %14 = arith.subf %12, %13 : vector<8x64xf32>
    %15 = arith.select %11, %9, %14 : vector<8x64xi1>, vector<8x64xf32>
    %c0_11 = arith.constant 0 : index
    %c0_12 = arith.constant 0 : index
    %16 = vector.load %arg5[%c0_11, %c0_12] : memref<4x8xf32, #tpu.memory_space<vmem>>, vector<4x8xf32>
    %c0_13 = arith.constant 0 : index
    %c0_14 = arith.constant 0 : index
    %17 = vector.load %arg6[%c0_13, %c0_14] : memref<4x1xf32, #tpu.memory_space<vmem>>, vector<4x1xf32>
    %cst_15 = arith.constant dense<0.000000e+00> : vector<4x64xf32>
    %18 = tpu.matmul %16, %15, %cst_15 {dimension_numbers = #tpu.dot_dimension_numbers<[1], [0], [0], [1], [0, 0, 1, 1], [], []>} : vector<4x8xf32>, vector<8x64xf32>, vector<4x64xf32> -> vector<4x64xf32>
    %19 = vector.broadcast %17 : vector<4x1xf32> to vector<4x64xf32>
    %20 = arith.addf %18, %19 : vector<4x64xf32>
    %c0_16 = arith.constant 0 : index
    %c0_17 = arith.constant 0 : index
    %c0_18 = arith.constant 0 : index
    %21 = vector.load %arg7[%c0_16, %c0_17, %c0_18] : memref<1x4x64xf32, #tpu.memory_space<vmem>>, vector<1x4x64xf32>
    %22 = vector.shape_cast %21 : vector<1x4x64xf32> to vector<4x64xf32>
    %23 = vector.shape_cast %20 : vector<4x64xf32> to vector<1x4x64xf32>
    tpu.vector_store %arg7[%c0_16, %c0_17, %c0_18], %23 {strides = array<i32>} : memref<1x4x64xf32, #tpu.memory_space<vmem>>, vector<1x4x64xf32>,
    return
  }
  func.func @transform_0(%arg0: i32) -> (i32, i32, i32) {
    %c0_i32 = arith.constant 0 : i32
    %c0_i32_0 = arith.constant 0 : i32
    %c0_i32_1 = arith.constant 0 : i32
    return %arg0, %c0_i32, %c0_i32_0 : i32, i32, i32
  }
  func.func @transform_1(%arg0: i32) -> (i32, i32, i32) {
    %c0_i32 = arith.constant 0 : i32
    %c0_i32_0 = arith.constant 0 : i32
    %c0_i32_1 = arith.constant 0 : i32
    return %arg0, %c0_i32, %c0_i32_0 : i32, i32, i32
  }
  func.func @transform_2(%arg0: i32) -> (i32, i32) {
    %c0_i32 = arith.constant 0 : i32
    %c0_i32_0 = arith.constant 0 : i32
    %c0_i32_1 = arith.constant 0 : i32
    return %c0_i32, %c0_i32_0 : i32, i32
  }
  func.func @transform_3(%arg0: i32) -> (i32, i32) {
    %c0_i32 = arith.constant 0 : i32
    %c0_i32_0 = arith.constant 0 : i32
    %c0_i32_1 = arith.constant 0 : i32
    return %c0_i32, %c0_i32_0 : i32, i32
  }
  func.func @transform_4(%arg0: i32) -> (i32, i32) {
    %c0_i32 = arith.constant 0 : i32
    %c0_i32_0 = arith.constant 0 : i32
    %c0_i32_1 = arith.constant 0 : i32
    return %c0_i32, %c0_i32_0 : i32, i32
  }
  func.func @transform_5(%arg0: i32) -> (i32, i32) {
    %c0_i32 = arith.constant 0 : i32
    %c0_i32_0 = arith.constant 0 : i32
    %c0_i32_1 = arith.constant 0 : i32
    return %c0_i32, %c0_i32_0 : i32, i32
  }
  func.func @transform_6(%arg0: i32) -> (i32, i32, i32) {
    %c0_i32 = arith.constant 0 : i32
    %c0_i32_0 = arith.constant 0 : i32
    %c0_i32_1 = arith.constant 0 : i32
    return %arg0, %c0_i32, %c0_i32_0 : i32, i32, i32
  }
}

module attributes {stable_mosaic.version = 11 : i64} {
  func.func @_attn_layer_kernel(%arg0: i32, %arg1: memref<1x8x8xf32, #tpu.memory_space<vmem>>, %arg2: memref<1x4x8x8xf32, #tpu.memory_space<vmem>>, %arg3: memref<8x96xbf16, #tpu.memory_space<vmem>>, %arg4: memref<4x24xf32, #tpu.memory_space<vmem>>, %arg5: memref<1x8x1xf32, #tpu.memory_space<vmem>>, %arg6: memref<1x4x8x8xf32, #tpu.memory_space<vmem>>, %arg7: memref<1x8x32xf32, #tpu.memory_space<vmem>>) attributes {dimension_semantics = [#tpu.dimension_semantics<parallel>], iteration_bounds = array<i64: 2>, scalar_prefetch = 0 : i64, scratch_operands = 0 : i64, tpu.core_type = #tpu.core_type<tc>, window_params = [{transform_indices = @transform_0, window_bounds = array<i64: 1, 8, 8>}, {transform_indices = @transform_1, window_bounds = array<i64: 1, 4, 8, 8>}, {pipeline_mode = #tpu.pipeline_mode<synchronous>, transform_indices = @transform_2, window_bounds = array<i64: 8, 96>}, {pipeline_mode = #tpu.pipeline_mode<synchronous>, transform_indices = @transform_3, window_bounds = array<i64: 4, 24>}, {transform_indices = @transform_4, window_bounds = array<i64: 1, 8, 1>}, {transform_indices = @transform_5, window_bounds = array<i64: 1, 4, 8, 8>}, {transform_indices = @transform_6, window_bounds = array<i64: 1, 8, 32>}]} {
    %c0 = arith.constant 0 : index
    %c0_0 = arith.constant 0 : index
    %c0_1 = arith.constant 0 : index
    %0 = vector.load %arg1[%c0, %c0_0, %c0_1] : memref<1x8x8xf32, #tpu.memory_space<vmem>>, vector<1x8x8xf32>
    %1 = vector.shape_cast %0 : vector<1x8x8xf32> to vector<8x8xf32>
    %2 = arith.truncf %1 : vector<8x8xf32> to vector<8x8xbf16>
    %c0_2 = arith.constant 0 : index
    %c0_3 = arith.constant 0 : index
    %3 = vector.load %arg3[%c0_2, %c0_3] : memref<8x96xbf16, #tpu.memory_space<vmem>>, vector<8x96xbf16>
    %cst = arith.constant dense<0.000000e+00> : vector<8x96xf32>
    %4 = tpu.matmul %2, %3, %cst {dimension_numbers = #tpu.dot_dimension_numbers<[1], [0], [0], [1], [0, 0, 1, 1], [], []>} : vector<8x8xbf16>, vector<8x96xbf16>, vector<8x96xf32> -> vector<8x96xf32>
    %5 = tpu.iota {dimensions = array<i32: 0>} : vector<8x8xi32>
    %6 = tpu.iota {dimensions = array<i32: 1>} : vector<8x8xi32>
    %7 = arith.cmpi eq, %5, %6 : vector<8x8xi32>
    %8 = arith.extui %7 : vector<8x8xi1> to vector<8x8xi32>
    %9 = arith.sitofp %8 : vector<8x8xi32> to vector<8x8xf32>
    %c0_4 = arith.constant 0 : index
    %c0_5 = arith.constant 0 : index
    %c0_6 = arith.constant 0 : index
    %10 = vector.load %arg5[%c0_4, %c0_5, %c0_6] : memref<1x8x1xf32, #tpu.memory_space<vmem>>, vector<1x8x1xf32>
    %11 = vector.shape_cast %10 : vector<1x8x1xf32> to vector<8x1xf32>
    %c0_7 = arith.constant 0 : index
    %c0_8 = arith.constant 0 : index
    %c0_9 = arith.constant 0 : index
    %c0_10 = arith.constant 0 : index
    %12 = vector.load %arg2[%c0_7, %c0_8, %c0_9, %c0_10] : memref<1x4x8x8xf32, #tpu.memory_space<vmem>>, vector<1x1x8x8xf32>
    %13 = vector.shape_cast %12 : vector<1x1x8x8xf32> to vector<8x8xf32>
    %cst_11 = arith.constant 1.000000e+00 : f32
    %14 = vector.broadcast %cst_11 : f32 to vector<8x8xf32>
    %15 = arith.subf %14, %9 : vector<8x8xf32>
    %16 = arith.mulf %13, %15 : vector<8x8xf32>
    %17 = arith.addf %16, %9 : vector<8x8xf32>
    %cst_12 = arith.constant dense<0.000000e+00> : vector<8xf32>
    %18 = vector.multi_reduction <add>, %17, %cst_12 [1] : vector<8x8xf32> to vector<8xf32>
    %19 = vector.shape_cast %18 : vector<8xf32> to vector<8x1xf32>
    %cst_13 = arith.constant 1.000000e+00 : f32
    %20 = vector.broadcast %cst_13 : f32 to vector<8x1xf32>
    %21 = arith.maximumf %19, %20 : vector<8x1xf32>
    %22 = math.rsqrt %21 : vector<8x1xf32>
    %23 = vector.extract_strided_slice %4 {offsets = [0, 0], sizes = [8, 24], strides = [1, 1]} : vector<8x96xf32> to vector<8x24xf32>
    %24 = vector.broadcast %22 : vector<8x1xf32> to vector<8x24xf32>
    %25 = arith.mulf %23, %24 : vector<8x24xf32>
    %cst_14 = arith.constant dense<0.000000e+00> : vector<8x24xf32>
    %26 = tpu.matmul %17, %25, %cst_14 {dimension_numbers = #tpu.dot_dimension_numbers<[1], [0], [0], [1], [0, 0, 1, 1], [], []>} : vector<8x8xf32>, vector<8x24xf32>, vector<8x24xf32> -> vector<8x24xf32>
    %27 = vector.broadcast %22 : vector<8x1xf32> to vector<8x24xf32>
    %28 = arith.mulf %26, %27 : vector<8x24xf32>
    %c0_15 = arith.constant 0 : index
    %c0_16 = arith.constant 0 : index
    %29 = vector.load %arg4[%c0_15, %c0_16] : memref<4x24xf32, #tpu.memory_space<vmem>>, vector<1x24xf32>
    %30 = vector.broadcast %29 : vector<1x24xf32> to vector<8x24xf32>
    %31 = arith.addf %28, %30 : vector<8x24xf32>
    %32 = vector.extract_strided_slice %31 {offsets = [0, 0], sizes = [8, 8], strides = [1, 1]} : vector<8x24xf32> to vector<8x8xf32>
    %33 = vector.extract_strided_slice %31 {offsets = [0, 8], sizes = [8, 8], strides = [1, 1]} : vector<8x24xf32> to vector<8x8xf32>
    %34 = vector.extract_strided_slice %32 {offsets = [0, 0], sizes = [8, 4], strides = [1, 1]} : vector<8x8xf32> to vector<8x4xf32>
    %35 = vector.extract_strided_slice %33 {offsets = [0, 0], sizes = [8, 4], strides = [1, 1]} : vector<8x8xf32> to vector<8x4xf32>
    %cst_17 = arith.constant dense<0.000000e+00> : vector<8x8xf32>
    %36 = tpu.matmul %34, %35, %cst_17 {dimension_numbers = #tpu.dot_dimension_numbers<[1], [1], [0], [0], [0, 0, 1, 0], [], []>} : vector<8x4xf32>, vector<8x4xf32>, vector<8x8xf32> -> vector<8x8xf32>
    %cst_18 = arith.constant dense<0.000000e+00> : vector<8x8xf32>
    %37 = tpu.matmul %35, %34, %cst_18 {dimension_numbers = #tpu.dot_dimension_numbers<[1], [1], [0], [0], [0, 0, 1, 0], [], []>} : vector<8x4xf32>, vector<8x4xf32>, vector<8x8xf32> -> vector<8x8xf32>
    %cst_19 = arith.constant 0.353553385 : f32
    %38 = vector.broadcast %cst_19 : f32 to vector<8x8xf32>
    %39 = arith.mulf %36, %38 : vector<8x8xf32>
    %40 = math.tanh %39 : vector<8x8xf32>
    %cst_20 = arith.constant 0.353553385 : f32
    %41 = vector.broadcast %cst_20 : f32 to vector<8x8xf32>
    %42 = arith.mulf %37, %41 : vector<8x8xf32>
    %43 = math.tanh %42 : vector<8x8xf32>
    %44 = arith.addf %40, %43 : vector<8x8xf32>
    %45 = vector.extract_strided_slice %32 {offsets = [0, 4], sizes = [8, 4], strides = [1, 1]} : vector<8x8xf32> to vector<8x4xf32>
    %46 = vector.extract_strided_slice %33 {offsets = [0, 4], sizes = [8, 4], strides = [1, 1]} : vector<8x8xf32> to vector<8x4xf32>
    %cst_21 = arith.constant dense<0.000000e+00> : vector<8x8xf32>
    %47 = tpu.matmul %45, %46, %cst_21 {dimension_numbers = #tpu.dot_dimension_numbers<[1], [1], [0], [0], [0, 0, 1, 0], [], []>} : vector<8x4xf32>, vector<8x4xf32>, vector<8x8xf32> -> vector<8x8xf32>
    %cst_22 = arith.constant dense<0.000000e+00> : vector<8x8xf32>
    %48 = tpu.matmul %46, %45, %cst_22 {dimension_numbers = #tpu.dot_dimension_numbers<[1], [1], [0], [0], [0, 0, 1, 0], [], []>} : vector<8x4xf32>, vector<8x4xf32>, vector<8x8xf32> -> vector<8x8xf32>
    %cst_23 = arith.constant 0.353553385 : f32
    %49 = vector.broadcast %cst_23 : f32 to vector<8x8xf32>
    %50 = arith.mulf %47, %49 : vector<8x8xf32>
    %51 = math.tanh %50 : vector<8x8xf32>
    %cst_24 = arith.constant 0.353553385 : f32
    %52 = vector.broadcast %cst_24 : f32 to vector<8x8xf32>
    %53 = arith.mulf %48, %52 : vector<8x8xf32>
    %54 = math.tanh %53 : vector<8x8xf32>
    %55 = arith.addf %51, %54 : vector<8x8xf32>
    %56 = arith.addf %44, %55 : vector<8x8xf32>
    %cst_25 = arith.constant 2.500000e-01 : f32
    %57 = vector.broadcast %cst_25 : f32 to vector<8x8xf32>
    %58 = arith.mulf %56, %57 : vector<8x8xf32>
    %c0_26 = arith.constant 0 : index
    %c0_27 = arith.constant 0 : index
    %c0_28 = arith.constant 0 : index
    %c0_29 = arith.constant 0 : index
    %59 = vector.load %arg6[%c0_26, %c0_27, %c0_28, %c0_29] : memref<1x4x8x8xf32, #tpu.memory_space<vmem>>, vector<1x1x8x8xf32>
    %60 = vector.shape_cast %59 : vector<1x1x8x8xf32> to vector<8x8xf32>
    %61 = vector.shape_cast %58 : vector<8x8xf32> to vector<1x1x8x8xf32>
    tpu.vector_store %arg6[%c0_26, %c0_27, %c0_28, %c0_29], %61 {strides = array<i32>} : memref<1x4x8x8xf32, #tpu.memory_space<vmem>>, vector<1x1x8x8xf32>,
    %62 = vector.extract_strided_slice %31 {offsets = [0, 16], sizes = [8, 8], strides = [1, 1]} : vector<8x24xf32> to vector<8x8xf32>
    %c0_30 = arith.constant 0 : index
    %c1 = arith.constant 1 : index
    %c0_31 = arith.constant 0 : index
    %c0_32 = arith.constant 0 : index
    %63 = vector.load %arg2[%c0_30, %c1, %c0_31, %c0_32] : memref<1x4x8x8xf32, #tpu.memory_space<vmem>>, vector<1x1x8x8xf32>
    %64 = vector.shape_cast %63 : vector<1x1x8x8xf32> to vector<8x8xf32>
    %cst_33 = arith.constant 1.000000e+00 : f32
    %65 = vector.broadcast %cst_33 : f32 to vector<8x8xf32>
    %66 = arith.subf %65, %9 : vector<8x8xf32>
    %67 = arith.mulf %64, %66 : vector<8x8xf32>
    %68 = arith.addf %67, %9 : vector<8x8xf32>
    %cst_34 = arith.constant dense<0.000000e+00> : vector<8xf32>
    %69 = vector.multi_reduction <add>, %68, %cst_34 [1] : vector<8x8xf32> to vector<8xf32>
    %70 = vector.shape_cast %69 : vector<8xf32> to vector<8x1xf32>
    %cst_35 = arith.constant 1.000000e+00 : f32
    %71 = vector.broadcast %cst_35 : f32 to vector<8x1xf32>
    %72 = arith.maximumf %70, %71 : vector<8x1xf32>
    %73 = math.rsqrt %72 : vector<8x1xf32>
    %74 = vector.extract_strided_slice %4 {offsets = [0, 24], sizes = [8, 24], strides = [1, 1]} : vector<8x96xf32> to vector<8x24xf32>
    %75 = vector.broadcast %73 : vector<8x1xf32> to vector<8x24xf32>
    %76 = arith.mulf %74, %75 : vector<8x24xf32>
    %cst_36 = arith.constant dense<0.000000e+00> : vector<8x24xf32>
    %77 = tpu.matmul %68, %76, %cst_36 {dimension_numbers = #tpu.dot_dimension_numbers<[1], [0], [0], [1], [0, 0, 1, 1], [], []>} : vector<8x8xf32>, vector<8x24xf32>, vector<8x24xf32> -> vector<8x24xf32>
    %78 = vector.broadcast %73 : vector<8x1xf32> to vector<8x24xf32>
    %79 = arith.mulf %77, %78 : vector<8x24xf32>
    %c1_37 = arith.constant 1 : index
    %c0_38 = arith.constant 0 : index
    %80 = vector.load %arg4[%c1_37, %c0_38] : memref<4x24xf32, #tpu.memory_space<vmem>>, vector<1x24xf32>
    %81 = vector.broadcast %80 : vector<1x24xf32> to vector<8x24xf32>
    %82 = arith.addf %79, %81 : vector<8x24xf32>
    %83 = vector.extract_strided_slice %82 {offsets = [0, 0], sizes = [8, 8], strides = [1, 1]} : vector<8x24xf32> to vector<8x8xf32>
    %84 = vector.extract_strided_slice %82 {offsets = [0, 8], sizes = [8, 8], strides = [1, 1]} : vector<8x24xf32> to vector<8x8xf32>
    %85 = vector.extract_strided_slice %83 {offsets = [0, 0], sizes = [8, 4], strides = [1, 1]} : vector<8x8xf32> to vector<8x4xf32>
    %86 = vector.extract_strided_slice %84 {offsets = [0, 0], sizes = [8, 4], strides = [1, 1]} : vector<8x8xf32> to vector<8x4xf32>
    %cst_39 = arith.constant dense<0.000000e+00> : vector<8x8xf32>
    %87 = tpu.matmul %85, %86, %cst_39 {dimension_numbers = #tpu.dot_dimension_numbers<[1], [1], [0], [0], [0, 0, 1, 0], [], []>} : vector<8x4xf32>, vector<8x4xf32>, vector<8x8xf32> -> vector<8x8xf32>
    %cst_40 = arith.constant dense<0.000000e+00> : vector<8x8xf32>
    %88 = tpu.matmul %86, %85, %cst_40 {dimension_numbers = #tpu.dot_dimension_numbers<[1], [1], [0], [0], [0, 0, 1, 0], [], []>} : vector<8x4xf32>, vector<8x4xf32>, vector<8x8xf32> -> vector<8x8xf32>
    %cst_41 = arith.constant 0.353553385 : f32
    %89 = vector.broadcast %cst_41 : f32 to vector<8x8xf32>
    %90 = arith.mulf %87, %89 : vector<8x8xf32>
    %91 = math.tanh %90 : vector<8x8xf32>
    %cst_42 = arith.constant 0.353553385 : f32
    %92 = vector.broadcast %cst_42 : f32 to vector<8x8xf32>
    %93 = arith.mulf %88, %92 : vector<8x8xf32>
    %94 = math.tanh %93 : vector<8x8xf32>
    %95 = arith.addf %91, %94 : vector<8x8xf32>
    %96 = vector.extract_strided_slice %83 {offsets = [0, 4], sizes = [8, 4], strides = [1, 1]} : vector<8x8xf32> to vector<8x4xf32>
    %97 = vector.extract_strided_slice %84 {offsets = [0, 4], sizes = [8, 4], strides = [1, 1]} : vector<8x8xf32> to vector<8x4xf32>
    %cst_43 = arith.constant dense<0.000000e+00> : vector<8x8xf32>
    %98 = tpu.matmul %96, %97, %cst_43 {dimension_numbers = #tpu.dot_dimension_numbers<[1], [1], [0], [0], [0, 0, 1, 0], [], []>} : vector<8x4xf32>, vector<8x4xf32>, vector<8x8xf32> -> vector<8x8xf32>
    %cst_44 = arith.constant dense<0.000000e+00> : vector<8x8xf32>
    %99 = tpu.matmul %97, %96, %cst_44 {dimension_numbers = #tpu.dot_dimension_numbers<[1], [1], [0], [0], [0, 0, 1, 0], [], []>} : vector<8x4xf32>, vector<8x4xf32>, vector<8x8xf32> -> vector<8x8xf32>
    %cst_45 = arith.constant 0.353553385 : f32
    %100 = vector.broadcast %cst_45 : f32 to vector<8x8xf32>
    %101 = arith.mulf %98, %100 : vector<8x8xf32>
    %102 = math.tanh %101 : vector<8x8xf32>
    %cst_46 = arith.constant 0.353553385 : f32
    %103 = vector.broadcast %cst_46 : f32 to vector<8x8xf32>
    %104 = arith.mulf %99, %103 : vector<8x8xf32>
    %105 = math.tanh %104 : vector<8x8xf32>
    %106 = arith.addf %102, %105 : vector<8x8xf32>
    %107 = arith.addf %95, %106 : vector<8x8xf32>
    %cst_47 = arith.constant 2.500000e-01 : f32
    %108 = vector.broadcast %cst_47 : f32 to vector<8x8xf32>
    %109 = arith.mulf %107, %108 : vector<8x8xf32>
    %c0_48 = arith.constant 0 : index
    %c1_49 = arith.constant 1 : index
    %c0_50 = arith.constant 0 : index
    %c0_51 = arith.constant 0 : index
    %110 = vector.load %arg6[%c0_48, %c1_49, %c0_50, %c0_51] : memref<1x4x8x8xf32, #tpu.memory_space<vmem>>, vector<1x1x8x8xf32>
    %111 = vector.shape_cast %110 : vector<1x1x8x8xf32> to vector<8x8xf32>
    %112 = vector.shape_cast %109 : vector<8x8xf32> to vector<1x1x8x8xf32>
    tpu.vector_store %arg6[%c0_48, %c1_49, %c0_50, %c0_51], %112 {strides = array<i32>} : memref<1x4x8x8xf32, #tpu.memory_space<vmem>>, vector<1x1x8x8xf32>,
    %113 = vector.extract_strided_slice %82 {offsets = [0, 16], sizes = [8, 8], strides = [1, 1]} : vector<8x24xf32> to vector<8x8xf32>
    %c0_52 = arith.constant 0 : index
    %c2 = arith.constant 2 : index
    %c0_53 = arith.constant 0 : index
    %c0_54 = arith.constant 0 : index
    %114 = vector.load %arg2[%c0_52, %c2, %c0_53, %c0_54] : memref<1x4x8x8xf32, #tpu.memory_space<vmem>>, vector<1x1x8x8xf32>
    %115 = vector.shape_cast %114 : vector<1x1x8x8xf32> to vector<8x8xf32>
    %cst_55 = arith.constant 1.000000e+00 : f32
    %116 = vector.broadcast %cst_55 : f32 to vector<8x8xf32>
    %117 = arith.subf %116, %9 : vector<8x8xf32>
    %118 = arith.mulf %115, %117 : vector<8x8xf32>
    %119 = arith.addf %118, %9 : vector<8x8xf32>
    %cst_56 = arith.constant dense<0.000000e+00> : vector<8xf32>
    %120 = vector.multi_reduction <add>, %119, %cst_56 [1] : vector<8x8xf32> to vector<8xf32>
    %121 = vector.shape_cast %120 : vector<8xf32> to vector<8x1xf32>
    %cst_57 = arith.constant 1.000000e+00 : f32
    %122 = vector.broadcast %cst_57 : f32 to vector<8x1xf32>
    %123 = arith.maximumf %121, %122 : vector<8x1xf32>
    %124 = math.rsqrt %123 : vector<8x1xf32>
    %125 = vector.extract_strided_slice %4 {offsets = [0, 48], sizes = [8, 24], strides = [1, 1]} : vector<8x96xf32> to vector<8x24xf32>
    %126 = vector.broadcast %124 : vector<8x1xf32> to vector<8x24xf32>
    %127 = arith.mulf %125, %126 : vector<8x24xf32>
    %cst_58 = arith.constant dense<0.000000e+00> : vector<8x24xf32>
    %128 = tpu.matmul %119, %127, %cst_58 {dimension_numbers = #tpu.dot_dimension_numbers<[1], [0], [0], [1], [0, 0, 1, 1], [], []>} : vector<8x8xf32>, vector<8x24xf32>, vector<8x24xf32> -> vector<8x24xf32>
    %129 = vector.broadcast %124 : vector<8x1xf32> to vector<8x24xf32>
    %130 = arith.mulf %128, %129 : vector<8x24xf32>
    %c2_59 = arith.constant 2 : index
    %c0_60 = arith.constant 0 : index
    %131 = vector.load %arg4[%c2_59, %c0_60] : memref<4x24xf32, #tpu.memory_space<vmem>>, vector<1x24xf32>
    %132 = vector.broadcast %131 : vector<1x24xf32> to vector<8x24xf32>
    %133 = arith.addf %130, %132 : vector<8x24xf32>
    %134 = vector.extract_strided_slice %133 {offsets = [0, 0], sizes = [8, 8], strides = [1, 1]} : vector<8x24xf32> to vector<8x8xf32>
    %135 = vector.extract_strided_slice %133 {offsets = [0, 8], sizes = [8, 8], strides = [1, 1]} : vector<8x24xf32> to vector<8x8xf32>
    %136 = vector.extract_strided_slice %134 {offsets = [0, 0], sizes = [8, 4], strides = [1, 1]} : vector<8x8xf32> to vector<8x4xf32>
    %137 = vector.extract_strided_slice %135 {offsets = [0, 0], sizes = [8, 4], strides = [1, 1]} : vector<8x8xf32> to vector<8x4xf32>
    %cst_61 = arith.constant dense<0.000000e+00> : vector<8x8xf32>
    %138 = tpu.matmul %136, %137, %cst_61 {dimension_numbers = #tpu.dot_dimension_numbers<[1], [1], [0], [0], [0, 0, 1, 0], [], []>} : vector<8x4xf32>, vector<8x4xf32>, vector<8x8xf32> -> vector<8x8xf32>
    %cst_62 = arith.constant dense<0.000000e+00> : vector<8x8xf32>
    %139 = tpu.matmul %137, %136, %cst_62 {dimension_numbers = #tpu.dot_dimension_numbers<[1], [1], [0], [0], [0, 0, 1, 0], [], []>} : vector<8x4xf32>, vector<8x4xf32>, vector<8x8xf32> -> vector<8x8xf32>
    %cst_63 = arith.constant 0.353553385 : f32
    %140 = vector.broadcast %cst_63 : f32 to vector<8x8xf32>
    %141 = arith.mulf %138, %140 : vector<8x8xf32>
    %142 = math.tanh %141 : vector<8x8xf32>
    %cst_64 = arith.constant 0.353553385 : f32
    %143 = vector.broadcast %cst_64 : f32 to vector<8x8xf32>
    %144 = arith.mulf %139, %143 : vector<8x8xf32>
    %145 = math.tanh %144 : vector<8x8xf32>
    %146 = arith.addf %142, %145 : vector<8x8xf32>
    %147 = vector.extract_strided_slice %134 {offsets = [0, 4], sizes = [8, 4], strides = [1, 1]} : vector<8x8xf32> to vector<8x4xf32>
    %148 = vector.extract_strided_slice %135 {offsets = [0, 4], sizes = [8, 4], strides = [1, 1]} : vector<8x8xf32> to vector<8x4xf32>
    %cst_65 = arith.constant dense<0.000000e+00> : vector<8x8xf32>
    %149 = tpu.matmul %147, %148, %cst_65 {dimension_numbers = #tpu.dot_dimension_numbers<[1], [1], [0], [0], [0, 0, 1, 0], [], []>} : vector<8x4xf32>, vector<8x4xf32>, vector<8x8xf32> -> vector<8x8xf32>
    %cst_66 = arith.constant dense<0.000000e+00> : vector<8x8xf32>
    %150 = tpu.matmul %148, %147, %cst_66 {dimension_numbers = #tpu.dot_dimension_numbers<[1], [1], [0], [0], [0, 0, 1, 0], [], []>} : vector<8x4xf32>, vector<8x4xf32>, vector<8x8xf32> -> vector<8x8xf32>
    %cst_67 = arith.constant 0.353553385 : f32
    %151 = vector.broadcast %cst_67 : f32 to vector<8x8xf32>
    %152 = arith.mulf %149, %151 : vector<8x8xf32>
    %153 = math.tanh %152 : vector<8x8xf32>
    %cst_68 = arith.constant 0.353553385 : f32
    %154 = vector.broadcast %cst_68 : f32 to vector<8x8xf32>
    %155 = arith.mulf %150, %154 : vector<8x8xf32>
    %156 = math.tanh %155 : vector<8x8xf32>
    %157 = arith.addf %153, %156 : vector<8x8xf32>
    %158 = arith.addf %146, %157 : vector<8x8xf32>
    %cst_69 = arith.constant 2.500000e-01 : f32
    %159 = vector.broadcast %cst_69 : f32 to vector<8x8xf32>
    %160 = arith.mulf %158, %159 : vector<8x8xf32>
    %c0_70 = arith.constant 0 : index
    %c2_71 = arith.constant 2 : index
    %c0_72 = arith.constant 0 : index
    %c0_73 = arith.constant 0 : index
    %161 = vector.load %arg6[%c0_70, %c2_71, %c0_72, %c0_73] : memref<1x4x8x8xf32, #tpu.memory_space<vmem>>, vector<1x1x8x8xf32>
    %162 = vector.shape_cast %161 : vector<1x1x8x8xf32> to vector<8x8xf32>
    %163 = vector.shape_cast %160 : vector<8x8xf32> to vector<1x1x8x8xf32>
    tpu.vector_store %arg6[%c0_70, %c2_71, %c0_72, %c0_73], %163 {strides = array<i32>} : memref<1x4x8x8xf32, #tpu.memory_space<vmem>>, vector<1x1x8x8xf32>,
    %164 = vector.extract_strided_slice %133 {offsets = [0, 16], sizes = [8, 8], strides = [1, 1]} : vector<8x24xf32> to vector<8x8xf32>
    %c0_74 = arith.constant 0 : index
    %c3 = arith.constant 3 : index
    %c0_75 = arith.constant 0 : index
    %c0_76 = arith.constant 0 : index
    %165 = vector.load %arg2[%c0_74, %c3, %c0_75, %c0_76] : memref<1x4x8x8xf32, #tpu.memory_space<vmem>>, vector<1x1x8x8xf32>
    %166 = vector.shape_cast %165 : vector<1x1x8x8xf32> to vector<8x8xf32>
    %cst_77 = arith.constant 1.000000e+00 : f32
    %167 = vector.broadcast %cst_77 : f32 to vector<8x8xf32>
    %168 = arith.subf %167, %9 : vector<8x8xf32>
    %169 = arith.mulf %166, %168 : vector<8x8xf32>
    %170 = arith.addf %169, %9 : vector<8x8xf32>
    %cst_78 = arith.constant dense<0.000000e+00> : vector<8xf32>
    %171 = vector.multi_reduction <add>, %170, %cst_78 [1] : vector<8x8xf32> to vector<8xf32>
    %172 = vector.shape_cast %171 : vector<8xf32> to vector<8x1xf32>
    %cst_79 = arith.constant 1.000000e+00 : f32
    %173 = vector.broadcast %cst_79 : f32 to vector<8x1xf32>
    %174 = arith.maximumf %172, %173 : vector<8x1xf32>
    %175 = math.rsqrt %174 : vector<8x1xf32>
    %176 = vector.extract_strided_slice %4 {offsets = [0, 72], sizes = [8, 24], strides = [1, 1]} : vector<8x96xf32> to vector<8x24xf32>
    %177 = vector.broadcast %175 : vector<8x1xf32> to vector<8x24xf32>
    %178 = arith.mulf %176, %177 : vector<8x24xf32>
    %cst_80 = arith.constant dense<0.000000e+00> : vector<8x24xf32>
    %179 = tpu.matmul %170, %178, %cst_80 {dimension_numbers = #tpu.dot_dimension_numbers<[1], [0], [0], [1], [0, 0, 1, 1], [], []>} : vector<8x8xf32>, vector<8x24xf32>, vector<8x24xf32> -> vector<8x24xf32>
    %180 = vector.broadcast %175 : vector<8x1xf32> to vector<8x24xf32>
    %181 = arith.mulf %179, %180 : vector<8x24xf32>
    %c3_81 = arith.constant 3 : index
    %c0_82 = arith.constant 0 : index
    %182 = vector.load %arg4[%c3_81, %c0_82] : memref<4x24xf32, #tpu.memory_space<vmem>>, vector<1x24xf32>
    %183 = vector.broadcast %182 : vector<1x24xf32> to vector<8x24xf32>
    %184 = arith.addf %181, %183 : vector<8x24xf32>
    %185 = vector.extract_strided_slice %184 {offsets = [0, 0], sizes = [8, 8], strides = [1, 1]} : vector<8x24xf32> to vector<8x8xf32>
    %186 = vector.extract_strided_slice %184 {offsets = [0, 8], sizes = [8, 8], strides = [1, 1]} : vector<8x24xf32> to vector<8x8xf32>
    %187 = vector.extract_strided_slice %185 {offsets = [0, 0], sizes = [8, 4], strides = [1, 1]} : vector<8x8xf32> to vector<8x4xf32>
    %188 = vector.extract_strided_slice %186 {offsets = [0, 0], sizes = [8, 4], strides = [1, 1]} : vector<8x8xf32> to vector<8x4xf32>
    %cst_83 = arith.constant dense<0.000000e+00> : vector<8x8xf32>
    %189 = tpu.matmul %187, %188, %cst_83 {dimension_numbers = #tpu.dot_dimension_numbers<[1], [1], [0], [0], [0, 0, 1, 0], [], []>} : vector<8x4xf32>, vector<8x4xf32>, vector<8x8xf32> -> vector<8x8xf32>
    %cst_84 = arith.constant dense<0.000000e+00> : vector<8x8xf32>
    %190 = tpu.matmul %188, %187, %cst_84 {dimension_numbers = #tpu.dot_dimension_numbers<[1], [1], [0], [0], [0, 0, 1, 0], [], []>} : vector<8x4xf32>, vector<8x4xf32>, vector<8x8xf32> -> vector<8x8xf32>
    %cst_85 = arith.constant 0.353553385 : f32
    %191 = vector.broadcast %cst_85 : f32 to vector<8x8xf32>
    %192 = arith.mulf %189, %191 : vector<8x8xf32>
    %193 = math.tanh %192 : vector<8x8xf32>
    %cst_86 = arith.constant 0.353553385 : f32
    %194 = vector.broadcast %cst_86 : f32 to vector<8x8xf32>
    %195 = arith.mulf %190, %194 : vector<8x8xf32>
    %196 = math.tanh %195 : vector<8x8xf32>
    %197 = arith.addf %193, %196 : vector<8x8xf32>
    %198 = vector.extract_strided_slice %185 {offsets = [0, 4], sizes = [8, 4], strides = [1, 1]} : vector<8x8xf32> to vector<8x4xf32>
    %199 = vector.extract_strided_slice %186 {offsets = [0, 4], sizes = [8, 4], strides = [1, 1]} : vector<8x8xf32> to vector<8x4xf32>
    %cst_87 = arith.constant dense<0.000000e+00> : vector<8x8xf32>
    %200 = tpu.matmul %198, %199, %cst_87 {dimension_numbers = #tpu.dot_dimension_numbers<[1], [1], [0], [0], [0, 0, 1, 0], [], []>} : vector<8x4xf32>, vector<8x4xf32>, vector<8x8xf32> -> vector<8x8xf32>
    %cst_88 = arith.constant dense<0.000000e+00> : vector<8x8xf32>
    %201 = tpu.matmul %199, %198, %cst_88 {dimension_numbers = #tpu.dot_dimension_numbers<[1], [1], [0], [0], [0, 0, 1, 0], [], []>} : vector<8x4xf32>, vector<8x4xf32>, vector<8x8xf32> -> vector<8x8xf32>
    %cst_89 = arith.constant 0.353553385 : f32
    %202 = vector.broadcast %cst_89 : f32 to vector<8x8xf32>
    %203 = arith.mulf %200, %202 : vector<8x8xf32>
    %204 = math.tanh %203 : vector<8x8xf32>
    %cst_90 = arith.constant 0.353553385 : f32
    %205 = vector.broadcast %cst_90 : f32 to vector<8x8xf32>
    %206 = arith.mulf %201, %205 : vector<8x8xf32>
    %207 = math.tanh %206 : vector<8x8xf32>
    %208 = arith.addf %204, %207 : vector<8x8xf32>
    %209 = arith.addf %197, %208 : vector<8x8xf32>
    %cst_91 = arith.constant 2.500000e-01 : f32
    %210 = vector.broadcast %cst_91 : f32 to vector<8x8xf32>
    %211 = arith.mulf %209, %210 : vector<8x8xf32>
    %c0_92 = arith.constant 0 : index
    %c3_93 = arith.constant 3 : index
    %c0_94 = arith.constant 0 : index
    %c0_95 = arith.constant 0 : index
    %212 = vector.load %arg6[%c0_92, %c3_93, %c0_94, %c0_95] : memref<1x4x8x8xf32, #tpu.memory_space<vmem>>, vector<1x1x8x8xf32>
    %213 = vector.shape_cast %212 : vector<1x1x8x8xf32> to vector<8x8xf32>
    %214 = vector.shape_cast %211 : vector<8x8xf32> to vector<1x1x8x8xf32>
    tpu.vector_store %arg6[%c0_92, %c3_93, %c0_94, %c0_95], %214 {strides = array<i32>} : memref<1x4x8x8xf32, #tpu.memory_space<vmem>>, vector<1x1x8x8xf32>,
    %215 = vector.extract_strided_slice %184 {offsets = [0, 16], sizes = [8, 8], strides = [1, 1]} : vector<8x24xf32> to vector<8x8xf32>
    %216 = tpu.concatenate %62, %113, %164, %215 in 1 : vector<8x8xf32>, vector<8x8xf32>, vector<8x8xf32>, vector<8x8xf32> -> vector<8x32xf32>
    %217 = vector.broadcast %11 : vector<8x1xf32> to vector<8x32xf32>
    %218 = arith.mulf %216, %217 : vector<8x32xf32>
    %c0_96 = arith.constant 0 : index
    %c0_97 = arith.constant 0 : index
    %c0_98 = arith.constant 0 : index
    %219 = vector.load %arg7[%c0_96, %c0_97, %c0_98] : memref<1x8x32xf32, #tpu.memory_space<vmem>>, vector<1x8x32xf32>
    %220 = vector.shape_cast %219 : vector<1x8x32xf32> to vector<8x32xf32>
    %221 = vector.shape_cast %218 : vector<8x32xf32> to vector<1x8x32xf32>
    tpu.vector_store %arg7[%c0_96, %c0_97, %c0_98], %221 {strides = array<i32>} : memref<1x8x32xf32, #tpu.memory_space<vmem>>, vector<1x8x32xf32>,
    return
  }
  func.func @transform_0(%arg0: i32) -> (i32, i32, i32) {
    %c0_i32 = arith.constant 0 : i32
    %c0_i32_0 = arith.constant 0 : i32
    %c0_i32_1 = arith.constant 0 : i32
    return %arg0, %c0_i32, %c0_i32_0 : i32, i32, i32
  }
  func.func @transform_1(%arg0: i32) -> (i32, i32, i32, i32) {
    %c0_i32 = arith.constant 0 : i32
    %c0_i32_0 = arith.constant 0 : i32
    %c0_i32_1 = arith.constant 0 : i32
    %c0_i32_2 = arith.constant 0 : i32
    return %arg0, %c0_i32, %c0_i32_0, %c0_i32_1 : i32, i32, i32, i32
  }
  func.func @transform_2(%arg0: i32) -> (i32, i32) {
    %c0_i32 = arith.constant 0 : i32
    %c0_i32_0 = arith.constant 0 : i32
    %c0_i32_1 = arith.constant 0 : i32
    return %c0_i32, %c0_i32_0 : i32, i32
  }
  func.func @transform_3(%arg0: i32) -> (i32, i32) {
    %c0_i32 = arith.constant 0 : i32
    %c0_i32_0 = arith.constant 0 : i32
    %c0_i32_1 = arith.constant 0 : i32
    return %c0_i32, %c0_i32_0 : i32, i32
  }
  func.func @transform_4(%arg0: i32) -> (i32, i32, i32) {
    %c0_i32 = arith.constant 0 : i32
    %c0_i32_0 = arith.constant 0 : i32
    %c0_i32_1 = arith.constant 0 : i32
    return %arg0, %c0_i32, %c0_i32_0 : i32, i32, i32
  }
  func.func @transform_5(%arg0: i32) -> (i32, i32, i32, i32) {
    %c0_i32 = arith.constant 0 : i32
    %c0_i32_0 = arith.constant 0 : i32
    %c0_i32_1 = arith.constant 0 : i32
    %c0_i32_2 = arith.constant 0 : i32
    return %arg0, %c0_i32, %c0_i32_0, %c0_i32_1 : i32, i32, i32, i32
  }
  func.func @transform_6(%arg0: i32) -> (i32, i32, i32) {
    %c0_i32 = arith.constant 0 : i32
    %c0_i32_0 = arith.constant 0 : i32
    %c0_i32_1 = arith.constant 0 : i32
    return %arg0, %c0_i32, %c0_i32_0 : i32, i32, i32
  }
}

module attributes {stable_mosaic.version = 11 : i64} {
  func.func @_chan_mlp_kernel(%arg0: i32, %arg1: memref<1x4x64xf32, #tpu.memory_space<vmem>>, %arg2: memref<1x4x64xf32, #tpu.memory_space<vmem>>, %arg3: memref<8x8xf32, #tpu.memory_space<vmem>>, %arg4: memref<8x1xf32, #tpu.memory_space<vmem>>, %arg5: memref<2x8xf32, #tpu.memory_space<vmem>>, %arg6: memref<2x1xf32, #tpu.memory_space<vmem>>, %arg7: memref<1x2x64xf32, #tpu.memory_space<vmem>>) attributes {dimension_semantics = [#tpu.dimension_semantics<parallel>], iteration_bounds = array<i64: 2>, scalar_prefetch = 0 : i64, scratch_operands = 0 : i64, tpu.core_type = #tpu.core_type<tc>, window_params = [{transform_indices = @transform_0, window_bounds = array<i64: 1, 4, 64>}, {transform_indices = @transform_1, window_bounds = array<i64: 1, 4, 64>}, {pipeline_mode = #tpu.pipeline_mode<synchronous>, transform_indices = @transform_2, window_bounds = array<i64: 8, 8>}, {pipeline_mode = #tpu.pipeline_mode<synchronous>, transform_indices = @transform_3, window_bounds = array<i64: 8, 1>}, {pipeline_mode = #tpu.pipeline_mode<synchronous>, transform_indices = @transform_4, window_bounds = array<i64: 2, 8>}, {pipeline_mode = #tpu.pipeline_mode<synchronous>, transform_indices = @transform_5, window_bounds = array<i64: 2, 1>}, {transform_indices = @transform_6, window_bounds = array<i64: 1, 2, 64>}]} {
    %c0 = arith.constant 0 : index
    %c0_0 = arith.constant 0 : index
    %c0_1 = arith.constant 0 : index
    %0 = vector.load %arg1[%c0, %c0_0, %c0_1] : memref<1x4x64xf32, #tpu.memory_space<vmem>>, vector<1x4x64xf32>
    %1 = vector.shape_cast %0 : vector<1x4x64xf32> to vector<4x64xf32>
    %c0_2 = arith.constant 0 : index
    %c0_3 = arith.constant 0 : index
    %c0_4 = arith.constant 0 : index
    %2 = vector.load %arg2[%c0_2, %c0_3, %c0_4] : memref<1x4x64xf32, #tpu.memory_space<vmem>>, vector<1x4x64xf32>
    %3 = vector.shape_cast %2 : vector<1x4x64xf32> to vector<4x64xf32>
    %4 = tpu.concatenate %1, %3 in 0 : vector<4x64xf32>, vector<4x64xf32> -> vector<8x64xf32>
    %c0_5 = arith.constant 0 : index
    %c0_6 = arith.constant 0 : index
    %5 = vector.load %arg3[%c0_5, %c0_6] : memref<8x8xf32, #tpu.memory_space<vmem>>, vector<8x8xf32>
    %c0_7 = arith.constant 0 : index
    %c0_8 = arith.constant 0 : index
    %6 = vector.load %arg4[%c0_7, %c0_8] : memref<8x1xf32, #tpu.memory_space<vmem>>, vector<8x1xf32>
    %cst = arith.constant dense<0.000000e+00> : vector<8x64xf32>
    %7 = tpu.matmul %5, %4, %cst {dimension_numbers = #tpu.dot_dimension_numbers<[1], [0], [0], [1], [0, 0, 1, 1], [], []>} : vector<8x8xf32>, vector<8x64xf32>, vector<8x64xf32> -> vector<8x64xf32>
    %8 = vector.broadcast %6 : vector<8x1xf32> to vector<8x64xf32>
    %9 = arith.addf %7, %8 : vector<8x64xf32>
    %cst_9 = arith.constant 0.000000e+00 : f32
    %10 = vector.broadcast %cst_9 : f32 to vector<8x64xf32>
    %11 = arith.cmpf ogt, %9, %10 : vector<8x64xf32>
    %12 = math.exp %9 : vector<8x64xf32>
    %cst_10 = arith.constant 1.000000e+00 : f32
    %13 = vector.broadcast %cst_10 : f32 to vector<8x64xf32>
    %14 = arith.subf %12, %13 : vector<8x64xf32>
    %15 = arith.select %11, %9, %14 : vector<8x64xi1>, vector<8x64xf32>
    %c0_11 = arith.constant 0 : index
    %c0_12 = arith.constant 0 : index
    %16 = vector.load %arg5[%c0_11, %c0_12] : memref<2x8xf32, #tpu.memory_space<vmem>>, vector<2x8xf32>
    %c0_13 = arith.constant 0 : index
    %c0_14 = arith.constant 0 : index
    %17 = vector.load %arg6[%c0_13, %c0_14] : memref<2x1xf32, #tpu.memory_space<vmem>>, vector<2x1xf32>
    %cst_15 = arith.constant dense<0.000000e+00> : vector<2x64xf32>
    %18 = tpu.matmul %16, %15, %cst_15 {dimension_numbers = #tpu.dot_dimension_numbers<[1], [0], [0], [1], [0, 0, 1, 1], [], []>} : vector<2x8xf32>, vector<8x64xf32>, vector<2x64xf32> -> vector<2x64xf32>
    %19 = vector.broadcast %17 : vector<2x1xf32> to vector<2x64xf32>
    %20 = arith.addf %18, %19 : vector<2x64xf32>
    %c0_16 = arith.constant 0 : index
    %c0_17 = arith.constant 0 : index
    %c0_18 = arith.constant 0 : index
    %21 = vector.load %arg7[%c0_16, %c0_17, %c0_18] : memref<1x2x64xf32, #tpu.memory_space<vmem>>, vector<1x2x64xf32>
    %22 = vector.shape_cast %21 : vector<1x2x64xf32> to vector<2x64xf32>
    %23 = vector.shape_cast %20 : vector<2x64xf32> to vector<1x2x64xf32>
    tpu.vector_store %arg7[%c0_16, %c0_17, %c0_18], %23 {strides = array<i32>} : memref<1x2x64xf32, #tpu.memory_space<vmem>>, vector<1x2x64xf32>,
    return
  }
  func.func @transform_0(%arg0: i32) -> (i32, i32, i32) {
    %c0_i32 = arith.constant 0 : i32
    %c0_i32_0 = arith.constant 0 : i32
    %c0_i32_1 = arith.constant 0 : i32
    return %arg0, %c0_i32, %c0_i32_0 : i32, i32, i32
  }
  func.func @transform_1(%arg0: i32) -> (i32, i32, i32) {
    %c0_i32 = arith.constant 0 : i32
    %c0_i32_0 = arith.constant 0 : i32
    %c0_i32_1 = arith.constant 0 : i32
    return %arg0, %c0_i32, %c0_i32_0 : i32, i32, i32
  }
  func.func @transform_2(%arg0: i32) -> (i32, i32) {
    %c0_i32 = arith.constant 0 : i32
    %c0_i32_0 = arith.constant 0 : i32
    %c0_i32_1 = arith.constant 0 : i32
    return %c0_i32, %c0_i32_0 : i32, i32
  }
  func.func @transform_3(%arg0: i32) -> (i32, i32) {
    %c0_i32 = arith.constant 0 : i32
    %c0_i32_0 = arith.constant 0 : i32
    %c0_i32_1 = arith.constant 0 : i32
    return %c0_i32, %c0_i32_0 : i32, i32
  }
  func.func @transform_4(%arg0: i32) -> (i32, i32) {
    %c0_i32 = arith.constant 0 : i32
    %c0_i32_0 = arith.constant 0 : i32
    %c0_i32_1 = arith.constant 0 : i32
    return %c0_i32, %c0_i32_0 : i32, i32
  }
  func.func @transform_5(%arg0: i32) -> (i32, i32) {
    %c0_i32 = arith.constant 0 : i32
    %c0_i32_0 = arith.constant 0 : i32
    %c0_i32_1 = arith.constant 0 : i32
    return %c0_i32, %c0_i32_0 : i32, i32
  }
  func.func @transform_6(%arg0: i32) -> (i32, i32, i32) {
    %c0_i32 = arith.constant 0 : i32
    %c0_i32_0 = arith.constant 0 : i32
    %c0_i32_1 = arith.constant 0 : i32
    return %arg0, %c0_i32, %c0_i32_0 : i32, i32, i32
  }
}

module attributes {stable_mosaic.version = 11 : i64} {
  func.func @_chan_mlp_kernel(%arg0: i32, %arg1: memref<1x2x64xf32, #tpu.memory_space<vmem>>, %arg2: memref<1x4x64xf32, #tpu.memory_space<vmem>>, %arg3: memref<1x4x64xf32, #tpu.memory_space<vmem>>, %arg4: memref<1x2x64xf32, #tpu.memory_space<vmem>>, %arg5: memref<24x12xf32, #tpu.memory_space<vmem>>, %arg6: memref<24x1xf32, #tpu.memory_space<vmem>>, %arg7: memref<24x24xf32, #tpu.memory_space<vmem>>, %arg8: memref<24x1xf32, #tpu.memory_space<vmem>>, %arg9: memref<1x24xf32, #tpu.memory_space<vmem>>, %arg10: memref<1x1xf32, #tpu.memory_space<vmem>>, %arg11: memref<1x1x64xf32, #tpu.memory_space<vmem>>) attributes {dimension_semantics = [#tpu.dimension_semantics<parallel>], iteration_bounds = array<i64: 2>, scalar_prefetch = 0 : i64, scratch_operands = 0 : i64, tpu.core_type = #tpu.core_type<tc>, window_params = [{transform_indices = @transform_0, window_bounds = array<i64: 1, 2, 64>}, {transform_indices = @transform_1, window_bounds = array<i64: 1, 4, 64>}, {transform_indices = @transform_2, window_bounds = array<i64: 1, 4, 64>}, {transform_indices = @transform_3, window_bounds = array<i64: 1, 2, 64>}, {pipeline_mode = #tpu.pipeline_mode<synchronous>, transform_indices = @transform_4, window_bounds = array<i64: 24, 12>}, {pipeline_mode = #tpu.pipeline_mode<synchronous>, transform_indices = @transform_5, window_bounds = array<i64: 24, 1>}, {pipeline_mode = #tpu.pipeline_mode<synchronous>, transform_indices = @transform_6, window_bounds = array<i64: 24, 24>}, {pipeline_mode = #tpu.pipeline_mode<synchronous>, transform_indices = @transform_7, window_bounds = array<i64: 24, 1>}, {pipeline_mode = #tpu.pipeline_mode<synchronous>, transform_indices = @transform_8, window_bounds = array<i64: 1, 24>}, {pipeline_mode = #tpu.pipeline_mode<synchronous>, transform_indices = @transform_9, window_bounds = array<i64: 1, 1>}, {transform_indices = @transform_10, window_bounds = array<i64: 1, 1, 64>}]} {
    %c0 = arith.constant 0 : index
    %c0_0 = arith.constant 0 : index
    %c0_1 = arith.constant 0 : index
    %0 = vector.load %arg1[%c0, %c0_0, %c0_1] : memref<1x2x64xf32, #tpu.memory_space<vmem>>, vector<1x2x64xf32>
    %1 = vector.shape_cast %0 : vector<1x2x64xf32> to vector<2x64xf32>
    %c0_2 = arith.constant 0 : index
    %c0_3 = arith.constant 0 : index
    %c0_4 = arith.constant 0 : index
    %2 = vector.load %arg2[%c0_2, %c0_3, %c0_4] : memref<1x4x64xf32, #tpu.memory_space<vmem>>, vector<1x4x64xf32>
    %3 = vector.shape_cast %2 : vector<1x4x64xf32> to vector<4x64xf32>
    %c0_5 = arith.constant 0 : index
    %c0_6 = arith.constant 0 : index
    %c0_7 = arith.constant 0 : index
    %4 = vector.load %arg3[%c0_5, %c0_6, %c0_7] : memref<1x4x64xf32, #tpu.memory_space<vmem>>, vector<1x4x64xf32>
    %5 = vector.shape_cast %4 : vector<1x4x64xf32> to vector<4x64xf32>
    %c0_8 = arith.constant 0 : index
    %c0_9 = arith.constant 0 : index
    %c0_10 = arith.constant 0 : index
    %6 = vector.load %arg4[%c0_8, %c0_9, %c0_10] : memref<1x2x64xf32, #tpu.memory_space<vmem>>, vector<1x2x64xf32>
    %7 = vector.shape_cast %6 : vector<1x2x64xf32> to vector<2x64xf32>
    %8 = tpu.concatenate %1, %3, %5, %7 in 0 : vector<2x64xf32>, vector<4x64xf32>, vector<4x64xf32>, vector<2x64xf32> -> vector<12x64xf32>
    %c0_11 = arith.constant 0 : index
    %c0_12 = arith.constant 0 : index
    %9 = vector.load %arg5[%c0_11, %c0_12] : memref<24x12xf32, #tpu.memory_space<vmem>>, vector<24x12xf32>
    %c0_13 = arith.constant 0 : index
    %c0_14 = arith.constant 0 : index
    %10 = vector.load %arg6[%c0_13, %c0_14] : memref<24x1xf32, #tpu.memory_space<vmem>>, vector<24x1xf32>
    %cst = arith.constant dense<0.000000e+00> : vector<24x64xf32>
    %11 = tpu.matmul %9, %8, %cst {dimension_numbers = #tpu.dot_dimension_numbers<[1], [0], [0], [1], [0, 0, 1, 1], [], []>} : vector<24x12xf32>, vector<12x64xf32>, vector<24x64xf32> -> vector<24x64xf32>
    %12 = vector.broadcast %10 : vector<24x1xf32> to vector<24x64xf32>
    %13 = arith.addf %11, %12 : vector<24x64xf32>
    %cst_15 = arith.constant 0.000000e+00 : f32
    %14 = vector.broadcast %cst_15 : f32 to vector<24x64xf32>
    %15 = arith.cmpf ogt, %13, %14 : vector<24x64xf32>
    %16 = math.exp %13 : vector<24x64xf32>
    %cst_16 = arith.constant 1.000000e+00 : f32
    %17 = vector.broadcast %cst_16 : f32 to vector<24x64xf32>
    %18 = arith.subf %16, %17 : vector<24x64xf32>
    %19 = arith.select %15, %13, %18 : vector<24x64xi1>, vector<24x64xf32>
    %c0_17 = arith.constant 0 : index
    %c0_18 = arith.constant 0 : index
    %20 = vector.load %arg7[%c0_17, %c0_18] : memref<24x24xf32, #tpu.memory_space<vmem>>, vector<24x24xf32>
    %c0_19 = arith.constant 0 : index
    %c0_20 = arith.constant 0 : index
    %21 = vector.load %arg8[%c0_19, %c0_20] : memref<24x1xf32, #tpu.memory_space<vmem>>, vector<24x1xf32>
    %cst_21 = arith.constant dense<0.000000e+00> : vector<24x64xf32>
    %22 = tpu.matmul %20, %19, %cst_21 {dimension_numbers = #tpu.dot_dimension_numbers<[1], [0], [0], [1], [0, 0, 1, 1], [], []>} : vector<24x24xf32>, vector<24x64xf32>, vector<24x64xf32> -> vector<24x64xf32>
    %23 = vector.broadcast %21 : vector<24x1xf32> to vector<24x64xf32>
    %24 = arith.addf %22, %23 : vector<24x64xf32>
    %cst_22 = arith.constant 0.000000e+00 : f32
    %25 = vector.broadcast %cst_22 : f32 to vector<24x64xf32>
    %26 = arith.cmpf ogt, %24, %25 : vector<24x64xf32>
    %27 = math.exp %24 : vector<24x64xf32>
    %cst_23 = arith.constant 1.000000e+00 : f32
    %28 = vector.broadcast %cst_23 : f32 to vector<24x64xf32>
    %29 = arith.subf %27, %28 : vector<24x64xf32>
    %30 = arith.select %26, %24, %29 : vector<24x64xi1>, vector<24x64xf32>
    %c0_24 = arith.constant 0 : index
    %c0_25 = arith.constant 0 : index
    %31 = vector.load %arg9[%c0_24, %c0_25] : memref<1x24xf32, #tpu.memory_space<vmem>>, vector<1x24xf32>
    %c0_26 = arith.constant 0 : index
    %c0_27 = arith.constant 0 : index
    %32 = vector.load %arg10[%c0_26, %c0_27] : memref<1x1xf32, #tpu.memory_space<vmem>>, vector<1x1xf32>
    %cst_28 = arith.constant dense<0.000000e+00> : vector<1x64xf32>
    %33 = tpu.matmul %31, %30, %cst_28 {dimension_numbers = #tpu.dot_dimension_numbers<[1], [0], [0], [1], [0, 0, 1, 1], [], []>} : vector<1x24xf32>, vector<24x64xf32>, vector<1x64xf32> -> vector<1x64xf32>
    %34 = vector.broadcast %32 : vector<1x1xf32> to vector<1x64xf32>
    %35 = arith.addf %33, %34 : vector<1x64xf32>
    %c0_29 = arith.constant 0 : index
    %c0_30 = arith.constant 0 : index
    %c0_31 = arith.constant 0 : index
    %36 = vector.load %arg11[%c0_29, %c0_30, %c0_31] : memref<1x1x64xf32, #tpu.memory_space<vmem>>, vector<1x1x64xf32>
    %37 = vector.shape_cast %36 : vector<1x1x64xf32> to vector<1x64xf32>
    %38 = vector.shape_cast %35 : vector<1x64xf32> to vector<1x1x64xf32>
    tpu.vector_store %arg11[%c0_29, %c0_30, %c0_31], %38 {strides = array<i32>} : memref<1x1x64xf32, #tpu.memory_space<vmem>>, vector<1x1x64xf32>,
    return
  }
  func.func @transform_0(%arg0: i32) -> (i32, i32, i32) {
    %c0_i32 = arith.constant 0 : i32
    %c0_i32_0 = arith.constant 0 : i32
    %c0_i32_1 = arith.constant 0 : i32
    return %arg0, %c0_i32, %c0_i32_0 : i32, i32, i32
  }
  func.func @transform_1(%arg0: i32) -> (i32, i32, i32) {
    %c0_i32 = arith.constant 0 : i32
    %c0_i32_0 = arith.constant 0 : i32
    %c0_i32_1 = arith.constant 0 : i32
    return %arg0, %c0_i32, %c0_i32_0 : i32, i32, i32
  }
  func.func @transform_2(%arg0: i32) -> (i32, i32, i32) {
    %c0_i32 = arith.constant 0 : i32
    %c0_i32_0 = arith.constant 0 : i32
    %c0_i32_1 = arith.constant 0 : i32
    return %arg0, %c0_i32, %c0_i32_0 : i32, i32, i32
  }
  func.func @transform_3(%arg0: i32) -> (i32, i32, i32) {
    %c0_i32 = arith.constant 0 : i32
    %c0_i32_0 = arith.constant 0 : i32
    %c0_i32_1 = arith.constant 0 : i32
    return %arg0, %c0_i32, %c0_i32_0 : i32, i32, i32
  }
  func.func @transform_4(%arg0: i32) -> (i32, i32) {
    %c0_i32 = arith.constant 0 : i32
    %c0_i32_0 = arith.constant 0 : i32
    %c0_i32_1 = arith.constant 0 : i32
    return %c0_i32, %c0_i32_0 : i32, i32
  }
  func.func @transform_5(%arg0: i32) -> (i32, i32) {
    %c0_i32 = arith.constant 0 : i32
    %c0_i32_0 = arith.constant 0 : i32
    %c0_i32_1 = arith.constant 0 : i32
    return %c0_i32, %c0_i32_0 : i32, i32
  }
  func.func @transform_6(%arg0: i32) -> (i32, i32) {
    %c0_i32 = arith.constant 0 : i32
    %c0_i32_0 = arith.constant 0 : i32
    %c0_i32_1 = arith.constant 0 : i32
    return %c0_i32, %c0_i32_0 : i32, i32
  }
  func.func @transform_7(%arg0: i32) -> (i32, i32) {
    %c0_i32 = arith.constant 0 : i32
    %c0_i32_0 = arith.constant 0 : i32
    %c0_i32_1 = arith.constant 0 : i32
    return %c0_i32, %c0_i32_0 : i32, i32
  }
  func.func @transform_8(%arg0: i32) -> (i32, i32) {
    %c0_i32 = arith.constant 0 : i32
    %c0_i32_0 = arith.constant 0 : i32
    %c0_i32_1 = arith.constant 0 : i32
    return %c0_i32, %c0_i32_0 : i32, i32
  }
  func.func @transform_9(%arg0: i32) -> (i32, i32) {
    %c0_i32 = arith.constant 0 : i32
    %c0_i32_0 = arith.constant 0 : i32
    %c0_i32_1 = arith.constant 0 : i32
    return %c0_i32, %c0_i32_0 : i32, i32
  }
  func.func @transform_10(%arg0: i32) -> (i32, i32, i32) {
    %c0_i32 = arith.constant 0 : i32
    %c0_i32_0 = arith.constant 0 : i32
    %c0_i32_1 = arith.constant 0 : i32
    return %arg0, %c0_i32, %c0_i32_0 : i32, i32, i32
  }
}

</mosaic_0001>

<llo_original>
// kernel: _lambda_.10
$region0: #{_lambda_.10}
  #allocation0 [shape = 'u32[]', space=smem, size = 0x4, offset = 0x4, fixed_abs, tag = 'smem constant byte address 0x4 - core index']
  #allocation1 [shape = 'u32[144,128]{1,0:T(1,128)}', space=vmem, size = 0x12000, scoped, tag = 'internal scratch']
  %s0 = inlined_call_operand.vmem [shape: f32[2,8,8], index: 0, kind: input, shape index: {}]
  %s1 = inlined_call_operand.vmem [shape: f32[2,2,8,8], index: 1, kind: output, shape index: {}]
  %s2 = sld [smem:[#allocation0]]
  $region37: #{_lambda_.10} parent=0
    _
  %s4 = ssub.s32 1, %s2
  %s5 = scalar_select 0, %s4, %s2
  loop: start=0, step=1, limit=4
  $region2: #{_lambda_.10} parent=0 // loop_pre_header
    _
  $region3: #{_lambda_.10} parent=0 // loop_header
    %s7 = sphi 0, %s11
    %p8 = scmp.ge.s32.totalorder %s7, 4
    %s17 = sphi 0, %s19
    %s20 = sphi 0, %s17
    %s21 = sphi 0, %s20
    %s37 = sphi 0, %s21
    %s43 = sphi 0, %s45
    %s46 = sphi 0, %s43
    %s47 = sphi 0, %s46
    %s63 = sphi 0, %s47
  $region4: #{_lambda_.10} parent=0 // loop_header_branch
    %10 = sbr.rel (%p8) target = $region8
  $region5: #{_lambda_.10} parent=0 // loop_body
    %s12 = ssub.s32 %s7, 1
    %s13 = ssub.s32 %s7, 2
    %s14 = sadd.s32 %s7, 1
    %s15 = ssub.s32 %s7, %s14
    %p16 = scmp.eq.s32.totalorder %s15, 0
    %s18 = sadd.s32 %s17, 1
    %s19 = scalar_select %p16, %s17, %s18
    %p22 = pneg %p16
    %p23 = scmp.eq.s32.totalorder %s7, 1
    %p24 = por %p22, %p23
    %p25 = scmp.ne.s32.totalorder %s17, %s20
    %p26 = scmp.eq.s32.totalorder %s7, 0
    %p27 = por %p25, %p26
    %p28 = scmp.ne.s32.totalorder %s17, %s20
    %p29 = scmp.eq.s32.totalorder %s12, 1
    %p30 = por %p28, %p29
    %p31 = scmp.ne.s32.totalorder %s20, %s21
    %p32 = scmp.eq.s32.totalorder %s12, 0
    %p33 = por %p31, %p32
    %p34 = scmp.ne.s32.totalorder %s20, %s21
    %p35 = scmp.eq.s32.totalorder %s13, 1
    %p36 = por %p34, %p35
    %p38 = scmp.ne.s32.totalorder %s21, %s37
    %p39 = scmp.eq.s32.totalorder %s13, 0
    %p40 = por %p38, %p39
    %s41 = ssub.s32 %s7, %s14
    %p42 = scmp.eq.s32.totalorder %s41, 0
    %s44 = sadd.s32 %s43, 1
    %s45 = scalar_select %p42, %s43, %s44
    %p48 = pneg %p42
    %p49 = scmp.eq.s32.totalorder %s7, 1
    %p50 = por %p48, %p49
    %p51 = scmp.ne.s32.totalorder %s43, %s46
    %p52 = scmp.eq.s32.totalorder %s7, 0
    %p53 = por %p51, %p52
    %p54 = scmp.ne.s32.totalorder %s43, %s46
    %p55 = scmp.eq.s32.totalorder %s12, 1
    %p56 = por %p54, %p55
    %p57 = scmp.ne.s32.totalorder %s46, %s47
    %p58 = scmp.eq.s32.totalorder %s12, 0
    %p59 = por %p57, %p58
    %p60 = scmp.ne.s32.totalorder %s46, %s47
    %p61 = scmp.eq.s32.totalorder %s13, 1
    %p62 = por %p60, %p61
    %p64 = scmp.ne.s32.totalorder %s47, %s63
    %p65 = scmp.eq.s32.totalorder %s13, 0
    %p66 = por %p64, %p65
    %p67 = scmp.le.s32.totalorder 1, %s7
    %p68 = scmp.lt.s32.totalorder %s7, 3
    %p69 = pnand %p67, %p68
    %p70 = pneg %p69
    // Predicated region
    $region9: #{_lambda_.10} parent=5 // pred_check
      _
    $region10: #{_lambda_.10} parent=5 // pred_check_branch
      %72 = sbr.rel (%p69) target = $region12
    $region11: #{_lambda_.10} parent=5 // pred_region
      %s73 = ssub.s32 %s7, 1
    $region12: #{_lambda_.10} parent=5 // pred_fallthru
      _
    %p74 = scmp.lt.s32.totalorder %s7, 2
    // Predicated region
    $region13: #{_lambda_.10} parent=5 // pred_check
      %p75 = pneg %p74
    $region14: #{_lambda_.10} parent=5 // pred_check_branch
      %77 = sbr.rel (%p75) target = $region16
    $region15: #{_lambda_.10} parent=5 // pred_region
      // Predicated region
      $region17: #{_lambda_.10} parent=15 // pred_check
        %p78 = pneg %p27
      $region18: #{_lambda_.10} parent=15 // pred_check_branch
        %80 = sbr.rel (%p78) target = $region20
      $region19: #{_lambda_.10} parent=15 // pred_region
        %p81 = scmp.lt.s32.totalorder %s7, 1
        %s82 = scalar_select %p81, %s7, 1
        %s83 = smul.addr %s82, 8
        %s84 = scalar_lea.vmem %s0, %s83
      $region20: #{_lambda_.10} parent=15 // pred_fallthru
        _
    $region16: #{_lambda_.10} parent=5 // pred_fallthru
      _
    %p85 = scmp.le.s32.totalorder 1, %s7
    %p86 = scmp.lt.s32.totalorder %s7, 3
    %p87 = pnand %p85, %p86
    %p88 = pneg %p87
    // Predicated region
    $region21: #{_lambda_.10} parent=5 // pred_check
      _
    $region22: #{_lambda_.10} parent=5 // pred_check_branch
      %90 = sbr.rel (%p87) target = $region24
    $region23: #{_lambda_.10} parent=5 // pred_region
      %s91 = ssub.s32 %s7, 1
      %p92 = scmp.lt.s32.totalorder %s12, 1
      %s93 = scalar_select %p92, %s12, 1
      %s94 = smul.addr %s93, 8
      %s95 = scalar_lea.vmem %s0, %s94
      %p96 = pneg %p33
      %p97 = pneg %p30
      %p98 = pneg %p59
      %p99 = pneg %p56
      %p100 = scmp.lt.s32.totalorder %s12, 1
      %s101 = scalar_select %p100, %s12, 1
      %s102 = smul.addr %s101, 2
      %s103 = smul.addr %s102, 8
      %s104 = scalar_lea.vmem %s1, %s103
      %p105 = scmp.lt.s32.totalorder %s12, 1
      %s106 = scalar_select %p105, %s12, 1
      %s107 = smul.addr %s106, 8
      %s108 = scalar_lea.vmem %s0, %s107
      %p109 = scmp.lt.s32.totalorder %s12, 1
      %s110 = scalar_select %p109, %s12, 1
      %s111 = smul.addr %s110, 2
      %s112 = smul.addr %s111, 8
      %s113 = scalar_lea.vmem %s1, %s112
      %v114 = vld [vmem:[%s108] sm:$0xff]
      %vm115 = vcmask 64512
      %116 = vst.msk [vmem:[%s113] sm:$0xff] %vm115, %v114
      %v118 = vsel %vm115, %v114, 0
      %120 = vmatprep.subr.mxu0 0.0
      %121 = vmatpush1.msra.mxu0 %v114
      %122 = vmatprep.subr.mxu0 0.0
      %123 = vmatpush1.msra.mxu0 0.0
      %124 = vmatprep.subr.mxu0 0.0
      %125 = vmatpush1.msra.mxu0 0.0
      %126 = vmatprep.subr.mxu0 0.0
      %127 = vmatpush1.msra.mxu0 0.0
      %128 = vmatprep.subr.mxu0 0.0
      %129 = vmatpush1.msra.mxu0 0.0
      %130 = vmatprep.subr.mxu0 0.0
      %131 = vmatpush1.msra.mxu0 0.0
      %132 = vmatprep.subr.mxu0 0.0
      %133 = vmatpush1.msra.mxu0 0.0
      %134 = vmatprep.subr.mxu0 0.0
      %135 = vmatpush1.msra.mxu0 0.0
      %136 = vmatprep.subr.mxu0 0.0
      %137 = vmatpush1.msra.mxu0 0.0
      %138 = vmatprep.subr.mxu0 0.0
      %139 = vmatpush1.msra.mxu0 0.0
      %140 = vmatprep.subr.mxu0 0.0
      %141 = vmatpush1.msra.mxu0 0.0
      %142 = vmatprep.subr.mxu0 0.0
      %143 = vmatpush1.msra.mxu0 0.0
      %144 = vmatprep.subr.mxu0 0.0
      %145 = vmatpush1.msra.mxu0 0.0
      %146 = vmatprep.subr.mxu0 0.0
      %147 = vmatpush1.msra.mxu0 0.0
      %148 = vmatprep.subr.mxu0 0.0
      %149 = vmatpush1.msra.mxu0 0.0
      %150 = vmatprep.subr.mxu0 0.0
      %151 = vmatpush1.msra.mxu0 0.0
      %152 = vmatprep.subr.mxu0 0.0
      %153 = vmatpush1.msra.mxu0 0.0
      %154 = vmatprep.subr.mxu0 0.0
      %155 = vmatpush1.msra.mxu0 0.0
      %156 = vmatprep.subr.mxu0 0.0
      %157 = vmatpush1.msra.mxu0 0.0
      %158 = vmatprep.subr.mxu0 0.0
      %159 = vmatpush1.msra.mxu0 0.0
      %160 = vmatprep.subr.mxu0 0.0
      %161 = vmatpush1.msra.mxu0 0.0
      %162 = vmatprep.subr.mxu0 0.0
      %163 = vmatpush1.msra.mxu0 0.0
      %164 = vmatprep.subr.mxu0 0.0
      %165 = vmatpush1.msra.mxu0 0.0
      %166 = vmatprep.subr.mxu0 0.0
      %167 = vmatpush1.msra.mxu0 0.0
      %168 = vmatprep.subr.mxu0 0.0
      %169 = vmatpush1.msra.mxu0 0.0
      %170 = vmatprep.subr.mxu0 0.0
      %171 = vmatpush1.msra.mxu0 0.0
      %172 = vmatprep.subr.mxu0 0.0
      %173 = vmatpush1.msra.mxu0 0.0
      %174 = vmatprep.subr.mxu0 0.0
      %175 = vmatpush1.msra.mxu0 0.0
      %176 = vmatprep.subr.mxu0 0.0
      %177 = vmatpush1.msra.mxu0 0.0
      %178 = vmatprep.subr.mxu0 0.0
      %179 = vmatpush1.msra.mxu0 0.0
      %180 = vmatprep.subr.mxu0 0.0
      %181 = vmatpush1.msra.mxu0 0.0
      %182 = vmatprep.subr.mxu0 0.0
      %183 = vmatpush1.msra.mxu0 0.0
      %184 = vmatprep.mubr.f32.mxu0 0.0
      %185 = vmatmul.mubr.f32.gmra.mrb[0].mxu0 %v118
      %v186 = vpop.f32.mrb[0].mxu0
      %v187 = vadd.f32 0.0, %v186
      %v188 = vpop.f32.mrb[0].mxu0
      %189 = vdwg.mxu0
      %s190 = scalar_lea.vmem %s113, 8
      %191 = vst.msk [vmem:[%s190] sm:$0xff] %vm115, %v187
      %p192 = scmp.lt.s32.totalorder %s12, 1
      %s193 = scalar_select %p192, %s12, 1
      %s194 = smul.addr %s193, 2
      %s195 = smul.addr %s194, 8
      %s196 = scalar_lea.vmem %s1, %s195
      // Predicated region
      $region25: #{_lambda_.10} parent=23 // pred_check
        %p197 = pneg %p56
      $region26: #{_lambda_.10} parent=23 // pred_check_branch
        %199 = sbr.rel (%p197) target = $region28
      $region27: #{_lambda_.10} parent=23 // pred_region
        _
      $region28: #{_lambda_.10} parent=23 // pred_fallthru
        _
    $region24: #{_lambda_.10} parent=5 // pred_fallthru
      _
    %p200 = scmp.le.s32.totalorder 2, %s7
    // Predicated region
    $region29: #{_lambda_.10} parent=5 // pred_check
      %p201 = pneg %p200
    $region30: #{_lambda_.10} parent=5 // pred_check_branch
      %203 = sbr.rel (%p201) target = $region32
    $region31: #{_lambda_.10} parent=5 // pred_region
      %s204 = ssub.s32 %s7, 2
      // Predicated region
      $region33: #{_lambda_.10} parent=31 // pred_check
        %p205 = pneg %p62
      $region34: #{_lambda_.10} parent=31 // pred_check_branch
        %207 = sbr.rel (%p205) target = $region36
      $region35: #{_lambda_.10} parent=31 // pred_region
        %p208 = scmp.lt.s32.totalorder %s13, 1
        %s209 = scalar_select %p208, %s13, 1
        %s210 = smul.addr %s209, 2
        %s211 = smul.addr %s210, 8
        %s212 = scalar_lea.vmem %s1, %s211
      $region36: #{_lambda_.10} parent=31 // pred_fallthru
        _
    $region32: #{_lambda_.10} parent=5 // pred_fallthru
      _
  $region6: #{_lambda_.10} parent=0 // loop_footer
    %s11 = sadd.s32 1, %s7
  $region7: #{_lambda_.10} parent=0 // loop_footer_branch
    %6 = sbr.rel target = $region3
  $region8: #{_lambda_.10} parent=0 // loop_exit
    _

// kernel: _lambda_.11
$region0: #{_lambda_.11}
  #allocation0 [shape = 'u32[]', space=smem, size = 0x4, offset = 0x4, fixed_abs, tag = 'smem constant byte address 0x4 - core index']
  #allocation1 [shape = 'u32[144,128]{1,0:T(1,128)}', space=vmem, size = 0x12000, scoped, tag = 'internal scratch']
  %s0 = inlined_call_operand.vmem [shape: f32[2,8,4], index: 0, kind: input, shape index: {}]
  %s1 = inlined_call_operand.vmem [shape: f32[2,2,8,8], index: 1, kind: input, shape index: {}]
  %s2 = inlined_call_operand.vmem [shape: bf16[4,48], index: 2, kind: input, shape index: {}]
  %s3 = inlined_call_operand.vmem [shape: f32[2,24], index: 3, kind: input, shape index: {}]
  %s4 = inlined_call_operand.vmem [shape: f32[2,8,1], index: 4, kind: input, shape index: {}]
  %s5 = inlined_call_operand.vmem [shape: f32[2,2,8,8], index: 5, kind: output, shape index: {0}]
  %s6 = inlined_call_operand.vmem [shape: f32[2,8,16], index: 6, kind: output, shape index: {1}]
  %7 = xla_tuple %s5, %s6
  %s8 = sld [smem:[#allocation0]]
  $region61: #{_lambda_.11} parent=0
    _
  %s10 = ssub.s32 1, %s8
  %s11 = scalar_select 0, %s10, %s8
  loop: start=0, step=1, limit=4
  $region2: #{_lambda_.11} parent=0 // loop_pre_header
    _
  $region3: #{_lambda_.11} parent=0 // loop_header
    %s13 = sphi 0, %s17
    %p14 = scmp.ge.s32.totalorder %s13, 4
    %s23 = sphi 0, %s25
    %s26 = sphi 0, %s23
    %s27 = sphi 0, %s26
    %s43 = sphi 0, %s27
    %s49 = sphi 0, %s51
    %s52 = sphi 0, %s49
    %s53 = sphi 0, %s52
    %s69 = sphi 0, %s53
    %s73 = sphi 0, %s73
    %s75 = sphi 0, %s73
    %s76 = sphi 0, %s75
    %s90 = sphi 0, %s76
    %s94 = sphi 0, %s94
    %s96 = sphi 0, %s94
    %s97 = sphi 0, %s96
    %s111 = sphi 0, %s97
    %s117 = sphi 0, %s119
    %s120 = sphi 0, %s117
    %s121 = sphi 0, %s120
    %s137 = sphi 0, %s121
    %s143 = sphi 0, %s145
    %s146 = sphi 0, %s143
    %s147 = sphi 0, %s146
    %s163 = sphi 0, %s147
    %s169 = sphi 0, %s171
    %s172 = sphi 0, %s169
    %s173 = sphi 0, %s172
    %s189 = sphi 0, %s173
  $region4: #{_lambda_.11} parent=0 // loop_header_branch
    %16 = sbr.rel (%p14) target = $region8
  $region5: #{_lambda_.11} parent=0 // loop_body
    %s18 = ssub.s32 %s13, 1
    %s19 = ssub.s32 %s13, 2
    %s20 = sadd.s32 %s13, 1
    %s21 = ssub.s32 %s13, %s20
    %p22 = scmp.eq.s32.totalorder %s21, 0
    %s24 = sadd.s32 %s23, 1
    %s25 = scalar_select %p22, %s23, %s24
    %p28 = pneg %p22
    %p29 = scmp.eq.s32.totalorder %s13, 1
    %p30 = por %p28, %p29
    %p31 = scmp.ne.s32.totalorder %s23, %s26
    %p32 = scmp.eq.s32.totalorder %s13, 0
    %p33 = por %p31, %p32
    %p34 = scmp.ne.s32.totalorder %s23, %s26
    %p35 = scmp.eq.s32.totalorder %s18, 1
    %p36 = por %p34, %p35
    %p37 = scmp.ne.s32.totalorder %s26, %s27
    %p38 = scmp.eq.s32.totalorder %s18, 0
    %p39 = por %p37, %p38
    %p40 = scmp.ne.s32.totalorder %s26, %s27
    %p41 = scmp.eq.s32.totalorder %s19, 1
    %p42 = por %p40, %p41
    %p44 = scmp.ne.s32.totalorder %s27, %s43
    %p45 = scmp.eq.s32.totalorder %s19, 0
    %p46 = por %p44, %p45
    %s47 = ssub.s32 %s13, %s20
    %p48 = scmp.eq.s32.totalorder %s47, 0
    %s50 = sadd.s32 %s49, 1
    %s51 = scalar_select %p48, %s49, %s50
    %p54 = pneg %p48
    %p55 = scmp.eq.s32.totalorder %s13, 1
    %p56 = por %p54, %p55
    %p57 = scmp.ne.s32.totalorder %s49, %s52
    %p58 = scmp.eq.s32.totalorder %s13, 0
    %p59 = por %p57, %p58
    %p60 = scmp.ne.s32.totalorder %s49, %s52
    %p61 = scmp.eq.s32.totalorder %s18, 1
    %p62 = por %p60, %p61
    %p63 = scmp.ne.s32.totalorder %s52, %s53
    %p64 = scmp.eq.s32.totalorder %s18, 0
    %p65 = por %p63, %p64
    %p66 = scmp.ne.s32.totalorder %s52, %s53
    %p67 = scmp.eq.s32.totalorder %s19, 1
    %p68 = por %p66, %p67
    %p70 = scmp.ne.s32.totalorder %s53, %s69
    %p71 = scmp.eq.s32.totalorder %s19, 0
    %p72 = por %p70, %p71
    %s74 = sadd.s32 %s73, 1
    %p77 = scmp.eq.s32.totalorder %s13, 1
    %p78 = scmp.ne.s32.totalorder %s73, %s75
    %p79 = scmp.eq.s32.totalorder %s13, 0
    %p80 = por %p78, %p79
    %p81 = scmp.ne.s32.totalorder %s73, %s75
    %p82 = scmp.eq.s32.totalorder %s18, 1
    %p83 = por %p81, %p82
    %p84 = scmp.ne.s32.totalorder %s75, %s76
    %p85 = scmp.eq.s32.totalorder %s18, 0
    %p86 = por %p84, %p85
    %p87 = scmp.ne.s32.totalorder %s75, %s76
    %p88 = scmp.eq.s32.totalorder %s19, 1
    %p89 = por %p87, %p88
    %p91 = scmp.ne.s32.totalorder %s76, %s90
    %p92 = scmp.eq.s32.totalorder %s19, 0
    %p93 = por %p91, %p92
    %s95 = sadd.s32 %s94, 1
    %p98 = scmp.eq.s32.totalorder %s13, 1
    %p99 = scmp.ne.s32.totalorder %s94, %s96
    %p100 = scmp.eq.s32.totalorder %s13, 0
    %p101 = por %p99, %p100
    %p102 = scmp.ne.s32.totalorder %s94, %s96
    %p103 = scmp.eq.s32.totalorder %s18, 1
    %p104 = por %p102, %p103
    %p105 = scmp.ne.s32.totalorder %s96, %s97
    %p106 = scmp.eq.s32.totalorder %s18, 0
    %p107 = por %p105, %p106
    %p108 = scmp.ne.s32.totalorder %s96, %s97
    %p109 = scmp.eq.s32.totalorder %s19, 1
    %p110 = por %p108, %p109
    %p112 = scmp.ne.s32.totalorder %s97, %s111
    %p113 = scmp.eq.s32.totalorder %s19, 0
    %p114 = por %p112, %p113
    %s115 = ssub.s32 %s13, %s20
    %p116 = scmp.eq.s32.totalorder %s115, 0
    %s118 = sadd.s32 %s117, 1
    %s119 = scalar_select %p116, %s117, %s118
    %p122 = pneg %p116
    %p123 = scmp.eq.s32.totalorder %s13, 1
    %p124 = por %p122, %p123
    %p125 = scmp.ne.s32.totalorder %s117, %s120
    %p126 = scmp.eq.s32.totalorder %s13, 0
    %p127 = por %p125, %p126
    %p128 = scmp.ne.s32.totalorder %s117, %s120
    %p129 = scmp.eq.s32.totalorder %s18, 1
    %p130 = por %p128, %p129
    %p131 = scmp.ne.s32.totalorder %s120, %s121
    %p132 = scmp.eq.s32.totalorder %s18, 0
    %p133 = por %p131, %p132
    %p134 = scmp.ne.s32.totalorder %s120, %s121
    %p135 = scmp.eq.s32.totalorder %s19, 1
    %p136 = por %p134, %p135
    %p138 = scmp.ne.s32.totalorder %s121, %s137
    %p139 = scmp.eq.s32.totalorder %s19, 0
    %p140 = por %p138, %p139
    %s141 = ssub.s32 %s13, %s20
    %p142 = scmp.eq.s32.totalorder %s141, 0
    %s144 = sadd.s32 %s143, 1
    %s145 = scalar_select %p142, %s143, %s144
    %p148 = pneg %p142
    %p149 = scmp.eq.s32.totalorder %s13, 1
    %p150 = por %p148, %p149
    %p151 = scmp.ne.s32.totalorder %s143, %s146
    %p152 = scmp.eq.s32.totalorder %s13, 0
    %p153 = por %p151, %p152
    %p154 = scmp.ne.s32.totalorder %s143, %s146
    %p155 = scmp.eq.s32.totalorder %s18, 1
    %p156 = por %p154, %p155
    %p157 = scmp.ne.s32.totalorder %s146, %s147
    %p158 = scmp.eq.s32.totalorder %s18, 0
    %p159 = por %p157, %p158
    %p160 = scmp.ne.s32.totalorder %s146, %s147
    %p161 = scmp.eq.s32.totalorder %s19, 1
    %p162 = por %p160, %p161
    %p164 = scmp.ne.s32.totalorder %s147, %s163
    %p165 = scmp.eq.s32.totalorder %s19, 0
    %p166 = por %p164, %p165
    %s167 = ssub.s32 %s13, %s20
    %p168 = scmp.eq.s32.totalorder %s167, 0
    %s170 = sadd.s32 %s169, 1
    %s171 = scalar_select %p168, %s169, %s170
    %p174 = pneg %p168
    %p175 = scmp.eq.s32.totalorder %s13, 1
    %p176 = por %p174, %p175
    %p177 = scmp.ne.s32.totalorder %s169, %s172
    %p178 = scmp.eq.s32.totalorder %s13, 0
    %p179 = por %p177, %p178
    %p180 = scmp.ne.s32.totalorder %s169, %s172
    %p181 = scmp.eq.s32.totalorder %s18, 1
    %p182 = por %p180, %p181
    %p183 = scmp.ne.s32.totalorder %s172, %s173
    %p184 = scmp.eq.s32.totalorder %s18, 0
    %p185 = por %p183, %p184
    %p186 = scmp.ne.s32.totalorder %s172, %s173
    %p187 = scmp.eq.s32.totalorder %s19, 1
    %p188 = por %p186, %p187
    %p190 = scmp.ne.s32.totalorder %s173, %s189
    %p191 = scmp.eq.s32.totalorder %s19, 0
    %p192 = por %p190, %p191
    %p193 = scmp.le.s32.totalorder 1, %s13
    %p194 = scmp.lt.s32.totalorder %s13, 3
    %p195 = pnand %p193, %p194
    %p196 = pneg %p195
    // Predicated region
    $region9: #{_lambda_.11} parent=5 // pred_check
      _
    $region10: #{_lambda_.11} parent=5 // pred_check_branch
      %198 = sbr.rel (%p195) target = $region12
    $region11: #{_lambda_.11} parent=5 // pred_region
      %s199 = ssub.s32 %s13, 1
      // Predicated region
      $region13: #{_lambda_.11} parent=11 // pred_check
        %p200 = pneg %p86
      $region14: #{_lambda_.11} parent=11 // pred_check_branch
        %202 = sbr.rel (%p200) target = $region16
      $region15: #{_lambda_.11} parent=11 // pred_region
        _
      $region16: #{_lambda_.11} parent=11 // pred_fallthru
        _
      // Predicated region
      $region17: #{_lambda_.11} parent=11 // pred_check
        %p203 = pneg %p107
      $region18: #{_lambda_.11} parent=11 // pred_check_branch
        %205 = sbr.rel (%p203) target = $region20
      $region19: #{_lambda_.11} parent=11 // pred_region
        _
      $region20: #{_lambda_.11} parent=11 // pred_fallthru
        _
    $region12: #{_lambda_.11} parent=5 // pred_fallthru
      _
    %p206 = scmp.lt.s32.totalorder %s13, 2
    // Predicated region
    $region21: #{_lambda_.11} parent=5 // pred_check
      %p207 = pneg %p206
    $region22: #{_lambda_.11} parent=5 // pred_check_branch
      %209 = sbr.rel (%p207) target = $region24
    $region23: #{_lambda_.11} parent=5 // pred_region
      // Predicated region
      $region25: #{_lambda_.11} parent=23 // pred_check
        %p210 = pneg %p33
      $region26: #{_lambda_.11} parent=23 // pred_check_branch
        %212 = sbr.rel (%p210) target = $region28
      $region27: #{_lambda_.11} parent=23 // pred_region
        %p213 = scmp.lt.s32.totalorder %s13, 1
        %s214 = scalar_select %p213, %s13, 1
        %s215 = smul.addr %s214, 8
        %s216 = scalar_lea.vmem %s0, %s215
      $region28: #{_lambda_.11} parent=23 // pred_fallthru
        _
      // Predicated region
      $region29: #{_lambda_.11} parent=23 // pred_check
        %p217 = pneg %p59
      $region30: #{_lambda_.11} parent=23 // pred_check_branch
        %219 = sbr.rel (%p217) target = $region32
      $region31: #{_lambda_.11} parent=23 // pred_region
        %p220 = scmp.lt.s32.totalorder %s13, 1
        %s221 = scalar_select %p220, %s13, 1
        %s222 = smul.addr %s221, 2
        %s223 = smul.addr %s222, 8
        %s224 = scalar_lea.vmem %s1, %s223
      $region32: #{_lambda_.11} parent=23 // pred_fallthru
        _
      // Predicated region
      $region33: #{_lambda_.11} parent=23 // pred_check
        %p225 = pneg %p127
      $region34: #{_lambda_.11} parent=23 // pred_check_branch
        %227 = sbr.rel (%p225) target = $region36
      $region35: #{_lambda_.11} parent=23 // pred_region
        %p228 = scmp.lt.s32.totalorder %s13, 1
        %s229 = scalar_select %p228, %s13, 1
        %s230 = smul.addr %s229, 8
        %s231 = scalar_lea.vmem %s4, %s230
      $region36: #{_lambda_.11} parent=23 // pred_fallthru
        _
    $region24: #{_lambda_.11} parent=5 // pred_fallthru
      _
    %p232 = scmp.le.s32.totalorder 1, %s13
    %p233 = scmp.lt.s32.totalorder %s13, 3
    %p234 = pnand %p232, %p233
    %p235 = pneg %p234
    // Predicated region
    $region37: #{_lambda_.11} parent=5 // pred_check
      _
    $region38: #{_lambda_.11} parent=5 // pred_check_branch
      %237 = sbr.rel (%p234) target = $region40
    $region39: #{_lambda_.11} parent=5 // pred_region
      %s238 = ssub.s32 %s13, 1
      %p239 = scmp.lt.s32.totalorder %s18, 1
      %s240 = scalar_select %p239, %s18, 1
      %s241 = smul.addr %s240, 8
      %s242 = scalar_lea.vmem %s0, %s241
      %p243 = pneg %p39
      %p244 = pneg %p36
      %p245 = scmp.lt.s32.totalorder %s18, 1
      %s246 = scalar_select %p245, %s18, 1
      %s247 = smul.addr %s246, 2
      %s248 = smul.addr %s247, 8
      %s249 = scalar_lea.vmem %s1, %s248
      %p250 = pneg %p65
      %p251 = pneg %p62
      %p252 = pneg %p86
      %p253 = pneg %p83
      %p254 = pneg %p107
      %p255 = pneg %p104
      %p256 = scmp.lt.s32.totalorder %s18, 1
      %s257 = scalar_select %p256, %s18, 1
      %s258 = smul.addr %s257, 8
      %s259 = scalar_lea.vmem %s4, %s258
      %p260 = pneg %p133
      %p261 = pneg %p130
      %p262 = pneg %p159
      %p263 = pneg %p156
      %p264 = scmp.lt.s32.totalorder %s18, 1
      %s265 = scalar_select %p264, %s18, 1
      %s266 = smul.addr %s265, 2
      %s267 = smul.addr %s266, 8
      %s268 = scalar_lea.vmem %s5, %s267
      %p269 = pneg %p185
      %p270 = pneg %p182
      %p271 = scmp.lt.s32.totalorder %s18, 1
      %s272 = scalar_select %p271, %s18, 1
      %s273 = smul.addr %s272, 8
      %s274 = scalar_lea.vmem %s6, %s273
      %p275 = scmp.lt.s32.totalorder %s18, 1
      %s276 = scalar_select %p275, %s18, 1
      %s277 = smul.addr %s276, 8
      %s278 = scalar_lea.vmem %s0, %s277
      %p279 = scmp.lt.s32.totalorder %s18, 1
      %s280 = scalar_select %p279, %s18, 1
      %s281 = smul.addr %s280, 2
      %s282 = smul.addr %s281, 8
      %s283 = scalar_lea.vmem %s1, %s282
      %p284 = scmp.lt.s32.totalorder %s18, 1
      %s285 = scalar_select %p284, %s18, 1
      %s286 = smul.addr %s285, 8
      %s287 = scalar_lea.vmem %s4, %s286
      %p288 = scmp.lt.s32.totalorder %s18, 1
      %s289 = scalar_select %p288, %s18, 1
      %s290 = smul.addr %s289, 2
      %s291 = smul.addr %s290, 8
      %s292 = scalar_lea.vmem %s5, %s291
      %p293 = scmp.lt.s32.totalorder %s18, 1
      %s294 = scalar_select %p293, %s18, 1
      %s295 = smul.addr %s294, 8
      %s296 = scalar_lea.vmem %s6, %s295
      %v298 = vld [vmem:[%s278] sm:$0xff]
      %v299 = vpack.c.bf16 %v298, %v298
      %v300 = vld [vmem:[%s2] sm:$0x3]
      %vm301 = vcmask 31744
      %v303 = vsel %vm301, %v299, 0
      %vm305 = vcmask 1041408
      %v307 = vsel %vm305, %v300, 0
      %309 = vmatprep.subr.bf16.mxu0 0
      %310 = vmatpush1.bf16.msra.mxu0 %v307
      %311 = vmatprep.subr.bf16.mxu0 0
      %312 = vmatpush1.bf16.msra.mxu0 0
      %313 = vmatprep.subr.bf16.mxu0 0
      %314 = vmatpush1.bf16.msra.mxu0 0
      %315 = vmatprep.subr.bf16.mxu0 0
      %316 = vmatpush1.bf16.msra.mxu0 0
      %317 = vmatprep.subr.bf16.mxu0 0
      %318 = vmatpush1.bf16.msra.mxu0 0
      %319 = vmatprep.subr.bf16.mxu0 0
      %320 = vmatpush1.bf16.msra.mxu0 0
      %321 = vmatprep.subr.bf16.mxu0 0
      %322 = vmatpush1.bf16.msra.mxu0 0
      %323 = vmatprep.subr.bf16.mxu0 0
      %324 = vmatpush1.bf16.msra.mxu0 0
      %325 = vmatprep.subr.bf16.mxu0 0
      %326 = vmatpush1.bf16.msra.mxu0 0
      %327 = vmatprep.subr.bf16.mxu0 0
      %328 = vmatpush1.bf16.msra.mxu0 0
      %329 = vmatprep.subr.bf16.mxu0 0
      %330 = vmatpush1.bf16.msra.mxu0 0
      %331 = vmatprep.subr.bf16.mxu0 0
      %332 = vmatpush1.bf16.msra.mxu0 0
      %333 = vmatprep.subr.bf16.mxu0 0
      %334 = vmatpush1.bf16.msra.mxu0 0
      %335 = vmatprep.subr.bf16.mxu0 0
      %336 = vmatpush1.bf16.msra.mxu0 0
      %337 = vmatprep.subr.bf16.mxu0 0
      %338 = vmatpush1.bf16.msra.mxu0 0
      %339 = vmatprep.subr.bf16.mxu0 0
      %340 = vmatpush1.bf16.msra.mxu0 0
      %341 = vmatprep.mubr.bf16.mxu0 0
      %342 = vmatmul.mubr.bf16.gmra.mrb[0].mxu0 %v303
      %v343 = vpop.f32.mrb[0].mxu0
      %v344 = vadd.f32 0.0, %v343
      %v345 = vpop.f32.mrb[0].mxu0
      %v346 = vpop.f32.mrb[0].mxu0
      %v347 = vpop.f32.mrb[0].mxu0
      %348 = vdwg.mxu0
      %v349 = vlaneseq
      %v350 = vshrl.u32 %v349, 7
      %v351 = vlaneseq
      %v352 = vand.u32 %v351, 127
      %vm353 = vcmp.eq.s32.totalorder %v350, %v352
      %v354 = vsel %vm353, 1, 0
      %v355 = vcvt.s32.f32 %v354
      %v356 = vld [vmem:[%s287] sm:$0xff]
      %v357 = vld [vmem:[%s283] sm:$0xff]
      %v358 = vsub.f32 1.0, %v355
      %v359 = vmul.f32 %v357, %v358
      %v360 = vadd.f32 %v359, %v355
      %vm361 = vcmask 64512
      %v362 = vsel %vm361, %v360, 0.0
      %363 = vadd.xlane.f32.xlu0 %v362
      %v364 = vpop.xlane.xlu0 %363
      %v365 = vmax.f32 %v364, 1.0
      %v366 = vrsqrt.pop %v365
      %v367 = vmul.f32 %v344, %v366
      %v369 = vsel %vm361, %v360, 0
      %371 = vmatprep.subr.mxu0 0.0
      %372 = vmatpush1.msra.mxu0 %v367
      %373 = vmatprep.subr.mxu0 0.0
      %374 = vmatpush1.msra.mxu0 0.0
      %375 = vmatprep.subr.mxu0 0.0
      %376 = vmatpush1.msra.mxu0 0.0
      %377 = vmatprep.subr.mxu0 0.0
      %378 = vmatpush1.msra.mxu0 0.0
      %379 = vmatprep.subr.mxu0 0.0
      %380 = vmatpush1.msra.mxu0 0.0
      %381 = vmatprep.subr.mxu0 0.0
      %382 = vmatpush1.msra.mxu0 0.0
      %383 = vmatprep.subr.mxu0 0.0
      %384 = vmatpush1.msra.mxu0 0.0
      %385 = vmatprep.subr.mxu0 0.0
      %386 = vmatpush1.msra.mxu0 0.0
      %387 = vmatprep.subr.mxu0 0.0
      %388 = vmatpush1.msra.mxu0 0.0
      %389 = vmatprep.subr.mxu0 0.0
      %390 = vmatpush1.msra.mxu0 0.0
      %391 = vmatprep.subr.mxu0 0.0
      %392 = vmatpush1.msra.mxu0 0.0
      %393 = vmatprep.subr.mxu0 0.0
      %394 = vmatpush1.msra.mxu0 0.0
      %395 = vmatprep.subr.mxu0 0.0
      %396 = vmatpush1.msra.mxu0 0.0
      %397 = vmatprep.subr.mxu0 0.0
      %398 = vmatpush1.msra.mxu0 0.0
      %399 = vmatprep.subr.mxu0 0.0
      %400 = vmatpush1.msra.mxu0 0.0
      %401 = vmatprep.subr.mxu0 0.0
      %402 = vmatpush1.msra.mxu0 0.0
      %403 = vmatprep.subr.mxu0 0.0
      %404 = vmatpush1.msra.mxu0 0.0
      %405 = vmatprep.subr.mxu0 0.0
      %406 = vmatpush1.msra.mxu0 0.0
      %407 = vmatprep.subr.mxu0 0.0
      %408 = vmatpush1.msra.mxu0 0.0
      %409 = vmatprep.subr.mxu0 0.0
      %410 = vmatpush1.msra.mxu0 0.0
      %411 = vmatprep.subr.mxu0 0.0
      %412 = vmatpush1.msra.mxu0 0.0
      %413 = vmatprep.subr.mxu0 0.0
      %414 = vmatpush1.msra.mxu0 0.0
      %415 = vmatprep.subr.mxu0 0.0
      %416 = vmatpush1.msra.mxu0 0.0
      %417 = vmatprep.subr.mxu0 0.0
      %418 = vmatpush1.msra.mxu0 0.0
      %419 = vmatprep.subr.mxu0 0.0
      %420 = vmatpush1.msra.mxu0 0.0
      %421 = vmatprep.subr.mxu0 0.0
      %422 = vmatpush1.msra.mxu0 0.0
      %423 = vmatprep.subr.mxu0 0.0
      %424 = vmatpush1.msra.mxu0 0.0
      %425 = vmatprep.subr.mxu0 0.0
      %426 = vmatpush1.msra.mxu0 0.0
      %427 = vmatprep.subr.mxu0 0.0
      %428 = vmatpush1.msra.mxu0 0.0
      %429 = vmatprep.subr.mxu0 0.0
      %430 = vmatpush1.msra.mxu0 0.0
      %431 = vmatprep.subr.mxu0 0.0
      %432 = vmatpush1.msra.mxu0 0.0
      %433 = vmatprep.subr.mxu0 0.0
      %434 = vmatpush1.msra.mxu0 0.0
      %435 = vmatprep.mubr.f32.mxu0 0.0
      %436 = vmatmul.mubr.f32.gmra.mrb[0].mxu0 %v369
      %v437 = vpop.f32.mrb[0].mxu0
      %v438 = vadd.f32 0.0, %v437
      %v439 = vpop.f32.mrb[0].mxu0
      %440 = vdwg.mxu0
      %v441 = vmul.f32 %v438, %v366
      %v442 = vld [vmem:[%s3] sm:$0x1]
      %v443 = vlaneseq
      %v444 = vshrl.u32 %v443, 7
      %v445 = vsub.s32 0, %v444
      %v446 = vrot.slane %v442, %v445
      %v447 = vadd.f32 %v441, %v446
      %449 = vrot.lane.b32.xlu0 %v447, 120
      %v450 = vpop.permute.xlu0 %449
      %v451 = vsel %vm301, %v447, 0
      %v453 = vsel %vm301, %v450, 0
      %455 = vmatprep.subr.mxu0 0.0
      %456 = vmatpush1.xpose.msra.mxu0 %v453
      %457 = vmatprep.subr.mxu0 0.0
      %458 = vmatpush1.xpose.msra.mxu0 0.0
      %459 = vmatprep.subr.mxu0 0.0
      %460 = vmatpush1.xpose.msra.mxu0 0.0
      %461 = vmatprep.subr.mxu0 0.0
      %462 = vmatpush1.xpose.msra.mxu0 0.0
      %463 = vmatprep.subr.mxu0 0.0
      %464 = vmatpush1.xpose.msra.mxu0 0.0
      %465 = vmatprep.subr.mxu0 0.0
      %466 = vmatpush1.xpose.msra.mxu0 0.0
      %467 = vmatprep.subr.mxu0 0.0
      %468 = vmatpush1.xpose.msra.mxu0 0.0
      %469 = vmatprep.subr.mxu0 0.0
      %470 = vmatpush1.xpose.msra.mxu0 0.0
      %471 = vmatprep.subr.mxu0 0.0
      %472 = vmatpush1.xpose.msra.mxu0 0.0
      %473 = vmatprep.subr.mxu0 0.0
      %474 = vmatpush1.xpose.msra.mxu0 0.0
      %475 = vmatprep.subr.mxu0 0.0
      %476 = vmatpush1.xpose.msra.mxu0 0.0
      %477 = vmatprep.subr.mxu0 0.0
      %478 = vmatpush1.xpose.msra.mxu0 0.0
      %479 = vmatprep.subr.mxu0 0.0
      %480 = vmatpush1.xpose.msra.mxu0 0.0
      %481 = vmatprep.subr.mxu0 0.0
      %482 = vmatpush1.xpose.msra.mxu0 0.0
      %483 = vmatprep.subr.mxu0 0.0
      %484 = vmatpush1.xpose.msra.mxu0 0.0
      %485 = vmatprep.subr.mxu0 0.0
      %486 = vmatpush1.xpose.msra.mxu0 0.0
      %487 = vmatprep.subr.mxu0 0.0
      %488 = vmatpush1.xpose.msra.mxu0 0.0
      %489 = vmatprep.subr.mxu0 0.0
      %490 = vmatpush1.xpose.msra.mxu0 0.0
      %491 = vmatprep.subr.mxu0 0.0
      %492 = vmatpush1.xpose.msra.mxu0 0.0
      %493 = vmatprep.subr.mxu0 0.0
      %494 = vmatpush1.xpose.msra.mxu0 0.0
      %495 = vmatprep.subr.mxu0 0.0
      %496 = vmatpush1.xpose.msra.mxu0 0.0
      %497 = vmatprep.subr.mxu0 0.0
      %498 = vmatpush1.xpose.msra.mxu0 0.0
      %499 = vmatprep.subr.mxu0 0.0
      %500 = vmatpush1.xpose.msra.mxu0 0.0
      %501 = vmatprep.subr.mxu0 0.0
      %502 = vmatpush1.xpose.msra.mxu0 0.0
      %503 = vmatprep.subr.mxu0 0.0
      %504 = vmatpush1.xpose.msra.mxu0 0.0
      %505 = vmatprep.subr.mxu0 0.0
      %506 = vmatpush1.xpose.msra.mxu0 0.0
      %507 = vmatprep.subr.mxu0 0.0
      %508 = vmatpush1.xpose.msra.mxu0 0.0
      %509 = vmatprep.subr.mxu0 0.0
      %510 = vmatpush1.xpose.msra.mxu0 0.0
      %511 = vmatprep.subr.mxu0 0.0
      %512 = vmatpush1.xpose.msra.mxu0 0.0
      %513 = vmatprep.subr.mxu0 0.0
      %514 = vmatpush1.xpose.msra.mxu0 0.0
      %515 = vmatprep.subr.mxu0 0.0
      %516 = vmatpush1.xpose.msra.mxu0 0.0
      %517 = vmatprep.subr.mxu0 0.0
      %518 = vmatpush1.xpose.msra.mxu0 0.0
      %519 = vmatprep.mubr.f32.mxu0 0.0
      %520 = vmatmul.mubr.f32.gmra.mrb[0].mxu0 %v451
      %v521 = vpop.f32.mrb[0].mxu0
      %v522 = vadd.f32 0.0, %v521
      %v523 = vpop.f32.mrb[0].mxu0
      %524 = vdwg.mxu0
      %525 = vmatprep.subr.mxu0 0.0
      %526 = vmatpush1.xpose.msra.mxu0 %v451
      %527 = vmatprep.subr.mxu0 0.0
      %528 = vmatpush1.xpose.msra.mxu0 0.0
      %529 = vmatprep.subr.mxu0 0.0
      %530 = vmatpush1.xpose.msra.mxu0 0.0
      %531 = vmatprep.subr.mxu0 0.0
      %532 = vmatpush1.xpose.msra.mxu0 0.0
      %533 = vmatprep.subr.mxu0 0.0
      %534 = vmatpush1.xpose.msra.mxu0 0.0
      %535 = vmatprep.subr.mxu0 0.0
      %536 = vmatpush1.xpose.msra.mxu0 0.0
      %537 = vmatprep.subr.mxu0 0.0
      %538 = vmatpush1.xpose.msra.mxu0 0.0
      %539 = vmatprep.subr.mxu0 0.0
      %540 = vmatpush1.xpose.msra.mxu0 0.0
      %541 = vmatprep.subr.mxu0 0.0
      %542 = vmatpush1.xpose.msra.mxu0 0.0
      %543 = vmatprep.subr.mxu0 0.0
      %544 = vmatpush1.xpose.msra.mxu0 0.0
      %545 = vmatprep.subr.mxu0 0.0
      %546 = vmatpush1.xpose.msra.mxu0 0.0
      %547 = vmatprep.subr.mxu0 0.0
      %548 = vmatpush1.xpose.msra.mxu0 0.0
      %549 = vmatprep.subr.mxu0 0.0
      %550 = vmatpush1.xpose.msra.mxu0 0.0
      %551 = vmatprep.subr.mxu0 0.0
      %552 = vmatpush1.xpose.msra.mxu0 0.0
      %553 = vmatprep.subr.mxu0 0.0
      %554 = vmatpush1.xpose.msra.mxu0 0.0
      %555 = vmatprep.subr.mxu0 0.0
      %556 = vmatpush1.xpose.msra.mxu0 0.0
      %557 = vmatprep.subr.mxu0 0.0
      %558 = vmatpush1.xpose.msra.mxu0 0.0
      %559 = vmatprep.subr.mxu0 0.0
      %560 = vmatpush1.xpose.msra.mxu0 0.0
      %561 = vmatprep.subr.mxu0 0.0
      %562 = vmatpush1.xpose.msra.mxu0 0.0
      %563 = vmatprep.subr.mxu0 0.0
      %564 = vmatpush1.xpose.msra.mxu0 0.0
      %565 = vmatprep.subr.mxu0 0.0
      %566 = vmatpush1.xpose.msra.mxu0 0.0
      %567 = vmatprep.subr.mxu0 0.0
      %568 = vmatpush1.xpose.msra.mxu0 0.0
      %569 = vmatprep.subr.mxu0 0.0
      %570 = vmatpush1.xpose.msra.mxu0 0.0
      %571 = vmatprep.subr.mxu0 0.0
      %572 = vmatpush1.xpose.msra.mxu0 0.0
      %573 = vmatprep.subr.mxu0 0.0
      %574 = vmatpush1.xpose.msra.mxu0 0.0
      %575 = vmatprep.subr.mxu0 0.0
      %576 = vmatpush1.xpose.msra.mxu0 0.0
      %577 = vmatprep.subr.mxu0 0.0
      %578 = vmatpush1.xpose.msra.mxu0 0.0
      %579 = vmatprep.subr.mxu0 0.0
      %580 = vmatpush1.xpose.msra.mxu0 0.0
      %581 = vmatprep.subr.mxu0 0.0
      %582 = vmatpush1.xpose.msra.mxu0 0.0
      %583 = vmatprep.subr.mxu0 0.0
      %584 = vmatpush1.xpose.msra.mxu0 0.0
      %585 = vmatprep.subr.mxu0 0.0
      %586 = vmatpush1.xpose.msra.mxu0 0.0
      %587 = vmatprep.subr.mxu0 0.0
      %588 = vmatpush1.xpose.msra.mxu0 0.0
      %589 = vmatprep.mubr.f32.mxu0 0.0
      %590 = vmatmul.mubr.f32.gmra.mrb[0].mxu0 %v453
      %v591 = vpop.f32.mrb[0].mxu0
      %v592 = vadd.f32 0.0, %v591
      %v593 = vpop.f32.mrb[0].mxu0
      %594 = vdwg.mxu0
      %v595 = vmul.f32 %v522, 0.35355338
      %v596 = vtanh.pop %v595
      %v597 = vmul.f32 %v592, 0.35355338
      %v598 = vtanh.pop %v597
      %v599 = vadd.f32 %v596, %v598
      %600 = vrot.lane.b32.xlu0 %v447, 124
      %v601 = vpop.permute.xlu0 %600
      %602 = vrot.lane.b32.xlu0 %v447, 116
      %v603 = vpop.permute.xlu0 %602
      %v604 = vsel %vm301, %v601, 0
      %v606 = vsel %vm301, %v603, 0
      %608 = vmatprep.subr.mxu0 0.0
      %609 = vmatpush1.xpose.msra.mxu0 %v606
      %610 = vmatprep.subr.mxu0 0.0
      %611 = vmatpush1.xpose.msra.mxu0 0.0
      %612 = vmatprep.subr.mxu0 0.0
      %613 = vmatpush1.xpose.msra.mxu0 0.0
      %614 = vmatprep.subr.mxu0 0.0
      %615 = vmatpush1.xpose.msra.mxu0 0.0
      %616 = vmatprep.subr.mxu0 0.0
      %617 = vmatpush1.xpose.msra.mxu0 0.0
      %618 = vmatprep.subr.mxu0 0.0
      %619 = vmatpush1.xpose.msra.mxu0 0.0
      %620 = vmatprep.subr.mxu0 0.0
      %621 = vmatpush1.xpose.msra.mxu0 0.0
      %622 = vmatprep.subr.mxu0 0.0
      %623 = vmatpush1.xpose.msra.mxu0 0.0
      %624 = vmatprep.subr.mxu0 0.0
      %625 = vmatpush1.xpose.msra.mxu0 0.0
      %626 = vmatprep.subr.mxu0 0.0
      %627 = vmatpush1.xpose.msra.mxu0 0.0
      %628 = vmatprep.subr.mxu0 0.0
      %629 = vmatpush1.xpose.msra.mxu0 0.0
      %630 = vmatprep.subr.mxu0 0.0
      %631 = vmatpush1.xpose.msra.mxu0 0.0
      %632 = vmatprep.subr.mxu0 0.0
      %633 = vmatpush1.xpose.msra.mxu0 0.0
      %634 = vmatprep.subr.mxu0 0.0
      %635 = vmatpush1.xpose.msra.mxu0 0.0
      %636 = vmatprep.subr.mxu0 0.0
      %637 = vmatpush1.xpose.msra.mxu0 0.0
      %638 = vmatprep.subr.mxu0 0.0
      %639 = vmatpush1.xpose.msra.mxu0 0.0
      %640 = vmatprep.subr.mxu0 0.0
      %641 = vmatpush1.xpose.msra.mxu0 0.0
      %642 = vmatprep.subr.mxu0 0.0
      %643 = vmatpush1.xpose.msra.mxu0 0.0
      %644 = vmatprep.subr.mxu0 0.0
      %645 = vmatpush1.xpose.msra.mxu0 0.0
      %646 = vmatprep.subr.mxu0 0.0
      %647 = vmatpush1.xpose.msra.mxu0 0.0
      %648 = vmatprep.subr.mxu0 0.0
      %649 = vmatpush1.xpose.msra.mxu0 0.0
      %650 = vmatprep.subr.mxu0 0.0
      %651 = vmatpush1.xpose.msra.mxu0 0.0
      %652 = vmatprep.subr.mxu0 0.0
      %653 = vmatpush1.xpose.msra.mxu0 0.0
      %654 = vmatprep.subr.mxu0 0.0
      %655 = vmatpush1.xpose.msra.mxu0 0.0
      %656 = vmatprep.subr.mxu0 0.0
      %657 = vmatpush1.xpose.msra.mxu0 0.0
      %658 = vmatprep.subr.mxu0 0.0
      %659 = vmatpush1.xpose.msra.mxu0 0.0
      %660 = vmatprep.subr.mxu0 0.0
      %661 = vmatpush1.xpose.msra.mxu0 0.0
      %662 = vmatprep.subr.mxu0 0.0
      %663 = vmatpush1.xpose.msra.mxu0 0.0
      %664 = vmatprep.subr.mxu0 0.0
      %665 = vmatpush1.xpose.msra.mxu0 0.0
      %666 = vmatprep.subr.mxu0 0.0
      %667 = vmatpush1.xpose.msra.mxu0 0.0
      %668 = vmatprep.subr.mxu0 0.0
      %669 = vmatpush1.xpose.msra.mxu0 0.0
      %670 = vmatprep.subr.mxu0 0.0
      %671 = vmatpush1.xpose.msra.mxu0 0.0
      %672 = vmatprep.mubr.f32.mxu0 0.0
      %673 = vmatmul.mubr.f32.gmra.mrb[0].mxu0 %v604
      %v674 = vpop.f32.mrb[0].mxu0
      %v675 = vadd.f32 0.0, %v674
      %v676 = vpop.f32.mrb[0].mxu0
      %677 = vdwg.mxu0
      %678 = vmatprep.subr.mxu0 0.0
      %679 = vmatpush1.xpose.msra.mxu0 %v604
      %680 = vmatprep.subr.mxu0 0.0
      %681 = vmatpush1.xpose.msra.mxu0 0.0
      %682 = vmatprep.subr.mxu0 0.0
      %683 = vmatpush1.xpose.msra.mxu0 0.0
      %684 = vmatprep.subr.mxu0 0.0
      %685 = vmatpush1.xpose.msra.mxu0 0.0
      %686 = vmatprep.subr.mxu0 0.0
      %687 = vmatpush1.xpose.msra.mxu0 0.0
      %688 = vmatprep.subr.mxu0 0.0
      %689 = vmatpush1.xpose.msra.mxu0 0.0
      %690 = vmatprep.subr.mxu0 0.0
      %691 = vmatpush1.xpose.msra.mxu0 0.0
      %692 = vmatprep.subr.mxu0 0.0
      %693 = vmatpush1.xpose.msra.mxu0 0.0
      %694 = vmatprep.subr.mxu0 0.0
      %695 = vmatpush1.xpose.msra.mxu0 0.0
      %696 = vmatprep.subr.mxu0 0.0
      %697 = vmatpush1.xpose.msra.mxu0 0.0
      %698 = vmatprep.subr.mxu0 0.0
      %699 = vmatpush1.xpose.msra.mxu0 0.0
      %700 = vmatprep.subr.mxu0 0.0
      %701 = vmatpush1.xpose.msra.mxu0 0.0
      %702 = vmatprep.subr.mxu0 0.0
      %703 = vmatpush1.xpose.msra.mxu0 0.0
      %704 = vmatprep.subr.mxu0 0.0
      %705 = vmatpush1.xpose.msra.mxu0 0.0
      %706 = vmatprep.subr.mxu0 0.0
      %707 = vmatpush1.xpose.msra.mxu0 0.0
      %708 = vmatprep.subr.mxu0 0.0
      %709 = vmatpush1.xpose.msra.mxu0 0.0
      %710 = vmatprep.subr.mxu0 0.0
      %711 = vmatpush1.xpose.msra.mxu0 0.0
      %712 = vmatprep.subr.mxu0 0.0
      %713 = vmatpush1.xpose.msra.mxu0 0.0
      %714 = vmatprep.subr.mxu0 0.0
      %715 = vmatpush1.xpose.msra.mxu0 0.0
      %716 = vmatprep.subr.mxu0 0.0
      %717 = vmatpush1.xpose.msra.mxu0 0.0
      %718 = vmatprep.subr.mxu0 0.0
      %719 = vmatpush1.xpose.msra.mxu0 0.0
      %720 = vmatprep.subr.mxu0 0.0
      %721 = vmatpush1.xpose.msra.mxu0 0.0
      %722 = vmatprep.subr.mxu0 0.0
      %723 = vmatpush1.xpose.msra.mxu0 0.0
      %724 = vmatprep.subr.mxu0 0.0
      %725 = vmatpush1.xpose.msra.mxu0 0.0
      %726 = vmatprep.subr.mxu0 0.0
      %727 = vmatpush1.xpose.msra.mxu0 0.0
      %728 = vmatprep.subr.mxu0 0.0
      %729 = vmatpush1.xpose.msra.mxu0 0.0
      %730 = vmatprep.subr.mxu0 0.0
      %731 = vmatpush1.xpose.msra.mxu0 0.0
      %732 = vmatprep.subr.mxu0 0.0
      %733 = vmatpush1.xpose.msra.mxu0 0.0
      %734 = vmatprep.subr.mxu0 0.0
      %735 = vmatpush1.xpose.msra.mxu0 0.0
      %736 = vmatprep.subr.mxu0 0.0
      %737 = vmatpush1.xpose.msra.mxu0 0.0
      %738 = vmatprep.subr.mxu0 0.0
      %739 = vmatpush1.xpose.msra.mxu0 0.0
      %740 = vmatprep.subr.mxu0 0.0
      %741 = vmatpush1.xpose.msra.mxu0 0.0
      %742 = vmatprep.mubr.f32.mxu0 0.0
      %743 = vmatmul.mubr.f32.gmra.mrb[0].mxu0 %v606
      %v744 = vpop.f32.mrb[0].mxu0
      %v745 = vadd.f32 0.0, %v744
      %v746 = vpop.f32.mrb[0].mxu0
      %747 = vdwg.mxu0
      %v748 = vmul.f32 %v675, 0.35355338
      %v749 = vtanh.pop %v748
      %v750 = vmul.f32 %v745, 0.35355338
      %v751 = vtanh.pop %v750
      %v752 = vadd.f32 %v749, %v751
      %v753 = vadd.f32 %v599, %v752
      %v754 = vmul.f32 %v753, 0.25
      %755 = vst.msk [vmem:[%s292] sm:$0xff] %vm361, %v754
      %s756 = scalar_lea.vmem %s283, 8
      %v757 = vld [vmem:[%s756] sm:$0xff]
      %v758 = vmul.f32 %v757, %v358
      %v759 = vadd.f32 %v758, %v355
      %v760 = vsel %vm361, %v759, 0.0
      %761 = vadd.xlane.f32.xlu0 %v760
      %v762 = vpop.xlane.xlu0 %761
      %v763 = vmax.f32 %v762, 1.0
      %v764 = vrsqrt.pop %v763
      %v765 = vmul.f32 %v344, %v764
      %767 = vrot.lane.b32.xlu0 %v765, 104
      %v768 = vpop.permute.xlu0 %767
      %v771 = vsel %vm361, %v759, 0
      %773 = vmatprep.subr.mxu0 0.0
      %774 = vmatpush1.msra.mxu0 %v768
      %775 = vmatprep.subr.mxu0 0.0
      %776 = vmatpush1.msra.mxu0 0.0
      %777 = vmatprep.subr.mxu0 0.0
      %778 = vmatpush1.msra.mxu0 0.0
      %779 = vmatprep.subr.mxu0 0.0
      %780 = vmatpush1.msra.mxu0 0.0
      %781 = vmatprep.subr.mxu0 0.0
      %782 = vmatpush1.msra.mxu0 0.0
      %783 = vmatprep.subr.mxu0 0.0
      %784 = vmatpush1.msra.mxu0 0.0
      %785 = vmatprep.subr.mxu0 0.0
      %786 = vmatpush1.msra.mxu0 0.0
      %787 = vmatprep.subr.mxu0 0.0
      %788 = vmatpush1.msra.mxu0 0.0
      %789 = vmatprep.subr.mxu0 0.0
      %790 = vmatpush1.msra.mxu0 0.0
      %791 = vmatprep.subr.mxu0 0.0
      %792 = vmatpush1.msra.mxu0 0.0
      %793 = vmatprep.subr.mxu0 0.0
      %794 = vmatpush1.msra.mxu0 0.0
      %795 = vmatprep.subr.mxu0 0.0
      %796 = vmatpush1.msra.mxu0 0.0
      %797 = vmatprep.subr.mxu0 0.0
      %798 = vmatpush1.msra.mxu0 0.0
      %799 = vmatprep.subr.mxu0 0.0
      %800 = vmatpush1.msra.mxu0 0.0
      %801 = vmatprep.subr.mxu0 0.0
      %802 = vmatpush1.msra.mxu0 0.0
      %803 = vmatprep.subr.mxu0 0.0
      %804 = vmatpush1.msra.mxu0 0.0
      %805 = vmatprep.subr.mxu0 0.0
      %806 = vmatpush1.msra.mxu0 0.0
      %807 = vmatprep.subr.mxu0 0.0
      %808 = vmatpush1.msra.mxu0 0.0
      %809 = vmatprep.subr.mxu0 0.0
      %810 = vmatpush1.msra.mxu0 0.0
      %811 = vmatprep.subr.mxu0 0.0
      %812 = vmatpush1.msra.mxu0 0.0
      %813 = vmatprep.subr.mxu0 0.0
      %814 = vmatpush1.msra.mxu0 0.0
      %815 = vmatprep.subr.mxu0 0.0
      %816 = vmatpush1.msra.mxu0 0.0
      %817 = vmatprep.subr.mxu0 0.0
      %818 = vmatpush1.msra.mxu0 0.0
      %819 = vmatprep.subr.mxu0 0.0
      %820 = vmatpush1.msra.mxu0 0.0
      %821 = vmatprep.subr.mxu0 0.0
      %822 = vmatpush1.msra.mxu0 0.0
      %823 = vmatprep.subr.mxu0 0.0
      %824 = vmatpush1.msra.mxu0 0.0
      %825 = vmatprep.subr.mxu0 0.0
      %826 = vmatpush1.msra.mxu0 0.0
      %827 = vmatprep.subr.mxu0 0.0
      %828 = vmatpush1.msra.mxu0 0.0
      %829 = vmatprep.subr.mxu0 0.0
      %830 = vmatpush1.msra.mxu0 0.0
      %831 = vmatprep.subr.mxu0 0.0
      %832 = vmatpush1.msra.mxu0 0.0
      %833 = vmatprep.subr.mxu0 0.0
      %834 = vmatpush1.msra.mxu0 0.0
      %835 = vmatprep.subr.mxu0 0.0
      %836 = vmatpush1.msra.mxu0 0.0
      %837 = vmatprep.mubr.f32.mxu0 0.0
      %838 = vmatmul.mubr.f32.gmra.mrb[0].mxu0 %v771
      %v839 = vpop.f32.mrb[0].mxu0
      %v840 = vadd.f32 0.0, %v839
      %v841 = vpop.f32.mrb[0].mxu0
      %842 = vdwg.mxu0
      %v843 = vmul.f32 %v840, %v764
      %v844 = vld [vmem:[%s3 + $0x1] sm:$0x1]
      %v845 = vlaneseq
      %v846 = vshrl.u32 %v845, 7
      %v847 = vsub.s32 0, %v846
      %v848 = vrot.slane %v844, %v847
      %v849 = vadd.f32 %v843, %v848
      %851 = vrot.lane.b32.xlu0 %v849, 120
      %v852 = vpop.permute.xlu0 %851
      %v853 = vsel %vm301, %v849, 0
      %v855 = vsel %vm301, %v852, 0
      %857 = vmatprep.subr.mxu0 0.0
      %858 = vmatpush1.xpose.msra.mxu0 %v855
      %859 = vmatprep.subr.mxu0 0.0
      %860 = vmatpush1.xpose.msra.mxu0 0.0
      %861 = vmatprep.subr.mxu0 0.0
      %862 = vmatpush1.xpose.msra.mxu0 0.0
      %863 = vmatprep.subr.mxu0 0.0
      %864 = vmatpush1.xpose.msra.mxu0 0.0
      %865 = vmatprep.subr.mxu0 0.0
      %866 = vmatpush1.xpose.msra.mxu0 0.0
      %867 = vmatprep.subr.mxu0 0.0
      %868 = vmatpush1.xpose.msra.mxu0 0.0
      %869 = vmatprep.subr.mxu0 0.0
      %870 = vmatpush1.xpose.msra.mxu0 0.0
      %871 = vmatprep.subr.mxu0 0.0
      %872 = vmatpush1.xpose.msra.mxu0 0.0
      %873 = vmatprep.subr.mxu0 0.0
      %874 = vmatpush1.xpose.msra.mxu0 0.0
      %875 = vmatprep.subr.mxu0 0.0
      %876 = vmatpush1.xpose.msra.mxu0 0.0
      %877 = vmatprep.subr.mxu0 0.0
      %878 = vmatpush1.xpose.msra.mxu0 0.0
      %879 = vmatprep.subr.mxu0 0.0
      %880 = vmatpush1.xpose.msra.mxu0 0.0
      %881 = vmatprep.subr.mxu0 0.0
      %882 = vmatpush1.xpose.msra.mxu0 0.0
      %883 = vmatprep.subr.mxu0 0.0
      %884 = vmatpush1.xpose.msra.mxu0 0.0
      %885 = vmatprep.subr.mxu0 0.0
      %886 = vmatpush1.xpose.msra.mxu0 0.0
      %887 = vmatprep.subr.mxu0 0.0
      %888 = vmatpush1.xpose.msra.mxu0 0.0
      %889 = vmatprep.subr.mxu0 0.0
      %890 = vmatpush1.xpose.msra.mxu0 0.0
      %891 = vmatprep.subr.mxu0 0.0
      %892 = vmatpush1.xpose.msra.mxu0 0.0
      %893 = vmatprep.subr.mxu0 0.0
      %894 = vmatpush1.xpose.msra.mxu0 0.0
      %895 = vmatprep.subr.mxu0 0.0
      %896 = vmatpush1.xpose.msra.mxu0 0.0
      %897 = vmatprep.subr.mxu0 0.0
      %898 = vmatpush1.xpose.msra.mxu0 0.0
      %899 = vmatprep.subr.mxu0 0.0
      %900 = vmatpush1.xpose.msra.mxu0 0.0
      %901 = vmatprep.subr.mxu0 0.0
      %902 = vmatpush1.xpose.msra.mxu0 0.0
      %903 = vmatprep.subr.mxu0 0.0
      %904 = vmatpush1.xpose.msra.mxu0 0.0
      %905 = vmatprep.subr.mxu0 0.0
      %906 = vmatpush1.xpose.msra.mxu0 0.0
      %907 = vmatprep.subr.mxu0 0.0
      %908 = vmatpush1.xpose.msra.mxu0 0.0
      %909 = vmatprep.subr.mxu0 0.0
      %910 = vmatpush1.xpose.msra.mxu0 0.0
      %911 = vmatprep.subr.mxu0 0.0
      %912 = vmatpush1.xpose.msra.mxu0 0.0
      %913 = vmatprep.subr.mxu0 0.0
      %914 = vmatpush1.xpose.msra.mxu0 0.0
      %915 = vmatprep.subr.mxu0 0.0
      %916 = vmatpush1.xpose.msra.mxu0 0.0
      %917 = vmatprep.subr.mxu0 0.0
      %918 = vmatpush1.xpose.msra.mxu0 0.0
      %919 = vmatprep.subr.mxu0 0.0
      %920 = vmatpush1.xpose.msra.mxu0 0.0
      %921 = vmatprep.mubr.f32.mxu0 0.0
      %922 = vmatmul.mubr.f32.gmra.mrb[0].mxu0 %v853
      %v923 = vpop.f32.mrb[0].mxu0
      %v924 = vadd.f32 0.0, %v923
      %v925 = vpop.f32.mrb[0].mxu0
      %926 = vdwg.mxu0
      %927 = vmatprep.subr.mxu0 0.0
      %928 = vmatpush1.xpose.msra.mxu0 %v853
      %929 = vmatprep.subr.mxu0 0.0
      %930 = vmatpush1.xpose.msra.mxu0 0.0
      %931 = vmatprep.subr.mxu0 0.0
      %932 = vmatpush1.xpose.msra.mxu0 0.0
      %933 = vmatprep.subr.mxu0 0.0
      %934 = vmatpush1.xpose.msra.mxu0 0.0
      %935 = vmatprep.subr.mxu0 0.0
      %936 = vmatpush1.xpose.msra.mxu0 0.0
      %937 = vmatprep.subr.mxu0 0.0
      %938 = vmatpush1.xpose.msra.mxu0 0.0
      %939 = vmatprep.subr.mxu0 0.0
      %940 = vmatpush1.xpose.msra.mxu0 0.0
      %941 = vmatprep.subr.mxu0 0.0
      %942 = vmatpush1.xpose.msra.mxu0 0.0
      %943 = vmatprep.subr.mxu0 0.0
      %944 = vmatpush1.xpose.msra.mxu0 0.0
      %945 = vmatprep.subr.mxu0 0.0
      %946 = vmatpush1.xpose.msra.mxu0 0.0
      %947 = vmatprep.subr.mxu0 0.0
      %948 = vmatpush1.xpose.msra.mxu0 0.0
      %949 = vmatprep.subr.mxu0 0.0
      %950 = vmatpush1.xpose.msra.mxu0 0.0
      %951 = vmatprep.subr.mxu0 0.0
      %952 = vmatpush1.xpose.msra.mxu0 0.0
      %953 = vmatprep.subr.mxu0 0.0
      %954 = vmatpush1.xpose.msra.mxu0 0.0
      %955 = vmatprep.subr.mxu0 0.0
      %956 = vmatpush1.xpose.msra.mxu0 0.0
      %957 = vmatprep.subr.mxu0 0.0
      %958 = vmatpush1.xpose.msra.mxu0 0.0
      %959 = vmatprep.subr.mxu0 0.0
      %960 = vmatpush1.xpose.msra.mxu0 0.0
      %961 = vmatprep.subr.mxu0 0.0
      %962 = vmatpush1.xpose.msra.mxu0 0.0
      %963 = vmatprep.subr.mxu0 0.0
      %964 = vmatpush1.xpose.msra.mxu0 0.0
      %965 = vmatprep.subr.mxu0 0.0
      %966 = vmatpush1.xpose.msra.mxu0 0.0
      %967 = vmatprep.subr.mxu0 0.0
      %968 = vmatpush1.xpose.msra.mxu0 0.0
      %969 = vmatprep.subr.mxu0 0.0
      %970 = vmatpush1.xpose.msra.mxu0 0.0
      %971 = vmatprep.subr.mxu0 0.0
      %972 = vmatpush1.xpose.msra.mxu0 0.0
      %973 = vmatprep.subr.mxu0 0.0
      %974 = vmatpush1.xpose.msra.mxu0 0.0
      %975 = vmatprep.subr.mxu0 0.0
      %976 = vmatpush1.xpose.msra.mxu0 0.0
      %977 = vmatprep.subr.mxu0 0.0
      %978 = vmatpush1.xpose.msra.mxu0 0.0
      %979 = vmatprep.subr.mxu0 0.0
      %980 = vmatpush1.xpose.msra.mxu0 0.0
      %981 = vmatprep.subr.mxu0 0.0
      %982 = vmatpush1.xpose.msra.mxu0 0.0
      %983 = vmatprep.subr.mxu0 0.0
      %984 = vmatpush1.xpose.msra.mxu0 0.0
      %985 = vmatprep.subr.mxu0 0.0
      %986 = vmatpush1.xpose.msra.mxu0 0.0
      %987 = vmatprep.subr.mxu0 0.0
      %988 = vmatpush1.xpose.msra.mxu0 0.0
      %989 = vmatprep.subr.mxu0 0.0
      %990 = vmatpush1.xpose.msra.mxu0 0.0
      %991 = vmatprep.mubr.f32.mxu0 0.0
      %992 = vmatmul.mubr.f32.gmra.mrb[0].mxu0 %v855
      %v993 = vpop.f32.mrb[0].mxu0
      %v994 = vadd.f32 0.0, %v993
      %v995 = vpop.f32.mrb[0].mxu0
      %996 = vdwg.mxu0
      %v997 = vmul.f32 %v924, 0.35355338
      %v998 = vtanh.pop %v997
      %v999 = vmul.f32 %v994, 0.35355338
      %v1000 = vtanh.pop %v999
      %v1001 = vadd.f32 %v998, %v1000
      %1002 = vrot.lane.b32.xlu0 %v849, 124
      %v1003 = vpop.permute.xlu0 %1002
      %1004 = vrot.lane.b32.xlu0 %v849, 116
      %v1005 = vpop.permute.xlu0 %1004
      %v1006 = vsel %vm301, %v1003, 0
      %v1008 = vsel %vm301, %v1005, 0
      %1010 = vmatprep.subr.mxu0 0.0
      %1011 = vmatpush1.xpose.msra.mxu0 %v1008
      %1012 = vmatprep.subr.mxu0 0.0
      %1013 = vmatpush1.xpose.msra.mxu0 0.0
      %1014 = vmatprep.subr.mxu0 0.0
      %1015 = vmatpush1.xpose.msra.mxu0 0.0
      %1016 = vmatprep.subr.mxu0 0.0
      %1017 = vmatpush1.xpose.msra.mxu0 0.0
      %1018 = vmatprep.subr.mxu0 0.0
      %1019 = vmatpush1.xpose.msra.mxu0 0.0
      %1020 = vmatprep.subr.mxu0 0.0
      %1021 = vmatpush1.xpose.msra.mxu0 0.0
      %1022 = vmatprep.subr.mxu0 0.0
      %1023 = vmatpush1.xpose.msra.mxu0 0.0
      %1024 = vmatprep.subr.mxu0 0.0
      %1025 = vmatpush1.xpose.msra.mxu0 0.0
      %1026 = vmatprep.subr.mxu0 0.0
      %1027 = vmatpush1.xpose.msra.mxu0 0.0
      %1028 = vmatprep.subr.mxu0 0.0
      %1029 = vmatpush1.xpose.msra.mxu0 0.0
      %1030 = vmatprep.subr.mxu0 0.0
      %1031 = vmatpush1.xpose.msra.mxu0 0.0
      %1032 = vmatprep.subr.mxu0 0.0
      %1033 = vmatpush1.xpose.msra.mxu0 0.0
      %1034 = vmatprep.subr.mxu0 0.0
      %1035 = vmatpush1.xpose.msra.mxu0 0.0
      %1036 = vmatprep.subr.mxu0 0.0
      %1037 = vmatpush1.xpose.msra.mxu0 0.0
      %1038 = vmatprep.subr.mxu0 0.0
      %1039 = vmatpush1.xpose.msra.mxu0 0.0
      %1040 = vmatprep.subr.mxu0 0.0
      %1041 = vmatpush1.xpose.msra.mxu0 0.0
      %1042 = vmatprep.subr.mxu0 0.0
      %1043 = vmatpush1.xpose.msra.mxu0 0.0
      %1044 = vmatprep.subr.mxu0 0.0
      %1045 = vmatpush1.xpose.msra.mxu0 0.0
      %1046 = vmatprep.subr.mxu0 0.0
      %1047 = vmatpush1.xpose.msra.mxu0 0.0
      %1048 = vmatprep.subr.mxu0 0.0
      %1049 = vmatpush1.xpose.msra.mxu0 0.0
      %1050 = vmatprep.subr.mxu0 0.0
      %1051 = vmatpush1.xpose.msra.mxu0 0.0
      %1052 = vmatprep.subr.mxu0 0.0
      %1053 = vmatpush1.xpose.msra.mxu0 0.0
      %1054 = vmatprep.subr.mxu0 0.0
      %1055 = vmatpush1.xpose.msra.mxu0 0.0
      %1056 = vmatprep.subr.mxu0 0.0
      %1057 = vmatpush1.xpose.msra.mxu0 0.0
      %1058 = vmatprep.subr.mxu0 0.0
      %1059 = vmatpush1.xpose.msra.mxu0 0.0
      %1060 = vmatprep.subr.mxu0 0.0
      %1061 = vmatpush1.xpose.msra.mxu0 0.0
      %1062 = vmatprep.subr.mxu0 0.0
      %1063 = vmatpush1.xpose.msra.mxu0 0.0
      %1064 = vmatprep.subr.mxu0 0.0
      %1065 = vmatpush1.xpose.msra.mxu0 0.0
      %1066 = vmatprep.subr.mxu0 0.0
      %1067 = vmatpush1.xpose.msra.mxu0 0.0
      %1068 = vmatprep.subr.mxu0 0.0
      %1069 = vmatpush1.xpose.msra.mxu0 0.0
      %1070 = vmatprep.subr.mxu0 0.0
      %1071 = vmatpush1.xpose.msra.mxu0 0.0
      %1072 = vmatprep.subr.mxu0 0.0
      %1073 = vmatpush1.xpose.msra.mxu0 0.0
      %1074 = vmatprep.mubr.f32.mxu0 0.0
      %1075 = vmatmul.mubr.f32.gmra.mrb[0].mxu0 %v1006
      %v1076 = vpop.f32.mrb[0].mxu0
      %v1077 = vadd.f32 0.0, %v1076
      %v1078 = vpop.f32.mrb[0].mxu0
      %1079 = vdwg.mxu0
      %1080 = vmatprep.subr.mxu0 0.0
      %1081 = vmatpush1.xpose.msra.mxu0 %v1006
      %1082 = vmatprep.subr.mxu0 0.0
      %1083 = vmatpush1.xpose.msra.mxu0 0.0
      %1084 = vmatprep.subr.mxu0 0.0
      %1085 = vmatpush1.xpose.msra.mxu0 0.0
      %1086 = vmatprep.subr.mxu0 0.0
      %1087 = vmatpush1.xpose.msra.mxu0 0.0
      %1088 = vmatprep.subr.mxu0 0.0
      %1089 = vmatpush1.xpose.msra.mxu0 0.0
      %1090 = vmatprep.subr.mxu0 0.0
      %1091 = vmatpush1.xpose.msra.mxu0 0.0
      %1092 = vmatprep.subr.mxu0 0.0
      %1093 = vmatpush1.xpose.msra.mxu0 0.0
      %1094 = vmatprep.subr.mxu0 0.0
      %1095 = vmatpush1.xpose.msra.mxu0 0.0
      %1096 = vmatprep.subr.mxu0 0.0
      %1097 = vmatpush1.xpose.msra.mxu0 0.0
      %1098 = vmatprep.subr.mxu0 0.0
      %1099 = vmatpush1.xpose.msra.mxu0 0.0
      %1100 = vmatprep.subr.mxu0 0.0
      %1101 = vmatpush1.xpose.msra.mxu0 0.0
      %1102 = vmatprep.subr.mxu0 0.0
      %1103 = vmatpush1.xpose.msra.mxu0 0.0
      %1104 = vmatprep.subr.mxu0 0.0
      %1105 = vmatpush1.xpose.msra.mxu0 0.0
      %1106 = vmatprep.subr.mxu0 0.0
      %1107 = vmatpush1.xpose.msra.mxu0 0.0
      %1108 = vmatprep.subr.mxu0 0.0
      %1109 = vmatpush1.xpose.msra.mxu0 0.0
      %1110 = vmatprep.subr.mxu0 0.0
      %1111 = vmatpush1.xpose.msra.mxu0 0.0
      %1112 = vmatprep.subr.mxu0 0.0
      %1113 = vmatpush1.xpose.msra.mxu0 0.0
      %1114 = vmatprep.subr.mxu0 0.0
      %1115 = vmatpush1.xpose.msra.mxu0 0.0
      %1116 = vmatprep.subr.mxu0 0.0
      %1117 = vmatpush1.xpose.msra.mxu0 0.0
      %1118 = vmatprep.subr.mxu0 0.0
      %1119 = vmatpush1.xpose.msra.mxu0 0.0
      %1120 = vmatprep.subr.mxu0 0.0
      %1121 = vmatpush1.xpose.msra.mxu0 0.0
      %1122 = vmatprep.subr.mxu0 0.0
      %1123 = vmatpush1.xpose.msra.mxu0 0.0
      %1124 = vmatprep.subr.mxu0 0.0
      %1125 = vmatpush1.xpose.msra.mxu0 0.0
      %1126 = vmatprep.subr.mxu0 0.0
      %1127 = vmatpush1.xpose.msra.mxu0 0.0
      %1128 = vmatprep.subr.mxu0 0.0
      %1129 = vmatpush1.xpose.msra.mxu0 0.0
      %1130 = vmatprep.subr.mxu0 0.0
      %1131 = vmatpush1.xpose.msra.mxu0 0.0
      %1132 = vmatprep.subr.mxu0 0.0
      %1133 = vmatpush1.xpose.msra.mxu0 0.0
      %1134 = vmatprep.subr.mxu0 0.0
      %1135 = vmatpush1.xpose.msra.mxu0 0.0
      %1136 = vmatprep.subr.mxu0 0.0
      %1137 = vmatpush1.xpose.msra.mxu0 0.0
      %1138 = vmatprep.subr.mxu0 0.0
      %1139 = vmatpush1.xpose.msra.mxu0 0.0
      %1140 = vmatprep.subr.mxu0 0.0
      %1141 = vmatpush1.xpose.msra.mxu0 0.0
      %1142 = vmatprep.subr.mxu0 0.0
      %1143 = vmatpush1.xpose.msra.mxu0 0.0
      %1144 = vmatprep.mubr.f32.mxu0 0.0
      %1145 = vmatmul.mubr.f32.gmra.mrb[0].mxu0 %v1008
      %v1146 = vpop.f32.mrb[0].mxu0
      %v1147 = vadd.f32 0.0, %v1146
      %v1148 = vpop.f32.mrb[0].mxu0
      %1149 = vdwg.mxu0
      %v1150 = vmul.f32 %v1077, 0.35355338
      %v1151 = vtanh.pop %v1150
      %v1152 = vmul.f32 %v1147, 0.35355338
      %v1153 = vtanh.pop %v1152
      %v1154 = vadd.f32 %v1151, %v1153
      %v1155 = vadd.f32 %v1001, %v1154
      %v1156 = vmul.f32 %v1155, 0.25
      %s1157 = scalar_lea.vmem %s292, 8
      %1158 = vst.msk [vmem:[%s1157] sm:$0xff] %vm361, %v1156
      %1159 = vrot.lane.b32.xlu0 %v447, 112
      %v1160 = vpop.permute.xlu0 %1159
      %v1163 = vsel %vm361, %v1160, %v852
      %1165 = vset.pattern.permute.xlu0 0
      %1166 = vperm.xlu0 %1165, %v356
      %v1167 = vpop.permute.xlu0 %1166
      %v1169 = vmul.f32 %v1163, %v1167
      %vm1170 = vcmask 130048
      %1171 = vst.msk [vmem:[%s296] sm:$0xff] %vm1170, %v1169
      %p1172 = scmp.lt.s32.totalorder %s18, 1
      %s1173 = scalar_select %p1172, %s18, 1
      %s1174 = smul.addr %s1173, 2
      %s1175 = smul.addr %s1174, 8
      %s1176 = scalar_lea.vmem %s5, %s1175
      %p1177 = scmp.lt.s32.totalorder %s18, 1
      %s1178 = scalar_select %p1177, %s18, 1
      %s1179 = smul.addr %s1178, 8
      %s1180 = scalar_lea.vmem %s6, %s1179
      // Predicated region
      $region41: #{_lambda_.11} parent=39 // pred_check
        %p1181 = pneg %p156
      $region42: #{_lambda_.11} parent=39 // pred_check_branch
        %1183 = sbr.rel (%p1181) target = $region44
      $region43: #{_lambda_.11} parent=39 // pred_region
        _
      $region44: #{_lambda_.11} parent=39 // pred_fallthru
        _
      // Predicated region
      $region45: #{_lambda_.11} parent=39 // pred_check
        %p1184 = pneg %p182
      $region46: #{_lambda_.11} parent=39 // pred_check_branch
        %1186 = sbr.rel (%p1184) target = $region48
      $region47: #{_lambda_.11} parent=39 // pred_region
        _
      $region48: #{_lambda_.11} parent=39 // pred_fallthru
        _
    $region40: #{_lambda_.11} parent=5 // pred_fallthru
      _
    %p1187 = scmp.le.s32.totalorder 2, %s13
    // Predicated region
    $region49: #{_lambda_.11} parent=5 // pred_check
      %p1188 = pneg %p1187
    $region50: #{_lambda_.11} parent=5 // pred_check_branch
      %1190 = sbr.rel (%p1188) target = $region52
    $region51: #{_lambda_.11} parent=5 // pred_region
      %s1191 = ssub.s32 %s13, 2
      // Predicated region
      $region53: #{_lambda_.11} parent=51 // pred_check
        %p1192 = pneg %p162
      $region54: #{_lambda_.11} parent=51 // pred_check_branch
        %1194 = sbr.rel (%p1192) target = $region56
      $region55: #{_lambda_.11} parent=51 // pred_region
        %p1195 = scmp.lt.s32.totalorder %s19, 1
        %s1196 = scalar_select %p1195, %s19, 1
        %s1197 = smul.addr %s1196, 2
        %s1198 = smul.addr %s1197, 8
        %s1199 = scalar_lea.vmem %s5, %s1198
      $region56: #{_lambda_.11} parent=51 // pred_fallthru
        _
      // Predicated region
      $region57: #{_lambda_.11} parent=51 // pred_check
        %p1200 = pneg %p188
      $region58: #{_lambda_.11} parent=51 // pred_check_branch
        %1202 = sbr.rel (%p1200) target = $region60
      $region59: #{_lambda_.11} parent=51 // pred_region
        %p1203 = scmp.lt.s32.totalorder %s19, 1
        %s1204 = scalar_select %p1203, %s19, 1
        %s1205 = smul.addr %s1204, 8
        %s1206 = scalar_lea.vmem %s6, %s1205
      $region60: #{_lambda_.11} parent=51 // pred_fallthru
        _
    $region52: #{_lambda_.11} parent=5 // pred_fallthru
      _
  $region6: #{_lambda_.11} parent=0 // loop_footer
    %s17 = sadd.s32 1, %s13
  $region7: #{_lambda_.11} parent=0 // loop_footer_branch
    %12 = sbr.rel target = $region3
  $region8: #{_lambda_.11} parent=0 // loop_exit
    _

// kernel: _lambda_.13
$region0: #{_lambda_.13}
  #allocation0 [shape = 'u32[]', space=smem, size = 0x4, offset = 0x4, fixed_abs, tag = 'smem constant byte address 0x4 - core index']
  #allocation1 [shape = 'u32[144,128]{1,0:T(1,128)}', space=vmem, size = 0x12000, scoped, tag = 'internal scratch']
  %s0 = inlined_call_operand.vmem [shape: f32[2,2,64], index: 0, kind: input, shape index: {}]
  %s1 = inlined_call_operand.vmem [shape: f32[2,2,64], index: 1, kind: input, shape index: {}]
  %s2 = inlined_call_operand.vmem [shape: f32[8,4], index: 2, kind: input, shape index: {}]
  %s3 = inlined_call_operand.vmem [shape: f32[8,1], index: 3, kind: input, shape index: {}]
  %s4 = inlined_call_operand.vmem [shape: f32[4,8], index: 4, kind: input, shape index: {}]
  %s5 = inlined_call_operand.vmem [shape: f32[4,1], index: 5, kind: input, shape index: {}]
  %s6 = inlined_call_operand.vmem [shape: f32[2,4,64], index: 6, kind: output, shape index: {}]
  %s7 = sld [smem:[#allocation0]]
  $region57: #{_lambda_.13} parent=0
    _
  %s9 = ssub.s32 1, %s7
  %s10 = scalar_select 0, %s9, %s7
  loop: start=0, step=1, limit=4
  $region2: #{_lambda_.13} parent=0 // loop_pre_header
    _
  $region3: #{_lambda_.13} parent=0 // loop_header
    %s12 = sphi 0, %s16
    %p13 = scmp.ge.s32.totalorder %s12, 4
    %s22 = sphi 0, %s24
    %s25 = sphi 0, %s22
    %s26 = sphi 0, %s25
    %s42 = sphi 0, %s26
    %s48 = sphi 0, %s50
    %s51 = sphi 0, %s48
    %s52 = sphi 0, %s51
    %s68 = sphi 0, %s52
    %s72 = sphi 0, %s72
    %s74 = sphi 0, %s72
    %s75 = sphi 0, %s74
    %s89 = sphi 0, %s75
    %s93 = sphi 0, %s93
    %s95 = sphi 0, %s93
    %s96 = sphi 0, %s95
    %s110 = sphi 0, %s96
    %s114 = sphi 0, %s114
    %s116 = sphi 0, %s114
    %s117 = sphi 0, %s116
    %s131 = sphi 0, %s117
    %s135 = sphi 0, %s135
    %s137 = sphi 0, %s135
    %s138 = sphi 0, %s137
    %s152 = sphi 0, %s138
    %s158 = sphi 0, %s160
    %s161 = sphi 0, %s158
    %s162 = sphi 0, %s161
    %s178 = sphi 0, %s162
  $region4: #{_lambda_.13} parent=0 // loop_header_branch
    %15 = sbr.rel (%p13) target = $region8
  $region5: #{_lambda_.13} parent=0 // loop_body
    %s17 = ssub.s32 %s12, 1
    %s18 = ssub.s32 %s12, 2
    %s19 = sadd.s32 %s12, 1
    %s20 = ssub.s32 %s12, %s19
    %p21 = scmp.eq.s32.totalorder %s20, 0
    %s23 = sadd.s32 %s22, 1
    %s24 = scalar_select %p21, %s22, %s23
    %p27 = pneg %p21
    %p28 = scmp.eq.s32.totalorder %s12, 1
    %p29 = por %p27, %p28
    %p30 = scmp.ne.s32.totalorder %s22, %s25
    %p31 = scmp.eq.s32.totalorder %s12, 0
    %p32 = por %p30, %p31
    %p33 = scmp.ne.s32.totalorder %s22, %s25
    %p34 = scmp.eq.s32.totalorder %s17, 1
    %p35 = por %p33, %p34
    %p36 = scmp.ne.s32.totalorder %s25, %s26
    %p37 = scmp.eq.s32.totalorder %s17, 0
    %p38 = por %p36, %p37
    %p39 = scmp.ne.s32.totalorder %s25, %s26
    %p40 = scmp.eq.s32.totalorder %s18, 1
    %p41 = por %p39, %p40
    %p43 = scmp.ne.s32.totalorder %s26, %s42
    %p44 = scmp.eq.s32.totalorder %s18, 0
    %p45 = por %p43, %p44
    %s46 = ssub.s32 %s12, %s19
    %p47 = scmp.eq.s32.totalorder %s46, 0
    %s49 = sadd.s32 %s48, 1
    %s50 = scalar_select %p47, %s48, %s49
    %p53 = pneg %p47
    %p54 = scmp.eq.s32.totalorder %s12, 1
    %p55 = por %p53, %p54
    %p56 = scmp.ne.s32.totalorder %s48, %s51
    %p57 = scmp.eq.s32.totalorder %s12, 0
    %p58 = por %p56, %p57
    %p59 = scmp.ne.s32.totalorder %s48, %s51
    %p60 = scmp.eq.s32.totalorder %s17, 1
    %p61 = por %p59, %p60
    %p62 = scmp.ne.s32.totalorder %s51, %s52
    %p63 = scmp.eq.s32.totalorder %s17, 0
    %p64 = por %p62, %p63
    %p65 = scmp.ne.s32.totalorder %s51, %s52
    %p66 = scmp.eq.s32.totalorder %s18, 1
    %p67 = por %p65, %p66
    %p69 = scmp.ne.s32.totalorder %s52, %s68
    %p70 = scmp.eq.s32.totalorder %s18, 0
    %p71 = por %p69, %p70
    %s73 = sadd.s32 %s72, 1
    %p76 = scmp.eq.s32.totalorder %s12, 1
    %p77 = scmp.ne.s32.totalorder %s72, %s74
    %p78 = scmp.eq.s32.totalorder %s12, 0
    %p79 = por %p77, %p78
    %p80 = scmp.ne.s32.totalorder %s72, %s74
    %p81 = scmp.eq.s32.totalorder %s17, 1
    %p82 = por %p80, %p81
    %p83 = scmp.ne.s32.totalorder %s74, %s75
    %p84 = scmp.eq.s32.totalorder %s17, 0
    %p85 = por %p83, %p84
    %p86 = scmp.ne.s32.totalorder %s74, %s75
    %p87 = scmp.eq.s32.totalorder %s18, 1
    %p88 = por %p86, %p87
    %p90 = scmp.ne.s32.totalorder %s75, %s89
    %p91 = scmp.eq.s32.totalorder %s18, 0
    %p92 = por %p90, %p91
    %s94 = sadd.s32 %s93, 1
    %p97 = scmp.eq.s32.totalorder %s12, 1
    %p98 = scmp.ne.s32.totalorder %s93, %s95
    %p99 = scmp.eq.s32.totalorder %s12, 0
    %p100 = por %p98, %p99
    %p101 = scmp.ne.s32.totalorder %s93, %s95
    %p102 = scmp.eq.s32.totalorder %s17, 1
    %p103 = por %p101, %p102
    %p104 = scmp.ne.s32.totalorder %s95, %s96
    %p105 = scmp.eq.s32.totalorder %s17, 0
    %p106 = por %p104, %p105
    %p107 = scmp.ne.s32.totalorder %s95, %s96
    %p108 = scmp.eq.s32.totalorder %s18, 1
    %p109 = por %p107, %p108
    %p111 = scmp.ne.s32.totalorder %s96, %s110
    %p112 = scmp.eq.s32.totalorder %s18, 0
    %p113 = por %p111, %p112
    %s115 = sadd.s32 %s114, 1
    %p118 = scmp.eq.s32.totalorder %s12, 1
    %p119 = scmp.ne.s32.totalorder %s114, %s116
    %p120 = scmp.eq.s32.totalorder %s12, 0
    %p121 = por %p119, %p120
    %p122 = scmp.ne.s32.totalorder %s114, %s116
    %p123 = scmp.eq.s32.totalorder %s17, 1
    %p124 = por %p122, %p123
    %p125 = scmp.ne.s32.totalorder %s116, %s117
    %p126 = scmp.eq.s32.totalorder %s17, 0
    %p127 = por %p125, %p126
    %p128 = scmp.ne.s32.totalorder %s116, %s117
    %p129 = scmp.eq.s32.totalorder %s18, 1
    %p130 = por %p128, %p129
    %p132 = scmp.ne.s32.totalorder %s117, %s131
    %p133 = scmp.eq.s32.totalorder %s18, 0
    %p134 = por %p132, %p133
    %s136 = sadd.s32 %s135, 1
    %p139 = scmp.eq.s32.totalorder %s12, 1
    %p140 = scmp.ne.s32.totalorder %s135, %s137
    %p141 = scmp.eq.s32.totalorder %s12, 0
    %p142 = por %p140, %p141
    %p143 = scmp.ne.s32.totalorder %s135, %s137
    %p144 = scmp.eq.s32.totalorder %s17, 1
    %p145 = por %p143, %p144
    %p146 = scmp.ne.s32.totalorder %s137, %s138
    %p147 = scmp.eq.s32.totalorder %s17, 0
    %p148 = por %p146, %p147
    %p149 = scmp.ne.s32.totalorder %s137, %s138
    %p150 = scmp.eq.s32.totalorder %s18, 1
    %p151 = por %p149, %p150
    %p153 = scmp.ne.s32.totalorder %s138, %s152
    %p154 = scmp.eq.s32.totalorder %s18, 0
    %p155 = por %p153, %p154
    %s156 = ssub.s32 %s12, %s19
    %p157 = scmp.eq.s32.totalorder %s156, 0
    %s159 = sadd.s32 %s158, 1
    %s160 = scalar_select %p157, %s158, %s159
    %p163 = pneg %p157
    %p164 = scmp.eq.s32.totalorder %s12, 1
    %p165 = por %p163, %p164
    %p166 = scmp.ne.s32.totalorder %s158, %s161
    %p167 = scmp.eq.s32.totalorder %s12, 0
    %p168 = por %p166, %p167
    %p169 = scmp.ne.s32.totalorder %s158, %s161
    %p170 = scmp.eq.s32.totalorder %s17, 1
    %p171 = por %p169, %p170
    %p172 = scmp.ne.s32.totalorder %s161, %s162
    %p173 = scmp.eq.s32.totalorder %s17, 0
    %p174 = por %p172, %p173
    %p175 = scmp.ne.s32.totalorder %s161, %s162
    %p176 = scmp.eq.s32.totalorder %s18, 1
    %p177 = por %p175, %p176
    %p179 = scmp.ne.s32.totalorder %s162, %s178
    %p180 = scmp.eq.s32.totalorder %s18, 0
    %p181 = por %p179, %p180
    %p182 = scmp.le.s32.totalorder 1, %s12
    %p183 = scmp.lt.s32.totalorder %s12, 3
    %p184 = pnand %p182, %p183
    %p185 = pneg %p184
    // Predicated region
    $region9: #{_lambda_.13} parent=5 // pred_check
      _
    $region10: #{_lambda_.13} parent=5 // pred_check_branch
      %187 = sbr.rel (%p184) target = $region12
    $region11: #{_lambda_.13} parent=5 // pred_region
      %s188 = ssub.s32 %s12, 1
      // Predicated region
      $region13: #{_lambda_.13} parent=11 // pred_check
        %p189 = pneg %p85
      $region14: #{_lambda_.13} parent=11 // pred_check_branch
        %191 = sbr.rel (%p189) target = $region16
      $region15: #{_lambda_.13} parent=11 // pred_region
        _
      $region16: #{_lambda_.13} parent=11 // pred_fallthru
        _
      // Predicated region
      $region17: #{_lambda_.13} parent=11 // pred_check
        %p192 = pneg %p106
      $region18: #{_lambda_.13} parent=11 // pred_check_branch
        %194 = sbr.rel (%p192) target = $region20
      $region19: #{_lambda_.13} parent=11 // pred_region
        _
      $region20: #{_lambda_.13} parent=11 // pred_fallthru
        _
      // Predicated region
      $region21: #{_lambda_.13} parent=11 // pred_check
        %p195 = pneg %p127
      $region22: #{_lambda_.13} parent=11 // pred_check_branch
        %197 = sbr.rel (%p195) target = $region24
      $region23: #{_lambda_.13} parent=11 // pred_region
        _
      $region24: #{_lambda_.13} parent=11 // pred_fallthru
        _
      // Predicated region
      $region25: #{_lambda_.13} parent=11 // pred_check
        %p198 = pneg %p148
      $region26: #{_lambda_.13} parent=11 // pred_check_branch
        %200 = sbr.rel (%p198) target = $region28
      $region27: #{_lambda_.13} parent=11 // pred_region
        _
      $region28: #{_lambda_.13} parent=11 // pred_fallthru
        _
    $region12: #{_lambda_.13} parent=5 // pred_fallthru
      _
    %p201 = scmp.lt.s32.totalorder %s12, 2
    // Predicated region
    $region29: #{_lambda_.13} parent=5 // pred_check
      %p202 = pneg %p201
    $region30: #{_lambda_.13} parent=5 // pred_check_branch
      %204 = sbr.rel (%p202) target = $region32
    $region31: #{_lambda_.13} parent=5 // pred_region
      // Predicated region
      $region33: #{_lambda_.13} parent=31 // pred_check
        %p205 = pneg %p32
      $region34: #{_lambda_.13} parent=31 // pred_check_branch
        %207 = sbr.rel (%p205) target = $region36
      $region35: #{_lambda_.13} parent=31 // pred_region
        %p208 = scmp.lt.s32.totalorder %s12, 1
        %s209 = scalar_select %p208, %s12, 1
        %s210 = smul.addr %s209, 2
        %s211 = scalar_lea.vmem %s0, %s210
      $region36: #{_lambda_.13} parent=31 // pred_fallthru
        _
      // Predicated region
      $region37: #{_lambda_.13} parent=31 // pred_check
        %p212 = pneg %p58
      $region38: #{_lambda_.13} parent=31 // pred_check_branch
        %214 = sbr.rel (%p212) target = $region40
      $region39: #{_lambda_.13} parent=31 // pred_region
        %p215 = scmp.lt.s32.totalorder %s12, 1
        %s216 = scalar_select %p215, %s12, 1
        %s217 = smul.addr %s216, 2
        %s218 = scalar_lea.vmem %s1, %s217
      $region40: #{_lambda_.13} parent=31 // pred_fallthru
        _
    $region32: #{_lambda_.13} parent=5 // pred_fallthru
      _
    %p219 = scmp.le.s32.totalorder 1, %s12
    %p220 = scmp.lt.s32.totalorder %s12, 3
    %p221 = pnand %p219, %p220
    %p222 = pneg %p221
    // Predicated region
    $region41: #{_lambda_.13} parent=5 // pred_check
      _
    $region42: #{_lambda_.13} parent=5 // pred_check_branch
      %224 = sbr.rel (%p221) target = $region44
    $region43: #{_lambda_.13} parent=5 // pred_region
      %s225 = ssub.s32 %s12, 1
      %p226 = scmp.lt.s32.totalorder %s17, 1
      %s227 = scalar_select %p226, %s17, 1
      %s228 = smul.addr %s227, 2
      %s229 = scalar_lea.vmem %s0, %s228
      %p230 = pneg %p38
      %p231 = pneg %p35
      %p232 = scmp.lt.s32.totalorder %s17, 1
      %s233 = scalar_select %p232, %s17, 1
      %s234 = smul.addr %s233, 2
      %s235 = scalar_lea.vmem %s1, %s234
      %p236 = pneg %p64
      %p237 = pneg %p61
      %p238 = pneg %p85
      %p239 = pneg %p82
      %p240 = pneg %p106
      %p241 = pneg %p103
      %p242 = pneg %p127
      %p243 = pneg %p124
      %p244 = pneg %p148
      %p245 = pneg %p145
      %p246 = pneg %p174
      %p247 = pneg %p171
      %p248 = scmp.lt.s32.totalorder %s17, 1
      %s249 = scalar_select %p248, %s17, 1
      %s250 = smul.addr %s249, 4
      %s251 = scalar_lea.vmem %s6, %s250
      %p252 = scmp.lt.s32.totalorder %s17, 1
      %s253 = scalar_select %p252, %s17, 1
      %s254 = smul.addr %s253, 2
      %s255 = scalar_lea.vmem %s0, %s254
      %p256 = scmp.lt.s32.totalorder %s17, 1
      %s257 = scalar_select %p256, %s17, 1
      %s258 = smul.addr %s257, 2
      %s259 = scalar_lea.vmem %s1, %s258
      %p260 = scmp.lt.s32.totalorder %s17, 1
      %s261 = scalar_select %p260, %s17, 1
      %s262 = smul.addr %s261, 4
      %s263 = scalar_lea.vmem %s6, %s262
      %v264 = vld [vmem:[%s255] sm:$0x3]
      %v265 = vld [vmem:[%s259] sm:$0x3]
      %v267 = vrot.slane %v265, 6
      %vm269 = vcmask 1041408
      %v270 = vsel %vm269, %v264, %v267
      %v271 = vld [vmem:[%s2] sm:$0xff]
      %v272 = vld [vmem:[%s3] sm:$0xff]
      %274 = vset.pattern.permute.xlu0 0
      %275 = vperm.xlu0 %274, %v272
      %v276 = vpop.permute.xlu0 %275
      %vm278 = vcmask 31744
      %v280 = vsel %vm278, %v271, 0
      %vm282 = vcmask 1043456
      %v284 = vsel %vm282, %v270, 0
      %286 = vmatprep.subr.mxu0 0.0
      %287 = vmatpush1.msra.mxu0 %v284
      %288 = vmatprep.subr.mxu0 0.0
      %289 = vmatpush1.msra.mxu0 0.0
      %290 = vmatprep.subr.mxu0 0.0
      %291 = vmatpush1.msra.mxu0 0.0
      %292 = vmatprep.subr.mxu0 0.0
      %293 = vmatpush1.msra.mxu0 0.0
      %294 = vmatprep.subr.mxu0 0.0
      %295 = vmatpush1.msra.mxu0 0.0
      %296 = vmatprep.subr.mxu0 0.0
      %297 = vmatpush1.msra.mxu0 0.0
      %298 = vmatprep.subr.mxu0 0.0
      %299 = vmatpush1.msra.mxu0 0.0
      %300 = vmatprep.subr.mxu0 0.0
      %301 = vmatpush1.msra.mxu0 0.0
      %302 = vmatprep.subr.mxu0 0.0
      %303 = vmatpush1.msra.mxu0 0.0
      %304 = vmatprep.subr.mxu0 0.0
      %305 = vmatpush1.msra.mxu0 0.0
      %306 = vmatprep.subr.mxu0 0.0
      %307 = vmatpush1.msra.mxu0 0.0
      %308 = vmatprep.subr.mxu0 0.0
      %309 = vmatpush1.msra.mxu0 0.0
      %310 = vmatprep.subr.mxu0 0.0
      %311 = vmatpush1.msra.mxu0 0.0
      %312 = vmatprep.subr.mxu0 0.0
      %313 = vmatpush1.msra.mxu0 0.0
      %314 = vmatprep.subr.mxu0 0.0
      %315 = vmatpush1.msra.mxu0 0.0
      %316 = vmatprep.subr.mxu0 0.0
      %317 = vmatpush1.msra.mxu0 0.0
      %318 = vmatprep.subr.mxu0 0.0
      %319 = vmatpush1.msra.mxu0 0.0
      %320 = vmatprep.subr.mxu0 0.0
      %321 = vmatpush1.msra.mxu0 0.0
      %322 = vmatprep.subr.mxu0 0.0
      %323 = vmatpush1.msra.mxu0 0.0
      %324 = vmatprep.subr.mxu0 0.0
      %325 = vmatpush1.msra.mxu0 0.0
      %326 = vmatprep.subr.mxu0 0.0
      %327 = vmatpush1.msra.mxu0 0.0
      %328 = vmatprep.subr.mxu0 0.0
      %329 = vmatpush1.msra.mxu0 0.0
      %330 = vmatprep.subr.mxu0 0.0
      %331 = vmatpush1.msra.mxu0 0.0
      %332 = vmatprep.subr.mxu0 0.0
      %333 = vmatpush1.msra.mxu0 0.0
      %334 = vmatprep.subr.mxu0 0.0
      %335 = vmatpush1.msra.mxu0 0.0
      %336 = vmatprep.subr.mxu0 0.0
      %337 = vmatpush1.msra.mxu0 0.0
      %338 = vmatprep.subr.mxu0 0.0
      %339 = vmatpush1.msra.mxu0 0.0
      %340 = vmatprep.subr.mxu0 0.0
      %341 = vmatpush1.msra.mxu0 0.0
      %342 = vmatprep.subr.mxu0 0.0
      %343 = vmatpush1.msra.mxu0 0.0
      %344 = vmatprep.subr.mxu0 0.0
      %345 = vmatpush1.msra.mxu0 0.0
      %346 = vmatprep.subr.mxu0 0.0
      %347 = vmatpush1.msra.mxu0 0.0
      %348 = vmatprep.subr.mxu0 0.0
      %349 = vmatpush1.msra.mxu0 0.0
      %350 = vmatprep.mubr.f32.mxu0 0.0
      %351 = vmatmul.mubr.f32.gmra.mrb[0].mxu0 %v280
      %v352 = vpop.f32.mrb[0].mxu0
      %v353 = vadd.f32 %v276, %v352
      %v354 = vpop.f32.mrb[0].mxu0
      %355 = vdwg.mxu0
      %vm356 = vcmp.gt.f32.partialorder %v353, 0.0
      %v357 = vmul.f32 %v353, 1.442695
      %v358 = vpow.pop %v357
      %v359 = vsub.f32 %v358, 1.0
      %v360 = vsel %vm356, %v353, %v359
      %v361 = vld [vmem:[%s4] sm:$0xf]
      %v362 = vld [vmem:[%s5] sm:$0xf]
      %364 = vset.pattern.permute.xlu0 0
      %365 = vperm.xlu0 %364, %v362
      %v366 = vpop.permute.xlu0 %365
      %vm368 = vcmask 64512
      %v370 = vsel %vm368, %v361, 0
      %372 = vmatprep.subr.mxu0 0.0
      %373 = vmatpush1.msra.mxu0 %v360
      %374 = vmatprep.subr.mxu0 0.0
      %375 = vmatpush1.msra.mxu0 0.0
      %376 = vmatprep.subr.mxu0 0.0
      %377 = vmatpush1.msra.mxu0 0.0
      %378 = vmatprep.subr.mxu0 0.0
      %379 = vmatpush1.msra.mxu0 0.0
      %380 = vmatprep.subr.mxu0 0.0
      %381 = vmatpush1.msra.mxu0 0.0
      %382 = vmatprep.subr.mxu0 0.0
      %383 = vmatpush1.msra.mxu0 0.0
      %384 = vmatprep.subr.mxu0 0.0
      %385 = vmatpush1.msra.mxu0 0.0
      %386 = vmatprep.subr.mxu0 0.0
      %387 = vmatpush1.msra.mxu0 0.0
      %388 = vmatprep.subr.mxu0 0.0
      %389 = vmatpush1.msra.mxu0 0.0
      %390 = vmatprep.subr.mxu0 0.0
      %391 = vmatpush1.msra.mxu0 0.0
      %392 = vmatprep.subr.mxu0 0.0
      %393 = vmatpush1.msra.mxu0 0.0
      %394 = vmatprep.subr.mxu0 0.0
      %395 = vmatpush1.msra.mxu0 0.0
      %396 = vmatprep.subr.mxu0 0.0
      %397 = vmatpush1.msra.mxu0 0.0
      %398 = vmatprep.subr.mxu0 0.0
      %399 = vmatpush1.msra.mxu0 0.0
      %400 = vmatprep.subr.mxu0 0.0
      %401 = vmatpush1.msra.mxu0 0.0
      %402 = vmatprep.subr.mxu0 0.0
      %403 = vmatpush1.msra.mxu0 0.0
      %404 = vmatprep.subr.mxu0 0.0
      %405 = vmatpush1.msra.mxu0 0.0
      %406 = vmatprep.subr.mxu0 0.0
      %407 = vmatpush1.msra.mxu0 0.0
      %408 = vmatprep.subr.mxu0 0.0
      %409 = vmatpush1.msra.mxu0 0.0
      %410 = vmatprep.subr.mxu0 0.0
      %411 = vmatpush1.msra.mxu0 0.0
      %412 = vmatprep.subr.mxu0 0.0
      %413 = vmatpush1.msra.mxu0 0.0
      %414 = vmatprep.subr.mxu0 0.0
      %415 = vmatpush1.msra.mxu0 0.0
      %416 = vmatprep.subr.mxu0 0.0
      %417 = vmatpush1.msra.mxu0 0.0
      %418 = vmatprep.subr.mxu0 0.0
      %419 = vmatpush1.msra.mxu0 0.0
      %420 = vmatprep.subr.mxu0 0.0
      %421 = vmatpush1.msra.mxu0 0.0
      %422 = vmatprep.subr.mxu0 0.0
      %423 = vmatpush1.msra.mxu0 0.0
      %424 = vmatprep.subr.mxu0 0.0
      %425 = vmatpush1.msra.mxu0 0.0
      %426 = vmatprep.subr.mxu0 0.0
      %427 = vmatpush1.msra.mxu0 0.0
      %428 = vmatprep.subr.mxu0 0.0
      %429 = vmatpush1.msra.mxu0 0.0
      %430 = vmatprep.subr.mxu0 0.0
      %431 = vmatpush1.msra.mxu0 0.0
      %432 = vmatprep.subr.mxu0 0.0
      %433 = vmatpush1.msra.mxu0 0.0
      %434 = vmatprep.subr.mxu0 0.0
      %435 = vmatpush1.msra.mxu0 0.0
      %436 = vmatprep.mubr.f32.mxu0 0.0
      %437 = vmatmul.mubr.f32.gmra.mrb[0].mxu0 %v370
      %v438 = vpop.f32.mrb[0].mxu0
      %v439 = vadd.f32 %v366, %v438
      %v440 = vpop.f32.mrb[0].mxu0
      %441 = vdwg.mxu0
      %vm442 = vcmask 519168
      %443 = vst.msk [vmem:[%s263] sm:$0xf] %vm442, %v439
      %p444 = scmp.lt.s32.totalorder %s17, 1
      %s445 = scalar_select %p444, %s17, 1
      %s446 = smul.addr %s445, 4
      %s447 = scalar_lea.vmem %s6, %s446
      // Predicated region
      $region45: #{_lambda_.13} parent=43 // pred_check
        %p448 = pneg %p171
      $region46: #{_lambda_.13} parent=43 // pred_check_branch
        %450 = sbr.rel (%p448) target = $region48
      $region47: #{_lambda_.13} parent=43 // pred_region
        _
      $region48: #{_lambda_.13} parent=43 // pred_fallthru
        _
    $region44: #{_lambda_.13} parent=5 // pred_fallthru
      _
    %p451 = scmp.le.s32.totalorder 2, %s12
    // Predicated region
    $region49: #{_lambda_.13} parent=5 // pred_check
      %p452 = pneg %p451
    $region50: #{_lambda_.13} parent=5 // pred_check_branch
      %454 = sbr.rel (%p452) target = $region52
    $region51: #{_lambda_.13} parent=5 // pred_region
      %s455 = ssub.s32 %s12, 2
      // Predicated region
      $region53: #{_lambda_.13} parent=51 // pred_check
        %p456 = pneg %p177
      $region54: #{_lambda_.13} parent=51 // pred_check_branch
        %458 = sbr.rel (%p456) target = $region56
      $region55: #{_lambda_.13} parent=51 // pred_region
        %p459 = scmp.lt.s32.totalorder %s18, 1
        %s460 = scalar_select %p459, %s18, 1
        %s461 = smul.addr %s460, 4
        %s462 = scalar_lea.vmem %s6, %s461
      $region56: #{_lambda_.13} parent=51 // pred_fallthru
        _
    $region52: #{_lambda_.13} parent=5 // pred_fallthru
      _
  $region6: #{_lambda_.13} parent=0 // loop_footer
    %s16 = sadd.s32 1, %s12
  $region7: #{_lambda_.13} parent=0 // loop_footer_branch
    %11 = sbr.rel target = $region3
  $region8: #{_lambda_.13} parent=0 // loop_exit
    _

// kernel: _lambda_.12
$region0: #{_lambda_.12}
  #allocation0 [shape = 'u32[]', space=smem, size = 0x4, offset = 0x4, fixed_abs, tag = 'smem constant byte address 0x4 - core index']
  #allocation1 [shape = 'u32[144,128]{1,0:T(1,128)}', space=vmem, size = 0x12000, scoped, tag = 'internal scratch']
  %s0 = inlined_call_operand.vmem [shape: f32[16,16], index: 0, kind: input, shape index: {}]
  %s1 = inlined_call_operand.vmem [shape: bf16[16,8], index: 1, kind: input, shape index: {}]
  %s2 = inlined_call_operand.vmem [shape: f32[1,8], index: 2, kind: input, shape index: {}]
  %s3 = inlined_call_operand.vmem [shape: bf16[8,8], index: 3, kind: input, shape index: {}]
  %s4 = inlined_call_operand.vmem [shape: f32[1,8], index: 4, kind: input, shape index: {}]
  %s5 = inlined_call_operand.vmem [shape: f32[16,8], index: 5, kind: output, shape index: {}]
  %s6 = sld [smem:[#allocation0]]
  $region30: #{_lambda_.12} parent=0
    _
  %s8 = ssub.s32 1, %s6
  %s9 = scalar_select 0, %s8, %s6
  // Predicated region
  $region2: #{_lambda_.12} parent=0 // pred_check
    _
  $region3: #{_lambda_.12} parent=0 // pred_check_branch
    %11 = sbr.rel (0) target = $region5
  $region4: #{_lambda_.12} parent=0 // pred_region
    _
  $region5: #{_lambda_.12} parent=0 // pred_fallthru
    _
  // Predicated region
  $region6: #{_lambda_.12} parent=0 // pred_check
    _
  $region7: #{_lambda_.12} parent=0 // pred_check_branch
    %13 = sbr.rel (0) target = $region9
  $region8: #{_lambda_.12} parent=0 // pred_region
    _
  $region9: #{_lambda_.12} parent=0 // pred_fallthru
    _
  // Predicated region
  $region10: #{_lambda_.12} parent=0 // pred_check
    _
  $region11: #{_lambda_.12} parent=0 // pred_check_branch
    %15 = sbr.rel (0) target = $region13
  $region12: #{_lambda_.12} parent=0 // pred_region
    _
  $region13: #{_lambda_.12} parent=0 // pred_fallthru
    _
  // Predicated region
  $region14: #{_lambda_.12} parent=0 // pred_check
    _
  $region15: #{_lambda_.12} parent=0 // pred_check_branch
    %17 = sbr.rel (0) target = $region17
  $region16: #{_lambda_.12} parent=0 // pred_region
    _
  $region17: #{_lambda_.12} parent=0 // pred_fallthru
    _
  // Predicated region
  $region18: #{_lambda_.12} parent=0 // pred_check
    _
  $region19: #{_lambda_.12} parent=0 // pred_check_branch
    %19 = sbr.rel (0) target = $region21
  $region20: #{_lambda_.12} parent=0 // pred_region
    _
  $region21: #{_lambda_.12} parent=0 // pred_fallthru
    _
  %v21 = vld [vmem:[%s0] sm:$0xff]
  %v22 = vld [vmem:[%s0 + $0x8] sm:$0xff]
  %v23 = vld [vmem:[%s1] sm:$0xf]
  %v24 = vld [vmem:[%s1 + $0x4] sm:$0xf]
  %v25 = vld [vmem:[%s2] sm:$0x1]
  %v26 = vpack.c.bf16 %v22, %v21
  %v28 = vlaneseq
  %v29 = vshrl.u32 %v28, 7
  %v30 = vsub.s32 0, %v29
  %v31 = vrot.slane %v25, %v30
  %v35 = vunpack.c.l.b16 %v23
  %v36 = vunpack.c.l.b16 %v24
  %v37 = vpack.c.b16 %v36, %v35
  %vm39 = vcmask 130048
  %v41 = vsel %vm39, %v26, 0
  %43 = vmatprep.subr.bf16.mxu0 0
  %44 = vmatpush1.bf16.msra.mxu0 %v37
  %45 = vmatprep.subr.bf16.mxu0 0
  %46 = vmatpush1.bf16.msra.mxu0 0
  %47 = vmatprep.subr.bf16.mxu0 0
  %48 = vmatpush1.bf16.msra.mxu0 0
  %49 = vmatprep.subr.bf16.mxu0 0
  %50 = vmatpush1.bf16.msra.mxu0 0
  %51 = vmatprep.subr.bf16.mxu0 0
  %52 = vmatpush1.bf16.msra.mxu0 0
  %53 = vmatprep.subr.bf16.mxu0 0
  %54 = vmatpush1.bf16.msra.mxu0 0
  %55 = vmatprep.subr.bf16.mxu0 0
  %56 = vmatpush1.bf16.msra.mxu0 0
  %57 = vmatprep.subr.bf16.mxu0 0
  %58 = vmatpush1.bf16.msra.mxu0 0
  %59 = vmatprep.subr.bf16.mxu0 0
  %60 = vmatpush1.bf16.msra.mxu0 0
  %61 = vmatprep.subr.bf16.mxu0 0
  %62 = vmatpush1.bf16.msra.mxu0 0
  %63 = vmatprep.subr.bf16.mxu0 0
  %64 = vmatpush1.bf16.msra.mxu0 0
  %65 = vmatprep.subr.bf16.mxu0 0
  %66 = vmatpush1.bf16.msra.mxu0 0
  %67 = vmatprep.subr.bf16.mxu0 0
  %68 = vmatpush1.bf16.msra.mxu0 0
  %69 = vmatprep.subr.bf16.mxu0 0
  %70 = vmatpush1.bf16.msra.mxu0 0
  %71 = vmatprep.subr.bf16.mxu0 0
  %72 = vmatpush1.bf16.msra.mxu0 0
  %73 = vmatprep.subr.bf16.mxu0 0
  %74 = vmatpush1.bf16.msra.mxu0 0
  %75 = vmatprep.mubr.bf16.mxu0 0
  %76 = vmatmul.mubr.bf16.gmra.mrb[0].mxu0 %v41
  %v77 = vpop.f32.mrb[0].mxu0
  %v78 = vadd.f32 %v31, %v77
  %v79 = vpop.f32.mrb[0].mxu0
  %v80 = vpop.f32.mrb[0].mxu0
  %v81 = vadd.f32 %v31, %v80
  %v82 = vpop.f32.mrb[0].mxu0
  %83 = vdwg.mxu0
  %vm84 = vcmp.gt.f32.partialorder %v78, 0.0
  %vm85 = vcmp.gt.f32.partialorder %v81, 0.0
  %v86 = vmul.f32 %v78, 1.442695
  %v87 = vpow.pop %v86
  %v88 = vmul.f32 %v81, 1.442695
  %v89 = vpow.pop %v88
  %v90 = vsub.f32 %v87, 1.0
  %v91 = vsub.f32 %v89, 1.0
  %v92 = vsel %vm84, %v78, %v90
  %v93 = vsel %vm85, %v81, %v91
  %v94 = vld [vmem:[%s3] sm:$0xf]
  %v95 = vld [vmem:[%s4] sm:$0x1]
  %v96 = vpack.c.bf16 %v93, %v92
  %v98 = vlaneseq
  %v99 = vshrl.u32 %v98, 7
  %v100 = vsub.s32 0, %v99
  %v101 = vrot.slane %v95, %v100
  %vm103 = vcmask 64512
  %v105 = vsel %vm103, %v96, 0
  %vm107 = vcmask 1043456
  %v109 = vsel %vm107, %v94, 0
  %111 = vmatprep.subr.bf16.mxu0 0
  %112 = vmatpush1.bf16.msra.mxu0 %v109
  %113 = vmatprep.subr.bf16.mxu0 0
  %114 = vmatpush1.bf16.msra.mxu0 0
  %115 = vmatprep.subr.bf16.mxu0 0
  %116 = vmatpush1.bf16.msra.mxu0 0
  %117 = vmatprep.subr.bf16.mxu0 0
  %118 = vmatpush1.bf16.msra.mxu0 0
  %119 = vmatprep.subr.bf16.mxu0 0
  %120 = vmatpush1.bf16.msra.mxu0 0
  %121 = vmatprep.subr.bf16.mxu0 0
  %122 = vmatpush1.bf16.msra.mxu0 0
  %123 = vmatprep.subr.bf16.mxu0 0
  %124 = vmatpush1.bf16.msra.mxu0 0
  %125 = vmatprep.subr.bf16.mxu0 0
  %126 = vmatpush1.bf16.msra.mxu0 0
  %127 = vmatprep.subr.bf16.mxu0 0
  %128 = vmatpush1.bf16.msra.mxu0 0
  %129 = vmatprep.subr.bf16.mxu0 0
  %130 = vmatpush1.bf16.msra.mxu0 0
  %131 = vmatprep.subr.bf16.mxu0 0
  %132 = vmatpush1.bf16.msra.mxu0 0
  %133 = vmatprep.subr.bf16.mxu0 0
  %134 = vmatpush1.bf16.msra.mxu0 0
  %135 = vmatprep.subr.bf16.mxu0 0
  %136 = vmatpush1.bf16.msra.mxu0 0
  %137 = vmatprep.subr.bf16.mxu0 0
  %138 = vmatpush1.bf16.msra.mxu0 0
  %139 = vmatprep.subr.bf16.mxu0 0
  %140 = vmatpush1.bf16.msra.mxu0 0
  %141 = vmatprep.subr.bf16.mxu0 0
  %142 = vmatpush1.bf16.msra.mxu0 0
  %143 = vmatprep.mubr.bf16.mxu0 0
  %144 = vmatmul.mubr.bf16.gmra.mrb[0].mxu0 %v105
  %v145 = vpop.f32.mrb[0].mxu0
  %v146 = vadd.f32 %v101, %v145
  %v147 = vpop.f32.mrb[0].mxu0
  %v148 = vpop.f32.mrb[0].mxu0
  %v149 = vadd.f32 %v101, %v148
  %v150 = vpop.f32.mrb[0].mxu0
  %151 = vdwg.mxu0
  %v152 = vtanh.pop %v146
  %v153 = vtanh.pop %v149
  %154 = vst.msk [vmem:[%s5] sm:$0xff] %vm103, %v152
  %155 = vst.msk [vmem:[%s5 + $0x8] sm:$0xff] %vm103, %v153
  // Predicated region
  $region22: #{_lambda_.12} parent=0 // pred_check
    _
  $region23: #{_lambda_.12} parent=0 // pred_check_branch
    %157 = sbr.rel (0) target = $region25
  $region24: #{_lambda_.12} parent=0 // pred_region
    _
  $region25: #{_lambda_.12} parent=0 // pred_fallthru
    _
  // Predicated region
  $region26: #{_lambda_.12} parent=0 // pred_check
    _
  $region27: #{_lambda_.12} parent=0 // pred_check_branch
    %159 = sbr.rel (0) target = $region29
  $region28: #{_lambda_.12} parent=0 // pred_region
    _
  $region29: #{_lambda_.12} parent=0 // pred_fallthru
    _

// kernel: _lambda_.15
$region0: #{_lambda_.15}
  #allocation0 [shape = 'u32[]', space=smem, size = 0x4, offset = 0x4, fixed_abs, tag = 'smem constant byte address 0x4 - core index']
  #allocation1 [shape = 'u32[144,128]{1,0:T(1,128)}', space=vmem, size = 0x12000, scoped, tag = 'internal scratch']
  %s0 = inlined_call_operand.vmem [shape: f32[16,32], index: 0, kind: input, shape index: {}]
  %s1 = inlined_call_operand.vmem [shape: bf16[32,8], index: 1, kind: input, shape index: {}]
  %s2 = inlined_call_operand.vmem [shape: f32[1,8], index: 2, kind: input, shape index: {}]
  %s3 = inlined_call_operand.vmem [shape: bf16[8,8], index: 3, kind: input, shape index: {}]
  %s4 = inlined_call_operand.vmem [shape: f32[1,8], index: 4, kind: input, shape index: {}]
  %s5 = inlined_call_operand.vmem [shape: f32[16,8], index: 5, kind: output, shape index: {}]
  %s6 = sld [smem:[#allocation0]]
  $region30: #{_lambda_.15} parent=0
    _
  %s8 = ssub.s32 1, %s6
  %s9 = scalar_select 0, %s8, %s6
  // Predicated region
  $region2: #{_lambda_.15} parent=0 // pred_check
    _
  $region3: #{_lambda_.15} parent=0 // pred_check_branch
    %11 = sbr.rel (0) target = $region5
  $region4: #{_lambda_.15} parent=0 // pred_region
    _
  $region5: #{_lambda_.15} parent=0 // pred_fallthru
    _
  // Predicated region
  $region6: #{_lambda_.15} parent=0 // pred_check
    _
  $region7: #{_lambda_.15} parent=0 // pred_check_branch
    %13 = sbr.rel (0) target = $region9
  $region8: #{_lambda_.15} parent=0 // pred_region
    _
  $region9: #{_lambda_.15} parent=0 // pred_fallthru
    _
  // Predicated region
  $region10: #{_lambda_.15} parent=0 // pred_check
    _
  $region11: #{_lambda_.15} parent=0 // pred_check_branch
    %15 = sbr.rel (0) target = $region13
  $region12: #{_lambda_.15} parent=0 // pred_region
    _
  $region13: #{_lambda_.15} parent=0 // pred_fallthru
    _
  // Predicated region
  $region14: #{_lambda_.15} parent=0 // pred_check
    _
  $region15: #{_lambda_.15} parent=0 // pred_check_branch
    %17 = sbr.rel (0) target = $region17
  $region16: #{_lambda_.15} parent=0 // pred_region
    _
  $region17: #{_lambda_.15} parent=0 // pred_fallthru
    _
  // Predicated region
  $region18: #{_lambda_.15} parent=0 // pred_check
    _
  $region19: #{_lambda_.15} parent=0 // pred_check_branch
    %19 = sbr.rel (0) target = $region21
  $region20: #{_lambda_.15} parent=0 // pred_region
    _
  $region21: #{_lambda_.15} parent=0 // pred_fallthru
    _
  %v21 = vld [vmem:[%s0] sm:$0xff]
  %v22 = vld [vmem:[%s0 + $0x8] sm:$0xff]
  %v23 = vld [vmem:[%s1] sm:$0xf]
  %v24 = vld [vmem:[%s1 + $0x4] sm:$0xf]
  %v25 = vld [vmem:[%s1 + $0x8] sm:$0xf]
  %v26 = vld [vmem:[%s1 + $0xc] sm:$0xf]
  %v27 = vld [vmem:[%s2] sm:$0x1]
  %v28 = vpack.c.bf16 %v22, %v21
  %v30 = vlaneseq
  %v31 = vshrl.u32 %v30, 7
  %v32 = vsub.s32 0, %v31
  %v33 = vrot.slane %v27, %v32
  %v39 = vunpack.c.l.b16 %v23
  %v40 = vunpack.c.l.b16 %v24
  %v41 = vunpack.c.l.b16 %v25
  %v42 = vunpack.c.l.b16 %v26
  %v43 = vpack.c.b16 %v40, %v39
  %v44 = vpack.c.b16 %v42, %v41
  %vm47 = vcmask 261120
  %v49 = vsel %vm47, %v28, 0
  %51 = vmatprep.subr.bf16.mxu0 0
  %52 = vmatpush1.bf16.msra.mxu0 %v43
  %53 = vmatprep.subr.bf16.mxu0 0
  %54 = vmatpush1.bf16.msra.mxu0 %v44
  %55 = vmatprep.subr.bf16.mxu0 0
  %56 = vmatpush1.bf16.msra.mxu0 0
  %57 = vmatprep.subr.bf16.mxu0 0
  %58 = vmatpush1.bf16.msra.mxu0 0
  %59 = vmatprep.subr.bf16.mxu0 0
  %60 = vmatpush1.bf16.msra.mxu0 0
  %61 = vmatprep.subr.bf16.mxu0 0
  %62 = vmatpush1.bf16.msra.mxu0 0
  %63 = vmatprep.subr.bf16.mxu0 0
  %64 = vmatpush1.bf16.msra.mxu0 0
  %65 = vmatprep.subr.bf16.mxu0 0
  %66 = vmatpush1.bf16.msra.mxu0 0
  %67 = vmatprep.subr.bf16.mxu0 0
  %68 = vmatpush1.bf16.msra.mxu0 0
  %69 = vmatprep.subr.bf16.mxu0 0
  %70 = vmatpush1.bf16.msra.mxu0 0
  %71 = vmatprep.subr.bf16.mxu0 0
  %72 = vmatpush1.bf16.msra.mxu0 0
  %73 = vmatprep.subr.bf16.mxu0 0
  %74 = vmatpush1.bf16.msra.mxu0 0
  %75 = vmatprep.subr.bf16.mxu0 0
  %76 = vmatpush1.bf16.msra.mxu0 0
  %77 = vmatprep.subr.bf16.mxu0 0
  %78 = vmatpush1.bf16.msra.mxu0 0
  %79 = vmatprep.subr.bf16.mxu0 0
  %80 = vmatpush1.bf16.msra.mxu0 0
  %81 = vmatprep.subr.bf16.mxu0 0
  %82 = vmatpush1.bf16.msra.mxu0 0
  %83 = vmatprep.mubr.bf16.mxu0 0
  %84 = vmatmul.mubr.bf16.gmra.mrb[0].mxu0 %v49
  %v85 = vpop.f32.mrb[0].mxu0
  %v86 = vadd.f32 %v33, %v85
  %v87 = vpop.f32.mrb[0].mxu0
  %v88 = vpop.f32.mrb[0].mxu0
  %v89 = vadd.f32 %v33, %v88
  %v90 = vpop.f32.mrb[0].mxu0
  %91 = vdwg.mxu0
  %vm92 = vcmp.gt.f32.partialorder %v86, 0.0
  %vm93 = vcmp.gt.f32.partialorder %v89, 0.0
  %v94 = vmul.f32 %v86, 1.442695
  %v95 = vpow.pop %v94
  %v96 = vmul.f32 %v89, 1.442695
  %v97 = vpow.pop %v96
  %v98 = vsub.f32 %v95, 1.0
  %v99 = vsub.f32 %v97, 1.0
  %v100 = vsel %vm92, %v86, %v98
  %v101 = vsel %vm93, %v89, %v99
  %v102 = vld [vmem:[%s3] sm:$0xf]
  %v103 = vld [vmem:[%s4] sm:$0x1]
  %v104 = vpack.c.bf16 %v101, %v100
  %v106 = vlaneseq
  %v107 = vshrl.u32 %v106, 7
  %v108 = vsub.s32 0, %v107
  %v109 = vrot.slane %v103, %v108
  %vm111 = vcmask 64512
  %v113 = vsel %vm111, %v104, 0
  %vm115 = vcmask 1043456
  %v117 = vsel %vm115, %v102, 0
  %119 = vmatprep.subr.bf16.mxu0 0
  %120 = vmatpush1.bf16.msra.mxu0 %v117
  %121 = vmatprep.subr.bf16.mxu0 0
  %122 = vmatpush1.bf16.msra.mxu0 0
  %123 = vmatprep.subr.bf16.mxu0 0
  %124 = vmatpush1.bf16.msra.mxu0 0
  %125 = vmatprep.subr.bf16.mxu0 0
  %126 = vmatpush1.bf16.msra.mxu0 0
  %127 = vmatprep.subr.bf16.mxu0 0
  %128 = vmatpush1.bf16.msra.mxu0 0
  %129 = vmatprep.subr.bf16.mxu0 0
  %130 = vmatpush1.bf16.msra.mxu0 0
  %131 = vmatprep.subr.bf16.mxu0 0
  %132 = vmatpush1.bf16.msra.mxu0 0
  %133 = vmatprep.subr.bf16.mxu0 0
  %134 = vmatpush1.bf16.msra.mxu0 0
  %135 = vmatprep.subr.bf16.mxu0 0
  %136 = vmatpush1.bf16.msra.mxu0 0
  %137 = vmatprep.subr.bf16.mxu0 0
  %138 = vmatpush1.bf16.msra.mxu0 0
  %139 = vmatprep.subr.bf16.mxu0 0
  %140 = vmatpush1.bf16.msra.mxu0 0
  %141 = vmatprep.subr.bf16.mxu0 0
  %142 = vmatpush1.bf16.msra.mxu0 0
  %143 = vmatprep.subr.bf16.mxu0 0
  %144 = vmatpush1.bf16.msra.mxu0 0
  %145 = vmatprep.subr.bf16.mxu0 0
  %146 = vmatpush1.bf16.msra.mxu0 0
  %147 = vmatprep.subr.bf16.mxu0 0
  %148 = vmatpush1.bf16.msra.mxu0 0
  %149 = vmatprep.subr.bf16.mxu0 0
  %150 = vmatpush1.bf16.msra.mxu0 0
  %151 = vmatprep.mubr.bf16.mxu0 0
  %152 = vmatmul.mubr.bf16.gmra.mrb[0].mxu0 %v113
  %v153 = vpop.f32.mrb[0].mxu0
  %v154 = vadd.f32 %v109, %v153
  %v155 = vpop.f32.mrb[0].mxu0
  %v156 = vpop.f32.mrb[0].mxu0
  %v157 = vadd.f32 %v109, %v156
  %v158 = vpop.f32.mrb[0].mxu0
  %159 = vdwg.mxu0
  %v160 = vtanh.pop %v154
  %v161 = vtanh.pop %v157
  %162 = vst.msk [vmem:[%s5] sm:$0xff] %vm111, %v160
  %163 = vst.msk [vmem:[%s5 + $0x8] sm:$0xff] %vm111, %v161
  // Predicated region
  $region22: #{_lambda_.15} parent=0 // pred_check
    _
  $region23: #{_lambda_.15} parent=0 // pred_check_branch
    %165 = sbr.rel (0) target = $region25
  $region24: #{_lambda_.15} parent=0 // pred_region
    _
  $region25: #{_lambda_.15} parent=0 // pred_fallthru
    _
  // Predicated region
  $region26: #{_lambda_.15} parent=0 // pred_check
    _
  $region27: #{_lambda_.15} parent=0 // pred_check_branch
    %167 = sbr.rel (0) target = $region29
  $region28: #{_lambda_.15} parent=0 // pred_region
    _
  $region29: #{_lambda_.15} parent=0 // pred_fallthru
    _

// kernel: _lambda_.16
$region0: #{_lambda_.16}
  #allocation0 [shape = 'u32[]', space=smem, size = 0x4, offset = 0x4, fixed_abs, tag = 'smem constant byte address 0x4 - core index']
  #allocation1 [shape = 'u32[144,128]{1,0:T(1,128)}', space=vmem, size = 0x12000, scoped, tag = 'internal scratch']
  %s0 = inlined_call_operand.vmem [shape: f32[2,4,64], index: 0, kind: input, shape index: {}]
  %s1 = inlined_call_operand.vmem [shape: f32[2,4,64], index: 1, kind: input, shape index: {}]
  %s2 = inlined_call_operand.vmem [shape: f32[8,8], index: 2, kind: input, shape index: {}]
  %s3 = inlined_call_operand.vmem [shape: f32[8,1], index: 3, kind: input, shape index: {}]
  %s4 = inlined_call_operand.vmem [shape: f32[4,8], index: 4, kind: input, shape index: {}]
  %s5 = inlined_call_operand.vmem [shape: f32[4,1], index: 5, kind: input, shape index: {}]
  %s6 = inlined_call_operand.vmem [shape: f32[2,4,64], index: 6, kind: output, shape index: {}]
  %s7 = sld [smem:[#allocation0]]
  $region57: #{_lambda_.16} parent=0
    _
  %s9 = ssub.s32 1, %s7
  %s10 = scalar_select 0, %s9, %s7
  loop: start=0, step=1, limit=4
  $region2: #{_lambda_.16} parent=0 // loop_pre_header
    _
  $region3: #{_lambda_.16} parent=0 // loop_header
    %s12 = sphi 0, %s16
    %p13 = scmp.ge.s32.totalorder %s12, 4
    %s22 = sphi 0, %s24
    %s25 = sphi 0, %s22
    %s26 = sphi 0, %s25
    %s42 = sphi 0, %s26
    %s48 = sphi 0, %s50
    %s51 = sphi 0, %s48
    %s52 = sphi 0, %s51
    %s68 = sphi 0, %s52
    %s72 = sphi 0, %s72
    %s74 = sphi 0, %s72
    %s75 = sphi 0, %s74
    %s89 = sphi 0, %s75
    %s93 = sphi 0, %s93
    %s95 = sphi 0, %s93
    %s96 = sphi 0, %s95
    %s110 = sphi 0, %s96
    %s114 = sphi 0, %s114
    %s116 = sphi 0, %s114
    %s117 = sphi 0, %s116
    %s131 = sphi 0, %s117
    %s135 = sphi 0, %s135
    %s137 = sphi 0, %s135
    %s138 = sphi 0, %s137
    %s152 = sphi 0, %s138
    %s158 = sphi 0, %s160
    %s161 = sphi 0, %s158
    %s162 = sphi 0, %s161
    %s178 = sphi 0, %s162
  $region4: #{_lambda_.16} parent=0 // loop_header_branch
    %15 = sbr.rel (%p13) target = $region8
  $region5: #{_lambda_.16} parent=0 // loop_body
    %s17 = ssub.s32 %s12, 1
    %s18 = ssub.s32 %s12, 2
    %s19 = sadd.s32 %s12, 1
    %s20 = ssub.s32 %s12, %s19
    %p21 = scmp.eq.s32.totalorder %s20, 0
    %s23 = sadd.s32 %s22, 1
    %s24 = scalar_select %p21, %s22, %s23
    %p27 = pneg %p21
    %p28 = scmp.eq.s32.totalorder %s12, 1
    %p29 = por %p27, %p28
    %p30 = scmp.ne.s32.totalorder %s22, %s25
    %p31 = scmp.eq.s32.totalorder %s12, 0
    %p32 = por %p30, %p31
    %p33 = scmp.ne.s32.totalorder %s22, %s25
    %p34 = scmp.eq.s32.totalorder %s17, 1
    %p35 = por %p33, %p34
    %p36 = scmp.ne.s32.totalorder %s25, %s26
    %p37 = scmp.eq.s32.totalorder %s17, 0
    %p38 = por %p36, %p37
    %p39 = scmp.ne.s32.totalorder %s25, %s26
    %p40 = scmp.eq.s32.totalorder %s18, 1
    %p41 = por %p39, %p40
    %p43 = scmp.ne.s32.totalorder %s26, %s42
    %p44 = scmp.eq.s32.totalorder %s18, 0
    %p45 = por %p43, %p44
    %s46 = ssub.s32 %s12, %s19
    %p47 = scmp.eq.s32.totalorder %s46, 0
    %s49 = sadd.s32 %s48, 1
    %s50 = scalar_select %p47, %s48, %s49
    %p53 = pneg %p47
    %p54 = scmp.eq.s32.totalorder %s12, 1
    %p55 = por %p53, %p54
    %p56 = scmp.ne.s32.totalorder %s48, %s51
    %p57 = scmp.eq.s32.totalorder %s12, 0
    %p58 = por %p56, %p57
    %p59 = scmp.ne.s32.totalorder %s48, %s51
    %p60 = scmp.eq.s32.totalorder %s17, 1
    %p61 = por %p59, %p60
    %p62 = scmp.ne.s32.totalorder %s51, %s52
    %p63 = scmp.eq.s32.totalorder %s17, 0
    %p64 = por %p62, %p63
    %p65 = scmp.ne.s32.totalorder %s51, %s52
    %p66 = scmp.eq.s32.totalorder %s18, 1
    %p67 = por %p65, %p66
    %p69 = scmp.ne.s32.totalorder %s52, %s68
    %p70 = scmp.eq.s32.totalorder %s18, 0
    %p71 = por %p69, %p70
    %s73 = sadd.s32 %s72, 1
    %p76 = scmp.eq.s32.totalorder %s12, 1
    %p77 = scmp.ne.s32.totalorder %s72, %s74
    %p78 = scmp.eq.s32.totalorder %s12, 0
    %p79 = por %p77, %p78
    %p80 = scmp.ne.s32.totalorder %s72, %s74
    %p81 = scmp.eq.s32.totalorder %s17, 1
    %p82 = por %p80, %p81
    %p83 = scmp.ne.s32.totalorder %s74, %s75
    %p84 = scmp.eq.s32.totalorder %s17, 0
    %p85 = por %p83, %p84
    %p86 = scmp.ne.s32.totalorder %s74, %s75
    %p87 = scmp.eq.s32.totalorder %s18, 1
    %p88 = por %p86, %p87
    %p90 = scmp.ne.s32.totalorder %s75, %s89
    %p91 = scmp.eq.s32.totalorder %s18, 0
    %p92 = por %p90, %p91
    %s94 = sadd.s32 %s93, 1
    %p97 = scmp.eq.s32.totalorder %s12, 1
    %p98 = scmp.ne.s32.totalorder %s93, %s95
    %p99 = scmp.eq.s32.totalorder %s12, 0
    %p100 = por %p98, %p99
    %p101 = scmp.ne.s32.totalorder %s93, %s95
    %p102 = scmp.eq.s32.totalorder %s17, 1
    %p103 = por %p101, %p102
    %p104 = scmp.ne.s32.totalorder %s95, %s96
    %p105 = scmp.eq.s32.totalorder %s17, 0
    %p106 = por %p104, %p105
    %p107 = scmp.ne.s32.totalorder %s95, %s96
    %p108 = scmp.eq.s32.totalorder %s18, 1
    %p109 = por %p107, %p108
    %p111 = scmp.ne.s32.totalorder %s96, %s110
    %p112 = scmp.eq.s32.totalorder %s18, 0
    %p113 = por %p111, %p112
    %s115 = sadd.s32 %s114, 1
    %p118 = scmp.eq.s32.totalorder %s12, 1
    %p119 = scmp.ne.s32.totalorder %s114, %s116
    %p120 = scmp.eq.s32.totalorder %s12, 0
    %p121 = por %p119, %p120
    %p122 = scmp.ne.s32.totalorder %s114, %s116
    %p123 = scmp.eq.s32.totalorder %s17, 1
    %p124 = por %p122, %p123
    %p125 = scmp.ne.s32.totalorder %s116, %s117
    %p126 = scmp.eq.s32.totalorder %s17, 0
    %p127 = por %p125, %p126
    %p128 = scmp.ne.s32.totalorder %s116, %s117
    %p129 = scmp.eq.s32.totalorder %s18, 1
    %p130 = por %p128, %p129
    %p132 = scmp.ne.s32.totalorder %s117, %s131
    %p133 = scmp.eq.s32.totalorder %s18, 0
    %p134 = por %p132, %p133
    %s136 = sadd.s32 %s135, 1
    %p139 = scmp.eq.s32.totalorder %s12, 1
    %p140 = scmp.ne.s32.totalorder %s135, %s137
    %p141 = scmp.eq.s32.totalorder %s12, 0
    %p142 = por %p140, %p141
    %p143 = scmp.ne.s32.totalorder %s135, %s137
    %p144 = scmp.eq.s32.totalorder %s17, 1
    %p145 = por %p143, %p144
    %p146 = scmp.ne.s32.totalorder %s137, %s138
    %p147 = scmp.eq.s32.totalorder %s17, 0
    %p148 = por %p146, %p147
    %p149 = scmp.ne.s32.totalorder %s137, %s138
    %p150 = scmp.eq.s32.totalorder %s18, 1
    %p151 = por %p149, %p150
    %p153 = scmp.ne.s32.totalorder %s138, %s152
    %p154 = scmp.eq.s32.totalorder %s18, 0
    %p155 = por %p153, %p154
    %s156 = ssub.s32 %s12, %s19
    %p157 = scmp.eq.s32.totalorder %s156, 0
    %s159 = sadd.s32 %s158, 1
    %s160 = scalar_select %p157, %s158, %s159
    %p163 = pneg %p157
    %p164 = scmp.eq.s32.totalorder %s12, 1
    %p165 = por %p163, %p164
    %p166 = scmp.ne.s32.totalorder %s158, %s161
    %p167 = scmp.eq.s32.totalorder %s12, 0
    %p168 = por %p166, %p167
    %p169 = scmp.ne.s32.totalorder %s158, %s161
    %p170 = scmp.eq.s32.totalorder %s17, 1
    %p171 = por %p169, %p170
    %p172 = scmp.ne.s32.totalorder %s161, %s162
    %p173 = scmp.eq.s32.totalorder %s17, 0
    %p174 = por %p172, %p173
    %p175 = scmp.ne.s32.totalorder %s161, %s162
    %p176 = scmp.eq.s32.totalorder %s18, 1
    %p177 = por %p175, %p176
    %p179 = scmp.ne.s32.totalorder %s162, %s178
    %p180 = scmp.eq.s32.totalorder %s18, 0
    %p181 = por %p179, %p180
    %p182 = scmp.le.s32.totalorder 1, %s12
    %p183 = scmp.lt.s32.totalorder %s12, 3
    %p184 = pnand %p182, %p183
    %p185 = pneg %p184
    // Predicated region
    $region9: #{_lambda_.16} parent=5 // pred_check
      _
    $region10: #{_lambda_.16} parent=5 // pred_check_branch
      %187 = sbr.rel (%p184) target = $region12
    $region11: #{_lambda_.16} parent=5 // pred_region
      %s188 = ssub.s32 %s12, 1
      // Predicated region
      $region13: #{_lambda_.16} parent=11 // pred_check
        %p189 = pneg %p85
      $region14: #{_lambda_.16} parent=11 // pred_check_branch
        %191 = sbr.rel (%p189) target = $region16
      $region15: #{_lambda_.16} parent=11 // pred_region
        _
      $region16: #{_lambda_.16} parent=11 // pred_fallthru
        _
      // Predicated region
      $region17: #{_lambda_.16} parent=11 // pred_check
        %p192 = pneg %p106
      $region18: #{_lambda_.16} parent=11 // pred_check_branch
        %194 = sbr.rel (%p192) target = $region20
      $region19: #{_lambda_.16} parent=11 // pred_region
        _
      $region20: #{_lambda_.16} parent=11 // pred_fallthru
        _
      // Predicated region
      $region21: #{_lambda_.16} parent=11 // pred_check
        %p195 = pneg %p127
      $region22: #{_lambda_.16} parent=11 // pred_check_branch
        %197 = sbr.rel (%p195) target = $region24
      $region23: #{_lambda_.16} parent=11 // pred_region
        _
      $region24: #{_lambda_.16} parent=11 // pred_fallthru
        _
      // Predicated region
      $region25: #{_lambda_.16} parent=11 // pred_check
        %p198 = pneg %p148
      $region26: #{_lambda_.16} parent=11 // pred_check_branch
        %200 = sbr.rel (%p198) target = $region28
      $region27: #{_lambda_.16} parent=11 // pred_region
        _
      $region28: #{_lambda_.16} parent=11 // pred_fallthru
        _
    $region12: #{_lambda_.16} parent=5 // pred_fallthru
      _
    %p201 = scmp.lt.s32.totalorder %s12, 2
    // Predicated region
    $region29: #{_lambda_.16} parent=5 // pred_check
      %p202 = pneg %p201
    $region30: #{_lambda_.16} parent=5 // pred_check_branch
      %204 = sbr.rel (%p202) target = $region32
    $region31: #{_lambda_.16} parent=5 // pred_region
      // Predicated region
      $region33: #{_lambda_.16} parent=31 // pred_check
        %p205 = pneg %p32
      $region34: #{_lambda_.16} parent=31 // pred_check_branch
        %207 = sbr.rel (%p205) target = $region36
      $region35: #{_lambda_.16} parent=31 // pred_region
        %p208 = scmp.lt.s32.totalorder %s12, 1
        %s209 = scalar_select %p208, %s12, 1
        %s210 = smul.addr %s209, 4
        %s211 = scalar_lea.vmem %s0, %s210
      $region36: #{_lambda_.16} parent=31 // pred_fallthru
        _
      // Predicated region
      $region37: #{_lambda_.16} parent=31 // pred_check
        %p212 = pneg %p58
      $region38: #{_lambda_.16} parent=31 // pred_check_branch
        %214 = sbr.rel (%p212) target = $region40
      $region39: #{_lambda_.16} parent=31 // pred_region
        %p215 = scmp.lt.s32.totalorder %s12, 1
        %s216 = scalar_select %p215, %s12, 1
        %s217 = smul.addr %s216, 4
        %s218 = scalar_lea.vmem %s1, %s217
      $region40: #{_lambda_.16} parent=31 // pred_fallthru
        _
    $region32: #{_lambda_.16} parent=5 // pred_fallthru
      _
    %p219 = scmp.le.s32.totalorder 1, %s12
    %p220 = scmp.lt.s32.totalorder %s12, 3
    %p221 = pnand %p219, %p220
    %p222 = pneg %p221
    // Predicated region
    $region41: #{_lambda_.16} parent=5 // pred_check
      _
    $region42: #{_lambda_.16} parent=5 // pred_check_branch
      %224 = sbr.rel (%p221) target = $region44
    $region43: #{_lambda_.16} parent=5 // pred_region
      %s225 = ssub.s32 %s12, 1
      %p226 = scmp.lt.s32.totalorder %s17, 1
      %s227 = scalar_select %p226, %s17, 1
      %s228 = smul.addr %s227, 4
      %s229 = scalar_lea.vmem %s0, %s228
      %p230 = pneg %p38
      %p231 = pneg %p35
      %p232 = scmp.lt.s32.totalorder %s17, 1
      %s233 = scalar_select %p232, %s17, 1
      %s234 = smul.addr %s233, 4
      %s235 = scalar_lea.vmem %s1, %s234
      %p236 = pneg %p64
      %p237 = pneg %p61
      %p238 = pneg %p85
      %p239 = pneg %p82
      %p240 = pneg %p106
      %p241 = pneg %p103
      %p242 = pneg %p127
      %p243 = pneg %p124
      %p244 = pneg %p148
      %p245 = pneg %p145
      %p246 = pneg %p174
      %p247 = pneg %p171
      %p248 = scmp.lt.s32.totalorder %s17, 1
      %s249 = scalar_select %p248, %s17, 1
      %s250 = smul.addr %s249, 4
      %s251 = scalar_lea.vmem %s6, %s250
      %p252 = scmp.lt.s32.totalorder %s17, 1
      %s253 = scalar_select %p252, %s17, 1
      %s254 = smul.addr %s253, 4
      %s255 = scalar_lea.vmem %s0, %s254
      %p256 = scmp.lt.s32.totalorder %s17, 1
      %s257 = scalar_select %p256, %s17, 1
      %s258 = smul.addr %s257, 4
      %s259 = scalar_lea.vmem %s1, %s258
      %p260 = scmp.lt.s32.totalorder %s17, 1
      %s261 = scalar_select %p260, %s17, 1
      %s262 = smul.addr %s261, 4
      %s263 = scalar_lea.vmem %s6, %s262
      %v264 = vld [vmem:[%s255] sm:$0xf]
      %v265 = vld [vmem:[%s259] sm:$0xf]
      %v267 = vrot.slane %v265, 4
      %vm269 = vcmask 1043456
      %v270 = vsel %vm269, %v264, %v267
      %v271 = vld [vmem:[%s2] sm:$0xff]
      %v272 = vld [vmem:[%s3] sm:$0xff]
      %274 = vset.pattern.permute.xlu0 0
      %275 = vperm.xlu0 %274, %v272
      %v276 = vpop.permute.xlu0 %275
      %vm278 = vcmask 64512
      %v280 = vsel %vm278, %v271, 0
      %282 = vmatprep.subr.mxu0 0.0
      %283 = vmatpush1.msra.mxu0 %v270
      %284 = vmatprep.subr.mxu0 0.0
      %285 = vmatpush1.msra.mxu0 0.0
      %286 = vmatprep.subr.mxu0 0.0
      %287 = vmatpush1.msra.mxu0 0.0
      %288 = vmatprep.subr.mxu0 0.0
      %289 = vmatpush1.msra.mxu0 0.0
      %290 = vmatprep.subr.mxu0 0.0
      %291 = vmatpush1.msra.mxu0 0.0
      %292 = vmatprep.subr.mxu0 0.0
      %293 = vmatpush1.msra.mxu0 0.0
      %294 = vmatprep.subr.mxu0 0.0
      %295 = vmatpush1.msra.mxu0 0.0
      %296 = vmatprep.subr.mxu0 0.0
      %297 = vmatpush1.msra.mxu0 0.0
      %298 = vmatprep.subr.mxu0 0.0
      %299 = vmatpush1.msra.mxu0 0.0
      %300 = vmatprep.subr.mxu0 0.0
      %301 = vmatpush1.msra.mxu0 0.0
      %302 = vmatprep.subr.mxu0 0.0
      %303 = vmatpush1.msra.mxu0 0.0
      %304 = vmatprep.subr.mxu0 0.0
      %305 = vmatpush1.msra.mxu0 0.0
      %306 = vmatprep.subr.mxu0 0.0
      %307 = vmatpush1.msra.mxu0 0.0
      %308 = vmatprep.subr.mxu0 0.0
      %309 = vmatpush1.msra.mxu0 0.0
      %310 = vmatprep.subr.mxu0 0.0
      %311 = vmatpush1.msra.mxu0 0.0
      %312 = vmatprep.subr.mxu0 0.0
      %313 = vmatpush1.msra.mxu0 0.0
      %314 = vmatprep.subr.mxu0 0.0
      %315 = vmatpush1.msra.mxu0 0.0
      %316 = vmatprep.subr.mxu0 0.0
      %317 = vmatpush1.msra.mxu0 0.0
      %318 = vmatprep.subr.mxu0 0.0
      %319 = vmatpush1.msra.mxu0 0.0
      %320 = vmatprep.subr.mxu0 0.0
      %321 = vmatpush1.msra.mxu0 0.0
      %322 = vmatprep.subr.mxu0 0.0
      %323 = vmatpush1.msra.mxu0 0.0
      %324 = vmatprep.subr.mxu0 0.0
      %325 = vmatpush1.msra.mxu0 0.0
      %326 = vmatprep.subr.mxu0 0.0
      %327 = vmatpush1.msra.mxu0 0.0
      %328 = vmatprep.subr.mxu0 0.0
      %329 = vmatpush1.msra.mxu0 0.0
      %330 = vmatprep.subr.mxu0 0.0
      %331 = vmatpush1.msra.mxu0 0.0
      %332 = vmatprep.subr.mxu0 0.0
      %333 = vmatpush1.msra.mxu0 0.0
      %334 = vmatprep.subr.mxu0 0.0
      %335 = vmatpush1.msra.mxu0 0.0
      %336 = vmatprep.subr.mxu0 0.0
      %337 = vmatpush1.msra.mxu0 0.0
      %338 = vmatprep.subr.mxu0 0.0
      %339 = vmatpush1.msra.mxu0 0.0
      %340 = vmatprep.subr.mxu0 0.0
      %341 = vmatpush1.msra.mxu0 0.0
      %342 = vmatprep.subr.mxu0 0.0
      %343 = vmatpush1.msra.mxu0 0.0
      %344 = vmatprep.subr.mxu0 0.0
      %345 = vmatpush1.msra.mxu0 0.0
      %346 = vmatprep.mubr.f32.mxu0 0.0
      %347 = vmatmul.mubr.f32.gmra.mrb[0].mxu0 %v280
      %v348 = vpop.f32.mrb[0].mxu0
      %v349 = vadd.f32 %v276, %v348
      %v350 = vpop.f32.mrb[0].mxu0
      %351 = vdwg.mxu0
      %vm352 = vcmp.gt.f32.partialorder %v349, 0.0
      %v353 = vmul.f32 %v349, 1.442695
      %v354 = vpow.pop %v353
      %v355 = vsub.f32 %v354, 1.0
      %v356 = vsel %vm352, %v349, %v355
      %v357 = vld [vmem:[%s4] sm:$0xf]
      %v358 = vld [vmem:[%s5] sm:$0xf]
      %360 = vset.pattern.permute.xlu0 0
      %361 = vperm.xlu0 %360, %v358
      %v362 = vpop.permute.xlu0 %361
      %v365 = vsel %vm278, %v357, 0
      %367 = vmatprep.subr.mxu0 0.0
      %368 = vmatpush1.msra.mxu0 %v356
      %369 = vmatprep.subr.mxu0 0.0
      %370 = vmatpush1.msra.mxu0 0.0
      %371 = vmatprep.subr.mxu0 0.0
      %372 = vmatpush1.msra.mxu0 0.0
      %373 = vmatprep.subr.mxu0 0.0
      %374 = vmatpush1.msra.mxu0 0.0
      %375 = vmatprep.subr.mxu0 0.0
      %376 = vmatpush1.msra.mxu0 0.0
      %377 = vmatprep.subr.mxu0 0.0
      %378 = vmatpush1.msra.mxu0 0.0
      %379 = vmatprep.subr.mxu0 0.0
      %380 = vmatpush1.msra.mxu0 0.0
      %381 = vmatprep.subr.mxu0 0.0
      %382 = vmatpush1.msra.mxu0 0.0
      %383 = vmatprep.subr.mxu0 0.0
      %384 = vmatpush1.msra.mxu0 0.0
      %385 = vmatprep.subr.mxu0 0.0
      %386 = vmatpush1.msra.mxu0 0.0
      %387 = vmatprep.subr.mxu0 0.0
      %388 = vmatpush1.msra.mxu0 0.0
      %389 = vmatprep.subr.mxu0 0.0
      %390 = vmatpush1.msra.mxu0 0.0
      %391 = vmatprep.subr.mxu0 0.0
      %392 = vmatpush1.msra.mxu0 0.0
      %393 = vmatprep.subr.mxu0 0.0
      %394 = vmatpush1.msra.mxu0 0.0
      %395 = vmatprep.subr.mxu0 0.0
      %396 = vmatpush1.msra.mxu0 0.0
      %397 = vmatprep.subr.mxu0 0.0
      %398 = vmatpush1.msra.mxu0 0.0
      %399 = vmatprep.subr.mxu0 0.0
      %400 = vmatpush1.msra.mxu0 0.0
      %401 = vmatprep.subr.mxu0 0.0
      %402 = vmatpush1.msra.mxu0 0.0
      %403 = vmatprep.subr.mxu0 0.0
      %404 = vmatpush1.msra.mxu0 0.0
      %405 = vmatprep.subr.mxu0 0.0
      %406 = vmatpush1.msra.mxu0 0.0
      %407 = vmatprep.subr.mxu0 0.0
      %408 = vmatpush1.msra.mxu0 0.0
      %409 = vmatprep.subr.mxu0 0.0
      %410 = vmatpush1.msra.mxu0 0.0
      %411 = vmatprep.subr.mxu0 0.0
      %412 = vmatpush1.msra.mxu0 0.0
      %413 = vmatprep.subr.mxu0 0.0
      %414 = vmatpush1.msra.mxu0 0.0
      %415 = vmatprep.subr.mxu0 0.0
      %416 = vmatpush1.msra.mxu0 0.0
      %417 = vmatprep.subr.mxu0 0.0
      %418 = vmatpush1.msra.mxu0 0.0
      %419 = vmatprep.subr.mxu0 0.0
      %420 = vmatpush1.msra.mxu0 0.0
      %421 = vmatprep.subr.mxu0 0.0
      %422 = vmatpush1.msra.mxu0 0.0
      %423 = vmatprep.subr.mxu0 0.0
      %424 = vmatpush1.msra.mxu0 0.0
      %425 = vmatprep.subr.mxu0 0.0
      %426 = vmatpush1.msra.mxu0 0.0
      %427 = vmatprep.subr.mxu0 0.0
      %428 = vmatpush1.msra.mxu0 0.0
      %429 = vmatprep.subr.mxu0 0.0
      %430 = vmatpush1.msra.mxu0 0.0
      %431 = vmatprep.mubr.f32.mxu0 0.0
      %432 = vmatmul.mubr.f32.gmra.mrb[0].mxu0 %v365
      %v433 = vpop.f32.mrb[0].mxu0
      %v434 = vadd.f32 %v362, %v433
      %v435 = vpop.f32.mrb[0].mxu0
      %436 = vdwg.mxu0
      %vm437 = vcmask 519168
      %438 = vst.msk [vmem:[%s263] sm:$0xf] %vm437, %v434
      %p439 = scmp.lt.s32.totalorder %s17, 1
      %s440 = scalar_select %p439, %s17, 1
      %s441 = smul.addr %s440, 4
      %s442 = scalar_lea.vmem %s6, %s441
      // Predicated region
      $region45: #{_lambda_.16} parent=43 // pred_check
        %p443 = pneg %p171
      $region46: #{_lambda_.16} parent=43 // pred_check_branch
        %445 = sbr.rel (%p443) target = $region48
      $region47: #{_lambda_.16} parent=43 // pred_region
        _
      $region48: #{_lambda_.16} parent=43 // pred_fallthru
        _
    $region44: #{_lambda_.16} parent=5 // pred_fallthru
      _
    %p446 = scmp.le.s32.totalorder 2, %s12
    // Predicated region
    $region49: #{_lambda_.16} parent=5 // pred_check
      %p447 = pneg %p446
    $region50: #{_lambda_.16} parent=5 // pred_check_branch
      %449 = sbr.rel (%p447) target = $region52
    $region51: #{_lambda_.16} parent=5 // pred_region
      %s450 = ssub.s32 %s12, 2
      // Predicated region
      $region53: #{_lambda_.16} parent=51 // pred_check
        %p451 = pneg %p177
      $region54: #{_lambda_.16} parent=51 // pred_check_branch
        %453 = sbr.rel (%p451) target = $region56
      $region55: #{_lambda_.16} parent=51 // pred_region
        %p454 = scmp.lt.s32.totalorder %s18, 1
        %s455 = scalar_select %p454, %s18, 1
        %s456 = smul.addr %s455, 4
        %s457 = scalar_lea.vmem %s6, %s456
      $region56: #{_lambda_.16} parent=51 // pred_fallthru
        _
    $region52: #{_lambda_.16} parent=5 // pred_fallthru
      _
  $region6: #{_lambda_.16} parent=0 // loop_footer
    %s16 = sadd.s32 1, %s12
  $region7: #{_lambda_.16} parent=0 // loop_footer_branch
    %11 = sbr.rel target = $region3
  $region8: #{_lambda_.16} parent=0 // loop_exit
    _

// kernel: _lambda_.14
$region0: #{_lambda_.14}
  #allocation0 [shape = 'u32[]', space=smem, size = 0x4, offset = 0x4, fixed_abs, tag = 'smem constant byte address 0x4 - core index']
  #allocation1 [shape = 'u32[144,128]{1,0:T(1,128)}', space=vmem, size = 0x12000, scoped, tag = 'internal scratch']
  %s0 = inlined_call_operand.vmem [shape: f32[2,8,8], index: 0, kind: input, shape index: {}]
  %s1 = inlined_call_operand.vmem [shape: f32[2,4,8,8], index: 1, kind: input, shape index: {}]
  %s2 = inlined_call_operand.vmem [shape: bf16[8,96], index: 2, kind: input, shape index: {}]
  %s3 = inlined_call_operand.vmem [shape: f32[4,24], index: 3, kind: input, shape index: {}]
  %s4 = inlined_call_operand.vmem [shape: f32[2,8,1], index: 4, kind: input, shape index: {}]
  %s5 = inlined_call_operand.vmem [shape: f32[2,4,8,8], index: 5, kind: output, shape index: {0}]
  %s6 = inlined_call_operand.vmem [shape: f32[2,8,32], index: 6, kind: output, shape index: {1}]
  %7 = xla_tuple %s5, %s6
  %s8 = sld [smem:[#allocation0]]
  $region61: #{_lambda_.14} parent=0
    _
  %s10 = ssub.s32 1, %s8
  %s11 = scalar_select 0, %s10, %s8
  loop: start=0, step=1, limit=4
  $region2: #{_lambda_.14} parent=0 // loop_pre_header
    _
  $region3: #{_lambda_.14} parent=0 // loop_header
    %s13 = sphi 0, %s17
    %p14 = scmp.ge.s32.totalorder %s13, 4
    %s23 = sphi 0, %s25
    %s26 = sphi 0, %s23
    %s27 = sphi 0, %s26
    %s43 = sphi 0, %s27
    %s49 = sphi 0, %s51
    %s52 = sphi 0, %s49
    %s53 = sphi 0, %s52
    %s69 = sphi 0, %s53
    %s73 = sphi 0, %s73
    %s75 = sphi 0, %s73
    %s76 = sphi 0, %s75
    %s90 = sphi 0, %s76
    %s94 = sphi 0, %s94
    %s96 = sphi 0, %s94
    %s97 = sphi 0, %s96
    %s111 = sphi 0, %s97
    %s117 = sphi 0, %s119
    %s120 = sphi 0, %s117
    %s121 = sphi 0, %s120
    %s137 = sphi 0, %s121
    %s143 = sphi 0, %s145
    %s146 = sphi 0, %s143
    %s147 = sphi 0, %s146
    %s163 = sphi 0, %s147
    %s169 = sphi 0, %s171
    %s172 = sphi 0, %s169
    %s173 = sphi 0, %s172
    %s189 = sphi 0, %s173
  $region4: #{_lambda_.14} parent=0 // loop_header_branch
    %16 = sbr.rel (%p14) target = $region8
  $region5: #{_lambda_.14} parent=0 // loop_body
    %s18 = ssub.s32 %s13, 1
    %s19 = ssub.s32 %s13, 2
    %s20 = sadd.s32 %s13, 1
    %s21 = ssub.s32 %s13, %s20
    %p22 = scmp.eq.s32.totalorder %s21, 0
    %s24 = sadd.s32 %s23, 1
    %s25 = scalar_select %p22, %s23, %s24
    %p28 = pneg %p22
    %p29 = scmp.eq.s32.totalorder %s13, 1
    %p30 = por %p28, %p29
    %p31 = scmp.ne.s32.totalorder %s23, %s26
    %p32 = scmp.eq.s32.totalorder %s13, 0
    %p33 = por %p31, %p32
    %p34 = scmp.ne.s32.totalorder %s23, %s26
    %p35 = scmp.eq.s32.totalorder %s18, 1
    %p36 = por %p34, %p35
    %p37 = scmp.ne.s32.totalorder %s26, %s27
    %p38 = scmp.eq.s32.totalorder %s18, 0
    %p39 = por %p37, %p38
    %p40 = scmp.ne.s32.totalorder %s26, %s27
    %p41 = scmp.eq.s32.totalorder %s19, 1
    %p42 = por %p40, %p41
    %p44 = scmp.ne.s32.totalorder %s27, %s43
    %p45 = scmp.eq.s32.totalorder %s19, 0
    %p46 = por %p44, %p45
    %s47 = ssub.s32 %s13, %s20
    %p48 = scmp.eq.s32.totalorder %s47, 0
    %s50 = sadd.s32 %s49, 1
    %s51 = scalar_select %p48, %s49, %s50
    %p54 = pneg %p48
    %p55 = scmp.eq.s32.totalorder %s13, 1
    %p56 = por %p54, %p55
    %p57 = scmp.ne.s32.totalorder %s49, %s52
    %p58 = scmp.eq.s32.totalorder %s13, 0
    %p59 = por %p57, %p58
    %p60 = scmp.ne.s32.totalorder %s49, %s52
    %p61 = scmp.eq.s32.totalorder %s18, 1
    %p62 = por %p60, %p61
    %p63 = scmp.ne.s32.totalorder %s52, %s53
    %p64 = scmp.eq.s32.totalorder %s18, 0
    %p65 = por %p63, %p64
    %p66 = scmp.ne.s32.totalorder %s52, %s53
    %p67 = scmp.eq.s32.totalorder %s19, 1
    %p68 = por %p66, %p67
    %p70 = scmp.ne.s32.totalorder %s53, %s69
    %p71 = scmp.eq.s32.totalorder %s19, 0
    %p72 = por %p70, %p71
    %s74 = sadd.s32 %s73, 1
    %p77 = scmp.eq.s32.totalorder %s13, 1
    %p78 = scmp.ne.s32.totalorder %s73, %s75
    %p79 = scmp.eq.s32.totalorder %s13, 0
    %p80 = por %p78, %p79
    %p81 = scmp.ne.s32.totalorder %s73, %s75
    %p82 = scmp.eq.s32.totalorder %s18, 1
    %p83 = por %p81, %p82
    %p84 = scmp.ne.s32.totalorder %s75, %s76
    %p85 = scmp.eq.s32.totalorder %s18, 0
    %p86 = por %p84, %p85
    %p87 = scmp.ne.s32.totalorder %s75, %s76
    %p88 = scmp.eq.s32.totalorder %s19, 1
    %p89 = por %p87, %p88
    %p91 = scmp.ne.s32.totalorder %s76, %s90
    %p92 = scmp.eq.s32.totalorder %s19, 0
    %p93 = por %p91, %p92
    %s95 = sadd.s32 %s94, 1
    %p98 = scmp.eq.s32.totalorder %s13, 1
    %p99 = scmp.ne.s32.totalorder %s94, %s96
    %p100 = scmp.eq.s32.totalorder %s13, 0
    %p101 = por %p99, %p100
    %p102 = scmp.ne.s32.totalorder %s94, %s96
    %p103 = scmp.eq.s32.totalorder %s18, 1
    %p104 = por %p102, %p103
    %p105 = scmp.ne.s32.totalorder %s96, %s97
    %p106 = scmp.eq.s32.totalorder %s18, 0
    %p107 = por %p105, %p106
    %p108 = scmp.ne.s32.totalorder %s96, %s97
    %p109 = scmp.eq.s32.totalorder %s19, 1
    %p110 = por %p108, %p109
    %p112 = scmp.ne.s32.totalorder %s97, %s111
    %p113 = scmp.eq.s32.totalorder %s19, 0
    %p114 = por %p112, %p113
    %s115 = ssub.s32 %s13, %s20
    %p116 = scmp.eq.s32.totalorder %s115, 0
    %s118 = sadd.s32 %s117, 1
    %s119 = scalar_select %p116, %s117, %s118
    %p122 = pneg %p116
    %p123 = scmp.eq.s32.totalorder %s13, 1
    %p124 = por %p122, %p123
    %p125 = scmp.ne.s32.totalorder %s117, %s120
    %p126 = scmp.eq.s32.totalorder %s13, 0
    %p127 = por %p125, %p126
    %p128 = scmp.ne.s32.totalorder %s117, %s120
    %p129 = scmp.eq.s32.totalorder %s18, 1
    %p130 = por %p128, %p129
    %p131 = scmp.ne.s32.totalorder %s120, %s121
    %p132 = scmp.eq.s32.totalorder %s18, 0
    %p133 = por %p131, %p132
    %p134 = scmp.ne.s32.totalorder %s120, %s121
    %p135 = scmp.eq.s32.totalorder %s19, 1
    %p136 = por %p134, %p135
    %p138 = scmp.ne.s32.totalorder %s121, %s137
    %p139 = scmp.eq.s32.totalorder %s19, 0
    %p140 = por %p138, %p139
    %s141 = ssub.s32 %s13, %s20
    %p142 = scmp.eq.s32.totalorder %s141, 0
    %s144 = sadd.s32 %s143, 1
    %s145 = scalar_select %p142, %s143, %s144
    %p148 = pneg %p142
    %p149 = scmp.eq.s32.totalorder %s13, 1
    %p150 = por %p148, %p149
    %p151 = scmp.ne.s32.totalorder %s143, %s146
    %p152 = scmp.eq.s32.totalorder %s13, 0
    %p153 = por %p151, %p152
    %p154 = scmp.ne.s32.totalorder %s143, %s146
    %p155 = scmp.eq.s32.totalorder %s18, 1
    %p156 = por %p154, %p155
    %p157 = scmp.ne.s32.totalorder %s146, %s147
    %p158 = scmp.eq.s32.totalorder %s18, 0
    %p159 = por %p157, %p158
    %p160 = scmp.ne.s32.totalorder %s146, %s147
    %p161 = scmp.eq.s32.totalorder %s19, 1
    %p162 = por %p160, %p161
    %p164 = scmp.ne.s32.totalorder %s147, %s163
    %p165 = scmp.eq.s32.totalorder %s19, 0
    %p166 = por %p164, %p165
    %s167 = ssub.s32 %s13, %s20
    %p168 = scmp.eq.s32.totalorder %s167, 0
    %s170 = sadd.s32 %s169, 1
    %s171 = scalar_select %p168, %s169, %s170
    %p174 = pneg %p168
    %p175 = scmp.eq.s32.totalorder %s13, 1
    %p176 = por %p174, %p175
    %p177 = scmp.ne.s32.totalorder %s169, %s172
    %p178 = scmp.eq.s32.totalorder %s13, 0
    %p179 = por %p177, %p178
    %p180 = scmp.ne.s32.totalorder %s169, %s172
    %p181 = scmp.eq.s32.totalorder %s18, 1
    %p182 = por %p180, %p181
    %p183 = scmp.ne.s32.totalorder %s172, %s173
    %p184 = scmp.eq.s32.totalorder %s18, 0
    %p185 = por %p183, %p184
    %p186 = scmp.ne.s32.totalorder %s172, %s173
    %p187 = scmp.eq.s32.totalorder %s19, 1
    %p188 = por %p186, %p187
    %p190 = scmp.ne.s32.totalorder %s173, %s189
    %p191 = scmp.eq.s32.totalorder %s19, 0
    %p192 = por %p190, %p191
    %p193 = scmp.le.s32.totalorder 1, %s13
    %p194 = scmp.lt.s32.totalorder %s13, 3
    %p195 = pnand %p193, %p194
    %p196 = pneg %p195
    // Predicated region
    $region9: #{_lambda_.14} parent=5 // pred_check
      _
    $region10: #{_lambda_.14} parent=5 // pred_check_branch
      %198 = sbr.rel (%p195) target = $region12
    $region11: #{_lambda_.14} parent=5 // pred_region
      %s199 = ssub.s32 %s13, 1
      // Predicated region
      $region13: #{_lambda_.14} parent=11 // pred_check
        %p200 = pneg %p86
      $region14: #{_lambda_.14} parent=11 // pred_check_branch
        %202 = sbr.rel (%p200) target = $region16
      $region15: #{_lambda_.14} parent=11 // pred_region
        _
      $region16: #{_lambda_.14} parent=11 // pred_fallthru
        _
      // Predicated region
      $region17: #{_lambda_.14} parent=11 // pred_check
        %p203 = pneg %p107
      $region18: #{_lambda_.14} parent=11 // pred_check_branch
        %205 = sbr.rel (%p203) target = $region20
      $region19: #{_lambda_.14} parent=11 // pred_region
        _
      $region20: #{_lambda_.14} parent=11 // pred_fallthru
        _
    $region12: #{_lambda_.14} parent=5 // pred_fallthru
      _
    %p206 = scmp.lt.s32.totalorder %s13, 2
    // Predicated region
    $region21: #{_lambda_.14} parent=5 // pred_check
      %p207 = pneg %p206
    $region22: #{_lambda_.14} parent=5 // pred_check_branch
      %209 = sbr.rel (%p207) target = $region24
    $region23: #{_lambda_.14} parent=5 // pred_region
      // Predicated region
      $region25: #{_lambda_.14} parent=23 // pred_check
        %p210 = pneg %p33
      $region26: #{_lambda_.14} parent=23 // pred_check_branch
        %212 = sbr.rel (%p210) target = $region28
      $region27: #{_lambda_.14} parent=23 // pred_region
        %p213 = scmp.lt.s32.totalorder %s13, 1
        %s214 = scalar_select %p213, %s13, 1
        %s215 = smul.addr %s214, 8
        %s216 = scalar_lea.vmem %s0, %s215
      $region28: #{_lambda_.14} parent=23 // pred_fallthru
        _
      // Predicated region
      $region29: #{_lambda_.14} parent=23 // pred_check
        %p217 = pneg %p59
      $region30: #{_lambda_.14} parent=23 // pred_check_branch
        %219 = sbr.rel (%p217) target = $region32
      $region31: #{_lambda_.14} parent=23 // pred_region
        %p220 = scmp.lt.s32.totalorder %s13, 1
        %s221 = scalar_select %p220, %s13, 1
        %s222 = smul.addr %s221, 4
        %s223 = smul.addr %s222, 8
        %s224 = scalar_lea.vmem %s1, %s223
      $region32: #{_lambda_.14} parent=23 // pred_fallthru
        _
      // Predicated region
      $region33: #{_lambda_.14} parent=23 // pred_check
        %p225 = pneg %p127
      $region34: #{_lambda_.14} parent=23 // pred_check_branch
        %227 = sbr.rel (%p225) target = $region36
      $region35: #{_lambda_.14} parent=23 // pred_region
        %p228 = scmp.lt.s32.totalorder %s13, 1
        %s229 = scalar_select %p228, %s13, 1
        %s230 = smul.addr %s229, 8
        %s231 = scalar_lea.vmem %s4, %s230
      $region36: #{_lambda_.14} parent=23 // pred_fallthru
        _
    $region24: #{_lambda_.14} parent=5 // pred_fallthru
      _
    %p232 = scmp.le.s32.totalorder 1, %s13
    %p233 = scmp.lt.s32.totalorder %s13, 3
    %p234 = pnand %p232, %p233
    %p235 = pneg %p234
    // Predicated region
    $region37: #{_lambda_.14} parent=5 // pred_check
      _
    $region38: #{_lambda_.14} parent=5 // pred_check_branch
      %237 = sbr.rel (%p234) target = $region40
    $region39: #{_lambda_.14} parent=5 // pred_region
      %s238 = ssub.s32 %s13, 1
      %p239 = scmp.lt.s32.totalorder %s18, 1
      %s240 = scalar_select %p239, %s18, 1
      %s241 = smul.addr %s240, 8
      %s242 = scalar_lea.vmem %s0, %s241
      %p243 = pneg %p39
      %p244 = pneg %p36
      %p245 = scmp.lt.s32.totalorder %s18, 1
      %s246 = scalar_select %p245, %s18, 1
      %s247 = smul.addr %s246, 4
      %s248 = smul.addr %s247, 8
      %s249 = scalar_lea.vmem %s1, %s248
      %p250 = pneg %p65
      %p251 = pneg %p62
      %p252 = pneg %p86
      %p253 = pneg %p83
      %p254 = pneg %p107
      %p255 = pneg %p104
      %p256 = scmp.lt.s32.totalorder %s18, 1
      %s257 = scalar_select %p256, %s18, 1
      %s258 = smul.addr %s257, 8
      %s259 = scalar_lea.vmem %s4, %s258
      %p260 = pneg %p133
      %p261 = pneg %p130
      %p262 = pneg %p159
      %p263 = pneg %p156
      %p264 = scmp.lt.s32.totalorder %s18, 1
      %s265 = scalar_select %p264, %s18, 1
      %s266 = smul.addr %s265, 4
      %s267 = smul.addr %s266, 8
      %s268 = scalar_lea.vmem %s5, %s267
      %p269 = pneg %p185
      %p270 = pneg %p182
      %p271 = scmp.lt.s32.totalorder %s18, 1
      %s272 = scalar_select %p271, %s18, 1
      %s273 = smul.addr %s272, 8
      %s274 = scalar_lea.vmem %s6, %s273
      %p275 = scmp.lt.s32.totalorder %s18, 1
      %s276 = scalar_select %p275, %s18, 1
      %s277 = smul.addr %s276, 8
      %s278 = scalar_lea.vmem %s0, %s277
      %p279 = scmp.lt.s32.totalorder %s18, 1
      %s280 = scalar_select %p279, %s18, 1
      %s281 = smul.addr %s280, 4
      %s282 = smul.addr %s281, 8
      %s283 = scalar_lea.vmem %s1, %s282
      %p284 = scmp.lt.s32.totalorder %s18, 1
      %s285 = scalar_select %p284, %s18, 1
      %s286 = smul.addr %s285, 8
      %s287 = scalar_lea.vmem %s4, %s286
      %p288 = scmp.lt.s32.totalorder %s18, 1
      %s289 = scalar_select %p288, %s18, 1
      %s290 = smul.addr %s289, 4
      %s291 = smul.addr %s290, 8
      %s292 = scalar_lea.vmem %s5, %s291
      %p293 = scmp.lt.s32.totalorder %s18, 1
      %s294 = scalar_select %p293, %s18, 1
      %s295 = smul.addr %s294, 8
      %s296 = scalar_lea.vmem %s6, %s295
      %v298 = vld [vmem:[%s278] sm:$0xff]
      %v299 = vpack.c.bf16 %v298, %v298
      %v300 = vld [vmem:[%s2] sm:$0xf]
      %vm301 = vcmask 64512
      %v303 = vsel %vm301, %v299, 0
      %vm305 = vcmask 1043456
      %v307 = vsel %vm305, %v300, 0
      %309 = vmatprep.subr.bf16.mxu0 0
      %310 = vmatpush1.bf16.msra.mxu0 %v307
      %311 = vmatprep.subr.bf16.mxu0 0
      %312 = vmatpush1.bf16.msra.mxu0 0
      %313 = vmatprep.subr.bf16.mxu0 0
      %314 = vmatpush1.bf16.msra.mxu0 0
      %315 = vmatprep.subr.bf16.mxu0 0
      %316 = vmatpush1.bf16.msra.mxu0 0
      %317 = vmatprep.subr.bf16.mxu0 0
      %318 = vmatpush1.bf16.msra.mxu0 0
      %319 = vmatprep.subr.bf16.mxu0 0
      %320 = vmatpush1.bf16.msra.mxu0 0
      %321 = vmatprep.subr.bf16.mxu0 0
      %322 = vmatpush1.bf16.msra.mxu0 0
      %323 = vmatprep.subr.bf16.mxu0 0
      %324 = vmatpush1.bf16.msra.mxu0 0
      %325 = vmatprep.subr.bf16.mxu0 0
      %326 = vmatpush1.bf16.msra.mxu0 0
      %327 = vmatprep.subr.bf16.mxu0 0
      %328 = vmatpush1.bf16.msra.mxu0 0
      %329 = vmatprep.subr.bf16.mxu0 0
      %330 = vmatpush1.bf16.msra.mxu0 0
      %331 = vmatprep.subr.bf16.mxu0 0
      %332 = vmatpush1.bf16.msra.mxu0 0
      %333 = vmatprep.subr.bf16.mxu0 0
      %334 = vmatpush1.bf16.msra.mxu0 0
      %335 = vmatprep.subr.bf16.mxu0 0
      %336 = vmatpush1.bf16.msra.mxu0 0
      %337 = vmatprep.subr.bf16.mxu0 0
      %338 = vmatpush1.bf16.msra.mxu0 0
      %339 = vmatprep.subr.bf16.mxu0 0
      %340 = vmatpush1.bf16.msra.mxu0 0
      %341 = vmatprep.mubr.bf16.mxu0 0
      %342 = vmatmul.mubr.bf16.gmra.mrb[0].mxu0 %v303
      %v343 = vpop.f32.mrb[0].mxu0
      %v344 = vadd.f32 0.0, %v343
      %v345 = vpop.f32.mrb[0].mxu0
      %v346 = vpop.f32.mrb[0].mxu0
      %v347 = vpop.f32.mrb[0].mxu0
      %348 = vdwg.mxu0
      %v349 = vlaneseq
      %v350 = vshrl.u32 %v349, 7
      %v351 = vlaneseq
      %v352 = vand.u32 %v351, 127
      %vm353 = vcmp.eq.s32.totalorder %v350, %v352
      %v354 = vsel %vm353, 1, 0
      %v355 = vcvt.s32.f32 %v354
      %v356 = vld [vmem:[%s287] sm:$0xff]
      %v357 = vld [vmem:[%s283] sm:$0xff]
      %v358 = vsub.f32 1.0, %v355
      %v359 = vmul.f32 %v357, %v358
      %v360 = vadd.f32 %v359, %v355
      %v361 = vsel %vm301, %v360, 0.0
      %362 = vadd.xlane.f32.xlu0 %v361
      %v363 = vpop.xlane.xlu0 %362
      %v364 = vmax.f32 %v363, 1.0
      %v365 = vrsqrt.pop %v364
      %v366 = vmul.f32 %v344, %v365
      %v368 = vsel %vm301, %v360, 0
      %370 = vmatprep.subr.mxu0 0.0
      %371 = vmatpush1.msra.mxu0 %v366
      %372 = vmatprep.subr.mxu0 0.0
      %373 = vmatpush1.msra.mxu0 0.0
      %374 = vmatprep.subr.mxu0 0.0
      %375 = vmatpush1.msra.mxu0 0.0
      %376 = vmatprep.subr.mxu0 0.0
      %377 = vmatpush1.msra.mxu0 0.0
      %378 = vmatprep.subr.mxu0 0.0
      %379 = vmatpush1.msra.mxu0 0.0
      %380 = vmatprep.subr.mxu0 0.0
      %381 = vmatpush1.msra.mxu0 0.0
      %382 = vmatprep.subr.mxu0 0.0
      %383 = vmatpush1.msra.mxu0 0.0
      %384 = vmatprep.subr.mxu0 0.0
      %385 = vmatpush1.msra.mxu0 0.0
      %386 = vmatprep.subr.mxu0 0.0
      %387 = vmatpush1.msra.mxu0 0.0
      %388 = vmatprep.subr.mxu0 0.0
      %389 = vmatpush1.msra.mxu0 0.0
      %390 = vmatprep.subr.mxu0 0.0
      %391 = vmatpush1.msra.mxu0 0.0
      %392 = vmatprep.subr.mxu0 0.0
      %393 = vmatpush1.msra.mxu0 0.0
      %394 = vmatprep.subr.mxu0 0.0
      %395 = vmatpush1.msra.mxu0 0.0
      %396 = vmatprep.subr.mxu0 0.0
      %397 = vmatpush1.msra.mxu0 0.0
      %398 = vmatprep.subr.mxu0 0.0
      %399 = vmatpush1.msra.mxu0 0.0
      %400 = vmatprep.subr.mxu0 0.0
      %401 = vmatpush1.msra.mxu0 0.0
      %402 = vmatprep.subr.mxu0 0.0
      %403 = vmatpush1.msra.mxu0 0.0
      %404 = vmatprep.subr.mxu0 0.0
      %405 = vmatpush1.msra.mxu0 0.0
      %406 = vmatprep.subr.mxu0 0.0
      %407 = vmatpush1.msra.mxu0 0.0
      %408 = vmatprep.subr.mxu0 0.0
      %409 = vmatpush1.msra.mxu0 0.0
      %410 = vmatprep.subr.mxu0 0.0
      %411 = vmatpush1.msra.mxu0 0.0
      %412 = vmatprep.subr.mxu0 0.0
      %413 = vmatpush1.msra.mxu0 0.0
      %414 = vmatprep.subr.mxu0 0.0
      %415 = vmatpush1.msra.mxu0 0.0
      %416 = vmatprep.subr.mxu0 0.0
      %417 = vmatpush1.msra.mxu0 0.0
      %418 = vmatprep.subr.mxu0 0.0
      %419 = vmatpush1.msra.mxu0 0.0
      %420 = vmatprep.subr.mxu0 0.0
      %421 = vmatpush1.msra.mxu0 0.0
      %422 = vmatprep.subr.mxu0 0.0
      %423 = vmatpush1.msra.mxu0 0.0
      %424 = vmatprep.subr.mxu0 0.0
      %425 = vmatpush1.msra.mxu0 0.0
      %426 = vmatprep.subr.mxu0 0.0
      %427 = vmatpush1.msra.mxu0 0.0
      %428 = vmatprep.subr.mxu0 0.0
      %429 = vmatpush1.msra.mxu0 0.0
      %430 = vmatprep.subr.mxu0 0.0
      %431 = vmatpush1.msra.mxu0 0.0
      %432 = vmatprep.subr.mxu0 0.0
      %433 = vmatpush1.msra.mxu0 0.0
      %434 = vmatprep.mubr.f32.mxu0 0.0
      %435 = vmatmul.mubr.f32.gmra.mrb[0].mxu0 %v368
      %v436 = vpop.f32.mrb[0].mxu0
      %v437 = vadd.f32 0.0, %v436
      %v438 = vpop.f32.mrb[0].mxu0
      %439 = vdwg.mxu0
      %v440 = vmul.f32 %v437, %v365
      %v441 = vld [vmem:[%s3] sm:$0x1]
      %v442 = vlaneseq
      %v443 = vshrl.u32 %v442, 7
      %v444 = vsub.s32 0, %v443
      %v445 = vrot.slane %v441, %v444
      %v446 = vadd.f32 %v440, %v445
      %448 = vrot.lane.b32.xlu0 %v446, 120
      %v449 = vpop.permute.xlu0 %448
      %vm450 = vcmask 31744
      %v451 = vsel %vm450, %v446, 0
      %v453 = vsel %vm450, %v449, 0
      %455 = vmatprep.subr.mxu0 0.0
      %456 = vmatpush1.xpose.msra.mxu0 %v453
      %457 = vmatprep.subr.mxu0 0.0
      %458 = vmatpush1.xpose.msra.mxu0 0.0
      %459 = vmatprep.subr.mxu0 0.0
      %460 = vmatpush1.xpose.msra.mxu0 0.0
      %461 = vmatprep.subr.mxu0 0.0
      %462 = vmatpush1.xpose.msra.mxu0 0.0
      %463 = vmatprep.subr.mxu0 0.0
      %464 = vmatpush1.xpose.msra.mxu0 0.0
      %465 = vmatprep.subr.mxu0 0.0
      %466 = vmatpush1.xpose.msra.mxu0 0.0
      %467 = vmatprep.subr.mxu0 0.0
      %468 = vmatpush1.xpose.msra.mxu0 0.0
      %469 = vmatprep.subr.mxu0 0.0
      %470 = vmatpush1.xpose.msra.mxu0 0.0
      %471 = vmatprep.subr.mxu0 0.0
      %472 = vmatpush1.xpose.msra.mxu0 0.0
      %473 = vmatprep.subr.mxu0 0.0
      %474 = vmatpush1.xpose.msra.mxu0 0.0
      %475 = vmatprep.subr.mxu0 0.0
      %476 = vmatpush1.xpose.msra.mxu0 0.0
      %477 = vmatprep.subr.mxu0 0.0
      %478 = vmatpush1.xpose.msra.mxu0 0.0
      %479 = vmatprep.subr.mxu0 0.0
      %480 = vmatpush1.xpose.msra.mxu0 0.0
      %481 = vmatprep.subr.mxu0 0.0
      %482 = vmatpush1.xpose.msra.mxu0 0.0
      %483 = vmatprep.subr.mxu0 0.0
      %484 = vmatpush1.xpose.msra.mxu0 0.0
      %485 = vmatprep.subr.mxu0 0.0
      %486 = vmatpush1.xpose.msra.mxu0 0.0
      %487 = vmatprep.subr.mxu0 0.0
      %488 = vmatpush1.xpose.msra.mxu0 0.0
      %489 = vmatprep.subr.mxu0 0.0
      %490 = vmatpush1.xpose.msra.mxu0 0.0
      %491 = vmatprep.subr.mxu0 0.0
      %492 = vmatpush1.xpose.msra.mxu0 0.0
      %493 = vmatprep.subr.mxu0 0.0
      %494 = vmatpush1.xpose.msra.mxu0 0.0
      %495 = vmatprep.subr.mxu0 0.0
      %496 = vmatpush1.xpose.msra.mxu0 0.0
      %497 = vmatprep.subr.mxu0 0.0
      %498 = vmatpush1.xpose.msra.mxu0 0.0
      %499 = vmatprep.subr.mxu0 0.0
      %500 = vmatpush1.xpose.msra.mxu0 0.0
      %501 = vmatprep.subr.mxu0 0.0
      %502 = vmatpush1.xpose.msra.mxu0 0.0
      %503 = vmatprep.subr.mxu0 0.0
      %504 = vmatpush1.xpose.msra.mxu0 0.0
      %505 = vmatprep.subr.mxu0 0.0
      %506 = vmatpush1.xpose.msra.mxu0 0.0
      %507 = vmatprep.subr.mxu0 0.0
      %508 = vmatpush1.xpose.msra.mxu0 0.0
      %509 = vmatprep.subr.mxu0 0.0
      %510 = vmatpush1.xpose.msra.mxu0 0.0
      %511 = vmatprep.subr.mxu0 0.0
      %512 = vmatpush1.xpose.msra.mxu0 0.0
      %513 = vmatprep.subr.mxu0 0.0
      %514 = vmatpush1.xpose.msra.mxu0 0.0
      %515 = vmatprep.subr.mxu0 0.0
      %516 = vmatpush1.xpose.msra.mxu0 0.0
      %517 = vmatprep.subr.mxu0 0.0
      %518 = vmatpush1.xpose.msra.mxu0 0.0
      %519 = vmatprep.mubr.f32.mxu0 0.0
      %520 = vmatmul.mubr.f32.gmra.mrb[0].mxu0 %v451
      %v521 = vpop.f32.mrb[0].mxu0
      %v522 = vadd.f32 0.0, %v521
      %v523 = vpop.f32.mrb[0].mxu0
      %524 = vdwg.mxu0
      %525 = vmatprep.subr.mxu0 0.0
      %526 = vmatpush1.xpose.msra.mxu0 %v451
      %527 = vmatprep.subr.mxu0 0.0
      %528 = vmatpush1.xpose.msra.mxu0 0.0
      %529 = vmatprep.subr.mxu0 0.0
      %530 = vmatpush1.xpose.msra.mxu0 0.0
      %531 = vmatprep.subr.mxu0 0.0
      %532 = vmatpush1.xpose.msra.mxu0 0.0
      %533 = vmatprep.subr.mxu0 0.0
      %534 = vmatpush1.xpose.msra.mxu0 0.0
      %535 = vmatprep.subr.mxu0 0.0
      %536 = vmatpush1.xpose.msra.mxu0 0.0
      %537 = vmatprep.subr.mxu0 0.0
      %538 = vmatpush1.xpose.msra.mxu0 0.0
      %539 = vmatprep.subr.mxu0 0.0
      %540 = vmatpush1.xpose.msra.mxu0 0.0
      %541 = vmatprep.subr.mxu0 0.0
      %542 = vmatpush1.xpose.msra.mxu0 0.0
      %543 = vmatprep.subr.mxu0 0.0
      %544 = vmatpush1.xpose.msra.mxu0 0.0
      %545 = vmatprep.subr.mxu0 0.0
      %546 = vmatpush1.xpose.msra.mxu0 0.0
      %547 = vmatprep.subr.mxu0 0.0
      %548 = vmatpush1.xpose.msra.mxu0 0.0
      %549 = vmatprep.subr.mxu0 0.0
      %550 = vmatpush1.xpose.msra.mxu0 0.0
      %551 = vmatprep.subr.mxu0 0.0
      %552 = vmatpush1.xpose.msra.mxu0 0.0
      %553 = vmatprep.subr.mxu0 0.0
      %554 = vmatpush1.xpose.msra.mxu0 0.0
      %555 = vmatprep.subr.mxu0 0.0
      %556 = vmatpush1.xpose.msra.mxu0 0.0
      %557 = vmatprep.subr.mxu0 0.0
      %558 = vmatpush1.xpose.msra.mxu0 0.0
      %559 = vmatprep.subr.mxu0 0.0
      %560 = vmatpush1.xpose.msra.mxu0 0.0
      %561 = vmatprep.subr.mxu0 0.0
      %562 = vmatpush1.xpose.msra.mxu0 0.0
      %563 = vmatprep.subr.mxu0 0.0
      %564 = vmatpush1.xpose.msra.mxu0 0.0
      %565 = vmatprep.subr.mxu0 0.0
      %566 = vmatpush1.xpose.msra.mxu0 0.0
      %567 = vmatprep.subr.mxu0 0.0
      %568 = vmatpush1.xpose.msra.mxu0 0.0
      %569 = vmatprep.subr.mxu0 0.0
      %570 = vmatpush1.xpose.msra.mxu0 0.0
      %571 = vmatprep.subr.mxu0 0.0
      %572 = vmatpush1.xpose.msra.mxu0 0.0
      %573 = vmatprep.subr.mxu0 0.0
      %574 = vmatpush1.xpose.msra.mxu0 0.0
      %575 = vmatprep.subr.mxu0 0.0
      %576 = vmatpush1.xpose.msra.mxu0 0.0
      %577 = vmatprep.subr.mxu0 0.0
      %578 = vmatpush1.xpose.msra.mxu0 0.0
      %579 = vmatprep.subr.mxu0 0.0
      %580 = vmatpush1.xpose.msra.mxu0 0.0
      %581 = vmatprep.subr.mxu0 0.0
      %582 = vmatpush1.xpose.msra.mxu0 0.0
      %583 = vmatprep.subr.mxu0 0.0
      %584 = vmatpush1.xpose.msra.mxu0 0.0
      %585 = vmatprep.subr.mxu0 0.0
      %586 = vmatpush1.xpose.msra.mxu0 0.0
      %587 = vmatprep.subr.mxu0 0.0
      %588 = vmatpush1.xpose.msra.mxu0 0.0
      %589 = vmatprep.mubr.f32.mxu0 0.0
      %590 = vmatmul.mubr.f32.gmra.mrb[0].mxu0 %v453
      %v591 = vpop.f32.mrb[0].mxu0
      %v592 = vadd.f32 0.0, %v591
      %v593 = vpop.f32.mrb[0].mxu0
      %594 = vdwg.mxu0
      %v595 = vmul.f32 %v522, 0.35355338
      %v596 = vtanh.pop %v595
      %v597 = vmul.f32 %v592, 0.35355338
      %v598 = vtanh.pop %v597
      %v599 = vadd.f32 %v596, %v598
      %600 = vrot.lane.b32.xlu0 %v446, 124
      %v601 = vpop.permute.xlu0 %600
      %602 = vrot.lane.b32.xlu0 %v446, 116
      %v603 = vpop.permute.xlu0 %602
      %v604 = vsel %vm450, %v601, 0
      %v606 = vsel %vm450, %v603, 0
      %608 = vmatprep.subr.mxu0 0.0
      %609 = vmatpush1.xpose.msra.mxu0 %v606
      %610 = vmatprep.subr.mxu0 0.0
      %611 = vmatpush1.xpose.msra.mxu0 0.0
      %612 = vmatprep.subr.mxu0 0.0
      %613 = vmatpush1.xpose.msra.mxu0 0.0
      %614 = vmatprep.subr.mxu0 0.0
      %615 = vmatpush1.xpose.msra.mxu0 0.0
      %616 = vmatprep.subr.mxu0 0.0
      %617 = vmatpush1.xpose.msra.mxu0 0.0
      %618 = vmatprep.subr.mxu0 0.0
      %619 = vmatpush1.xpose.msra.mxu0 0.0
      %620 = vmatprep.subr.mxu0 0.0
      %621 = vmatpush1.xpose.msra.mxu0 0.0
      %622 = vmatprep.subr.mxu0 0.0
      %623 = vmatpush1.xpose.msra.mxu0 0.0
      %624 = vmatprep.subr.mxu0 0.0
      %625 = vmatpush1.xpose.msra.mxu0 0.0
      %626 = vmatprep.subr.mxu0 0.0
      %627 = vmatpush1.xpose.msra.mxu0 0.0
      %628 = vmatprep.subr.mxu0 0.0
      %629 = vmatpush1.xpose.msra.mxu0 0.0
      %630 = vmatprep.subr.mxu0 0.0
      %631 = vmatpush1.xpose.msra.mxu0 0.0
      %632 = vmatprep.subr.mxu0 0.0
      %633 = vmatpush1.xpose.msra.mxu0 0.0
      %634 = vmatprep.subr.mxu0 0.0
      %635 = vmatpush1.xpose.msra.mxu0 0.0
      %636 = vmatprep.subr.mxu0 0.0
      %637 = vmatpush1.xpose.msra.mxu0 0.0
      %638 = vmatprep.subr.mxu0 0.0
      %639 = vmatpush1.xpose.msra.mxu0 0.0
      %640 = vmatprep.subr.mxu0 0.0
      %641 = vmatpush1.xpose.msra.mxu0 0.0
      %642 = vmatprep.subr.mxu0 0.0
      %643 = vmatpush1.xpose.msra.mxu0 0.0
      %644 = vmatprep.subr.mxu0 0.0
      %645 = vmatpush1.xpose.msra.mxu0 0.0
      %646 = vmatprep.subr.mxu0 0.0
      %647 = vmatpush1.xpose.msra.mxu0 0.0
      %648 = vmatprep.subr.mxu0 0.0
      %649 = vmatpush1.xpose.msra.mxu0 0.0
      %650 = vmatprep.subr.mxu0 0.0
      %651 = vmatpush1.xpose.msra.mxu0 0.0
      %652 = vmatprep.subr.mxu0 0.0
      %653 = vmatpush1.xpose.msra.mxu0 0.0
      %654 = vmatprep.subr.mxu0 0.0
      %655 = vmatpush1.xpose.msra.mxu0 0.0
      %656 = vmatprep.subr.mxu0 0.0
      %657 = vmatpush1.xpose.msra.mxu0 0.0
      %658 = vmatprep.subr.mxu0 0.0
      %659 = vmatpush1.xpose.msra.mxu0 0.0
      %660 = vmatprep.subr.mxu0 0.0
      %661 = vmatpush1.xpose.msra.mxu0 0.0
      %662 = vmatprep.subr.mxu0 0.0
      %663 = vmatpush1.xpose.msra.mxu0 0.0
      %664 = vmatprep.subr.mxu0 0.0
      %665 = vmatpush1.xpose.msra.mxu0 0.0
      %666 = vmatprep.subr.mxu0 0.0
      %667 = vmatpush1.xpose.msra.mxu0 0.0
      %668 = vmatprep.subr.mxu0 0.0
      %669 = vmatpush1.xpose.msra.mxu0 0.0
      %670 = vmatprep.subr.mxu0 0.0
      %671 = vmatpush1.xpose.msra.mxu0 0.0
      %672 = vmatprep.mubr.f32.mxu0 0.0
      %673 = vmatmul.mubr.f32.gmra.mrb[0].mxu0 %v604
      %v674 = vpop.f32.mrb[0].mxu0
      %v675 = vadd.f32 0.0, %v674
      %v676 = vpop.f32.mrb[0].mxu0
      %677 = vdwg.mxu0
      %678 = vmatprep.subr.mxu0 0.0
      %679 = vmatpush1.xpose.msra.mxu0 %v604
      %680 = vmatprep.subr.mxu0 0.0
      %681 = vmatpush1.xpose.msra.mxu0 0.0
      %682 = vmatprep.subr.mxu0 0.0
      %683 = vmatpush1.xpose.msra.mxu0 0.0
      %684 = vmatprep.subr.mxu0 0.0
      %685 = vmatpush1.xpose.msra.mxu0 0.0
      %686 = vmatprep.subr.mxu0 0.0
      %687 = vmatpush1.xpose.msra.mxu0 0.0
      %688 = vmatprep.subr.mxu0 0.0
      %689 = vmatpush1.xpose.msra.mxu0 0.0
      %690 = vmatprep.subr.mxu0 0.0
      %691 = vmatpush1.xpose.msra.mxu0 0.0
      %692 = vmatprep.subr.mxu0 0.0
      %693 = vmatpush1.xpose.msra.mxu0 0.0
      %694 = vmatprep.subr.mxu0 0.0
      %695 = vmatpush1.xpose.msra.mxu0 0.0
      %696 = vmatprep.subr.mxu0 0.0
      %697 = vmatpush1.xpose.msra.mxu0 0.0
      %698 = vmatprep.subr.mxu0 0.0
      %699 = vmatpush1.xpose.msra.mxu0 0.0
      %700 = vmatprep.subr.mxu0 0.0
      %701 = vmatpush1.xpose.msra.mxu0 0.0
      %702 = vmatprep.subr.mxu0 0.0
      %703 = vmatpush1.xpose.msra.mxu0 0.0
      %704 = vmatprep.subr.mxu0 0.0
      %705 = vmatpush1.xpose.msra.mxu0 0.0
      %706 = vmatprep.subr.mxu0 0.0
      %707 = vmatpush1.xpose.msra.mxu0 0.0
      %708 = vmatprep.subr.mxu0 0.0
      %709 = vmatpush1.xpose.msra.mxu0 0.0
      %710 = vmatprep.subr.mxu0 0.0
      %711 = vmatpush1.xpose.msra.mxu0 0.0
      %712 = vmatprep.subr.mxu0 0.0
      %713 = vmatpush1.xpose.msra.mxu0 0.0
      %714 = vmatprep.subr.mxu0 0.0
      %715 = vmatpush1.xpose.msra.mxu0 0.0
      %716 = vmatprep.subr.mxu0 0.0
      %717 = vmatpush1.xpose.msra.mxu0 0.0
      %718 = vmatprep.subr.mxu0 0.0
      %719 = vmatpush1.xpose.msra.mxu0 0.0
      %720 = vmatprep.subr.mxu0 0.0
      %721 = vmatpush1.xpose.msra.mxu0 0.0
      %722 = vmatprep.subr.mxu0 0.0
      %723 = vmatpush1.xpose.msra.mxu0 0.0
      %724 = vmatprep.subr.mxu0 0.0
      %725 = vmatpush1.xpose.msra.mxu0 0.0
      %726 = vmatprep.subr.mxu0 0.0
      %727 = vmatpush1.xpose.msra.mxu0 0.0
      %728 = vmatprep.subr.mxu0 0.0
      %729 = vmatpush1.xpose.msra.mxu0 0.0
      %730 = vmatprep.subr.mxu0 0.0
      %731 = vmatpush1.xpose.msra.mxu0 0.0
      %732 = vmatprep.subr.mxu0 0.0
      %733 = vmatpush1.xpose.msra.mxu0 0.0
      %734 = vmatprep.subr.mxu0 0.0
      %735 = vmatpush1.xpose.msra.mxu0 0.0
      %736 = vmatprep.subr.mxu0 0.0
      %737 = vmatpush1.xpose.msra.mxu0 0.0
      %738 = vmatprep.subr.mxu0 0.0
      %739 = vmatpush1.xpose.msra.mxu0 0.0
      %740 = vmatprep.subr.mxu0 0.0
      %741 = vmatpush1.xpose.msra.mxu0 0.0
      %742 = vmatprep.mubr.f32.mxu0 0.0
      %743 = vmatmul.mubr.f32.gmra.mrb[0].mxu0 %v606
      %v744 = vpop.f32.mrb[0].mxu0
      %v745 = vadd.f32 0.0, %v744
      %v746 = vpop.f32.mrb[0].mxu0
      %747 = vdwg.mxu0
      %v748 = vmul.f32 %v675, 0.35355338
      %v749 = vtanh.pop %v748
      %v750 = vmul.f32 %v745, 0.35355338
      %v751 = vtanh.pop %v750
      %v752 = vadd.f32 %v749, %v751
      %v753 = vadd.f32 %v599, %v752
      %v754 = vmul.f32 %v753, 0.25
      %755 = vst.msk [vmem:[%s292] sm:$0xff] %vm301, %v754
      %s756 = scalar_lea.vmem %s283, 8
      %v757 = vld [vmem:[%s756] sm:$0xff]
      %v758 = vmul.f32 %v757, %v358
      %v759 = vadd.f32 %v758, %v355
      %v760 = vsel %vm301, %v759, 0.0
      %761 = vadd.xlane.f32.xlu0 %v760
      %v762 = vpop.xlane.xlu0 %761
      %v763 = vmax.f32 %v762, 1.0
      %v764 = vrsqrt.pop %v763
      %v765 = vmul.f32 %v344, %v764
      %767 = vrot.lane.b32.xlu0 %v765, 104
      %v768 = vpop.permute.xlu0 %767
      %v771 = vsel %vm301, %v759, 0
      %773 = vmatprep.subr.mxu0 0.0
      %774 = vmatpush1.msra.mxu0 %v768
      %775 = vmatprep.subr.mxu0 0.0
      %776 = vmatpush1.msra.mxu0 0.0
      %777 = vmatprep.subr.mxu0 0.0
      %778 = vmatpush1.msra.mxu0 0.0
      %779 = vmatprep.subr.mxu0 0.0
      %780 = vmatpush1.msra.mxu0 0.0
      %781 = vmatprep.subr.mxu0 0.0
      %782 = vmatpush1.msra.mxu0 0.0
      %783 = vmatprep.subr.mxu0 0.0
      %784 = vmatpush1.msra.mxu0 0.0
      %785 = vmatprep.subr.mxu0 0.0
      %786 = vmatpush1.msra.mxu0 0.0
      %787 = vmatprep.subr.mxu0 0.0
      %788 = vmatpush1.msra.mxu0 0.0
      %789 = vmatprep.subr.mxu0 0.0
      %790 = vmatpush1.msra.mxu0 0.0
      %791 = vmatprep.subr.mxu0 0.0
      %792 = vmatpush1.msra.mxu0 0.0
      %793 = vmatprep.subr.mxu0 0.0
      %794 = vmatpush1.msra.mxu0 0.0
      %795 = vmatprep.subr.mxu0 0.0
      %796 = vmatpush1.msra.mxu0 0.0
      %797 = vmatprep.subr.mxu0 0.0
      %798 = vmatpush1.msra.mxu0 0.0
      %799 = vmatprep.subr.mxu0 0.0
      %800 = vmatpush1.msra.mxu0 0.0
      %801 = vmatprep.subr.mxu0 0.0
      %802 = vmatpush1.msra.mxu0 0.0
      %803 = vmatprep.subr.mxu0 0.0
      %804 = vmatpush1.msra.mxu0 0.0
      %805 = vmatprep.subr.mxu0 0.0
      %806 = vmatpush1.msra.mxu0 0.0
      %807 = vmatprep.subr.mxu0 0.0
      %808 = vmatpush1.msra.mxu0 0.0
      %809 = vmatprep.subr.mxu0 0.0
      %810 = vmatpush1.msra.mxu0 0.0
      %811 = vmatprep.subr.mxu0 0.0
      %812 = vmatpush1.msra.mxu0 0.0
      %813 = vmatprep.subr.mxu0 0.0
      %814 = vmatpush1.msra.mxu0 0.0
      %815 = vmatprep.subr.mxu0 0.0
      %816 = vmatpush1.msra.mxu0 0.0
      %817 = vmatprep.subr.mxu0 0.0
      %818 = vmatpush1.msra.mxu0 0.0
      %819 = vmatprep.subr.mxu0 0.0
      %820 = vmatpush1.msra.mxu0 0.0
      %821 = vmatprep.subr.mxu0 0.0
      %822 = vmatpush1.msra.mxu0 0.0
      %823 = vmatprep.subr.mxu0 0.0
      %824 = vmatpush1.msra.mxu0 0.0
      %825 = vmatprep.subr.mxu0 0.0
      %826 = vmatpush1.msra.mxu0 0.0
      %827 = vmatprep.subr.mxu0 0.0
      %828 = vmatpush1.msra.mxu0 0.0
      %829 = vmatprep.subr.mxu0 0.0
      %830 = vmatpush1.msra.mxu0 0.0
      %831 = vmatprep.subr.mxu0 0.0
      %832 = vmatpush1.msra.mxu0 0.0
      %833 = vmatprep.subr.mxu0 0.0
      %834 = vmatpush1.msra.mxu0 0.0
      %835 = vmatprep.subr.mxu0 0.0
      %836 = vmatpush1.msra.mxu0 0.0
      %837 = vmatprep.mubr.f32.mxu0 0.0
      %838 = vmatmul.mubr.f32.gmra.mrb[0].mxu0 %v771
      %v839 = vpop.f32.mrb[0].mxu0
      %v840 = vadd.f32 0.0, %v839
      %v841 = vpop.f32.mrb[0].mxu0
      %842 = vdwg.mxu0
      %v843 = vmul.f32 %v840, %v764
      %v844 = vld [vmem:[%s3 + $0x1] sm:$0x1]
      %v845 = vlaneseq
      %v846 = vshrl.u32 %v845, 7
      %v847 = vsub.s32 0, %v846
      %v848 = vrot.slane %v844, %v847
      %v849 = vadd.f32 %v843, %v848
      %851 = vrot.lane.b32.xlu0 %v849, 120
      %v852 = vpop.permute.xlu0 %851
      %v853 = vsel %vm450, %v849, 0
      %v855 = vsel %vm450, %v852, 0
      %857 = vmatprep.subr.mxu0 0.0
      %858 = vmatpush1.xpose.msra.mxu0 %v855
      %859 = vmatprep.subr.mxu0 0.0
      %860 = vmatpush1.xpose.msra.mxu0 0.0
      %861 = vmatprep.subr.mxu0 0.0
      %862 = vmatpush1.xpose.msra.mxu0 0.0
      %863 = vmatprep.subr.mxu0 0.0
      %864 = vmatpush1.xpose.msra.mxu0 0.0
      %865 = vmatprep.subr.mxu0 0.0
      %866 = vmatpush1.xpose.msra.mxu0 0.0
      %867 = vmatprep.subr.mxu0 0.0
      %868 = vmatpush1.xpose.msra.mxu0 0.0
      %869 = vmatprep.subr.mxu0 0.0
      %870 = vmatpush1.xpose.msra.mxu0 0.0
      %871 = vmatprep.subr.mxu0 0.0
      %872 = vmatpush1.xpose.msra.mxu0 0.0
      %873 = vmatprep.subr.mxu0 0.0
      %874 = vmatpush1.xpose.msra.mxu0 0.0
      %875 = vmatprep.subr.mxu0 0.0
      %876 = vmatpush1.xpose.msra.mxu0 0.0
      %877 = vmatprep.subr.mxu0 0.0
      %878 = vmatpush1.xpose.msra.mxu0 0.0
      %879 = vmatprep.subr.mxu0 0.0
      %880 = vmatpush1.xpose.msra.mxu0 0.0
      %881 = vmatprep.subr.mxu0 0.0
      %882 = vmatpush1.xpose.msra.mxu0 0.0
      %883 = vmatprep.subr.mxu0 0.0
      %884 = vmatpush1.xpose.msra.mxu0 0.0
      %885 = vmatprep.subr.mxu0 0.0
      %886 = vmatpush1.xpose.msra.mxu0 0.0
      %887 = vmatprep.subr.mxu0 0.0
      %888 = vmatpush1.xpose.msra.mxu0 0.0
      %889 = vmatprep.subr.mxu0 0.0
      %890 = vmatpush1.xpose.msra.mxu0 0.0
      %891 = vmatprep.subr.mxu0 0.0
      %892 = vmatpush1.xpose.msra.mxu0 0.0
      %893 = vmatprep.subr.mxu0 0.0
      %894 = vmatpush1.xpose.msra.mxu0 0.0
      %895 = vmatprep.subr.mxu0 0.0
      %896 = vmatpush1.xpose.msra.mxu0 0.0
      %897 = vmatprep.subr.mxu0 0.0
      %898 = vmatpush1.xpose.msra.mxu0 0.0
      %899 = vmatprep.subr.mxu0 0.0
      %900 = vmatpush1.xpose.msra.mxu0 0.0
      %901 = vmatprep.subr.mxu0 0.0
      %902 = vmatpush1.xpose.msra.mxu0 0.0
      %903 = vmatprep.subr.mxu0 0.0
      %904 = vmatpush1.xpose.msra.mxu0 0.0
      %905 = vmatprep.subr.mxu0 0.0
      %906 = vmatpush1.xpose.msra.mxu0 0.0
      %907 = vmatprep.subr.mxu0 0.0
      %908 = vmatpush1.xpose.msra.mxu0 0.0
      %909 = vmatprep.subr.mxu0 0.0
      %910 = vmatpush1.xpose.msra.mxu0 0.0
      %911 = vmatprep.subr.mxu0 0.0
      %912 = vmatpush1.xpose.msra.mxu0 0.0
      %913 = vmatprep.subr.mxu0 0.0
      %914 = vmatpush1.xpose.msra.mxu0 0.0
      %915 = vmatprep.subr.mxu0 0.0
      %916 = vmatpush1.xpose.msra.mxu0 0.0
      %917 = vmatprep.subr.mxu0 0.0
      %918 = vmatpush1.xpose.msra.mxu0 0.0
      %919 = vmatprep.subr.mxu0 0.0
      %920 = vmatpush1.xpose.msra.mxu0 0.0
      %921 = vmatprep.mubr.f32.mxu0 0.0
      %922 = vmatmul.mubr.f32.gmra.mrb[0].mxu0 %v853
      %v923 = vpop.f32.mrb[0].mxu0
      %v924 = vadd.f32 0.0, %v923
      %v925 = vpop.f32.mrb[0].mxu0
      %926 = vdwg.mxu0
      %927 = vmatprep.subr.mxu0 0.0
      %928 = vmatpush1.xpose.msra.mxu0 %v853
      %929 = vmatprep.subr.mxu0 0.0
      %930 = vmatpush1.xpose.msra.mxu0 0.0
      %931 = vmatprep.subr.mxu0 0.0
      %932 = vmatpush1.xpose.msra.mxu0 0.0
      %933 = vmatprep.subr.mxu0 0.0
      %934 = vmatpush1.xpose.msra.mxu0 0.0
      %935 = vmatprep.subr.mxu0 0.0
      %936 = vmatpush1.xpose.msra.mxu0 0.0
      %937 = vmatprep.subr.mxu0 0.0
      %938 = vmatpush1.xpose.msra.mxu0 0.0
      %939 = vmatprep.subr.mxu0 0.0
      %940 = vmatpush1.xpose.msra.mxu0 0.0
      %941 = vmatprep.subr.mxu0 0.0
      %942 = vmatpush1.xpose.msra.mxu0 0.0
      %943 = vmatprep.subr.mxu0 0.0
      %944 = vmatpush1.xpose.msra.mxu0 0.0
      %945 = vmatprep.subr.mxu0 0.0
      %946 = vmatpush1.xpose.msra.mxu0 0.0
      %947 = vmatprep.subr.mxu0 0.0
      %948 = vmatpush1.xpose.msra.mxu0 0.0
      %949 = vmatprep.subr.mxu0 0.0
      %950 = vmatpush1.xpose.msra.mxu0 0.0
      %951 = vmatprep.subr.mxu0 0.0
      %952 = vmatpush1.xpose.msra.mxu0 0.0
      %953 = vmatprep.subr.mxu0 0.0
      %954 = vmatpush1.xpose.msra.mxu0 0.0
      %955 = vmatprep.subr.mxu0 0.0
      %956 = vmatpush1.xpose.msra.mxu0 0.0
      %957 = vmatprep.subr.mxu0 0.0
      %958 = vmatpush1.xpose.msra.mxu0 0.0
      %959 = vmatprep.subr.mxu0 0.0
      %960 = vmatpush1.xpose.msra.mxu0 0.0
      %961 = vmatprep.subr.mxu0 0.0
      %962 = vmatpush1.xpose.msra.mxu0 0.0
      %963 = vmatprep.subr.mxu0 0.0
      %964 = vmatpush1.xpose.msra.mxu0 0.0
      %965 = vmatprep.subr.mxu0 0.0
      %966 = vmatpush1.xpose.msra.mxu0 0.0
      %967 = vmatprep.subr.mxu0 0.0
      %968 = vmatpush1.xpose.msra.mxu0 0.0
      %969 = vmatprep.subr.mxu0 0.0
      %970 = vmatpush1.xpose.msra.mxu0 0.0
      %971 = vmatprep.subr.mxu0 0.0
      %972 = vmatpush1.xpose.msra.mxu0 0.0
      %973 = vmatprep.subr.mxu0 0.0
      %974 = vmatpush1.xpose.msra.mxu0 0.0
      %975 = vmatprep.subr.mxu0 0.0
      %976 = vmatpush1.xpose.msra.mxu0 0.0
      %977 = vmatprep.subr.mxu0 0.0
      %978 = vmatpush1.xpose.msra.mxu0 0.0
      %979 = vmatprep.subr.mxu0 0.0
      %980 = vmatpush1.xpose.msra.mxu0 0.0
      %981 = vmatprep.subr.mxu0 0.0
      %982 = vmatpush1.xpose.msra.mxu0 0.0
      %983 = vmatprep.subr.mxu0 0.0
      %984 = vmatpush1.xpose.msra.mxu0 0.0
      %985 = vmatprep.subr.mxu0 0.0
      %986 = vmatpush1.xpose.msra.mxu0 0.0
      %987 = vmatprep.subr.mxu0 0.0
      %988 = vmatpush1.xpose.msra.mxu0 0.0
      %989 = vmatprep.subr.mxu0 0.0
      %990 = vmatpush1.xpose.msra.mxu0 0.0
      %991 = vmatprep.mubr.f32.mxu0 0.0
      %992 = vmatmul.mubr.f32.gmra.mrb[0].mxu0 %v855
      %v993 = vpop.f32.mrb[0].mxu0
      %v994 = vadd.f32 0.0, %v993
      %v995 = vpop.f32.mrb[0].mxu0
      %996 = vdwg.mxu0
      %v997 = vmul.f32 %v924, 0.35355338
      %v998 = vtanh.pop %v997
      %v999 = vmul.f32 %v994, 0.35355338
      %v1000 = vtanh.pop %v999
      %v1001 = vadd.f32 %v998, %v1000
      %1002 = vrot.lane.b32.xlu0 %v849, 124
      %v1003 = vpop.permute.xlu0 %1002
      %1004 = vrot.lane.b32.xlu0 %v849, 116
      %v1005 = vpop.permute.xlu0 %1004
      %v1006 = vsel %vm450, %v1003, 0
      %v1008 = vsel %vm450, %v1005, 0
      %1010 = vmatprep.subr.mxu0 0.0
      %1011 = vmatpush1.xpose.msra.mxu0 %v1008
      %1012 = vmatprep.subr.mxu0 0.0
      %1013 = vmatpush1.xpose.msra.mxu0 0.0
      %1014 = vmatprep.subr.mxu0 0.0
      %1015 = vmatpush1.xpose.msra.mxu0 0.0
      %1016 = vmatprep.subr.mxu0 0.0
      %1017 = vmatpush1.xpose.msra.mxu0 0.0
      %1018 = vmatprep.subr.mxu0 0.0
      %1019 = vmatpush1.xpose.msra.mxu0 0.0
      %1020 = vmatprep.subr.mxu0 0.0
      %1021 = vmatpush1.xpose.msra.mxu0 0.0
      %1022 = vmatprep.subr.mxu0 0.0
      %1023 = vmatpush1.xpose.msra.mxu0 0.0
      %1024 = vmatprep.subr.mxu0 0.0
      %1025 = vmatpush1.xpose.msra.mxu0 0.0
      %1026 = vmatprep.subr.mxu0 0.0
      %1027 = vmatpush1.xpose.msra.mxu0 0.0
      %1028 = vmatprep.subr.mxu0 0.0
      %1029 = vmatpush1.xpose.msra.mxu0 0.0
      %1030 = vmatprep.subr.mxu0 0.0
      %1031 = vmatpush1.xpose.msra.mxu0 0.0
      %1032 = vmatprep.subr.mxu0 0.0
      %1033 = vmatpush1.xpose.msra.mxu0 0.0
      %1034 = vmatprep.subr.mxu0 0.0
      %1035 = vmatpush1.xpose.msra.mxu0 0.0
      %1036 = vmatprep.subr.mxu0 0.0
      %1037 = vmatpush1.xpose.msra.mxu0 0.0
      %1038 = vmatprep.subr.mxu0 0.0
      %1039 = vmatpush1.xpose.msra.mxu0 0.0
      %1040 = vmatprep.subr.mxu0 0.0
      %1041 = vmatpush1.xpose.msra.mxu0 0.0
      %1042 = vmatprep.subr.mxu0 0.0
      %1043 = vmatpush1.xpose.msra.mxu0 0.0
      %1044 = vmatprep.subr.mxu0 0.0
      %1045 = vmatpush1.xpose.msra.mxu0 0.0
      %1046 = vmatprep.subr.mxu0 0.0
      %1047 = vmatpush1.xpose.msra.mxu0 0.0
      %1048 = vmatprep.subr.mxu0 0.0
      %1049 = vmatpush1.xpose.msra.mxu0 0.0
      %1050 = vmatprep.subr.mxu0 0.0
      %1051 = vmatpush1.xpose.msra.mxu0 0.0
      %1052 = vmatprep.subr.mxu0 0.0
      %1053 = vmatpush1.xpose.msra.mxu0 0.0
      %1054 = vmatprep.subr.mxu0 0.0
      %1055 = vmatpush1.xpose.msra.mxu0 0.0
      %1056 = vmatprep.subr.mxu0 0.0
      %1057 = vmatpush1.xpose.msra.mxu0 0.0
      %1058 = vmatprep.subr.mxu0 0.0
      %1059 = vmatpush1.xpose.msra.mxu0 0.0
      %1060 = vmatprep.subr.mxu0 0.0
      %1061 = vmatpush1.xpose.msra.mxu0 0.0
      %1062 = vmatprep.subr.mxu0 0.0
      %1063 = vmatpush1.xpose.msra.mxu0 0.0
      %1064 = vmatprep.subr.mxu0 0.0
      %1065 = vmatpush1.xpose.msra.mxu0 0.0
      %1066 = vmatprep.subr.mxu0 0.0
      %1067 = vmatpush1.xpose.msra.mxu0 0.0
      %1068 = vmatprep.subr.mxu0 0.0
      %1069 = vmatpush1.xpose.msra.mxu0 0.0
      %1070 = vmatprep.subr.mxu0 0.0
      %1071 = vmatpush1.xpose.msra.mxu0 0.0
      %1072 = vmatprep.subr.mxu0 0.0
      %1073 = vmatpush1.xpose.msra.mxu0 0.0
      %1074 = vmatprep.mubr.f32.mxu0 0.0
      %1075 = vmatmul.mubr.f32.gmra.mrb[0].mxu0 %v1006
      %v1076 = vpop.f32.mrb[0].mxu0
      %v1077 = vadd.f32 0.0, %v1076
      %v1078 = vpop.f32.mrb[0].mxu0
      %1079 = vdwg.mxu0
      %1080 = vmatprep.subr.mxu0 0.0
      %1081 = vmatpush1.xpose.msra.mxu0 %v1006
      %1082 = vmatprep.subr.mxu0 0.0
      %1083 = vmatpush1.xpose.msra.mxu0 0.0
      %1084 = vmatprep.subr.mxu0 0.0
      %1085 = vmatpush1.xpose.msra.mxu0 0.0
      %1086 = vmatprep.subr.mxu0 0.0
      %1087 = vmatpush1.xpose.msra.mxu0 0.0
      %1088 = vmatprep.subr.mxu0 0.0
      %1089 = vmatpush1.xpose.msra.mxu0 0.0
      %1090 = vmatprep.subr.mxu0 0.0
      %1091 = vmatpush1.xpose.msra.mxu0 0.0
      %1092 = vmatprep.subr.mxu0 0.0
      %1093 = vmatpush1.xpose.msra.mxu0 0.0
      %1094 = vmatprep.subr.mxu0 0.0
      %1095 = vmatpush1.xpose.msra.mxu0 0.0
      %1096 = vmatprep.subr.mxu0 0.0
      %1097 = vmatpush1.xpose.msra.mxu0 0.0
      %1098 = vmatprep.subr.mxu0 0.0
      %1099 = vmatpush1.xpose.msra.mxu0 0.0
      %1100 = vmatprep.subr.mxu0 0.0
      %1101 = vmatpush1.xpose.msra.mxu0 0.0
      %1102 = vmatprep.subr.mxu0 0.0
      %1103 = vmatpush1.xpose.msra.mxu0 0.0
      %1104 = vmatprep.subr.mxu0 0.0
      %1105 = vmatpush1.xpose.msra.mxu0 0.0
      %1106 = vmatprep.subr.mxu0 0.0
      %1107 = vmatpush1.xpose.msra.mxu0 0.0
      %1108 = vmatprep.subr.mxu0 0.0
      %1109 = vmatpush1.xpose.msra.mxu0 0.0
      %1110 = vmatprep.subr.mxu0 0.0
      %1111 = vmatpush1.xpose.msra.mxu0 0.0
      %1112 = vmatprep.subr.mxu0 0.0
      %1113 = vmatpush1.xpose.msra.mxu0 0.0
      %1114 = vmatprep.subr.mxu0 0.0
      %1115 = vmatpush1.xpose.msra.mxu0 0.0
      %1116 = vmatprep.subr.mxu0 0.0
      %1117 = vmatpush1.xpose.msra.mxu0 0.0
      %1118 = vmatprep.subr.mxu0 0.0
      %1119 = vmatpush1.xpose.msra.mxu0 0.0
      %1120 = vmatprep.subr.mxu0 0.0
      %1121 = vmatpush1.xpose.msra.mxu0 0.0
      %1122 = vmatprep.subr.mxu0 0.0
      %1123 = vmatpush1.xpose.msra.mxu0 0.0
      %1124 = vmatprep.subr.mxu0 0.0
      %1125 = vmatpush1.xpose.msra.mxu0 0.0
      %1126 = vmatprep.subr.mxu0 0.0
      %1127 = vmatpush1.xpose.msra.mxu0 0.0
      %1128 = vmatprep.subr.mxu0 0.0
      %1129 = vmatpush1.xpose.msra.mxu0 0.0
      %1130 = vmatprep.subr.mxu0 0.0
      %1131 = vmatpush1.xpose.msra.mxu0 0.0
      %1132 = vmatprep.subr.mxu0 0.0
      %1133 = vmatpush1.xpose.msra.mxu0 0.0
      %1134 = vmatprep.subr.mxu0 0.0
      %1135 = vmatpush1.xpose.msra.mxu0 0.0
      %1136 = vmatprep.subr.mxu0 0.0
      %1137 = vmatpush1.xpose.msra.mxu0 0.0
      %1138 = vmatprep.subr.mxu0 0.0
      %1139 = vmatpush1.xpose.msra.mxu0 0.0
      %1140 = vmatprep.subr.mxu0 0.0
      %1141 = vmatpush1.xpose.msra.mxu0 0.0
      %1142 = vmatprep.subr.mxu0 0.0
      %1143 = vmatpush1.xpose.msra.mxu0 0.0
      %1144 = vmatprep.mubr.f32.mxu0 0.0
      %1145 = vmatmul.mubr.f32.gmra.mrb[0].mxu0 %v1008
      %v1146 = vpop.f32.mrb[0].mxu0
      %v1147 = vadd.f32 0.0, %v1146
      %v1148 = vpop.f32.mrb[0].mxu0
      %1149 = vdwg.mxu0
      %v1150 = vmul.f32 %v1077, 0.35355338
      %v1151 = vtanh.pop %v1150
      %v1152 = vmul.f32 %v1147, 0.35355338
      %v1153 = vtanh.pop %v1152
      %v1154 = vadd.f32 %v1151, %v1153
      %v1155 = vadd.f32 %v1001, %v1154
      %v1156 = vmul.f32 %v1155, 0.25
      %s1157 = scalar_lea.vmem %s292, 8
      %1158 = vst.msk [vmem:[%s1157] sm:$0xff] %vm301, %v1156
      %s1159 = scalar_lea.vmem %s283, 16
      %v1160 = vld [vmem:[%s1159] sm:$0xff]
      %v1161 = vmul.f32 %v1160, %v358
      %v1162 = vadd.f32 %v1161, %v355
      %v1163 = vsel %vm301, %v1162, 0.0
      %1164 = vadd.xlane.f32.xlu0 %v1163
      %v1165 = vpop.xlane.xlu0 %1164
      %v1166 = vmax.f32 %v1165, 1.0
      %v1167 = vrsqrt.pop %v1166
      %v1168 = vmul.f32 %v344, %v1167
      %1170 = vrot.lane.b32.xlu0 %v1168, 80
      %v1171 = vpop.permute.xlu0 %1170
      %v1174 = vsel %vm301, %v1162, 0
      %1176 = vmatprep.subr.mxu0 0.0
      %1177 = vmatpush1.msra.mxu0 %v1171
      %1178 = vmatprep.subr.mxu0 0.0
      %1179 = vmatpush1.msra.mxu0 0.0
      %1180 = vmatprep.subr.mxu0 0.0
      %1181 = vmatpush1.msra.mxu0 0.0
      %1182 = vmatprep.subr.mxu0 0.0
      %1183 = vmatpush1.msra.mxu0 0.0
      %1184 = vmatprep.subr.mxu0 0.0
      %1185 = vmatpush1.msra.mxu0 0.0
      %1186 = vmatprep.subr.mxu0 0.0
      %1187 = vmatpush1.msra.mxu0 0.0
      %1188 = vmatprep.subr.mxu0 0.0
      %1189 = vmatpush1.msra.mxu0 0.0
      %1190 = vmatprep.subr.mxu0 0.0
      %1191 = vmatpush1.msra.mxu0 0.0
      %1192 = vmatprep.subr.mxu0 0.0
      %1193 = vmatpush1.msra.mxu0 0.0
      %1194 = vmatprep.subr.mxu0 0.0
      %1195 = vmatpush1.msra.mxu0 0.0
      %1196 = vmatprep.subr.mxu0 0.0
      %1197 = vmatpush1.msra.mxu0 0.0
      %1198 = vmatprep.subr.mxu0 0.0
      %1199 = vmatpush1.msra.mxu0 0.0
      %1200 = vmatprep.subr.mxu0 0.0
      %1201 = vmatpush1.msra.mxu0 0.0
      %1202 = vmatprep.subr.mxu0 0.0
      %1203 = vmatpush1.msra.mxu0 0.0
      %1204 = vmatprep.subr.mxu0 0.0
      %1205 = vmatpush1.msra.mxu0 0.0
      %1206 = vmatprep.subr.mxu0 0.0
      %1207 = vmatpush1.msra.mxu0 0.0
      %1208 = vmatprep.subr.mxu0 0.0
      %1209 = vmatpush1.msra.mxu0 0.0
      %1210 = vmatprep.subr.mxu0 0.0
      %1211 = vmatpush1.msra.mxu0 0.0
      %1212 = vmatprep.subr.mxu0 0.0
      %1213 = vmatpush1.msra.mxu0 0.0
      %1214 = vmatprep.subr.mxu0 0.0
      %1215 = vmatpush1.msra.mxu0 0.0
      %1216 = vmatprep.subr.mxu0 0.0
      %1217 = vmatpush1.msra.mxu0 0.0
      %1218 = vmatprep.subr.mxu0 0.0
      %1219 = vmatpush1.msra.mxu0 0.0
      %1220 = vmatprep.subr.mxu0 0.0
      %1221 = vmatpush1.msra.mxu0 0.0
      %1222 = vmatprep.subr.mxu0 0.0
      %1223 = vmatpush1.msra.mxu0 0.0
      %1224 = vmatprep.subr.mxu0 0.0
      %1225 = vmatpush1.msra.mxu0 0.0
      %1226 = vmatprep.subr.mxu0 0.0
      %1227 = vmatpush1.msra.mxu0 0.0
      %1228 = vmatprep.subr.mxu0 0.0
      %1229 = vmatpush1.msra.mxu0 0.0
      %1230 = vmatprep.subr.mxu0 0.0
      %1231 = vmatpush1.msra.mxu0 0.0
      %1232 = vmatprep.subr.mxu0 0.0
      %1233 = vmatpush1.msra.mxu0 0.0
      %1234 = vmatprep.subr.mxu0 0.0
      %1235 = vmatpush1.msra.mxu0 0.0
      %1236 = vmatprep.subr.mxu0 0.0
      %1237 = vmatpush1.msra.mxu0 0.0
      %1238 = vmatprep.subr.mxu0 0.0
      %1239 = vmatpush1.msra.mxu0 0.0
      %1240 = vmatprep.mubr.f32.mxu0 0.0
      %1241 = vmatmul.mubr.f32.gmra.mrb[0].mxu0 %v1174
      %v1242 = vpop.f32.mrb[0].mxu0
      %v1243 = vadd.f32 0.0, %v1242
      %v1244 = vpop.f32.mrb[0].mxu0
      %1245 = vdwg.mxu0
      %v1246 = vmul.f32 %v1243, %v1167
      %v1247 = vld [vmem:[%s3 + $0x2] sm:$0x1]
      %v1248 = vlaneseq
      %v1249 = vshrl.u32 %v1248, 7
      %v1250 = vsub.s32 0, %v1249
      %v1251 = vrot.slane %v1247, %v1250
      %v1252 = vadd.f32 %v1246, %v1251
      %1254 = vrot.lane.b32.xlu0 %v1252, 120
      %v1255 = vpop.permute.xlu0 %1254
      %v1256 = vsel %vm450, %v1252, 0
      %v1258 = vsel %vm450, %v1255, 0
      %1260 = vmatprep.subr.mxu0 0.0
      %1261 = vmatpush1.xpose.msra.mxu0 %v1258
      %1262 = vmatprep.subr.mxu0 0.0
      %1263 = vmatpush1.xpose.msra.mxu0 0.0
      %1264 = vmatprep.subr.mxu0 0.0
      %1265 = vmatpush1.xpose.msra.mxu0 0.0
      %1266 = vmatprep.subr.mxu0 0.0
      %1267 = vmatpush1.xpose.msra.mxu0 0.0
      %1268 = vmatprep.subr.mxu0 0.0
      %1269 = vmatpush1.xpose.msra.mxu0 0.0
      %1270 = vmatprep.subr.mxu0 0.0
      %1271 = vmatpush1.xpose.msra.mxu0 0.0
      %1272 = vmatprep.subr.mxu0 0.0
      %1273 = vmatpush1.xpose.msra.mxu0 0.0
      %1274 = vmatprep.subr.mxu0 0.0
      %1275 = vmatpush1.xpose.msra.mxu0 0.0
      %1276 = vmatprep.subr.mxu0 0.0
      %1277 = vmatpush1.xpose.msra.mxu0 0.0
      %1278 = vmatprep.subr.mxu0 0.0
      %1279 = vmatpush1.xpose.msra.mxu0 0.0
      %1280 = vmatprep.subr.mxu0 0.0
      %1281 = vmatpush1.xpose.msra.mxu0 0.0
      %1282 = vmatprep.subr.mxu0 0.0
      %1283 = vmatpush1.xpose.msra.mxu0 0.0
      %1284 = vmatprep.subr.mxu0 0.0
      %1285 = vmatpush1.xpose.msra.mxu0 0.0
      %1286 = vmatprep.subr.mxu0 0.0
      %1287 = vmatpush1.xpose.msra.mxu0 0.0
      %1288 = vmatprep.subr.mxu0 0.0
      %1289 = vmatpush1.xpose.msra.mxu0 0.0
      %1290 = vmatprep.subr.mxu0 0.0
      %1291 = vmatpush1.xpose.msra.mxu0 0.0
      %1292 = vmatprep.subr.mxu0 0.0
      %1293 = vmatpush1.xpose.msra.mxu0 0.0
      %1294 = vmatprep.subr.mxu0 0.0
      %1295 = vmatpush1.xpose.msra.mxu0 0.0
      %1296 = vmatprep.subr.mxu0 0.0
      %1297 = vmatpush1.xpose.msra.mxu0 0.0
      %1298 = vmatprep.subr.mxu0 0.0
      %1299 = vmatpush1.xpose.msra.mxu0 0.0
      %1300 = vmatprep.subr.mxu0 0.0
      %1301 = vmatpush1.xpose.msra.mxu0 0.0
      %1302 = vmatprep.subr.mxu0 0.0
      %1303 = vmatpush1.xpose.msra.mxu0 0.0
      %1304 = vmatprep.subr.mxu0 0.0
      %1305 = vmatpush1.xpose.msra.mxu0 0.0
      %1306 = vmatprep.subr.mxu0 0.0
      %1307 = vmatpush1.xpose.msra.mxu0 0.0
      %1308 = vmatprep.subr.mxu0 0.0
      %1309 = vmatpush1.xpose.msra.mxu0 0.0
      %1310 = vmatprep.subr.mxu0 0.0
      %1311 = vmatpush1.xpose.msra.mxu0 0.0
      %1312 = vmatprep.subr.mxu0 0.0
      %1313 = vmatpush1.xpose.msra.mxu0 0.0
      %1314 = vmatprep.subr.mxu0 0.0
      %1315 = vmatpush1.xpose.msra.mxu0 0.0
      %1316 = vmatprep.subr.mxu0 0.0
      %1317 = vmatpush1.xpose.msra.mxu0 0.0
      %1318 = vmatprep.subr.mxu0 0.0
      %1319 = vmatpush1.xpose.msra.mxu0 0.0
      %1320 = vmatprep.subr.mxu0 0.0
      %1321 = vmatpush1.xpose.msra.mxu0 0.0
      %1322 = vmatprep.subr.mxu0 0.0
      %1323 = vmatpush1.xpose.msra.mxu0 0.0
      %1324 = vmatprep.mubr.f32.mxu0 0.0
      %1325 = vmatmul.mubr.f32.gmra.mrb[0].mxu0 %v1256
      %v1326 = vpop.f32.mrb[0].mxu0
      %v1327 = vadd.f32 0.0, %v1326
      %v1328 = vpop.f32.mrb[0].mxu0
      %1329 = vdwg.mxu0
      %1330 = vmatprep.subr.mxu0 0.0
      %1331 = vmatpush1.xpose.msra.mxu0 %v1256
      %1332 = vmatprep.subr.mxu0 0.0
      %1333 = vmatpush1.xpose.msra.mxu0 0.0
      %1334 = vmatprep.subr.mxu0 0.0
      %1335 = vmatpush1.xpose.msra.mxu0 0.0
      %1336 = vmatprep.subr.mxu0 0.0
      %1337 = vmatpush1.xpose.msra.mxu0 0.0
      %1338 = vmatprep.subr.mxu0 0.0
      %1339 = vmatpush1.xpose.msra.mxu0 0.0
      %1340 = vmatprep.subr.mxu0 0.0
      %1341 = vmatpush1.xpose.msra.mxu0 0.0
      %1342 = vmatprep.subr.mxu0 0.0
      %1343 = vmatpush1.xpose.msra.mxu0 0.0
      %1344 = vmatprep.subr.mxu0 0.0
      %1345 = vmatpush1.xpose.msra.mxu0 0.0
      %1346 = vmatprep.subr.mxu0 0.0
      %1347 = vmatpush1.xpose.msra.mxu0 0.0
      %1348 = vmatprep.subr.mxu0 0.0
      %1349 = vmatpush1.xpose.msra.mxu0 0.0
      %1350 = vmatprep.subr.mxu0 0.0
      %1351 = vmatpush1.xpose.msra.mxu0 0.0
      %1352 = vmatprep.subr.mxu0 0.0
      %1353 = vmatpush1.xpose.msra.mxu0 0.0
      %1354 = vmatprep.subr.mxu0 0.0
      %1355 = vmatpush1.xpose.msra.mxu0 0.0
      %1356 = vmatprep.subr.mxu0 0.0
      %1357 = vmatpush1.xpose.msra.mxu0 0.0
      %1358 = vmatprep.subr.mxu0 0.0
      %1359 = vmatpush1.xpose.msra.mxu0 0.0
      %1360 = vmatprep.subr.mxu0 0.0
      %1361 = vmatpush1.xpose.msra.mxu0 0.0
      %1362 = vmatprep.subr.mxu0 0.0
      %1363 = vmatpush1.xpose.msra.mxu0 0.0
      %1364 = vmatprep.subr.mxu0 0.0
      %1365 = vmatpush1.xpose.msra.mxu0 0.0
      %1366 = vmatprep.subr.mxu0 0.0
      %1367 = vmatpush1.xpose.msra.mxu0 0.0
      %1368 = vmatprep.subr.mxu0 0.0
      %1369 = vmatpush1.xpose.msra.mxu0 0.0
      %1370 = vmatprep.subr.mxu0 0.0
      %1371 = vmatpush1.xpose.msra.mxu0 0.0
      %1372 = vmatprep.subr.mxu0 0.0
      %1373 = vmatpush1.xpose.msra.mxu0 0.0
      %1374 = vmatprep.subr.mxu0 0.0
      %1375 = vmatpush1.xpose.msra.mxu0 0.0
      %1376 = vmatprep.subr.mxu0 0.0
      %1377 = vmatpush1.xpose.msra.mxu0 0.0
      %1378 = vmatprep.subr.mxu0 0.0
      %1379 = vmatpush1.xpose.msra.mxu0 0.0
      %1380 = vmatprep.subr.mxu0 0.0
      %1381 = vmatpush1.xpose.msra.mxu0 0.0
      %1382 = vmatprep.subr.mxu0 0.0
      %1383 = vmatpush1.xpose.msra.mxu0 0.0
      %1384 = vmatprep.subr.mxu0 0.0
      %1385 = vmatpush1.xpose.msra.mxu0 0.0
      %1386 = vmatprep.subr.mxu0 0.0
      %1387 = vmatpush1.xpose.msra.mxu0 0.0
      %1388 = vmatprep.subr.mxu0 0.0
      %1389 = vmatpush1.xpose.msra.mxu0 0.0
      %1390 = vmatprep.subr.mxu0 0.0
      %1391 = vmatpush1.xpose.msra.mxu0 0.0
      %1392 = vmatprep.subr.mxu0 0.0
      %1393 = vmatpush1.xpose.msra.mxu0 0.0
      %1394 = vmatprep.mubr.f32.mxu0 0.0
      %1395 = vmatmul.mubr.f32.gmra.mrb[0].mxu0 %v1258
      %v1396 = vpop.f32.mrb[0].mxu0
      %v1397 = vadd.f32 0.0, %v1396
      %v1398 = vpop.f32.mrb[0].mxu0
      %1399 = vdwg.mxu0
      %v1400 = vmul.f32 %v1327, 0.35355338
      %v1401 = vtanh.pop %v1400
      %v1402 = vmul.f32 %v1397, 0.35355338
      %v1403 = vtanh.pop %v1402
      %v1404 = vadd.f32 %v1401, %v1403
      %1405 = vrot.lane.b32.xlu0 %v1252, 124
      %v1406 = vpop.permute.xlu0 %1405
      %1407 = vrot.lane.b32.xlu0 %v1252, 116
      %v1408 = vpop.permute.xlu0 %1407
      %v1409 = vsel %vm450, %v1406, 0
      %v1411 = vsel %vm450, %v1408, 0
      %1413 = vmatprep.subr.mxu0 0.0
      %1414 = vmatpush1.xpose.msra.mxu0 %v1411
      %1415 = vmatprep.subr.mxu0 0.0
      %1416 = vmatpush1.xpose.msra.mxu0 0.0
      %1417 = vmatprep.subr.mxu0 0.0
      %1418 = vmatpush1.xpose.msra.mxu0 0.0
      %1419 = vmatprep.subr.mxu0 0.0
      %1420 = vmatpush1.xpose.msra.mxu0 0.0
      %1421 = vmatprep.subr.mxu0 0.0
      %1422 = vmatpush1.xpose.msra.mxu0 0.0
      %1423 = vmatprep.subr.mxu0 0.0
      %1424 = vmatpush1.xpose.msra.mxu0 0.0
      %1425 = vmatprep.subr.mxu0 0.0
      %1426 = vmatpush1.xpose.msra.mxu0 0.0
      %1427 = vmatprep.subr.mxu0 0.0
      %1428 = vmatpush1.xpose.msra.mxu0 0.0
      %1429 = vmatprep.subr.mxu0 0.0
      %1430 = vmatpush1.xpose.msra.mxu0 0.0
      %1431 = vmatprep.subr.mxu0 0.0
      %1432 = vmatpush1.xpose.msra.mxu0 0.0
      %1433 = vmatprep.subr.mxu0 0.0
      %1434 = vmatpush1.xpose.msra.mxu0 0.0
      %1435 = vmatprep.subr.mxu0 0.0
      %1436 = vmatpush1.xpose.msra.mxu0 0.0
      %1437 = vmatprep.subr.mxu0 0.0
      %1438 = vmatpush1.xpose.msra.mxu0 0.0
      %1439 = vmatprep.subr.mxu0 0.0
      %1440 = vmatpush1.xpose.msra.mxu0 0.0
      %1441 = vmatprep.subr.mxu0 0.0
      %1442 = vmatpush1.xpose.msra.mxu0 0.0
      %1443 = vmatprep.subr.mxu0 0.0
      %1444 = vmatpush1.xpose.msra.mxu0 0.0
      %1445 = vmatprep.subr.mxu0 0.0
      %1446 = vmatpush1.xpose.msra.mxu0 0.0
      %1447 = vmatprep.subr.mxu0 0.0
      %1448 = vmatpush1.xpose.msra.mxu0 0.0
      %1449 = vmatprep.subr.mxu0 0.0
      %1450 = vmatpush1.xpose.msra.mxu0 0.0
      %1451 = vmatprep.subr.mxu0 0.0
      %1452 = vmatpush1.xpose.msra.mxu0 0.0
      %1453 = vmatprep.subr.mxu0 0.0
      %1454 = vmatpush1.xpose.msra.mxu0 0.0
      %1455 = vmatprep.subr.mxu0 0.0
      %1456 = vmatpush1.xpose.msra.mxu0 0.0
      %1457 = vmatprep.subr.mxu0 0.0
      %1458 = vmatpush1.xpose.msra.mxu0 0.0
      %1459 = vmatprep.subr.mxu0 0.0
      %1460 = vmatpush1.xpose.msra.mxu0 0.0
      %1461 = vmatprep.subr.mxu0 0.0
      %1462 = vmatpush1.xpose.msra.mxu0 0.0
      %1463 = vmatprep.subr.mxu0 0.0
      %1464 = vmatpush1.xpose.msra.mxu0 0.0
      %1465 = vmatprep.subr.mxu0 0.0
      %1466 = vmatpush1.xpose.msra.mxu0 0.0
      %1467 = vmatprep.subr.mxu0 0.0
      %1468 = vmatpush1.xpose.msra.mxu0 0.0
      %1469 = vmatprep.subr.mxu0 0.0
      %1470 = vmatpush1.xpose.msra.mxu0 0.0
      %1471 = vmatprep.subr.mxu0 0.0
      %1472 = vmatpush1.xpose.msra.mxu0 0.0
      %1473 = vmatprep.subr.mxu0 0.0
      %1474 = vmatpush1.xpose.msra.mxu0 0.0
      %1475 = vmatprep.subr.mxu0 0.0
      %1476 = vmatpush1.xpose.msra.mxu0 0.0
      %1477 = vmatprep.mubr.f32.mxu0 0.0
      %1478 = vmatmul.mubr.f32.gmra.mrb[0].mxu0 %v1409
      %v1479 = vpop.f32.mrb[0].mxu0
      %v1480 = vadd.f32 0.0, %v1479
      %v1481 = vpop.f32.mrb[0].mxu0
      %1482 = vdwg.mxu0
      %1483 = vmatprep.subr.mxu0 0.0
      %1484 = vmatpush1.xpose.msra.mxu0 %v1409
      %1485 = vmatprep.subr.mxu0 0.0
      %1486 = vmatpush1.xpose.msra.mxu0 0.0
      %1487 = vmatprep.subr.mxu0 0.0
      %1488 = vmatpush1.xpose.msra.mxu0 0.0
      %1489 = vmatprep.subr.mxu0 0.0
      %1490 = vmatpush1.xpose.msra.mxu0 0.0
      %1491 = vmatprep.subr.mxu0 0.0
      %1492 = vmatpush1.xpose.msra.mxu0 0.0
      %1493 = vmatprep.subr.mxu0 0.0
      %1494 = vmatpush1.xpose.msra.mxu0 0.0
      %1495 = vmatprep.subr.mxu0 0.0
      %1496 = vmatpush1.xpose.msra.mxu0 0.0
      %1497 = vmatprep.subr.mxu0 0.0
      %1498 = vmatpush1.xpose.msra.mxu0 0.0
      %1499 = vmatprep.subr.mxu0 0.0
      %1500 = vmatpush1.xpose.msra.mxu0 0.0
      %1501 = vmatprep.subr.mxu0 0.0
      %1502 = vmatpush1.xpose.msra.mxu0 0.0
      %1503 = vmatprep.subr.mxu0 0.0
      %1504 = vmatpush1.xpose.msra.mxu0 0.0
      %1505 = vmatprep.subr.mxu0 0.0
      %1506 = vmatpush1.xpose.msra.mxu0 0.0
      %1507 = vmatprep.subr.mxu0 0.0
      %1508 = vmatpush1.xpose.msra.mxu0 0.0
      %1509 = vmatprep.subr.mxu0 0.0
      %1510 = vmatpush1.xpose.msra.mxu0 0.0
      %1511 = vmatprep.subr.mxu0 0.0
      %1512 = vmatpush1.xpose.msra.mxu0 0.0
      %1513 = vmatprep.subr.mxu0 0.0
      %1514 = vmatpush1.xpose.msra.mxu0 0.0
      %1515 = vmatprep.subr.mxu0 0.0
      %1516 = vmatpush1.xpose.msra.mxu0 0.0
      %1517 = vmatprep.subr.mxu0 0.0
      %1518 = vmatpush1.xpose.msra.mxu0 0.0
      %1519 = vmatprep.subr.mxu0 0.0
      %1520 = vmatpush1.xpose.msra.mxu0 0.0
      %1521 = vmatprep.subr.mxu0 0.0
      %1522 = vmatpush1.xpose.msra.mxu0 0.0
      %1523 = vmatprep.subr.mxu0 0.0
      %1524 = vmatpush1.xpose.msra.mxu0 0.0
      %1525 = vmatprep.subr.mxu0 0.0
      %1526 = vmatpush1.xpose.msra.mxu0 0.0
      %1527 = vmatprep.subr.mxu0 0.0
      %1528 = vmatpush1.xpose.msra.mxu0 0.0
      %1529 = vmatprep.subr.mxu0 0.0
      %1530 = vmatpush1.xpose.msra.mxu0 0.0
      %1531 = vmatprep.subr.mxu0 0.0
      %1532 = vmatpush1.xpose.msra.mxu0 0.0
      %1533 = vmatprep.subr.mxu0 0.0
      %1534 = vmatpush1.xpose.msra.mxu0 0.0
      %1535 = vmatprep.subr.mxu0 0.0
      %1536 = vmatpush1.xpose.msra.mxu0 0.0
      %1537 = vmatprep.subr.mxu0 0.0
      %1538 = vmatpush1.xpose.msra.mxu0 0.0
      %1539 = vmatprep.subr.mxu0 0.0
      %1540 = vmatpush1.xpose.msra.mxu0 0.0
      %1541 = vmatprep.subr.mxu0 0.0
      %1542 = vmatpush1.xpose.msra.mxu0 0.0
      %1543 = vmatprep.subr.mxu0 0.0
      %1544 = vmatpush1.xpose.msra.mxu0 0.0
      %1545 = vmatprep.subr.mxu0 0.0
      %1546 = vmatpush1.xpose.msra.mxu0 0.0
      %1547 = vmatprep.mubr.f32.mxu0 0.0
      %1548 = vmatmul.mubr.f32.gmra.mrb[0].mxu0 %v1411
      %v1549 = vpop.f32.mrb[0].mxu0
      %v1550 = vadd.f32 0.0, %v1549
      %v1551 = vpop.f32.mrb[0].mxu0
      %1552 = vdwg.mxu0
      %v1553 = vmul.f32 %v1480, 0.35355338
      %v1554 = vtanh.pop %v1553
      %v1555 = vmul.f32 %v1550, 0.35355338
      %v1556 = vtanh.pop %v1555
      %v1557 = vadd.f32 %v1554, %v1556
      %v1558 = vadd.f32 %v1404, %v1557
      %v1559 = vmul.f32 %v1558, 0.25
      %s1560 = scalar_lea.vmem %s292, 16
      %1561 = vst.msk [vmem:[%s1560] sm:$0xff] %vm301, %v1559
      %s1562 = scalar_lea.vmem %s283, 24
      %v1563 = vld [vmem:[%s1562] sm:$0xff]
      %v1564 = vmul.f32 %v1563, %v358
      %v1565 = vadd.f32 %v1564, %v355
      %v1566 = vsel %vm301, %v1565, 0.0
      %1567 = vadd.xlane.f32.xlu0 %v1566
      %v1568 = vpop.xlane.xlu0 %1567
      %v1569 = vmax.f32 %v1568, 1.0
      %v1570 = vrsqrt.pop %v1569
      %v1571 = vmul.f32 %v344, %v1570
      %1573 = vrot.lane.b32.xlu0 %v1571, 56
      %v1574 = vpop.permute.xlu0 %1573
      %v1577 = vsel %vm301, %v1565, 0
      %1579 = vmatprep.subr.mxu0 0.0
      %1580 = vmatpush1.msra.mxu0 %v1574
      %1581 = vmatprep.subr.mxu0 0.0
      %1582 = vmatpush1.msra.mxu0 0.0
      %1583 = vmatprep.subr.mxu0 0.0
      %1584 = vmatpush1.msra.mxu0 0.0
      %1585 = vmatprep.subr.mxu0 0.0
      %1586 = vmatpush1.msra.mxu0 0.0
      %1587 = vmatprep.subr.mxu0 0.0
      %1588 = vmatpush1.msra.mxu0 0.0
      %1589 = vmatprep.subr.mxu0 0.0
      %1590 = vmatpush1.msra.mxu0 0.0
      %1591 = vmatprep.subr.mxu0 0.0
      %1592 = vmatpush1.msra.mxu0 0.0
      %1593 = vmatprep.subr.mxu0 0.0
      %1594 = vmatpush1.msra.mxu0 0.0
      %1595 = vmatprep.subr.mxu0 0.0
      %1596 = vmatpush1.msra.mxu0 0.0
      %1597 = vmatprep.subr.mxu0 0.0
      %1598 = vmatpush1.msra.mxu0 0.0
      %1599 = vmatprep.subr.mxu0 0.0
      %1600 = vmatpush1.msra.mxu0 0.0
      %1601 = vmatprep.subr.mxu0 0.0
      %1602 = vmatpush1.msra.mxu0 0.0
      %1603 = vmatprep.subr.mxu0 0.0
      %1604 = vmatpush1.msra.mxu0 0.0
      %1605 = vmatprep.subr.mxu0 0.0
      %1606 = vmatpush1.msra.mxu0 0.0
      %1607 = vmatprep.subr.mxu0 0.0
      %1608 = vmatpush1.msra.mxu0 0.0
      %1609 = vmatprep.subr.mxu0 0.0
      %1610 = vmatpush1.msra.mxu0 0.0
      %1611 = vmatprep.subr.mxu0 0.0
      %1612 = vmatpush1.msra.mxu0 0.0
      %1613 = vmatprep.subr.mxu0 0.0
      %1614 = vmatpush1.msra.mxu0 0.0
      %1615 = vmatprep.subr.mxu0 0.0
      %1616 = vmatpush1.msra.mxu0 0.0
      %1617 = vmatprep.subr.mxu0 0.0
      %1618 = vmatpush1.msra.mxu0 0.0
      %1619 = vmatprep.subr.mxu0 0.0
      %1620 = vmatpush1.msra.mxu0 0.0
      %1621 = vmatprep.subr.mxu0 0.0
      %1622 = vmatpush1.msra.mxu0 0.0
      %1623 = vmatprep.subr.mxu0 0.0
      %1624 = vmatpush1.msra.mxu0 0.0
      %1625 = vmatprep.subr.mxu0 0.0
      %1626 = vmatpush1.msra.mxu0 0.0
      %1627 = vmatprep.subr.mxu0 0.0
      %1628 = vmatpush1.msra.mxu0 0.0
      %1629 = vmatprep.subr.mxu0 0.0
      %1630 = vmatpush1.msra.mxu0 0.0
      %1631 = vmatprep.subr.mxu0 0.0
      %1632 = vmatpush1.msra.mxu0 0.0
      %1633 = vmatprep.subr.mxu0 0.0
      %1634 = vmatpush1.msra.mxu0 0.0
      %1635 = vmatprep.subr.mxu0 0.0
      %1636 = vmatpush1.msra.mxu0 0.0
      %1637 = vmatprep.subr.mxu0 0.0
      %1638 = vmatpush1.msra.mxu0 0.0
      %1639 = vmatprep.subr.mxu0 0.0
      %1640 = vmatpush1.msra.mxu0 0.0
      %1641 = vmatprep.subr.mxu0 0.0
      %1642 = vmatpush1.msra.mxu0 0.0
      %1643 = vmatprep.mubr.f32.mxu0 0.0
      %1644 = vmatmul.mubr.f32.gmra.mrb[0].mxu0 %v1577
      %v1645 = vpop.f32.mrb[0].mxu0
      %v1646 = vadd.f32 0.0, %v1645
      %v1647 = vpop.f32.mrb[0].mxu0
      %1648 = vdwg.mxu0
      %v1649 = vmul.f32 %v1646, %v1570
      %v1650 = vld [vmem:[%s3 + $0x3] sm:$0x1]
      %v1651 = vlaneseq
      %v1652 = vshrl.u32 %v1651, 7
      %v1653 = vsub.s32 0, %v1652
      %v1654 = vrot.slane %v1650, %v1653
      %v1655 = vadd.f32 %v1649, %v1654
      %1657 = vrot.lane.b32.xlu0 %v1655, 120
      %v1658 = vpop.permute.xlu0 %1657
      %v1659 = vsel %vm450, %v1655, 0
      %v1661 = vsel %vm450, %v1658, 0
      %1663 = vmatprep.subr.mxu0 0.0
      %1664 = vmatpush1.xpose.msra.mxu0 %v1661
      %1665 = vmatprep.subr.mxu0 0.0
      %1666 = vmatpush1.xpose.msra.mxu0 0.0
      %1667 = vmatprep.subr.mxu0 0.0
      %1668 = vmatpush1.xpose.msra.mxu0 0.0
      %1669 = vmatprep.subr.mxu0 0.0
      %1670 = vmatpush1.xpose.msra.mxu0 0.0
      %1671 = vmatprep.subr.mxu0 0.0
      %1672 = vmatpush1.xpose.msra.mxu0 0.0
      %1673 = vmatprep.subr.mxu0 0.0
      %1674 = vmatpush1.xpose.msra.mxu0 0.0
      %1675 = vmatprep.subr.mxu0 0.0
      %1676 = vmatpush1.xpose.msra.mxu0 0.0
      %1677 = vmatprep.subr.mxu0 0.0
      %1678 = vmatpush1.xpose.msra.mxu0 0.0
      %1679 = vmatprep.subr.mxu0 0.0
      %1680 = vmatpush1.xpose.msra.mxu0 0.0
      %1681 = vmatprep.subr.mxu0 0.0
      %1682 = vmatpush1.xpose.msra.mxu0 0.0
      %1683 = vmatprep.subr.mxu0 0.0
      %1684 = vmatpush1.xpose.msra.mxu0 0.0
      %1685 = vmatprep.subr.mxu0 0.0
      %1686 = vmatpush1.xpose.msra.mxu0 0.0
      %1687 = vmatprep.subr.mxu0 0.0
      %1688 = vmatpush1.xpose.msra.mxu0 0.0
      %1689 = vmatprep.subr.mxu0 0.0
      %1690 = vmatpush1.xpose.msra.mxu0 0.0
      %1691 = vmatprep.subr.mxu0 0.0
      %1692 = vmatpush1.xpose.msra.mxu0 0.0
      %1693 = vmatprep.subr.mxu0 0.0
      %1694 = vmatpush1.xpose.msra.mxu0 0.0
      %1695 = vmatprep.subr.mxu0 0.0
      %1696 = vmatpush1.xpose.msra.mxu0 0.0
      %1697 = vmatprep.subr.mxu0 0.0
      %1698 = vmatpush1.xpose.msra.mxu0 0.0
      %1699 = vmatprep.subr.mxu0 0.0
      %1700 = vmatpush1.xpose.msra.mxu0 0.0
      %1701 = vmatprep.subr.mxu0 0.0
      %1702 = vmatpush1.xpose.msra.mxu0 0.0
      %1703 = vmatprep.subr.mxu0 0.0
      %1704 = vmatpush1.xpose.msra.mxu0 0.0
      %1705 = vmatprep.subr.mxu0 0.0
      %1706 = vmatpush1.xpose.msra.mxu0 0.0
      %1707 = vmatprep.subr.mxu0 0.0
      %1708 = vmatpush1.xpose.msra.mxu0 0.0
      %1709 = vmatprep.subr.mxu0 0.0
      %1710 = vmatpush1.xpose.msra.mxu0 0.0
      %1711 = vmatprep.subr.mxu0 0.0
      %1712 = vmatpush1.xpose.msra.mxu0 0.0
      %1713 = vmatprep.subr.mxu0 0.0
      %1714 = vmatpush1.xpose.msra.mxu0 0.0
      %1715 = vmatprep.subr.mxu0 0.0
      %1716 = vmatpush1.xpose.msra.mxu0 0.0
      %1717 = vmatprep.subr.mxu0 0.0
      %1718 = vmatpush1.xpose.msra.mxu0 0.0
      %1719 = vmatprep.subr.mxu0 0.0
      %1720 = vmatpush1.xpose.msra.mxu0 0.0
      %1721 = vmatprep.subr.mxu0 0.0
      %1722 = vmatpush1.xpose.msra.mxu0 0.0
      %1723 = vmatprep.subr.mxu0 0.0
      %1724 = vmatpush1.xpose.msra.mxu0 0.0
      %1725 = vmatprep.subr.mxu0 0.0
      %1726 = vmatpush1.xpose.msra.mxu0 0.0
      %1727 = vmatprep.mubr.f32.mxu0 0.0
      %1728 = vmatmul.mubr.f32.gmra.mrb[0].mxu0 %v1659
      %v1729 = vpop.f32.mrb[0].mxu0
      %v1730 = vadd.f32 0.0, %v1729
      %v1731 = vpop.f32.mrb[0].mxu0
      %1732 = vdwg.mxu0
      %1733 = vmatprep.subr.mxu0 0.0
      %1734 = vmatpush1.xpose.msra.mxu0 %v1659
      %1735 = vmatprep.subr.mxu0 0.0
      %1736 = vmatpush1.xpose.msra.mxu0 0.0
      %1737 = vmatprep.subr.mxu0 0.0
      %1738 = vmatpush1.xpose.msra.mxu0 0.0
      %1739 = vmatprep.subr.mxu0 0.0
      %1740 = vmatpush1.xpose.msra.mxu0 0.0
      %1741 = vmatprep.subr.mxu0 0.0
      %1742 = vmatpush1.xpose.msra.mxu0 0.0
      %1743 = vmatprep.subr.mxu0 0.0
      %1744 = vmatpush1.xpose.msra.mxu0 0.0
      %1745 = vmatprep.subr.mxu0 0.0
      %1746 = vmatpush1.xpose.msra.mxu0 0.0
      %1747 = vmatprep.subr.mxu0 0.0
      %1748 = vmatpush1.xpose.msra.mxu0 0.0
      %1749 = vmatprep.subr.mxu0 0.0
      %1750 = vmatpush1.xpose.msra.mxu0 0.0
      %1751 = vmatprep.subr.mxu0 0.0
      %1752 = vmatpush1.xpose.msra.mxu0 0.0
      %1753 = vmatprep.subr.mxu0 0.0
      %1754 = vmatpush1.xpose.msra.mxu0 0.0
      %1755 = vmatprep.subr.mxu0 0.0
      %1756 = vmatpush1.xpose.msra.mxu0 0.0
      %1757 = vmatprep.subr.mxu0 0.0
      %1758 = vmatpush1.xpose.msra.mxu0 0.0
      %1759 = vmatprep.subr.mxu0 0.0
      %1760 = vmatpush1.xpose.msra.mxu0 0.0
      %1761 = vmatprep.subr.mxu0 0.0
      %1762 = vmatpush1.xpose.msra.mxu0 0.0
      %1763 = vmatprep.subr.mxu0 0.0
      %1764 = vmatpush1.xpose.msra.mxu0 0.0
      %1765 = vmatprep.subr.mxu0 0.0
      %1766 = vmatpush1.xpose.msra.mxu0 0.0
      %1767 = vmatprep.subr.mxu0 0.0
      %1768 = vmatpush1.xpose.msra.mxu0 0.0
      %1769 = vmatprep.subr.mxu0 0.0
      %1770 = vmatpush1.xpose.msra.mxu0 0.0
      %1771 = vmatprep.subr.mxu0 0.0
      %1772 = vmatpush1.xpose.msra.mxu0 0.0
      %1773 = vmatprep.subr.mxu0 0.0
      %1774 = vmatpush1.xpose.msra.mxu0 0.0
      %1775 = vmatprep.subr.mxu0 0.0
      %1776 = vmatpush1.xpose.msra.mxu0 0.0
      %1777 = vmatprep.subr.mxu0 0.0
      %1778 = vmatpush1.xpose.msra.mxu0 0.0
      %1779 = vmatprep.subr.mxu0 0.0
      %1780 = vmatpush1.xpose.msra.mxu0 0.0
      %1781 = vmatprep.subr.mxu0 0.0
      %1782 = vmatpush1.xpose.msra.mxu0 0.0
      %1783 = vmatprep.subr.mxu0 0.0
      %1784 = vmatpush1.xpose.msra.mxu0 0.0
      %1785 = vmatprep.subr.mxu0 0.0
      %1786 = vmatpush1.xpose.msra.mxu0 0.0
      %1787 = vmatprep.subr.mxu0 0.0
      %1788 = vmatpush1.xpose.msra.mxu0 0.0
      %1789 = vmatprep.subr.mxu0 0.0
      %1790 = vmatpush1.xpose.msra.mxu0 0.0
      %1791 = vmatprep.subr.mxu0 0.0
      %1792 = vmatpush1.xpose.msra.mxu0 0.0
      %1793 = vmatprep.subr.mxu0 0.0
      %1794 = vmatpush1.xpose.msra.mxu0 0.0
      %1795 = vmatprep.subr.mxu0 0.0
      %1796 = vmatpush1.xpose.msra.mxu0 0.0
      %1797 = vmatprep.mubr.f32.mxu0 0.0
      %1798 = vmatmul.mubr.f32.gmra.mrb[0].mxu0 %v1661
      %v1799 = vpop.f32.mrb[0].mxu0
      %v1800 = vadd.f32 0.0, %v1799
      %v1801 = vpop.f32.mrb[0].mxu0
      %1802 = vdwg.mxu0
      %v1803 = vmul.f32 %v1730, 0.35355338
      %v1804 = vtanh.pop %v1803
      %v1805 = vmul.f32 %v1800, 0.35355338
      %v1806 = vtanh.pop %v1805
      %v1807 = vadd.f32 %v1804, %v1806
      %1808 = vrot.lane.b32.xlu0 %v1655, 124
      %v1809 = vpop.permute.xlu0 %1808
      %1810 = vrot.lane.b32.xlu0 %v1655, 116
      %v1811 = vpop.permute.xlu0 %1810
      %v1812 = vsel %vm450, %v1809, 0
      %v1814 = vsel %vm450, %v1811, 0
      %1816 = vmatprep.subr.mxu0 0.0
      %1817 = vmatpush1.xpose.msra.mxu0 %v1814
      %1818 = vmatprep.subr.mxu0 0.0
      %1819 = vmatpush1.xpose.msra.mxu0 0.0
      %1820 = vmatprep.subr.mxu0 0.0
      %1821 = vmatpush1.xpose.msra.mxu0 0.0
      %1822 = vmatprep.subr.mxu0 0.0
      %1823 = vmatpush1.xpose.msra.mxu0 0.0
      %1824 = vmatprep.subr.mxu0 0.0
      %1825 = vmatpush1.xpose.msra.mxu0 0.0
      %1826 = vmatprep.subr.mxu0 0.0
      %1827 = vmatpush1.xpose.msra.mxu0 0.0
      %1828 = vmatprep.subr.mxu0 0.0
      %1829 = vmatpush1.xpose.msra.mxu0 0.0
      %1830 = vmatprep.subr.mxu0 0.0
      %1831 = vmatpush1.xpose.msra.mxu0 0.0
      %1832 = vmatprep.subr.mxu0 0.0
      %1833 = vmatpush1.xpose.msra.mxu0 0.0
      %1834 = vmatprep.subr.mxu0 0.0
      %1835 = vmatpush1.xpose.msra.mxu0 0.0
      %1836 = vmatprep.subr.mxu0 0.0
      %1837 = vmatpush1.xpose.msra.mxu0 0.0
      %1838 = vmatprep.subr.mxu0 0.0
      %1839 = vmatpush1.xpose.msra.mxu0 0.0
      %1840 = vmatprep.subr.mxu0 0.0
      %1841 = vmatpush1.xpose.msra.mxu0 0.0
      %1842 = vmatprep.subr.mxu0 0.0
      %1843 = vmatpush1.xpose.msra.mxu0 0.0
      %1844 = vmatprep.subr.mxu0 0.0
      %1845 = vmatpush1.xpose.msra.mxu0 0.0
      %1846 = vmatprep.subr.mxu0 0.0
      %1847 = vmatpush1.xpose.msra.mxu0 0.0
      %1848 = vmatprep.subr.mxu0 0.0
      %1849 = vmatpush1.xpose.msra.mxu0 0.0
      %1850 = vmatprep.subr.mxu0 0.0
      %1851 = vmatpush1.xpose.msra.mxu0 0.0
      %1852 = vmatprep.subr.mxu0 0.0
      %1853 = vmatpush1.xpose.msra.mxu0 0.0
      %1854 = vmatprep.subr.mxu0 0.0
      %1855 = vmatpush1.xpose.msra.mxu0 0.0
      %1856 = vmatprep.subr.mxu0 0.0
      %1857 = vmatpush1.xpose.msra.mxu0 0.0
      %1858 = vmatprep.subr.mxu0 0.0
      %1859 = vmatpush1.xpose.msra.mxu0 0.0
      %1860 = vmatprep.subr.mxu0 0.0
      %1861 = vmatpush1.xpose.msra.mxu0 0.0
      %1862 = vmatprep.subr.mxu0 0.0
      %1863 = vmatpush1.xpose.msra.mxu0 0.0
      %1864 = vmatprep.subr.mxu0 0.0
      %1865 = vmatpush1.xpose.msra.mxu0 0.0
      %1866 = vmatprep.subr.mxu0 0.0
      %1867 = vmatpush1.xpose.msra.mxu0 0.0
      %1868 = vmatprep.subr.mxu0 0.0
      %1869 = vmatpush1.xpose.msra.mxu0 0.0
      %1870 = vmatprep.subr.mxu0 0.0
      %1871 = vmatpush1.xpose.msra.mxu0 0.0
      %1872 = vmatprep.subr.mxu0 0.0
      %1873 = vmatpush1.xpose.msra.mxu0 0.0
      %1874 = vmatprep.subr.mxu0 0.0
      %1875 = vmatpush1.xpose.msra.mxu0 0.0
      %1876 = vmatprep.subr.mxu0 0.0
      %1877 = vmatpush1.xpose.msra.mxu0 0.0
      %1878 = vmatprep.subr.mxu0 0.0
      %1879 = vmatpush1.xpose.msra.mxu0 0.0
      %1880 = vmatprep.mubr.f32.mxu0 0.0
      %1881 = vmatmul.mubr.f32.gmra.mrb[0].mxu0 %v1812
      %v1882 = vpop.f32.mrb[0].mxu0
      %v1883 = vadd.f32 0.0, %v1882
      %v1884 = vpop.f32.mrb[0].mxu0
      %1885 = vdwg.mxu0
      %1886 = vmatprep.subr.mxu0 0.0
      %1887 = vmatpush1.xpose.msra.mxu0 %v1812
      %1888 = vmatprep.subr.mxu0 0.0
      %1889 = vmatpush1.xpose.msra.mxu0 0.0
      %1890 = vmatprep.subr.mxu0 0.0
      %1891 = vmatpush1.xpose.msra.mxu0 0.0
      %1892 = vmatprep.subr.mxu0 0.0
      %1893 = vmatpush1.xpose.msra.mxu0 0.0
      %1894 = vmatprep.subr.mxu0 0.0
      %1895 = vmatpush1.xpose.msra.mxu0 0.0
      %1896 = vmatprep.subr.mxu0 0.0
      %1897 = vmatpush1.xpose.msra.mxu0 0.0
      %1898 = vmatprep.subr.mxu0 0.0
      %1899 = vmatpush1.xpose.msra.mxu0 0.0
      %1900 = vmatprep.subr.mxu0 0.0
      %1901 = vmatpush1.xpose.msra.mxu0 0.0
      %1902 = vmatprep.subr.mxu0 0.0
      %1903 = vmatpush1.xpose.msra.mxu0 0.0
      %1904 = vmatprep.subr.mxu0 0.0
      %1905 = vmatpush1.xpose.msra.mxu0 0.0
      %1906 = vmatprep.subr.mxu0 0.0
      %1907 = vmatpush1.xpose.msra.mxu0 0.0
      %1908 = vmatprep.subr.mxu0 0.0
      %1909 = vmatpush1.xpose.msra.mxu0 0.0
      %1910 = vmatprep.subr.mxu0 0.0
      %1911 = vmatpush1.xpose.msra.mxu0 0.0
      %1912 = vmatprep.subr.mxu0 0.0
      %1913 = vmatpush1.xpose.msra.mxu0 0.0
      %1914 = vmatprep.subr.mxu0 0.0
      %1915 = vmatpush1.xpose.msra.mxu0 0.0
      %1916 = vmatprep.subr.mxu0 0.0
      %1917 = vmatpush1.xpose.msra.mxu0 0.0
      %1918 = vmatprep.subr.mxu0 0.0
      %1919 = vmatpush1.xpose.msra.mxu0 0.0
      %1920 = vmatprep.subr.mxu0 0.0
      %1921 = vmatpush1.xpose.msra.mxu0 0.0
      %1922 = vmatprep.subr.mxu0 0.0
      %1923 = vmatpush1.xpose.msra.mxu0 0.0
      %1924 = vmatprep.subr.mxu0 0.0
      %1925 = vmatpush1.xpose.msra.mxu0 0.0
      %1926 = vmatprep.subr.mxu0 0.0
      %1927 = vmatpush1.xpose.msra.mxu0 0.0
      %1928 = vmatprep.subr.mxu0 0.0
      %1929 = vmatpush1.xpose.msra.mxu0 0.0
      %1930 = vmatprep.subr.mxu0 0.0
      %1931 = vmatpush1.xpose.msra.mxu0 0.0
      %1932 = vmatprep.subr.mxu0 0.0
      %1933 = vmatpush1.xpose.msra.mxu0 0.0
      %1934 = vmatprep.subr.mxu0 0.0
      %1935 = vmatpush1.xpose.msra.mxu0 0.0
      %1936 = vmatprep.subr.mxu0 0.0
      %1937 = vmatpush1.xpose.msra.mxu0 0.0
      %1938 = vmatprep.subr.mxu0 0.0
      %1939 = vmatpush1.xpose.msra.mxu0 0.0
      %1940 = vmatprep.subr.mxu0 0.0
      %1941 = vmatpush1.xpose.msra.mxu0 0.0
      %1942 = vmatprep.subr.mxu0 0.0
      %1943 = vmatpush1.xpose.msra.mxu0 0.0
      %1944 = vmatprep.subr.mxu0 0.0
      %1945 = vmatpush1.xpose.msra.mxu0 0.0
      %1946 = vmatprep.subr.mxu0 0.0
      %1947 = vmatpush1.xpose.msra.mxu0 0.0
      %1948 = vmatprep.subr.mxu0 0.0
      %1949 = vmatpush1.xpose.msra.mxu0 0.0
      %1950 = vmatprep.mubr.f32.mxu0 0.0
      %1951 = vmatmul.mubr.f32.gmra.mrb[0].mxu0 %v1814
      %v1952 = vpop.f32.mrb[0].mxu0
      %v1953 = vadd.f32 0.0, %v1952
      %v1954 = vpop.f32.mrb[0].mxu0
      %1955 = vdwg.mxu0
      %v1956 = vmul.f32 %v1883, 0.35355338
      %v1957 = vtanh.pop %v1956
      %v1958 = vmul.f32 %v1953, 0.35355338
      %v1959 = vtanh.pop %v1958
      %v1960 = vadd.f32 %v1957, %v1959
      %v1961 = vadd.f32 %v1807, %v1960
      %v1962 = vmul.f32 %v1961, 0.25
      %s1963 = scalar_lea.vmem %s292, 24
      %1964 = vst.msk [vmem:[%s1963] sm:$0xff] %vm301, %v1962
      %1965 = vrot.lane.b32.xlu0 %v446, 112
      %v1966 = vpop.permute.xlu0 %1965
      %1969 = vrot.lane.b32.xlu0 %v1655, 8
      %v1970 = vpop.permute.xlu0 %1969
      %v1972 = vsel %vm301, %v1966, %v852
      %vm1973 = vcmask 130048
      %v1974 = vsel %vm1973, %v1972, %v1252
      %vm1975 = vcmask 195584
      %v1976 = vsel %vm1975, %v1974, %v1970
      %1978 = vset.pattern.permute.xlu0 0
      %1979 = vperm.xlu0 %1978, %v356
      %v1980 = vpop.permute.xlu0 %1979
      %v1982 = vmul.f32 %v1976, %v1980
      %vm1983 = vcmask 261120
      %1984 = vst.msk [vmem:[%s296] sm:$0xff] %vm1983, %v1982
      %p1985 = scmp.lt.s32.totalorder %s18, 1
      %s1986 = scalar_select %p1985, %s18, 1
      %s1987 = smul.addr %s1986, 4
      %s1988 = smul.addr %s1987, 8
      %s1989 = scalar_lea.vmem %s5, %s1988
      %p1990 = scmp.lt.s32.totalorder %s18, 1
      %s1991 = scalar_select %p1990, %s18, 1
      %s1992 = smul.addr %s1991, 8
      %s1993 = scalar_lea.vmem %s6, %s1992
      // Predicated region
      $region41: #{_lambda_.14} parent=39 // pred_check
        %p1994 = pneg %p156
      $region42: #{_lambda_.14} parent=39 // pred_check_branch
        %1996 = sbr.rel (%p1994) target = $region44
      $region43: #{_lambda_.14} parent=39 // pred_region
        _
      $region44: #{_lambda_.14} parent=39 // pred_fallthru
        _
      // Predicated region
      $region45: #{_lambda_.14} parent=39 // pred_check
        %p1997 = pneg %p182
      $region46: #{_lambda_.14} parent=39 // pred_check_branch
        %1999 = sbr.rel (%p1997) target = $region48
      $region47: #{_lambda_.14} parent=39 // pred_region
        _
      $region48: #{_lambda_.14} parent=39 // pred_fallthru
        _
    $region40: #{_lambda_.14} parent=5 // pred_fallthru
      _
    %p2000 = scmp.le.s32.totalorder 2, %s13
    // Predicated region
    $region49: #{_lambda_.14} parent=5 // pred_check
      %p2001 = pneg %p2000
    $region50: #{_lambda_.14} parent=5 // pred_check_branch
      %2003 = sbr.rel (%p2001) target = $region52
    $region51: #{_lambda_.14} parent=5 // pred_region
      %s2004 = ssub.s32 %s13, 2
      // Predicated region
      $region53: #{_lambda_.14} parent=51 // pred_check
        %p2005 = pneg %p162
      $region54: #{_lambda_.14} parent=51 // pred_check_branch
        %2007 = sbr.rel (%p2005) target = $region56
      $region55: #{_lambda_.14} parent=51 // pred_region
        %p2008 = scmp.lt.s32.totalorder %s19, 1
        %s2009 = scalar_select %p2008, %s19, 1
        %s2010 = smul.addr %s2009, 4
        %s2011 = smul.addr %s2010, 8
        %s2012 = scalar_lea.vmem %s5, %s2011
      $region56: #{_lambda_.14} parent=51 // pred_fallthru
        _
      // Predicated region
      $region57: #{_lambda_.14} parent=51 // pred_check
        %p2013 = pneg %p188
      $region58: #{_lambda_.14} parent=51 // pred_check_branch
        %2015 = sbr.rel (%p2013) target = $region60
      $region59: #{_lambda_.14} parent=51 // pred_region
        %p2016 = scmp.lt.s32.totalorder %s19, 1
        %s2017 = scalar_select %p2016, %s19, 1
        %s2018 = smul.addr %s2017, 8
        %s2019 = scalar_lea.vmem %s6, %s2018
      $region60: #{_lambda_.14} parent=51 // pred_fallthru
        _
    $region52: #{_lambda_.14} parent=5 // pred_fallthru
      _
  $region6: #{_lambda_.14} parent=0 // loop_footer
    %s17 = sadd.s32 1, %s13
  $region7: #{_lambda_.14} parent=0 // loop_footer_branch
    %12 = sbr.rel target = $region3
  $region8: #{_lambda_.14} parent=0 // loop_exit
    _

// kernel: _lambda_.18
$region0: #{_lambda_.18}
  #allocation0 [shape = 'u32[]', space=smem, size = 0x4, offset = 0x4, fixed_abs, tag = 'smem constant byte address 0x4 - core index']
  #allocation1 [shape = 'u32[144,128]{1,0:T(1,128)}', space=vmem, size = 0x12000, scoped, tag = 'internal scratch']
  %s0 = inlined_call_operand.vmem [shape: f32[2,4,64], index: 0, kind: input, shape index: {}]
  %s1 = inlined_call_operand.vmem [shape: f32[2,4,64], index: 1, kind: input, shape index: {}]
  %s2 = inlined_call_operand.vmem [shape: f32[8,8], index: 2, kind: input, shape index: {}]
  %s3 = inlined_call_operand.vmem [shape: f32[8,1], index: 3, kind: input, shape index: {}]
  %s4 = inlined_call_operand.vmem [shape: f32[2,8], index: 4, kind: input, shape index: {}]
  %s5 = inlined_call_operand.vmem [shape: f32[2,1], index: 5, kind: input, shape index: {}]
  %s6 = inlined_call_operand.vmem [shape: f32[2,2,64], index: 6, kind: output, shape index: {}]
  %s7 = sld [smem:[#allocation0]]
  $region57: #{_lambda_.18} parent=0
    _
  %s9 = ssub.s32 1, %s7
  %s10 = scalar_select 0, %s9, %s7
  loop: start=0, step=1, limit=4
  $region2: #{_lambda_.18} parent=0 // loop_pre_header
    _
  $region3: #{_lambda_.18} parent=0 // loop_header
    %s12 = sphi 0, %s16
    %p13 = scmp.ge.s32.totalorder %s12, 4
    %s22 = sphi 0, %s24
    %s25 = sphi 0, %s22
    %s26 = sphi 0, %s25
    %s42 = sphi 0, %s26
    %s48 = sphi 0, %s50
    %s51 = sphi 0, %s48
    %s52 = sphi 0, %s51
    %s68 = sphi 0, %s52
    %s72 = sphi 0, %s72
    %s74 = sphi 0, %s72
    %s75 = sphi 0, %s74
    %s89 = sphi 0, %s75
    %s93 = sphi 0, %s93
    %s95 = sphi 0, %s93
    %s96 = sphi 0, %s95
    %s110 = sphi 0, %s96
    %s114 = sphi 0, %s114
    %s116 = sphi 0, %s114
    %s117 = sphi 0, %s116
    %s131 = sphi 0, %s117
    %s135 = sphi 0, %s135
    %s137 = sphi 0, %s135
    %s138 = sphi 0, %s137
    %s152 = sphi 0, %s138
    %s158 = sphi 0, %s160
    %s161 = sphi 0, %s158
    %s162 = sphi 0, %s161
    %s178 = sphi 0, %s162
  $region4: #{_lambda_.18} parent=0 // loop_header_branch
    %15 = sbr.rel (%p13) target = $region8
  $region5: #{_lambda_.18} parent=0 // loop_body
    %s17 = ssub.s32 %s12, 1
    %s18 = ssub.s32 %s12, 2
    %s19 = sadd.s32 %s12, 1
    %s20 = ssub.s32 %s12, %s19
    %p21 = scmp.eq.s32.totalorder %s20, 0
    %s23 = sadd.s32 %s22, 1
    %s24 = scalar_select %p21, %s22, %s23
    %p27 = pneg %p21
    %p28 = scmp.eq.s32.totalorder %s12, 1
    %p29 = por %p27, %p28
    %p30 = scmp.ne.s32.totalorder %s22, %s25
    %p31 = scmp.eq.s32.totalorder %s12, 0
    %p32 = por %p30, %p31
    %p33 = scmp.ne.s32.totalorder %s22, %s25
    %p34 = scmp.eq.s32.totalorder %s17, 1
    %p35 = por %p33, %p34
    %p36 = scmp.ne.s32.totalorder %s25, %s26
    %p37 = scmp.eq.s32.totalorder %s17, 0
    %p38 = por %p36, %p37
    %p39 = scmp.ne.s32.totalorder %s25, %s26
    %p40 = scmp.eq.s32.totalorder %s18, 1
    %p41 = por %p39, %p40
    %p43 = scmp.ne.s32.totalorder %s26, %s42
    %p44 = scmp.eq.s32.totalorder %s18, 0
    %p45 = por %p43, %p44
    %s46 = ssub.s32 %s12, %s19
    %p47 = scmp.eq.s32.totalorder %s46, 0
    %s49 = sadd.s32 %s48, 1
    %s50 = scalar_select %p47, %s48, %s49
    %p53 = pneg %p47
    %p54 = scmp.eq.s32.totalorder %s12, 1
    %p55 = por %p53, %p54
    %p56 = scmp.ne.s32.totalorder %s48, %s51
    %p57 = scmp.eq.s32.totalorder %s12, 0
    %p58 = por %p56, %p57
    %p59 = scmp.ne.s32.totalorder %s48, %s51
    %p60 = scmp.eq.s32.totalorder %s17, 1
    %p61 = por %p59, %p60
    %p62 = scmp.ne.s32.totalorder %s51, %s52
    %p63 = scmp.eq.s32.totalorder %s17, 0
    %p64 = por %p62, %p63
    %p65 = scmp.ne.s32.totalorder %s51, %s52
    %p66 = scmp.eq.s32.totalorder %s18, 1
    %p67 = por %p65, %p66
    %p69 = scmp.ne.s32.totalorder %s52, %s68
    %p70 = scmp.eq.s32.totalorder %s18, 0
    %p71 = por %p69, %p70
    %s73 = sadd.s32 %s72, 1
    %p76 = scmp.eq.s32.totalorder %s12, 1
    %p77 = scmp.ne.s32.totalorder %s72, %s74
    %p78 = scmp.eq.s32.totalorder %s12, 0
    %p79 = por %p77, %p78
    %p80 = scmp.ne.s32.totalorder %s72, %s74
    %p81 = scmp.eq.s32.totalorder %s17, 1
    %p82 = por %p80, %p81
    %p83 = scmp.ne.s32.totalorder %s74, %s75
    %p84 = scmp.eq.s32.totalorder %s17, 0
    %p85 = por %p83, %p84
    %p86 = scmp.ne.s32.totalorder %s74, %s75
    %p87 = scmp.eq.s32.totalorder %s18, 1
    %p88 = por %p86, %p87
    %p90 = scmp.ne.s32.totalorder %s75, %s89
    %p91 = scmp.eq.s32.totalorder %s18, 0
    %p92 = por %p90, %p91
    %s94 = sadd.s32 %s93, 1
    %p97 = scmp.eq.s32.totalorder %s12, 1
    %p98 = scmp.ne.s32.totalorder %s93, %s95
    %p99 = scmp.eq.s32.totalorder %s12, 0
    %p100 = por %p98, %p99
    %p101 = scmp.ne.s32.totalorder %s93, %s95
    %p102 = scmp.eq.s32.totalorder %s17, 1
    %p103 = por %p101, %p102
    %p104 = scmp.ne.s32.totalorder %s95, %s96
    %p105 = scmp.eq.s32.totalorder %s17, 0
    %p106 = por %p104, %p105
    %p107 = scmp.ne.s32.totalorder %s95, %s96
    %p108 = scmp.eq.s32.totalorder %s18, 1
    %p109 = por %p107, %p108
    %p111 = scmp.ne.s32.totalorder %s96, %s110
    %p112 = scmp.eq.s32.totalorder %s18, 0
    %p113 = por %p111, %p112
    %s115 = sadd.s32 %s114, 1
    %p118 = scmp.eq.s32.totalorder %s12, 1
    %p119 = scmp.ne.s32.totalorder %s114, %s116
    %p120 = scmp.eq.s32.totalorder %s12, 0
    %p121 = por %p119, %p120
    %p122 = scmp.ne.s32.totalorder %s114, %s116
    %p123 = scmp.eq.s32.totalorder %s17, 1
    %p124 = por %p122, %p123
    %p125 = scmp.ne.s32.totalorder %s116, %s117
    %p126 = scmp.eq.s32.totalorder %s17, 0
    %p127 = por %p125, %p126
    %p128 = scmp.ne.s32.totalorder %s116, %s117
    %p129 = scmp.eq.s32.totalorder %s18, 1
    %p130 = por %p128, %p129
    %p132 = scmp.ne.s32.totalorder %s117, %s131
    %p133 = scmp.eq.s32.totalorder %s18, 0
    %p134 = por %p132, %p133
    %s136 = sadd.s32 %s135, 1
    %p139 = scmp.eq.s32.totalorder %s12, 1
    %p140 = scmp.ne.s32.totalorder %s135, %s137
    %p141 = scmp.eq.s32.totalorder %s12, 0
    %p142 = por %p140, %p141
    %p143 = scmp.ne.s32.totalorder %s135, %s137
    %p144 = scmp.eq.s32.totalorder %s17, 1
    %p145 = por %p143, %p144
    %p146 = scmp.ne.s32.totalorder %s137, %s138
    %p147 = scmp.eq.s32.totalorder %s17, 0
    %p148 = por %p146, %p147
    %p149 = scmp.ne.s32.totalorder %s137, %s138
    %p150 = scmp.eq.s32.totalorder %s18, 1
    %p151 = por %p149, %p150
    %p153 = scmp.ne.s32.totalorder %s138, %s152
    %p154 = scmp.eq.s32.totalorder %s18, 0
    %p155 = por %p153, %p154
    %s156 = ssub.s32 %s12, %s19
    %p157 = scmp.eq.s32.totalorder %s156, 0
    %s159 = sadd.s32 %s158, 1
    %s160 = scalar_select %p157, %s158, %s159
    %p163 = pneg %p157
    %p164 = scmp.eq.s32.totalorder %s12, 1
    %p165 = por %p163, %p164
    %p166 = scmp.ne.s32.totalorder %s158, %s161
    %p167 = scmp.eq.s32.totalorder %s12, 0
    %p168 = por %p166, %p167
    %p169 = scmp.ne.s32.totalorder %s158, %s161
    %p170 = scmp.eq.s32.totalorder %s17, 1
    %p171 = por %p169, %p170
    %p172 = scmp.ne.s32.totalorder %s161, %s162
    %p173 = scmp.eq.s32.totalorder %s17, 0
    %p174 = por %p172, %p173
    %p175 = scmp.ne.s32.totalorder %s161, %s162
    %p176 = scmp.eq.s32.totalorder %s18, 1
    %p177 = por %p175, %p176
    %p179 = scmp.ne.s32.totalorder %s162, %s178
    %p180 = scmp.eq.s32.totalorder %s18, 0
    %p181 = por %p179, %p180
    %p182 = scmp.le.s32.totalorder 1, %s12
    %p183 = scmp.lt.s32.totalorder %s12, 3
    %p184 = pnand %p182, %p183
    %p185 = pneg %p184
    // Predicated region
    $region9: #{_lambda_.18} parent=5 // pred_check
      _
    $region10: #{_lambda_.18} parent=5 // pred_check_branch
      %187 = sbr.rel (%p184) target = $region12
    $region11: #{_lambda_.18} parent=5 // pred_region
      %s188 = ssub.s32 %s12, 1
      // Predicated region
      $region13: #{_lambda_.18} parent=11 // pred_check
        %p189 = pneg %p85
      $region14: #{_lambda_.18} parent=11 // pred_check_branch
        %191 = sbr.rel (%p189) target = $region16
      $region15: #{_lambda_.18} parent=11 // pred_region
        _
      $region16: #{_lambda_.18} parent=11 // pred_fallthru
        _
      // Predicated region
      $region17: #{_lambda_.18} parent=11 // pred_check
        %p192 = pneg %p106
      $region18: #{_lambda_.18} parent=11 // pred_check_branch
        %194 = sbr.rel (%p192) target = $region20
      $region19: #{_lambda_.18} parent=11 // pred_region
        _
      $region20: #{_lambda_.18} parent=11 // pred_fallthru
        _
      // Predicated region
      $region21: #{_lambda_.18} parent=11 // pred_check
        %p195 = pneg %p127
      $region22: #{_lambda_.18} parent=11 // pred_check_branch
        %197 = sbr.rel (%p195) target = $region24
      $region23: #{_lambda_.18} parent=11 // pred_region
        _
      $region24: #{_lambda_.18} parent=11 // pred_fallthru
        _
      // Predicated region
      $region25: #{_lambda_.18} parent=11 // pred_check
        %p198 = pneg %p148
      $region26: #{_lambda_.18} parent=11 // pred_check_branch
        %200 = sbr.rel (%p198) target = $region28
      $region27: #{_lambda_.18} parent=11 // pred_region
        _
      $region28: #{_lambda_.18} parent=11 // pred_fallthru
        _
    $region12: #{_lambda_.18} parent=5 // pred_fallthru
      _
    %p201 = scmp.lt.s32.totalorder %s12, 2
    // Predicated region
    $region29: #{_lambda_.18} parent=5 // pred_check
      %p202 = pneg %p201
    $region30: #{_lambda_.18} parent=5 // pred_check_branch
      %204 = sbr.rel (%p202) target = $region32
    $region31: #{_lambda_.18} parent=5 // pred_region
      // Predicated region
      $region33: #{_lambda_.18} parent=31 // pred_check
        %p205 = pneg %p32
      $region34: #{_lambda_.18} parent=31 // pred_check_branch
        %207 = sbr.rel (%p205) target = $region36
      $region35: #{_lambda_.18} parent=31 // pred_region
        %p208 = scmp.lt.s32.totalorder %s12, 1
        %s209 = scalar_select %p208, %s12, 1
        %s210 = smul.addr %s209, 4
        %s211 = scalar_lea.vmem %s0, %s210
      $region36: #{_lambda_.18} parent=31 // pred_fallthru
        _
      // Predicated region
      $region37: #{_lambda_.18} parent=31 // pred_check
        %p212 = pneg %p58
      $region38: #{_lambda_.18} parent=31 // pred_check_branch
        %214 = sbr.rel (%p212) target = $region40
      $region39: #{_lambda_.18} parent=31 // pred_region
        %p215 = scmp.lt.s32.totalorder %s12, 1
        %s216 = scalar_select %p215, %s12, 1
        %s217 = smul.addr %s216, 4
        %s218 = scalar_lea.vmem %s1, %s217
      $region40: #{_lambda_.18} parent=31 // pred_fallthru
        _
    $region32: #{_lambda_.18} parent=5 // pred_fallthru
      _
    %p219 = scmp.le.s32.totalorder 1, %s12
    %p220 = scmp.lt.s32.totalorder %s12, 3
    %p221 = pnand %p219, %p220
    %p222 = pneg %p221
    // Predicated region
    $region41: #{_lambda_.18} parent=5 // pred_check
      _
    $region42: #{_lambda_.18} parent=5 // pred_check_branch
      %224 = sbr.rel (%p221) target = $region44
    $region43: #{_lambda_.18} parent=5 // pred_region
      %s225 = ssub.s32 %s12, 1
      %p226 = scmp.lt.s32.totalorder %s17, 1
      %s227 = scalar_select %p226, %s17, 1
      %s228 = smul.addr %s227, 4
      %s229 = scalar_lea.vmem %s0, %s228
      %p230 = pneg %p38
      %p231 = pneg %p35
      %p232 = scmp.lt.s32.totalorder %s17, 1
      %s233 = scalar_select %p232, %s17, 1
      %s234 = smul.addr %s233, 4
      %s235 = scalar_lea.vmem %s1, %s234
      %p236 = pneg %p64
      %p237 = pneg %p61
      %p238 = pneg %p85
      %p239 = pneg %p82
      %p240 = pneg %p106
      %p241 = pneg %p103
      %p242 = pneg %p127
      %p243 = pneg %p124
      %p244 = pneg %p148
      %p245 = pneg %p145
      %p246 = pneg %p174
      %p247 = pneg %p171
      %p248 = scmp.lt.s32.totalorder %s17, 1
      %s249 = scalar_select %p248, %s17, 1
      %s250 = smul.addr %s249, 2
      %s251 = scalar_lea.vmem %s6, %s250
      %p252 = scmp.lt.s32.totalorder %s17, 1
      %s253 = scalar_select %p252, %s17, 1
      %s254 = smul.addr %s253, 4
      %s255 = scalar_lea.vmem %s0, %s254
      %p256 = scmp.lt.s32.totalorder %s17, 1
      %s257 = scalar_select %p256, %s17, 1
      %s258 = smul.addr %s257, 4
      %s259 = scalar_lea.vmem %s1, %s258
      %p260 = scmp.lt.s32.totalorder %s17, 1
      %s261 = scalar_select %p260, %s17, 1
      %s262 = smul.addr %s261, 2
      %s263 = scalar_lea.vmem %s6, %s262
      %v264 = vld [vmem:[%s255] sm:$0xf]
      %v265 = vld [vmem:[%s259] sm:$0xf]
      %v267 = vrot.slane %v265, 4
      %vm269 = vcmask 1043456
      %v270 = vsel %vm269, %v264, %v267
      %v271 = vld [vmem:[%s2] sm:$0xff]
      %v272 = vld [vmem:[%s3] sm:$0xff]
      %274 = vset.pattern.permute.xlu0 0
      %275 = vperm.xlu0 %274, %v272
      %v276 = vpop.permute.xlu0 %275
      %vm278 = vcmask 64512
      %v280 = vsel %vm278, %v271, 0
      %282 = vmatprep.subr.mxu0 0.0
      %283 = vmatpush1.msra.mxu0 %v270
      %284 = vmatprep.subr.mxu0 0.0
      %285 = vmatpush1.msra.mxu0 0.0
      %286 = vmatprep.subr.mxu0 0.0
      %287 = vmatpush1.msra.mxu0 0.0
      %288 = vmatprep.subr.mxu0 0.0
      %289 = vmatpush1.msra.mxu0 0.0
      %290 = vmatprep.subr.mxu0 0.0
      %291 = vmatpush1.msra.mxu0 0.0
      %292 = vmatprep.subr.mxu0 0.0
      %293 = vmatpush1.msra.mxu0 0.0
      %294 = vmatprep.subr.mxu0 0.0
      %295 = vmatpush1.msra.mxu0 0.0
      %296 = vmatprep.subr.mxu0 0.0
      %297 = vmatpush1.msra.mxu0 0.0
      %298 = vmatprep.subr.mxu0 0.0
      %299 = vmatpush1.msra.mxu0 0.0
      %300 = vmatprep.subr.mxu0 0.0
      %301 = vmatpush1.msra.mxu0 0.0
      %302 = vmatprep.subr.mxu0 0.0
      %303 = vmatpush1.msra.mxu0 0.0
      %304 = vmatprep.subr.mxu0 0.0
      %305 = vmatpush1.msra.mxu0 0.0
      %306 = vmatprep.subr.mxu0 0.0
      %307 = vmatpush1.msra.mxu0 0.0
      %308 = vmatprep.subr.mxu0 0.0
      %309 = vmatpush1.msra.mxu0 0.0
      %310 = vmatprep.subr.mxu0 0.0
      %311 = vmatpush1.msra.mxu0 0.0
      %312 = vmatprep.subr.mxu0 0.0
      %313 = vmatpush1.msra.mxu0 0.0
      %314 = vmatprep.subr.mxu0 0.0
      %315 = vmatpush1.msra.mxu0 0.0
      %316 = vmatprep.subr.mxu0 0.0
      %317 = vmatpush1.msra.mxu0 0.0
      %318 = vmatprep.subr.mxu0 0.0
      %319 = vmatpush1.msra.mxu0 0.0
      %320 = vmatprep.subr.mxu0 0.0
      %321 = vmatpush1.msra.mxu0 0.0
      %322 = vmatprep.subr.mxu0 0.0
      %323 = vmatpush1.msra.mxu0 0.0
      %324 = vmatprep.subr.mxu0 0.0
      %325 = vmatpush1.msra.mxu0 0.0
      %326 = vmatprep.subr.mxu0 0.0
      %327 = vmatpush1.msra.mxu0 0.0
      %328 = vmatprep.subr.mxu0 0.0
      %329 = vmatpush1.msra.mxu0 0.0
      %330 = vmatprep.subr.mxu0 0.0
      %331 = vmatpush1.msra.mxu0 0.0
      %332 = vmatprep.subr.mxu0 0.0
      %333 = vmatpush1.msra.mxu0 0.0
      %334 = vmatprep.subr.mxu0 0.0
      %335 = vmatpush1.msra.mxu0 0.0
      %336 = vmatprep.subr.mxu0 0.0
      %337 = vmatpush1.msra.mxu0 0.0
      %338 = vmatprep.subr.mxu0 0.0
      %339 = vmatpush1.msra.mxu0 0.0
      %340 = vmatprep.subr.mxu0 0.0
      %341 = vmatpush1.msra.mxu0 0.0
      %342 = vmatprep.subr.mxu0 0.0
      %343 = vmatpush1.msra.mxu0 0.0
      %344 = vmatprep.subr.mxu0 0.0
      %345 = vmatpush1.msra.mxu0 0.0
      %346 = vmatprep.mubr.f32.mxu0 0.0
      %347 = vmatmul.mubr.f32.gmra.mrb[0].mxu0 %v280
      %v348 = vpop.f32.mrb[0].mxu0
      %v349 = vadd.f32 %v276, %v348
      %v350 = vpop.f32.mrb[0].mxu0
      %351 = vdwg.mxu0
      %vm352 = vcmp.gt.f32.partialorder %v349, 0.0
      %v353 = vmul.f32 %v349, 1.442695
      %v354 = vpow.pop %v353
      %v355 = vsub.f32 %v354, 1.0
      %v356 = vsel %vm352, %v349, %v355
      %v357 = vld [vmem:[%s4] sm:$0x3]
      %v358 = vld [vmem:[%s5] sm:$0x3]
      %360 = vset.pattern.permute.xlu0 0
      %361 = vperm.xlu0 %360, %v358
      %v362 = vpop.permute.xlu0 %361
      %v365 = vsel %vm278, %v357, 0
      %367 = vmatprep.subr.mxu0 0.0
      %368 = vmatpush1.msra.mxu0 %v356
      %369 = vmatprep.subr.mxu0 0.0
      %370 = vmatpush1.msra.mxu0 0.0
      %371 = vmatprep.subr.mxu0 0.0
      %372 = vmatpush1.msra.mxu0 0.0
      %373 = vmatprep.subr.mxu0 0.0
      %374 = vmatpush1.msra.mxu0 0.0
      %375 = vmatprep.subr.mxu0 0.0
      %376 = vmatpush1.msra.mxu0 0.0
      %377 = vmatprep.subr.mxu0 0.0
      %378 = vmatpush1.msra.mxu0 0.0
      %379 = vmatprep.subr.mxu0 0.0
      %380 = vmatpush1.msra.mxu0 0.0
      %381 = vmatprep.subr.mxu0 0.0
      %382 = vmatpush1.msra.mxu0 0.0
      %383 = vmatprep.subr.mxu0 0.0
      %384 = vmatpush1.msra.mxu0 0.0
      %385 = vmatprep.subr.mxu0 0.0
      %386 = vmatpush1.msra.mxu0 0.0
      %387 = vmatprep.subr.mxu0 0.0
      %388 = vmatpush1.msra.mxu0 0.0
      %389 = vmatprep.subr.mxu0 0.0
      %390 = vmatpush1.msra.mxu0 0.0
      %391 = vmatprep.subr.mxu0 0.0
      %392 = vmatpush1.msra.mxu0 0.0
      %393 = vmatprep.subr.mxu0 0.0
      %394 = vmatpush1.msra.mxu0 0.0
      %395 = vmatprep.subr.mxu0 0.0
      %396 = vmatpush1.msra.mxu0 0.0
      %397 = vmatprep.subr.mxu0 0.0
      %398 = vmatpush1.msra.mxu0 0.0
      %399 = vmatprep.subr.mxu0 0.0
      %400 = vmatpush1.msra.mxu0 0.0
      %401 = vmatprep.subr.mxu0 0.0
      %402 = vmatpush1.msra.mxu0 0.0
      %403 = vmatprep.subr.mxu0 0.0
      %404 = vmatpush1.msra.mxu0 0.0
      %405 = vmatprep.subr.mxu0 0.0
      %406 = vmatpush1.msra.mxu0 0.0
      %407 = vmatprep.subr.mxu0 0.0
      %408 = vmatpush1.msra.mxu0 0.0
      %409 = vmatprep.subr.mxu0 0.0
      %410 = vmatpush1.msra.mxu0 0.0
      %411 = vmatprep.subr.mxu0 0.0
      %412 = vmatpush1.msra.mxu0 0.0
      %413 = vmatprep.subr.mxu0 0.0
      %414 = vmatpush1.msra.mxu0 0.0
      %415 = vmatprep.subr.mxu0 0.0
      %416 = vmatpush1.msra.mxu0 0.0
      %417 = vmatprep.subr.mxu0 0.0
      %418 = vmatpush1.msra.mxu0 0.0
      %419 = vmatprep.subr.mxu0 0.0
      %420 = vmatpush1.msra.mxu0 0.0
      %421 = vmatprep.subr.mxu0 0.0
      %422 = vmatpush1.msra.mxu0 0.0
      %423 = vmatprep.subr.mxu0 0.0
      %424 = vmatpush1.msra.mxu0 0.0
      %425 = vmatprep.subr.mxu0 0.0
      %426 = vmatpush1.msra.mxu0 0.0
      %427 = vmatprep.subr.mxu0 0.0
      %428 = vmatpush1.msra.mxu0 0.0
      %429 = vmatprep.subr.mxu0 0.0
      %430 = vmatpush1.msra.mxu0 0.0
      %431 = vmatprep.mubr.f32.mxu0 0.0
      %432 = vmatmul.mubr.f32.gmra.mrb[0].mxu0 %v365
      %v433 = vpop.f32.mrb[0].mxu0
      %v434 = vadd.f32 %v362, %v433
      %v435 = vpop.f32.mrb[0].mxu0
      %436 = vdwg.mxu0
      %vm437 = vcmask 517120
      %438 = vst.msk [vmem:[%s263] sm:$0x3] %vm437, %v434
      %p439 = scmp.lt.s32.totalorder %s17, 1
      %s440 = scalar_select %p439, %s17, 1
      %s441 = smul.addr %s440, 2
      %s442 = scalar_lea.vmem %s6, %s441
      // Predicated region
      $region45: #{_lambda_.18} parent=43 // pred_check
        %p443 = pneg %p171
      $region46: #{_lambda_.18} parent=43 // pred_check_branch
        %445 = sbr.rel (%p443) target = $region48
      $region47: #{_lambda_.18} parent=43 // pred_region
        _
      $region48: #{_lambda_.18} parent=43 // pred_fallthru
        _
    $region44: #{_lambda_.18} parent=5 // pred_fallthru
      _
    %p446 = scmp.le.s32.totalorder 2, %s12
    // Predicated region
    $region49: #{_lambda_.18} parent=5 // pred_check
      %p447 = pneg %p446
    $region50: #{_lambda_.18} parent=5 // pred_check_branch
      %449 = sbr.rel (%p447) target = $region52
    $region51: #{_lambda_.18} parent=5 // pred_region
      %s450 = ssub.s32 %s12, 2
      // Predicated region
      $region53: #{_lambda_.18} parent=51 // pred_check
        %p451 = pneg %p177
      $region54: #{_lambda_.18} parent=51 // pred_check_branch
        %453 = sbr.rel (%p451) target = $region56
      $region55: #{_lambda_.18} parent=51 // pred_region
        %p454 = scmp.lt.s32.totalorder %s18, 1
        %s455 = scalar_select %p454, %s18, 1
        %s456 = smul.addr %s455, 2
        %s457 = scalar_lea.vmem %s6, %s456
      $region56: #{_lambda_.18} parent=51 // pred_fallthru
        _
    $region52: #{_lambda_.18} parent=5 // pred_fallthru
      _
  $region6: #{_lambda_.18} parent=0 // loop_footer
    %s16 = sadd.s32 1, %s12
  $region7: #{_lambda_.18} parent=0 // loop_footer_branch
    %11 = sbr.rel target = $region3
  $region8: #{_lambda_.18} parent=0 // loop_exit
    _

// kernel: _lambda_.17
$region0: #{_lambda_.17}
  #allocation0 [shape = 'u32[]', space=smem, size = 0x4, offset = 0x4, fixed_abs, tag = 'smem constant byte address 0x4 - core index']
  #allocation1 [shape = 'u32[144,128]{1,0:T(1,128)}', space=vmem, size = 0x12000, scoped, tag = 'internal scratch']
  %s0 = inlined_call_operand.vmem [shape: f32[2,8,8], index: 0, kind: input, shape index: {}]
  %s1 = inlined_call_operand.vmem [shape: f32[2,4,8,8], index: 1, kind: input, shape index: {}]
  %s2 = inlined_call_operand.vmem [shape: bf16[8,96], index: 2, kind: input, shape index: {}]
  %s3 = inlined_call_operand.vmem [shape: f32[4,24], index: 3, kind: input, shape index: {}]
  %s4 = inlined_call_operand.vmem [shape: f32[2,8,1], index: 4, kind: input, shape index: {}]
  %s5 = inlined_call_operand.vmem [shape: f32[2,4,8,8], index: 5, kind: output, shape index: {0}]
  %s6 = inlined_call_operand.hbm [shape: f32[2,8,32], index: 6, kind: output, shape index: {1}]
  %7 = xla_tuple %s5, %s6
  %s8 = sld [smem:[#allocation0]]
  $region61: #{_lambda_.17} parent=0
    _
  %s10 = ssub.s32 1, %s8
  %s11 = scalar_select 0, %s10, %s8
  $region1: #{_lambda_.17} parent=0
    #allocation2 [shape = 'u8[8192]{0}', space=vmem, size = 0x2000, scoped, tag = 'output window, operand 1']
    #allocation3 [shape = 's32[2]{0}', space=sflag, size = 0x8, scoped, tag = 'scoped memory for _lambda_.17']
    %12 = vsyncpa [#allocation3], 0
    %s13 = scalar_lea.sflag [#allocation3], 1
    %14 = vsyncpa %s13, 0
    loop: start=0, step=1, limit=4
    $region2: #{_lambda_.17} parent=1 // loop_pre_header
      _
    $region3: #{_lambda_.17} parent=1 // loop_header
      %s16 = sphi 0, %s20
      %p17 = scmp.ge.s32.totalorder %s16, 4
      %s26 = sphi 0, %s28
      %s29 = sphi 0, %s26
      %s30 = sphi 0, %s29
      %s46 = sphi 0, %s30
      %s52 = sphi 0, %s54
      %s55 = sphi 0, %s52
      %s56 = sphi 0, %s55
      %s72 = sphi 0, %s56
      %s76 = sphi 0, %s76
      %s78 = sphi 0, %s76
      %s79 = sphi 0, %s78
      %s93 = sphi 0, %s79
      %s97 = sphi 0, %s97
      %s99 = sphi 0, %s97
      %s100 = sphi 0, %s99
      %s114 = sphi 0, %s100
      %s120 = sphi 0, %s122
      %s123 = sphi 0, %s120
      %s124 = sphi 0, %s123
      %s140 = sphi 0, %s124
      %s146 = sphi 0, %s148
      %s149 = sphi 0, %s146
      %s150 = sphi 0, %s149
      %s166 = sphi 0, %s150
      %s172 = sphi 0, %s174
      %s175 = sphi 0, %s172
      %s176 = sphi 0, %s175
      %s192 = sphi 0, %s176
    $region4: #{_lambda_.17} parent=1 // loop_header_branch
      %19 = sbr.rel (%p17) target = $region8
    $region5: #{_lambda_.17} parent=1 // loop_body
      %s21 = ssub.s32 %s16, 1
      %s22 = ssub.s32 %s16, 2
      %s23 = sadd.s32 %s16, 1
      %s24 = ssub.s32 %s16, %s23
      %p25 = scmp.eq.s32.totalorder %s24, 0
      %s27 = sadd.s32 %s26, 1
      %s28 = scalar_select %p25, %s26, %s27
      %p31 = pneg %p25
      %p32 = scmp.eq.s32.totalorder %s16, 1
      %p33 = por %p31, %p32
      %p34 = scmp.ne.s32.totalorder %s26, %s29
      %p35 = scmp.eq.s32.totalorder %s16, 0
      %p36 = por %p34, %p35
      %p37 = scmp.ne.s32.totalorder %s26, %s29
      %p38 = scmp.eq.s32.totalorder %s21, 1
      %p39 = por %p37, %p38
      %p40 = scmp.ne.s32.totalorder %s29, %s30
      %p41 = scmp.eq.s32.totalorder %s21, 0
      %p42 = por %p40, %p41
      %p43 = scmp.ne.s32.totalorder %s29, %s30
      %p44 = scmp.eq.s32.totalorder %s22, 1
      %p45 = por %p43, %p44
      %p47 = scmp.ne.s32.totalorder %s30, %s46
      %p48 = scmp.eq.s32.totalorder %s22, 0
      %p49 = por %p47, %p48
      %s50 = ssub.s32 %s16, %s23
      %p51 = scmp.eq.s32.totalorder %s50, 0
      %s53 = sadd.s32 %s52, 1
      %s54 = scalar_select %p51, %s52, %s53
      %p57 = pneg %p51
      %p58 = scmp.eq.s32.totalorder %s16, 1
      %p59 = por %p57, %p58
      %p60 = scmp.ne.s32.totalorder %s52, %s55
      %p61 = scmp.eq.s32.totalorder %s16, 0
      %p62 = por %p60, %p61
      %p63 = scmp.ne.s32.totalorder %s52, %s55
      %p64 = scmp.eq.s32.totalorder %s21, 1
      %p65 = por %p63, %p64
      %p66 = scmp.ne.s32.totalorder %s55, %s56
      %p67 = scmp.eq.s32.totalorder %s21, 0
      %p68 = por %p66, %p67
      %p69 = scmp.ne.s32.totalorder %s55, %s56
      %p70 = scmp.eq.s32.totalorder %s22, 1
      %p71 = por %p69, %p70
      %p73 = scmp.ne.s32.totalorder %s56, %s72
      %p74 = scmp.eq.s32.totalorder %s22, 0
      %p75 = por %p73, %p74
      %s77 = sadd.s32 %s76, 1
      %p80 = scmp.eq.s32.totalorder %s16, 1
      %p81 = scmp.ne.s32.totalorder %s76, %s78
      %p82 = scmp.eq.s32.totalorder %s16, 0
      %p83 = por %p81, %p82
      %p84 = scmp.ne.s32.totalorder %s76, %s78
      %p85 = scmp.eq.s32.totalorder %s21, 1
      %p86 = por %p84, %p85
      %p87 = scmp.ne.s32.totalorder %s78, %s79
      %p88 = scmp.eq.s32.totalorder %s21, 0
      %p89 = por %p87, %p88
      %p90 = scmp.ne.s32.totalorder %s78, %s79
      %p91 = scmp.eq.s32.totalorder %s22, 1
      %p92 = por %p90, %p91
      %p94 = scmp.ne.s32.totalorder %s79, %s93
      %p95 = scmp.eq.s32.totalorder %s22, 0
      %p96 = por %p94, %p95
      %s98 = sadd.s32 %s97, 1
      %p101 = scmp.eq.s32.totalorder %s16, 1
      %p102 = scmp.ne.s32.totalorder %s97, %s99
      %p103 = scmp.eq.s32.totalorder %s16, 0
      %p104 = por %p102, %p103
      %p105 = scmp.ne.s32.totalorder %s97, %s99
      %p106 = scmp.eq.s32.totalorder %s21, 1
      %p107 = por %p105, %p106
      %p108 = scmp.ne.s32.totalorder %s99, %s100
      %p109 = scmp.eq.s32.totalorder %s21, 0
      %p110 = por %p108, %p109
      %p111 = scmp.ne.s32.totalorder %s99, %s100
      %p112 = scmp.eq.s32.totalorder %s22, 1
      %p113 = por %p111, %p112
      %p115 = scmp.ne.s32.totalorder %s100, %s114
      %p116 = scmp.eq.s32.totalorder %s22, 0
      %p117 = por %p115, %p116
      %s118 = ssub.s32 %s16, %s23
      %p119 = scmp.eq.s32.totalorder %s118, 0
      %s121 = sadd.s32 %s120, 1
      %s122 = scalar_select %p119, %s120, %s121
      %p125 = pneg %p119
      %p126 = scmp.eq.s32.totalorder %s16, 1
      %p127 = por %p125, %p126
      %p128 = scmp.ne.s32.totalorder %s120, %s123
      %p129 = scmp.eq.s32.totalorder %s16, 0
      %p130 = por %p128, %p129
      %p131 = scmp.ne.s32.totalorder %s120, %s123
      %p132 = scmp.eq.s32.totalorder %s21, 1
      %p133 = por %p131, %p132
      %p134 = scmp.ne.s32.totalorder %s123, %s124
      %p135 = scmp.eq.s32.totalorder %s21, 0
      %p136 = por %p134, %p135
      %p137 = scmp.ne.s32.totalorder %s123, %s124
      %p138 = scmp.eq.s32.totalorder %s22, 1
      %p139 = por %p137, %p138
      %p141 = scmp.ne.s32.totalorder %s124, %s140
      %p142 = scmp.eq.s32.totalorder %s22, 0
      %p143 = por %p141, %p142
      %s144 = ssub.s32 %s16, %s23
      %p145 = scmp.eq.s32.totalorder %s144, 0
      %s147 = sadd.s32 %s146, 1
      %s148 = scalar_select %p145, %s146, %s147
      %p151 = pneg %p145
      %p152 = scmp.eq.s32.totalorder %s16, 1
      %p153 = por %p151, %p152
      %p154 = scmp.ne.s32.totalorder %s146, %s149
      %p155 = scmp.eq.s32.totalorder %s16, 0
      %p156 = por %p154, %p155
      %p157 = scmp.ne.s32.totalorder %s146, %s149
      %p158 = scmp.eq.s32.totalorder %s21, 1
      %p159 = por %p157, %p158
      %p160 = scmp.ne.s32.totalorder %s149, %s150
      %p161 = scmp.eq.s32.totalorder %s21, 0
      %p162 = por %p160, %p161
      %p163 = scmp.ne.s32.totalorder %s149, %s150
      %p164 = scmp.eq.s32.totalorder %s22, 1
      %p165 = por %p163, %p164
      %p167 = scmp.ne.s32.totalorder %s150, %s166
      %p168 = scmp.eq.s32.totalorder %s22, 0
      %p169 = por %p167, %p168
      %s170 = ssub.s32 %s16, %s23
      %p171 = scmp.eq.s32.totalorder %s170, 0
      %s173 = sadd.s32 %s172, 1
      %s174 = scalar_select %p171, %s172, %s173
      %p177 = pneg %p171
      %p178 = scmp.eq.s32.totalorder %s16, 1
      %p179 = por %p177, %p178
      %p180 = scmp.ne.s32.totalorder %s172, %s175
      %p181 = scmp.eq.s32.totalorder %s16, 0
      %p182 = por %p180, %p181
      %p183 = scmp.ne.s32.totalorder %s172, %s175
      %p184 = scmp.eq.s32.totalorder %s21, 1
      %p185 = por %p183, %p184
      %p186 = scmp.ne.s32.totalorder %s175, %s176
      %p187 = scmp.eq.s32.totalorder %s21, 0
      %p188 = por %p186, %p187
      %p189 = scmp.ne.s32.totalorder %s175, %s176
      %p190 = scmp.eq.s32.totalorder %s22, 1
      %p191 = por %p189, %p190
      %p193 = scmp.ne.s32.totalorder %s176, %s192
      %p194 = scmp.eq.s32.totalorder %s22, 0
      %p195 = por %p193, %p194
      %p196 = scmp.le.s32.totalorder 1, %s16
      %p197 = scmp.lt.s32.totalorder %s16, 3
      %p198 = pnand %p196, %p197
      %p199 = pneg %p198
      // Predicated region
      $region9: #{_lambda_.17} parent=5 // pred_check
        _
      $region10: #{_lambda_.17} parent=5 // pred_check_branch
        %201 = sbr.rel (%p198) target = $region12
      $region11: #{_lambda_.17} parent=5 // pred_region
        %s202 = ssub.s32 %s16, 1
        // Predicated region
        $region13: #{_lambda_.17} parent=11 // pred_check
          %p203 = pneg %p89
        $region14: #{_lambda_.17} parent=11 // pred_check_branch
          %205 = sbr.rel (%p203) target = $region16
        $region15: #{_lambda_.17} parent=11 // pred_region
          _
        $region16: #{_lambda_.17} parent=11 // pred_fallthru
          _
        // Predicated region
        $region17: #{_lambda_.17} parent=11 // pred_check
          %p206 = pneg %p110
        $region18: #{_lambda_.17} parent=11 // pred_check_branch
          %208 = sbr.rel (%p206) target = $region20
        $region19: #{_lambda_.17} parent=11 // pred_region
          _
        $region20: #{_lambda_.17} parent=11 // pred_fallthru
          _
      $region12: #{_lambda_.17} parent=5 // pred_fallthru
        _
      %p209 = scmp.lt.s32.totalorder %s16, 2
      // Predicated region
      $region21: #{_lambda_.17} parent=5 // pred_check
        %p210 = pneg %p209
      $region22: #{_lambda_.17} parent=5 // pred_check_branch
        %212 = sbr.rel (%p210) target = $region24
      $region23: #{_lambda_.17} parent=5 // pred_region
        // Predicated region
        $region25: #{_lambda_.17} parent=23 // pred_check
          %p213 = pneg %p36
        $region26: #{_lambda_.17} parent=23 // pred_check_branch
          %215 = sbr.rel (%p213) target = $region28
        $region27: #{_lambda_.17} parent=23 // pred_region
          %p216 = scmp.lt.s32.totalorder %s16, 1
          %s217 = scalar_select %p216, %s16, 1
          %s218 = smul.addr %s217, 8
          %s219 = scalar_lea.vmem %s0, %s218
        $region28: #{_lambda_.17} parent=23 // pred_fallthru
          _
        // Predicated region
        $region29: #{_lambda_.17} parent=23 // pred_check
          %p220 = pneg %p62
        $region30: #{_lambda_.17} parent=23 // pred_check_branch
          %222 = sbr.rel (%p220) target = $region32
        $region31: #{_lambda_.17} parent=23 // pred_region
          %p223 = scmp.lt.s32.totalorder %s16, 1
          %s224 = scalar_select %p223, %s16, 1
          %s225 = smul.addr %s224, 4
          %s226 = smul.addr %s225, 8
          %s227 = scalar_lea.vmem %s1, %s226
        $region32: #{_lambda_.17} parent=23 // pred_fallthru
          _
        // Predicated region
        $region33: #{_lambda_.17} parent=23 // pred_check
          %p228 = pneg %p130
        $region34: #{_lambda_.17} parent=23 // pred_check_branch
          %230 = sbr.rel (%p228) target = $region36
        $region35: #{_lambda_.17} parent=23 // pred_region
          %p231 = scmp.lt.s32.totalorder %s16, 1
          %s232 = scalar_select %p231, %s16, 1
          %s233 = smul.addr %s232, 8
          %s234 = scalar_lea.vmem %s4, %s233
        $region36: #{_lambda_.17} parent=23 // pred_fallthru
          _
      $region24: #{_lambda_.17} parent=5 // pred_fallthru
        _
      %p235 = scmp.le.s32.totalorder 1, %s16
      %p236 = scmp.lt.s32.totalorder %s16, 3
      %p237 = pnand %p235, %p236
      %p238 = pneg %p237
      // Predicated region
      $region37: #{_lambda_.17} parent=5 // pred_check
        _
      $region38: #{_lambda_.17} parent=5 // pred_check_branch
        %240 = sbr.rel (%p237) target = $region40
      $region39: #{_lambda_.17} parent=5 // pred_region
        %s241 = ssub.s32 %s16, 1
        %p242 = scmp.lt.s32.totalorder %s21, 1
        %s243 = scalar_select %p242, %s21, 1
        %s244 = smul.addr %s243, 8
        %s245 = scalar_lea.vmem %s0, %s244
        %p246 = pneg %p42
        %p247 = pneg %p39
        %p248 = scmp.lt.s32.totalorder %s21, 1
        %s249 = scalar_select %p248, %s21, 1
        %s250 = smul.addr %s249, 4
        %s251 = smul.addr %s250, 8
        %s252 = scalar_lea.vmem %s1, %s251
        %p253 = pneg %p68
        %p254 = pneg %p65
        %p255 = pneg %p89
        %p256 = pneg %p86
        %p257 = pneg %p110
        %p258 = pneg %p107
        %p259 = scmp.lt.s32.totalorder %s21, 1
        %s260 = scalar_select %p259, %s21, 1
        %s261 = smul.addr %s260, 8
        %s262 = scalar_lea.vmem %s4, %s261
        %p263 = pneg %p136
        %p264 = pneg %p133
        %p265 = pneg %p162
        %p266 = pneg %p159
        %p267 = scmp.lt.s32.totalorder %s21, 1
        %s268 = scalar_select %p267, %s21, 1
        %s269 = smul.addr %s268, 4
        %s270 = smul.addr %s269, 8
        %s271 = scalar_lea.vmem %s5, %s270
        %p272 = pneg %p188
        %p273 = pneg %p185
        %s274 = sand.u32 %s175, 1
        %s275 = scalar_lea.sflag [#allocation3], %s274
        %s276 = sand.u32 %s175, 1
        %s277 = smul.addr %s276, 8
        %s278 = scalar_lea.vmem [#allocation2], %s277
        %p279 = scmp.lt.s32.totalorder %s21, 1
        %s280 = scalar_select %p279, %s21, 1
        %s281 = smul.addr %s280, 8
        %s282 = scalar_lea.vmem %s0, %s281
        %p283 = scmp.lt.s32.totalorder %s21, 1
        %s284 = scalar_select %p283, %s21, 1
        %s285 = smul.addr %s284, 4
        %s286 = smul.addr %s285, 8
        %s287 = scalar_lea.vmem %s1, %s286
        %p288 = scmp.lt.s32.totalorder %s21, 1
        %s289 = scalar_select %p288, %s21, 1
        %s290 = smul.addr %s289, 8
        %s291 = scalar_lea.vmem %s4, %s290
        %p292 = scmp.lt.s32.totalorder %s21, 1
        %s293 = scalar_select %p292, %s21, 1
        %s294 = smul.addr %s293, 4
        %s295 = smul.addr %s294, 8
        %s296 = scalar_lea.vmem %s5, %s295
        %v298 = vld [vmem:[%s282] sm:$0xff]
        %v299 = vpack.c.bf16 %v298, %v298
        %v300 = vld [vmem:[%s2] sm:$0xf]
        %vm301 = vcmask 64512
        %v303 = vsel %vm301, %v299, 0
        %vm305 = vcmask 1043456
        %v307 = vsel %vm305, %v300, 0
        %309 = vmatprep.subr.bf16.mxu0 0
        %310 = vmatpush1.bf16.msra.mxu0 %v307
        %311 = vmatprep.subr.bf16.mxu0 0
        %312 = vmatpush1.bf16.msra.mxu0 0
        %313 = vmatprep.subr.bf16.mxu0 0
        %314 = vmatpush1.bf16.msra.mxu0 0
        %315 = vmatprep.subr.bf16.mxu0 0
        %316 = vmatpush1.bf16.msra.mxu0 0
        %317 = vmatprep.subr.bf16.mxu0 0
        %318 = vmatpush1.bf16.msra.mxu0 0
        %319 = vmatprep.subr.bf16.mxu0 0
        %320 = vmatpush1.bf16.msra.mxu0 0
        %321 = vmatprep.subr.bf16.mxu0 0
        %322 = vmatpush1.bf16.msra.mxu0 0
        %323 = vmatprep.subr.bf16.mxu0 0
        %324 = vmatpush1.bf16.msra.mxu0 0
        %325 = vmatprep.subr.bf16.mxu0 0
        %326 = vmatpush1.bf16.msra.mxu0 0
        %327 = vmatprep.subr.bf16.mxu0 0
        %328 = vmatpush1.bf16.msra.mxu0 0
        %329 = vmatprep.subr.bf16.mxu0 0
        %330 = vmatpush1.bf16.msra.mxu0 0
        %331 = vmatprep.subr.bf16.mxu0 0
        %332 = vmatpush1.bf16.msra.mxu0 0
        %333 = vmatprep.subr.bf16.mxu0 0
        %334 = vmatpush1.bf16.msra.mxu0 0
        %335 = vmatprep.subr.bf16.mxu0 0
        %336 = vmatpush1.bf16.msra.mxu0 0
        %337 = vmatprep.subr.bf16.mxu0 0
        %338 = vmatpush1.bf16.msra.mxu0 0
        %339 = vmatprep.subr.bf16.mxu0 0
        %340 = vmatpush1.bf16.msra.mxu0 0
        %341 = vmatprep.mubr.bf16.mxu0 0
        %342 = vmatmul.mubr.bf16.gmra.mrb[0].mxu0 %v303
        %v343 = vpop.f32.mrb[0].mxu0
        %v344 = vadd.f32 0.0, %v343
        %v345 = vpop.f32.mrb[0].mxu0
        %v346 = vpop.f32.mrb[0].mxu0
        %v347 = vpop.f32.mrb[0].mxu0
        %348 = vdwg.mxu0
        %v349 = vlaneseq
        %v350 = vshrl.u32 %v349, 7
        %v351 = vlaneseq
        %v352 = vand.u32 %v351, 127
        %vm353 = vcmp.eq.s32.totalorder %v350, %v352
        %v354 = vsel %vm353, 1, 0
        %v355 = vcvt.s32.f32 %v354
        %v356 = vld [vmem:[%s291] sm:$0xff]
        %v357 = vld [vmem:[%s287] sm:$0xff]
        %v358 = vsub.f32 1.0, %v355
        %v359 = vmul.f32 %v357, %v358
        %v360 = vadd.f32 %v359, %v355
        %v361 = vsel %vm301, %v360, 0.0
        %362 = vadd.xlane.f32.xlu0 %v361
        %v363 = vpop.xlane.xlu0 %362
        %v364 = vmax.f32 %v363, 1.0
        %v365 = vrsqrt.pop %v364
        %v366 = vmul.f32 %v344, %v365
        %v368 = vsel %vm301, %v360, 0
        %370 = vmatprep.subr.mxu0 0.0
        %371 = vmatpush1.msra.mxu0 %v366
        %372 = vmatprep.subr.mxu0 0.0
        %373 = vmatpush1.msra.mxu0 0.0
        %374 = vmatprep.subr.mxu0 0.0
        %375 = vmatpush1.msra.mxu0 0.0
        %376 = vmatprep.subr.mxu0 0.0
        %377 = vmatpush1.msra.mxu0 0.0
        %378 = vmatprep.subr.mxu0 0.0
        %379 = vmatpush1.msra.mxu0 0.0
        %380 = vmatprep.subr.mxu0 0.0
        %381 = vmatpush1.msra.mxu0 0.0
        %382 = vmatprep.subr.mxu0 0.0
        %383 = vmatpush1.msra.mxu0 0.0
        %384 = vmatprep.subr.mxu0 0.0
        %385 = vmatpush1.msra.mxu0 0.0
        %386 = vmatprep.subr.mxu0 0.0
        %387 = vmatpush1.msra.mxu0 0.0
        %388 = vmatprep.subr.mxu0 0.0
        %389 = vmatpush1.msra.mxu0 0.0
        %390 = vmatprep.subr.mxu0 0.0
        %391 = vmatpush1.msra.mxu0 0.0
        %392 = vmatprep.subr.mxu0 0.0
        %393 = vmatpush1.msra.mxu0 0.0
        %394 = vmatprep.subr.mxu0 0.0
        %395 = vmatpush1.msra.mxu0 0.0
        %396 = vmatprep.subr.mxu0 0.0
        %397 = vmatpush1.msra.mxu0 0.0
        %398 = vmatprep.subr.mxu0 0.0
        %399 = vmatpush1.msra.mxu0 0.0
        %400 = vmatprep.subr.mxu0 0.0
        %401 = vmatpush1.msra.mxu0 0.0
        %402 = vmatprep.subr.mxu0 0.0
        %403 = vmatpush1.msra.mxu0 0.0
        %404 = vmatprep.subr.mxu0 0.0
        %405 = vmatpush1.msra.mxu0 0.0
        %406 = vmatprep.subr.mxu0 0.0
        %407 = vmatpush1.msra.mxu0 0.0
        %408 = vmatprep.subr.mxu0 0.0
        %409 = vmatpush1.msra.mxu0 0.0
        %410 = vmatprep.subr.mxu0 0.0
        %411 = vmatpush1.msra.mxu0 0.0
        %412 = vmatprep.subr.mxu0 0.0
        %413 = vmatpush1.msra.mxu0 0.0
        %414 = vmatprep.subr.mxu0 0.0
        %415 = vmatpush1.msra.mxu0 0.0
        %416 = vmatprep.subr.mxu0 0.0
        %417 = vmatpush1.msra.mxu0 0.0
        %418 = vmatprep.subr.mxu0 0.0
        %419 = vmatpush1.msra.mxu0 0.0
        %420 = vmatprep.subr.mxu0 0.0
        %421 = vmatpush1.msra.mxu0 0.0
        %422 = vmatprep.subr.mxu0 0.0
        %423 = vmatpush1.msra.mxu0 0.0
        %424 = vmatprep.subr.mxu0 0.0
        %425 = vmatpush1.msra.mxu0 0.0
        %426 = vmatprep.subr.mxu0 0.0
        %427 = vmatpush1.msra.mxu0 0.0
        %428 = vmatprep.subr.mxu0 0.0
        %429 = vmatpush1.msra.mxu0 0.0
        %430 = vmatprep.subr.mxu0 0.0
        %431 = vmatpush1.msra.mxu0 0.0
        %432 = vmatprep.subr.mxu0 0.0
        %433 = vmatpush1.msra.mxu0 0.0
        %434 = vmatprep.mubr.f32.mxu0 0.0
        %435 = vmatmul.mubr.f32.gmra.mrb[0].mxu0 %v368
        %v436 = vpop.f32.mrb[0].mxu0
        %v437 = vadd.f32 0.0, %v436
        %v438 = vpop.f32.mrb[0].mxu0
        %439 = vdwg.mxu0
        %v440 = vmul.f32 %v437, %v365
        %v441 = vld [vmem:[%s3] sm:$0x1]
        %v442 = vlaneseq
        %v443 = vshrl.u32 %v442, 7
        %v444 = vsub.s32 0, %v443
        %v445 = vrot.slane %v441, %v444
        %v446 = vadd.f32 %v440, %v445
        %448 = vrot.lane.b32.xlu0 %v446, 120
        %v449 = vpop.permute.xlu0 %448
        %vm450 = vcmask 31744
        %v451 = vsel %vm450, %v446, 0
        %v453 = vsel %vm450, %v449, 0
        %455 = vmatprep.subr.mxu0 0.0
        %456 = vmatpush1.xpose.msra.mxu0 %v453
        %457 = vmatprep.subr.mxu0 0.0
        %458 = vmatpush1.xpose.msra.mxu0 0.0
        %459 = vmatprep.subr.mxu0 0.0
        %460 = vmatpush1.xpose.msra.mxu0 0.0
        %461 = vmatprep.subr.mxu0 0.0
        %462 = vmatpush1.xpose.msra.mxu0 0.0
        %463 = vmatprep.subr.mxu0 0.0
        %464 = vmatpush1.xpose.msra.mxu0 0.0
        %465 = vmatprep.subr.mxu0 0.0
        %466 = vmatpush1.xpose.msra.mxu0 0.0
        %467 = vmatprep.subr.mxu0 0.0
        %468 = vmatpush1.xpose.msra.mxu0 0.0
        %469 = vmatprep.subr.mxu0 0.0
        %470 = vmatpush1.xpose.msra.mxu0 0.0
        %471 = vmatprep.subr.mxu0 0.0
        %472 = vmatpush1.xpose.msra.mxu0 0.0
        %473 = vmatprep.subr.mxu0 0.0
        %474 = vmatpush1.xpose.msra.mxu0 0.0
        %475 = vmatprep.subr.mxu0 0.0
        %476 = vmatpush1.xpose.msra.mxu0 0.0
        %477 = vmatprep.subr.mxu0 0.0
        %478 = vmatpush1.xpose.msra.mxu0 0.0
        %479 = vmatprep.subr.mxu0 0.0
        %480 = vmatpush1.xpose.msra.mxu0 0.0
        %481 = vmatprep.subr.mxu0 0.0
        %482 = vmatpush1.xpose.msra.mxu0 0.0
        %483 = vmatprep.subr.mxu0 0.0
        %484 = vmatpush1.xpose.msra.mxu0 0.0
        %485 = vmatprep.subr.mxu0 0.0
        %486 = vmatpush1.xpose.msra.mxu0 0.0
        %487 = vmatprep.subr.mxu0 0.0
        %488 = vmatpush1.xpose.msra.mxu0 0.0
        %489 = vmatprep.subr.mxu0 0.0
        %490 = vmatpush1.xpose.msra.mxu0 0.0
        %491 = vmatprep.subr.mxu0 0.0
        %492 = vmatpush1.xpose.msra.mxu0 0.0
        %493 = vmatprep.subr.mxu0 0.0
        %494 = vmatpush1.xpose.msra.mxu0 0.0
        %495 = vmatprep.subr.mxu0 0.0
        %496 = vmatpush1.xpose.msra.mxu0 0.0
        %497 = vmatprep.subr.mxu0 0.0
        %498 = vmatpush1.xpose.msra.mxu0 0.0
        %499 = vmatprep.subr.mxu0 0.0
        %500 = vmatpush1.xpose.msra.mxu0 0.0
        %501 = vmatprep.subr.mxu0 0.0
        %502 = vmatpush1.xpose.msra.mxu0 0.0
        %503 = vmatprep.subr.mxu0 0.0
        %504 = vmatpush1.xpose.msra.mxu0 0.0
        %505 = vmatprep.subr.mxu0 0.0
        %506 = vmatpush1.xpose.msra.mxu0 0.0
        %507 = vmatprep.subr.mxu0 0.0
        %508 = vmatpush1.xpose.msra.mxu0 0.0
        %509 = vmatprep.subr.mxu0 0.0
        %510 = vmatpush1.xpose.msra.mxu0 0.0
        %511 = vmatprep.subr.mxu0 0.0
        %512 = vmatpush1.xpose.msra.mxu0 0.0
        %513 = vmatprep.subr.mxu0 0.0
        %514 = vmatpush1.xpose.msra.mxu0 0.0
        %515 = vmatprep.subr.mxu0 0.0
        %516 = vmatpush1.xpose.msra.mxu0 0.0
        %517 = vmatprep.subr.mxu0 0.0
        %518 = vmatpush1.xpose.msra.mxu0 0.0
        %519 = vmatprep.mubr.f32.mxu0 0.0
        %520 = vmatmul.mubr.f32.gmra.mrb[0].mxu0 %v451
        %v521 = vpop.f32.mrb[0].mxu0
        %v522 = vadd.f32 0.0, %v521
        %v523 = vpop.f32.mrb[0].mxu0
        %524 = vdwg.mxu0
        %525 = vmatprep.subr.mxu0 0.0
        %526 = vmatpush1.xpose.msra.mxu0 %v451
        %527 = vmatprep.subr.mxu0 0.0
        %528 = vmatpush1.xpose.msra.mxu0 0.0
        %529 = vmatprep.subr.mxu0 0.0
        %530 = vmatpush1.xpose.msra.mxu0 0.0
        %531 = vmatprep.subr.mxu0 0.0
        %532 = vmatpush1.xpose.msra.mxu0 0.0
        %533 = vmatprep.subr.mxu0 0.0
        %534 = vmatpush1.xpose.msra.mxu0 0.0
        %535 = vmatprep.subr.mxu0 0.0
        %536 = vmatpush1.xpose.msra.mxu0 0.0
        %537 = vmatprep.subr.mxu0 0.0
        %538 = vmatpush1.xpose.msra.mxu0 0.0
        %539 = vmatprep.subr.mxu0 0.0
        %540 = vmatpush1.xpose.msra.mxu0 0.0
        %541 = vmatprep.subr.mxu0 0.0
        %542 = vmatpush1.xpose.msra.mxu0 0.0
        %543 = vmatprep.subr.mxu0 0.0
        %544 = vmatpush1.xpose.msra.mxu0 0.0
        %545 = vmatprep.subr.mxu0 0.0
        %546 = vmatpush1.xpose.msra.mxu0 0.0
        %547 = vmatprep.subr.mxu0 0.0
        %548 = vmatpush1.xpose.msra.mxu0 0.0
        %549 = vmatprep.subr.mxu0 0.0
        %550 = vmatpush1.xpose.msra.mxu0 0.0
        %551 = vmatprep.subr.mxu0 0.0
        %552 = vmatpush1.xpose.msra.mxu0 0.0
        %553 = vmatprep.subr.mxu0 0.0
        %554 = vmatpush1.xpose.msra.mxu0 0.0
        %555 = vmatprep.subr.mxu0 0.0
        %556 = vmatpush1.xpose.msra.mxu0 0.0
        %557 = vmatprep.subr.mxu0 0.0
        %558 = vmatpush1.xpose.msra.mxu0 0.0
        %559 = vmatprep.subr.mxu0 0.0
        %560 = vmatpush1.xpose.msra.mxu0 0.0
        %561 = vmatprep.subr.mxu0 0.0
        %562 = vmatpush1.xpose.msra.mxu0 0.0
        %563 = vmatprep.subr.mxu0 0.0
        %564 = vmatpush1.xpose.msra.mxu0 0.0
        %565 = vmatprep.subr.mxu0 0.0
        %566 = vmatpush1.xpose.msra.mxu0 0.0
        %567 = vmatprep.subr.mxu0 0.0
        %568 = vmatpush1.xpose.msra.mxu0 0.0
        %569 = vmatprep.subr.mxu0 0.0
        %570 = vmatpush1.xpose.msra.mxu0 0.0
        %571 = vmatprep.subr.mxu0 0.0
        %572 = vmatpush1.xpose.msra.mxu0 0.0
        %573 = vmatprep.subr.mxu0 0.0
        %574 = vmatpush1.xpose.msra.mxu0 0.0
        %575 = vmatprep.subr.mxu0 0.0
        %576 = vmatpush1.xpose.msra.mxu0 0.0
        %577 = vmatprep.subr.mxu0 0.0
        %578 = vmatpush1.xpose.msra.mxu0 0.0
        %579 = vmatprep.subr.mxu0 0.0
        %580 = vmatpush1.xpose.msra.mxu0 0.0
        %581 = vmatprep.subr.mxu0 0.0
        %582 = vmatpush1.xpose.msra.mxu0 0.0
        %583 = vmatprep.subr.mxu0 0.0
        %584 = vmatpush1.xpose.msra.mxu0 0.0
        %585 = vmatprep.subr.mxu0 0.0
        %586 = vmatpush1.xpose.msra.mxu0 0.0
        %587 = vmatprep.subr.mxu0 0.0
        %588 = vmatpush1.xpose.msra.mxu0 0.0
        %589 = vmatprep.mubr.f32.mxu0 0.0
        %590 = vmatmul.mubr.f32.gmra.mrb[0].mxu0 %v453
        %v591 = vpop.f32.mrb[0].mxu0
        %v592 = vadd.f32 0.0, %v591
        %v593 = vpop.f32.mrb[0].mxu0
        %594 = vdwg.mxu0
        %v595 = vmul.f32 %v522, 0.35355338
        %v596 = vtanh.pop %v595
        %v597 = vmul.f32 %v592, 0.35355338
        %v598 = vtanh.pop %v597
        %v599 = vadd.f32 %v596, %v598
        %600 = vrot.lane.b32.xlu0 %v446, 124
        %v601 = vpop.permute.xlu0 %600
        %602 = vrot.lane.b32.xlu0 %v446, 116
        %v603 = vpop.permute.xlu0 %602
        %v604 = vsel %vm450, %v601, 0
        %v606 = vsel %vm450, %v603, 0
        %608 = vmatprep.subr.mxu0 0.0
        %609 = vmatpush1.xpose.msra.mxu0 %v606
        %610 = vmatprep.subr.mxu0 0.0
        %611 = vmatpush1.xpose.msra.mxu0 0.0
        %612 = vmatprep.subr.mxu0 0.0
        %613 = vmatpush1.xpose.msra.mxu0 0.0
        %614 = vmatprep.subr.mxu0 0.0
        %615 = vmatpush1.xpose.msra.mxu0 0.0
        %616 = vmatprep.subr.mxu0 0.0
        %617 = vmatpush1.xpose.msra.mxu0 0.0
        %618 = vmatprep.subr.mxu0 0.0
        %619 = vmatpush1.xpose.msra.mxu0 0.0
        %620 = vmatprep.subr.mxu0 0.0
        %621 = vmatpush1.xpose.msra.mxu0 0.0
        %622 = vmatprep.subr.mxu0 0.0
        %623 = vmatpush1.xpose.msra.mxu0 0.0
        %624 = vmatprep.subr.mxu0 0.0
        %625 = vmatpush1.xpose.msra.mxu0 0.0
        %626 = vmatprep.subr.mxu0 0.0
        %627 = vmatpush1.xpose.msra.mxu0 0.0
        %628 = vmatprep.subr.mxu0 0.0
        %629 = vmatpush1.xpose.msra.mxu0 0.0
        %630 = vmatprep.subr.mxu0 0.0
        %631 = vmatpush1.xpose.msra.mxu0 0.0
        %632 = vmatprep.subr.mxu0 0.0
        %633 = vmatpush1.xpose.msra.mxu0 0.0
        %634 = vmatprep.subr.mxu0 0.0
        %635 = vmatpush1.xpose.msra.mxu0 0.0
        %636 = vmatprep.subr.mxu0 0.0
        %637 = vmatpush1.xpose.msra.mxu0 0.0
        %638 = vmatprep.subr.mxu0 0.0
        %639 = vmatpush1.xpose.msra.mxu0 0.0
        %640 = vmatprep.subr.mxu0 0.0
        %641 = vmatpush1.xpose.msra.mxu0 0.0
        %642 = vmatprep.subr.mxu0 0.0
        %643 = vmatpush1.xpose.msra.mxu0 0.0
        %644 = vmatprep.subr.mxu0 0.0
        %645 = vmatpush1.xpose.msra.mxu0 0.0
        %646 = vmatprep.subr.mxu0 0.0
        %647 = vmatpush1.xpose.msra.mxu0 0.0
        %648 = vmatprep.subr.mxu0 0.0
        %649 = vmatpush1.xpose.msra.mxu0 0.0
        %650 = vmatprep.subr.mxu0 0.0
        %651 = vmatpush1.xpose.msra.mxu0 0.0
        %652 = vmatprep.subr.mxu0 0.0
        %653 = vmatpush1.xpose.msra.mxu0 0.0
        %654 = vmatprep.subr.mxu0 0.0
        %655 = vmatpush1.xpose.msra.mxu0 0.0
        %656 = vmatprep.subr.mxu0 0.0
        %657 = vmatpush1.xpose.msra.mxu0 0.0
        %658 = vmatprep.subr.mxu0 0.0
        %659 = vmatpush1.xpose.msra.mxu0 0.0
        %660 = vmatprep.subr.mxu0 0.0
        %661 = vmatpush1.xpose.msra.mxu0 0.0
        %662 = vmatprep.subr.mxu0 0.0
        %663 = vmatpush1.xpose.msra.mxu0 0.0
        %664 = vmatprep.subr.mxu0 0.0
        %665 = vmatpush1.xpose.msra.mxu0 0.0
        %666 = vmatprep.subr.mxu0 0.0
        %667 = vmatpush1.xpose.msra.mxu0 0.0
        %668 = vmatprep.subr.mxu0 0.0
        %669 = vmatpush1.xpose.msra.mxu0 0.0
        %670 = vmatprep.subr.mxu0 0.0
        %671 = vmatpush1.xpose.msra.mxu0 0.0
        %672 = vmatprep.mubr.f32.mxu0 0.0
        %673 = vmatmul.mubr.f32.gmra.mrb[0].mxu0 %v604
        %v674 = vpop.f32.mrb[0].mxu0
        %v675 = vadd.f32 0.0, %v674
        %v676 = vpop.f32.mrb[0].mxu0
        %677 = vdwg.mxu0
        %678 = vmatprep.subr.mxu0 0.0
        %679 = vmatpush1.xpose.msra.mxu0 %v604
        %680 = vmatprep.subr.mxu0 0.0
        %681 = vmatpush1.xpose.msra.mxu0 0.0
        %682 = vmatprep.subr.mxu0 0.0
        %683 = vmatpush1.xpose.msra.mxu0 0.0
        %684 = vmatprep.subr.mxu0 0.0
        %685 = vmatpush1.xpose.msra.mxu0 0.0
        %686 = vmatprep.subr.mxu0 0.0
        %687 = vmatpush1.xpose.msra.mxu0 0.0
        %688 = vmatprep.subr.mxu0 0.0
        %689 = vmatpush1.xpose.msra.mxu0 0.0
        %690 = vmatprep.subr.mxu0 0.0
        %691 = vmatpush1.xpose.msra.mxu0 0.0
        %692 = vmatprep.subr.mxu0 0.0
        %693 = vmatpush1.xpose.msra.mxu0 0.0
        %694 = vmatprep.subr.mxu0 0.0
        %695 = vmatpush1.xpose.msra.mxu0 0.0
        %696 = vmatprep.subr.mxu0 0.0
        %697 = vmatpush1.xpose.msra.mxu0 0.0
        %698 = vmatprep.subr.mxu0 0.0
        %699 = vmatpush1.xpose.msra.mxu0 0.0
        %700 = vmatprep.subr.mxu0 0.0
        %701 = vmatpush1.xpose.msra.mxu0 0.0
        %702 = vmatprep.subr.mxu0 0.0
        %703 = vmatpush1.xpose.msra.mxu0 0.0
        %704 = vmatprep.subr.mxu0 0.0
        %705 = vmatpush1.xpose.msra.mxu0 0.0
        %706 = vmatprep.subr.mxu0 0.0
        %707 = vmatpush1.xpose.msra.mxu0 0.0
        %708 = vmatprep.subr.mxu0 0.0
        %709 = vmatpush1.xpose.msra.mxu0 0.0
        %710 = vmatprep.subr.mxu0 0.0
        %711 = vmatpush1.xpose.msra.mxu0 0.0
        %712 = vmatprep.subr.mxu0 0.0
        %713 = vmatpush1.xpose.msra.mxu0 0.0
        %714 = vmatprep.subr.mxu0 0.0
        %715 = vmatpush1.xpose.msra.mxu0 0.0
        %716 = vmatprep.subr.mxu0 0.0
        %717 = vmatpush1.xpose.msra.mxu0 0.0
        %718 = vmatprep.subr.mxu0 0.0
        %719 = vmatpush1.xpose.msra.mxu0 0.0
        %720 = vmatprep.subr.mxu0 0.0
        %721 = vmatpush1.xpose.msra.mxu0 0.0
        %722 = vmatprep.subr.mxu0 0.0
        %723 = vmatpush1.xpose.msra.mxu0 0.0
        %724 = vmatprep.subr.mxu0 0.0
        %725 = vmatpush1.xpose.msra.mxu0 0.0
        %726 = vmatprep.subr.mxu0 0.0
        %727 = vmatpush1.xpose.msra.mxu0 0.0
        %728 = vmatprep.subr.mxu0 0.0
        %729 = vmatpush1.xpose.msra.mxu0 0.0
        %730 = vmatprep.subr.mxu0 0.0
        %731 = vmatpush1.xpose.msra.mxu0 0.0
        %732 = vmatprep.subr.mxu0 0.0
        %733 = vmatpush1.xpose.msra.mxu0 0.0
        %734 = vmatprep.subr.mxu0 0.0
        %735 = vmatpush1.xpose.msra.mxu0 0.0
        %736 = vmatprep.subr.mxu0 0.0
        %737 = vmatpush1.xpose.msra.mxu0 0.0
        %738 = vmatprep.subr.mxu0 0.0
        %739 = vmatpush1.xpose.msra.mxu0 0.0
        %740 = vmatprep.subr.mxu0 0.0
        %741 = vmatpush1.xpose.msra.mxu0 0.0
        %742 = vmatprep.mubr.f32.mxu0 0.0
        %743 = vmatmul.mubr.f32.gmra.mrb[0].mxu0 %v606
        %v744 = vpop.f32.mrb[0].mxu0
        %v745 = vadd.f32 0.0, %v744
        %v746 = vpop.f32.mrb[0].mxu0
        %747 = vdwg.mxu0
        %v748 = vmul.f32 %v675, 0.35355338
        %v749 = vtanh.pop %v748
        %v750 = vmul.f32 %v745, 0.35355338
        %v751 = vtanh.pop %v750
        %v752 = vadd.f32 %v749, %v751
        %v753 = vadd.f32 %v599, %v752
        %v754 = vmul.f32 %v753, 0.25
        %755 = vst.msk [vmem:[%s296] sm:$0xff] %vm301, %v754
        %s756 = scalar_lea.vmem %s287, 8
        %v757 = vld [vmem:[%s756] sm:$0xff]
        %v758 = vmul.f32 %v757, %v358
        %v759 = vadd.f32 %v758, %v355
        %v760 = vsel %vm301, %v759, 0.0
        %761 = vadd.xlane.f32.xlu0 %v760
        %v762 = vpop.xlane.xlu0 %761
        %v763 = vmax.f32 %v762, 1.0
        %v764 = vrsqrt.pop %v763
        %v765 = vmul.f32 %v344, %v764
        %767 = vrot.lane.b32.xlu0 %v765, 104
        %v768 = vpop.permute.xlu0 %767
        %v771 = vsel %vm301, %v759, 0
        %773 = vmatprep.subr.mxu0 0.0
        %774 = vmatpush1.msra.mxu0 %v768
        %775 = vmatprep.subr.mxu0 0.0
        %776 = vmatpush1.msra.mxu0 0.0
        %777 = vmatprep.subr.mxu0 0.0
        %778 = vmatpush1.msra.mxu0 0.0
        %779 = vmatprep.subr.mxu0 0.0
        %780 = vmatpush1.msra.mxu0 0.0
        %781 = vmatprep.subr.mxu0 0.0
        %782 = vmatpush1.msra.mxu0 0.0
        %783 = vmatprep.subr.mxu0 0.0
        %784 = vmatpush1.msra.mxu0 0.0
        %785 = vmatprep.subr.mxu0 0.0
        %786 = vmatpush1.msra.mxu0 0.0
        %787 = vmatprep.subr.mxu0 0.0
        %788 = vmatpush1.msra.mxu0 0.0
        %789 = vmatprep.subr.mxu0 0.0
        %790 = vmatpush1.msra.mxu0 0.0
        %791 = vmatprep.subr.mxu0 0.0
        %792 = vmatpush1.msra.mxu0 0.0
        %793 = vmatprep.subr.mxu0 0.0
        %794 = vmatpush1.msra.mxu0 0.0
        %795 = vmatprep.subr.mxu0 0.0
        %796 = vmatpush1.msra.mxu0 0.0
        %797 = vmatprep.subr.mxu0 0.0
        %798 = vmatpush1.msra.mxu0 0.0
        %799 = vmatprep.subr.mxu0 0.0
        %800 = vmatpush1.msra.mxu0 0.0
        %801 = vmatprep.subr.mxu0 0.0
        %802 = vmatpush1.msra.mxu0 0.0
        %803 = vmatprep.subr.mxu0 0.0
        %804 = vmatpush1.msra.mxu0 0.0
        %805 = vmatprep.subr.mxu0 0.0
        %806 = vmatpush1.msra.mxu0 0.0
        %807 = vmatprep.subr.mxu0 0.0
        %808 = vmatpush1.msra.mxu0 0.0
        %809 = vmatprep.subr.mxu0 0.0
        %810 = vmatpush1.msra.mxu0 0.0
        %811 = vmatprep.subr.mxu0 0.0
        %812 = vmatpush1.msra.mxu0 0.0
        %813 = vmatprep.subr.mxu0 0.0
        %814 = vmatpush1.msra.mxu0 0.0
        %815 = vmatprep.subr.mxu0 0.0
        %816 = vmatpush1.msra.mxu0 0.0
        %817 = vmatprep.subr.mxu0 0.0
        %818 = vmatpush1.msra.mxu0 0.0
        %819 = vmatprep.subr.mxu0 0.0
        %820 = vmatpush1.msra.mxu0 0.0
        %821 = vmatprep.subr.mxu0 0.0
        %822 = vmatpush1.msra.mxu0 0.0
        %823 = vmatprep.subr.mxu0 0.0
        %824 = vmatpush1.msra.mxu0 0.0
        %825 = vmatprep.subr.mxu0 0.0
        %826 = vmatpush1.msra.mxu0 0.0
        %827 = vmatprep.subr.mxu0 0.0
        %828 = vmatpush1.msra.mxu0 0.0
        %829 = vmatprep.subr.mxu0 0.0
        %830 = vmatpush1.msra.mxu0 0.0
        %831 = vmatprep.subr.mxu0 0.0
        %832 = vmatpush1.msra.mxu0 0.0
        %833 = vmatprep.subr.mxu0 0.0
        %834 = vmatpush1.msra.mxu0 0.0
        %835 = vmatprep.subr.mxu0 0.0
        %836 = vmatpush1.msra.mxu0 0.0
        %837 = vmatprep.mubr.f32.mxu0 0.0
        %838 = vmatmul.mubr.f32.gmra.mrb[0].mxu0 %v771
        %v839 = vpop.f32.mrb[0].mxu0
        %v840 = vadd.f32 0.0, %v839
        %v841 = vpop.f32.mrb[0].mxu0
        %842 = vdwg.mxu0
        %v843 = vmul.f32 %v840, %v764
        %v844 = vld [vmem:[%s3 + $0x1] sm:$0x1]
        %v845 = vlaneseq
        %v846 = vshrl.u32 %v845, 7
        %v847 = vsub.s32 0, %v846
        %v848 = vrot.slane %v844, %v847
        %v849 = vadd.f32 %v843, %v848
        %851 = vrot.lane.b32.xlu0 %v849, 120
        %v852 = vpop.permute.xlu0 %851
        %v853 = vsel %vm450, %v849, 0
        %v855 = vsel %vm450, %v852, 0
        %857 = vmatprep.subr.mxu0 0.0
        %858 = vmatpush1.xpose.msra.mxu0 %v855
        %859 = vmatprep.subr.mxu0 0.0
        %860 = vmatpush1.xpose.msra.mxu0 0.0
        %861 = vmatprep.subr.mxu0 0.0
        %862 = vmatpush1.xpose.msra.mxu0 0.0
        %863 = vmatprep.subr.mxu0 0.0
        %864 = vmatpush1.xpose.msra.mxu0 0.0
        %865 = vmatprep.subr.mxu0 0.0
        %866 = vmatpush1.xpose.msra.mxu0 0.0
        %867 = vmatprep.subr.mxu0 0.0
        %868 = vmatpush1.xpose.msra.mxu0 0.0
        %869 = vmatprep.subr.mxu0 0.0
        %870 = vmatpush1.xpose.msra.mxu0 0.0
        %871 = vmatprep.subr.mxu0 0.0
        %872 = vmatpush1.xpose.msra.mxu0 0.0
        %873 = vmatprep.subr.mxu0 0.0
        %874 = vmatpush1.xpose.msra.mxu0 0.0
        %875 = vmatprep.subr.mxu0 0.0
        %876 = vmatpush1.xpose.msra.mxu0 0.0
        %877 = vmatprep.subr.mxu0 0.0
        %878 = vmatpush1.xpose.msra.mxu0 0.0
        %879 = vmatprep.subr.mxu0 0.0
        %880 = vmatpush1.xpose.msra.mxu0 0.0
        %881 = vmatprep.subr.mxu0 0.0
        %882 = vmatpush1.xpose.msra.mxu0 0.0
        %883 = vmatprep.subr.mxu0 0.0
        %884 = vmatpush1.xpose.msra.mxu0 0.0
        %885 = vmatprep.subr.mxu0 0.0
        %886 = vmatpush1.xpose.msra.mxu0 0.0
        %887 = vmatprep.subr.mxu0 0.0
        %888 = vmatpush1.xpose.msra.mxu0 0.0
        %889 = vmatprep.subr.mxu0 0.0
        %890 = vmatpush1.xpose.msra.mxu0 0.0
        %891 = vmatprep.subr.mxu0 0.0
        %892 = vmatpush1.xpose.msra.mxu0 0.0
        %893 = vmatprep.subr.mxu0 0.0
        %894 = vmatpush1.xpose.msra.mxu0 0.0
        %895 = vmatprep.subr.mxu0 0.0
        %896 = vmatpush1.xpose.msra.mxu0 0.0
        %897 = vmatprep.subr.mxu0 0.0
        %898 = vmatpush1.xpose.msra.mxu0 0.0
        %899 = vmatprep.subr.mxu0 0.0
        %900 = vmatpush1.xpose.msra.mxu0 0.0
        %901 = vmatprep.subr.mxu0 0.0
        %902 = vmatpush1.xpose.msra.mxu0 0.0
        %903 = vmatprep.subr.mxu0 0.0
        %904 = vmatpush1.xpose.msra.mxu0 0.0
        %905 = vmatprep.subr.mxu0 0.0
        %906 = vmatpush1.xpose.msra.mxu0 0.0
        %907 = vmatprep.subr.mxu0 0.0
        %908 = vmatpush1.xpose.msra.mxu0 0.0
        %909 = vmatprep.subr.mxu0 0.0
        %910 = vmatpush1.xpose.msra.mxu0 0.0
        %911 = vmatprep.subr.mxu0 0.0
        %912 = vmatpush1.xpose.msra.mxu0 0.0
        %913 = vmatprep.subr.mxu0 0.0
        %914 = vmatpush1.xpose.msra.mxu0 0.0
        %915 = vmatprep.subr.mxu0 0.0
        %916 = vmatpush1.xpose.msra.mxu0 0.0
        %917 = vmatprep.subr.mxu0 0.0
        %918 = vmatpush1.xpose.msra.mxu0 0.0
        %919 = vmatprep.subr.mxu0 0.0
        %920 = vmatpush1.xpose.msra.mxu0 0.0
        %921 = vmatprep.mubr.f32.mxu0 0.0
        %922 = vmatmul.mubr.f32.gmra.mrb[0].mxu0 %v853
        %v923 = vpop.f32.mrb[0].mxu0
        %v924 = vadd.f32 0.0, %v923
        %v925 = vpop.f32.mrb[0].mxu0
        %926 = vdwg.mxu0
        %927 = vmatprep.subr.mxu0 0.0
        %928 = vmatpush1.xpose.msra.mxu0 %v853
        %929 = vmatprep.subr.mxu0 0.0
        %930 = vmatpush1.xpose.msra.mxu0 0.0
        %931 = vmatprep.subr.mxu0 0.0
        %932 = vmatpush1.xpose.msra.mxu0 0.0
        %933 = vmatprep.subr.mxu0 0.0
        %934 = vmatpush1.xpose.msra.mxu0 0.0
        %935 = vmatprep.subr.mxu0 0.0
        %936 = vmatpush1.xpose.msra.mxu0 0.0
        %937 = vmatprep.subr.mxu0 0.0
        %938 = vmatpush1.xpose.msra.mxu0 0.0
        %939 = vmatprep.subr.mxu0 0.0
        %940 = vmatpush1.xpose.msra.mxu0 0.0
        %941 = vmatprep.subr.mxu0 0.0
        %942 = vmatpush1.xpose.msra.mxu0 0.0
        %943 = vmatprep.subr.mxu0 0.0
        %944 = vmatpush1.xpose.msra.mxu0 0.0
        %945 = vmatprep.subr.mxu0 0.0
        %946 = vmatpush1.xpose.msra.mxu0 0.0
        %947 = vmatprep.subr.mxu0 0.0
        %948 = vmatpush1.xpose.msra.mxu0 0.0
        %949 = vmatprep.subr.mxu0 0.0
        %950 = vmatpush1.xpose.msra.mxu0 0.0
        %951 = vmatprep.subr.mxu0 0.0
        %952 = vmatpush1.xpose.msra.mxu0 0.0
        %953 = vmatprep.subr.mxu0 0.0
        %954 = vmatpush1.xpose.msra.mxu0 0.0
        %955 = vmatprep.subr.mxu0 0.0
        %956 = vmatpush1.xpose.msra.mxu0 0.0
        %957 = vmatprep.subr.mxu0 0.0
        %958 = vmatpush1.xpose.msra.mxu0 0.0
        %959 = vmatprep.subr.mxu0 0.0
        %960 = vmatpush1.xpose.msra.mxu0 0.0
        %961 = vmatprep.subr.mxu0 0.0
        %962 = vmatpush1.xpose.msra.mxu0 0.0
        %963 = vmatprep.subr.mxu0 0.0
        %964 = vmatpush1.xpose.msra.mxu0 0.0
        %965 = vmatprep.subr.mxu0 0.0
        %966 = vmatpush1.xpose.msra.mxu0 0.0
        %967 = vmatprep.subr.mxu0 0.0
        %968 = vmatpush1.xpose.msra.mxu0 0.0
        %969 = vmatprep.subr.mxu0 0.0
        %970 = vmatpush1.xpose.msra.mxu0 0.0
        %971 = vmatprep.subr.mxu0 0.0
        %972 = vmatpush1.xpose.msra.mxu0 0.0
        %973 = vmatprep.subr.mxu0 0.0
        %974 = vmatpush1.xpose.msra.mxu0 0.0
        %975 = vmatprep.subr.mxu0 0.0
        %976 = vmatpush1.xpose.msra.mxu0 0.0
        %977 = vmatprep.subr.mxu0 0.0
        %978 = vmatpush1.xpose.msra.mxu0 0.0
        %979 = vmatprep.subr.mxu0 0.0
        %980 = vmatpush1.xpose.msra.mxu0 0.0
        %981 = vmatprep.subr.mxu0 0.0
        %982 = vmatpush1.xpose.msra.mxu0 0.0
        %983 = vmatprep.subr.mxu0 0.0
        %984 = vmatpush1.xpose.msra.mxu0 0.0
        %985 = vmatprep.subr.mxu0 0.0
        %986 = vmatpush1.xpose.msra.mxu0 0.0
        %987 = vmatprep.subr.mxu0 0.0
        %988 = vmatpush1.xpose.msra.mxu0 0.0
        %989 = vmatprep.subr.mxu0 0.0
        %990 = vmatpush1.xpose.msra.mxu0 0.0
        %991 = vmatprep.mubr.f32.mxu0 0.0
        %992 = vmatmul.mubr.f32.gmra.mrb[0].mxu0 %v855
        %v993 = vpop.f32.mrb[0].mxu0
        %v994 = vadd.f32 0.0, %v993
        %v995 = vpop.f32.mrb[0].mxu0
        %996 = vdwg.mxu0
        %v997 = vmul.f32 %v924, 0.35355338
        %v998 = vtanh.pop %v997
        %v999 = vmul.f32 %v994, 0.35355338
        %v1000 = vtanh.pop %v999
        %v1001 = vadd.f32 %v998, %v1000
        %1002 = vrot.lane.b32.xlu0 %v849, 124
        %v1003 = vpop.permute.xlu0 %1002
        %1004 = vrot.lane.b32.xlu0 %v849, 116
        %v1005 = vpop.permute.xlu0 %1004
        %v1006 = vsel %vm450, %v1003, 0
        %v1008 = vsel %vm450, %v1005, 0
        %1010 = vmatprep.subr.mxu0 0.0
        %1011 = vmatpush1.xpose.msra.mxu0 %v1008
        %1012 = vmatprep.subr.mxu0 0.0
        %1013 = vmatpush1.xpose.msra.mxu0 0.0
        %1014 = vmatprep.subr.mxu0 0.0
        %1015 = vmatpush1.xpose.msra.mxu0 0.0
        %1016 = vmatprep.subr.mxu0 0.0
        %1017 = vmatpush1.xpose.msra.mxu0 0.0
        %1018 = vmatprep.subr.mxu0 0.0
        %1019 = vmatpush1.xpose.msra.mxu0 0.0
        %1020 = vmatprep.subr.mxu0 0.0
        %1021 = vmatpush1.xpose.msra.mxu0 0.0
        %1022 = vmatprep.subr.mxu0 0.0
        %1023 = vmatpush1.xpose.msra.mxu0 0.0
        %1024 = vmatprep.subr.mxu0 0.0
        %1025 = vmatpush1.xpose.msra.mxu0 0.0
        %1026 = vmatprep.subr.mxu0 0.0
        %1027 = vmatpush1.xpose.msra.mxu0 0.0
        %1028 = vmatprep.subr.mxu0 0.0
        %1029 = vmatpush1.xpose.msra.mxu0 0.0
        %1030 = vmatprep.subr.mxu0 0.0
        %1031 = vmatpush1.xpose.msra.mxu0 0.0
        %1032 = vmatprep.subr.mxu0 0.0
        %1033 = vmatpush1.xpose.msra.mxu0 0.0
        %1034 = vmatprep.subr.mxu0 0.0
        %1035 = vmatpush1.xpose.msra.mxu0 0.0
        %1036 = vmatprep.subr.mxu0 0.0
        %1037 = vmatpush1.xpose.msra.mxu0 0.0
        %1038 = vmatprep.subr.mxu0 0.0
        %1039 = vmatpush1.xpose.msra.mxu0 0.0
        %1040 = vmatprep.subr.mxu0 0.0
        %1041 = vmatpush1.xpose.msra.mxu0 0.0
        %1042 = vmatprep.subr.mxu0 0.0
        %1043 = vmatpush1.xpose.msra.mxu0 0.0
        %1044 = vmatprep.subr.mxu0 0.0
        %1045 = vmatpush1.xpose.msra.mxu0 0.0
        %1046 = vmatprep.subr.mxu0 0.0
        %1047 = vmatpush1.xpose.msra.mxu0 0.0
        %1048 = vmatprep.subr.mxu0 0.0
        %1049 = vmatpush1.xpose.msra.mxu0 0.0
        %1050 = vmatprep.subr.mxu0 0.0
        %1051 = vmatpush1.xpose.msra.mxu0 0.0
        %1052 = vmatprep.subr.mxu0 0.0
        %1053 = vmatpush1.xpose.msra.mxu0 0.0
        %1054 = vmatprep.subr.mxu0 0.0
        %1055 = vmatpush1.xpose.msra.mxu0 0.0
        %1056 = vmatprep.subr.mxu0 0.0
        %1057 = vmatpush1.xpose.msra.mxu0 0.0
        %1058 = vmatprep.subr.mxu0 0.0
        %1059 = vmatpush1.xpose.msra.mxu0 0.0
        %1060 = vmatprep.subr.mxu0 0.0
        %1061 = vmatpush1.xpose.msra.mxu0 0.0
        %1062 = vmatprep.subr.mxu0 0.0
        %1063 = vmatpush1.xpose.msra.mxu0 0.0
        %1064 = vmatprep.subr.mxu0 0.0
        %1065 = vmatpush1.xpose.msra.mxu0 0.0
        %1066 = vmatprep.subr.mxu0 0.0
        %1067 = vmatpush1.xpose.msra.mxu0 0.0
        %1068 = vmatprep.subr.mxu0 0.0
        %1069 = vmatpush1.xpose.msra.mxu0 0.0
        %1070 = vmatprep.subr.mxu0 0.0
        %1071 = vmatpush1.xpose.msra.mxu0 0.0
        %1072 = vmatprep.subr.mxu0 0.0
        %1073 = vmatpush1.xpose.msra.mxu0 0.0
        %1074 = vmatprep.mubr.f32.mxu0 0.0
        %1075 = vmatmul.mubr.f32.gmra.mrb[0].mxu0 %v1006
        %v1076 = vpop.f32.mrb[0].mxu0
        %v1077 = vadd.f32 0.0, %v1076
        %v1078 = vpop.f32.mrb[0].mxu0
        %1079 = vdwg.mxu0
        %1080 = vmatprep.subr.mxu0 0.0
        %1081 = vmatpush1.xpose.msra.mxu0 %v1006
        %1082 = vmatprep.subr.mxu0 0.0
        %1083 = vmatpush1.xpose.msra.mxu0 0.0
        %1084 = vmatprep.subr.mxu0 0.0
        %1085 = vmatpush1.xpose.msra.mxu0 0.0
        %1086 = vmatprep.subr.mxu0 0.0
        %1087 = vmatpush1.xpose.msra.mxu0 0.0
        %1088 = vmatprep.subr.mxu0 0.0
        %1089 = vmatpush1.xpose.msra.mxu0 0.0
        %1090 = vmatprep.subr.mxu0 0.0
        %1091 = vmatpush1.xpose.msra.mxu0 0.0
        %1092 = vmatprep.subr.mxu0 0.0
        %1093 = vmatpush1.xpose.msra.mxu0 0.0
        %1094 = vmatprep.subr.mxu0 0.0
        %1095 = vmatpush1.xpose.msra.mxu0 0.0
        %1096 = vmatprep.subr.mxu0 0.0
        %1097 = vmatpush1.xpose.msra.mxu0 0.0
        %1098 = vmatprep.subr.mxu0 0.0
        %1099 = vmatpush1.xpose.msra.mxu0 0.0
        %1100 = vmatprep.subr.mxu0 0.0
        %1101 = vmatpush1.xpose.msra.mxu0 0.0
        %1102 = vmatprep.subr.mxu0 0.0
        %1103 = vmatpush1.xpose.msra.mxu0 0.0
        %1104 = vmatprep.subr.mxu0 0.0
        %1105 = vmatpush1.xpose.msra.mxu0 0.0
        %1106 = vmatprep.subr.mxu0 0.0
        %1107 = vmatpush1.xpose.msra.mxu0 0.0
        %1108 = vmatprep.subr.mxu0 0.0
        %1109 = vmatpush1.xpose.msra.mxu0 0.0
        %1110 = vmatprep.subr.mxu0 0.0
        %1111 = vmatpush1.xpose.msra.mxu0 0.0
        %1112 = vmatprep.subr.mxu0 0.0
        %1113 = vmatpush1.xpose.msra.mxu0 0.0
        %1114 = vmatprep.subr.mxu0 0.0
        %1115 = vmatpush1.xpose.msra.mxu0 0.0
        %1116 = vmatprep.subr.mxu0 0.0
        %1117 = vmatpush1.xpose.msra.mxu0 0.0
        %1118 = vmatprep.subr.mxu0 0.0
        %1119 = vmatpush1.xpose.msra.mxu0 0.0
        %1120 = vmatprep.subr.mxu0 0.0
        %1121 = vmatpush1.xpose.msra.mxu0 0.0
        %1122 = vmatprep.subr.mxu0 0.0
        %1123 = vmatpush1.xpose.msra.mxu0 0.0
        %1124 = vmatprep.subr.mxu0 0.0
        %1125 = vmatpush1.xpose.msra.mxu0 0.0
        %1126 = vmatprep.subr.mxu0 0.0
        %1127 = vmatpush1.xpose.msra.mxu0 0.0
        %1128 = vmatprep.subr.mxu0 0.0
        %1129 = vmatpush1.xpose.msra.mxu0 0.0
        %1130 = vmatprep.subr.mxu0 0.0
        %1131 = vmatpush1.xpose.msra.mxu0 0.0
        %1132 = vmatprep.subr.mxu0 0.0
        %1133 = vmatpush1.xpose.msra.mxu0 0.0
        %1134 = vmatprep.subr.mxu0 0.0
        %1135 = vmatpush1.xpose.msra.mxu0 0.0
        %1136 = vmatprep.subr.mxu0 0.0
        %1137 = vmatpush1.xpose.msra.mxu0 0.0
        %1138 = vmatprep.subr.mxu0 0.0
        %1139 = vmatpush1.xpose.msra.mxu0 0.0
        %1140 = vmatprep.subr.mxu0 0.0
        %1141 = vmatpush1.xpose.msra.mxu0 0.0
        %1142 = vmatprep.subr.mxu0 0.0
        %1143 = vmatpush1.xpose.msra.mxu0 0.0
        %1144 = vmatprep.mubr.f32.mxu0 0.0
        %1145 = vmatmul.mubr.f32.gmra.mrb[0].mxu0 %v1008
        %v1146 = vpop.f32.mrb[0].mxu0
        %v1147 = vadd.f32 0.0, %v1146
        %v1148 = vpop.f32.mrb[0].mxu0
        %1149 = vdwg.mxu0
        %v1150 = vmul.f32 %v1077, 0.35355338
        %v1151 = vtanh.pop %v1150
        %v1152 = vmul.f32 %v1147, 0.35355338
        %v1153 = vtanh.pop %v1152
        %v1154 = vadd.f32 %v1151, %v1153
        %v1155 = vadd.f32 %v1001, %v1154
        %v1156 = vmul.f32 %v1155, 0.25
        %s1157 = scalar_lea.vmem %s296, 8
        %1158 = vst.msk [vmem:[%s1157] sm:$0xff] %vm301, %v1156
        %s1159 = scalar_lea.vmem %s287, 16
        %v1160 = vld [vmem:[%s1159] sm:$0xff]
        %v1161 = vmul.f32 %v1160, %v358
        %v1162 = vadd.f32 %v1161, %v355
        %v1163 = vsel %vm301, %v1162, 0.0
        %1164 = vadd.xlane.f32.xlu0 %v1163
        %v1165 = vpop.xlane.xlu0 %1164
        %v1166 = vmax.f32 %v1165, 1.0
        %v1167 = vrsqrt.pop %v1166
        %v1168 = vmul.f32 %v344, %v1167
        %1170 = vrot.lane.b32.xlu0 %v1168, 80
        %v1171 = vpop.permute.xlu0 %1170
        %v1174 = vsel %vm301, %v1162, 0
        %1176 = vmatprep.subr.mxu0 0.0
        %1177 = vmatpush1.msra.mxu0 %v1171
        %1178 = vmatprep.subr.mxu0 0.0
        %1179 = vmatpush1.msra.mxu0 0.0
        %1180 = vmatprep.subr.mxu0 0.0
        %1181 = vmatpush1.msra.mxu0 0.0
        %1182 = vmatprep.subr.mxu0 0.0
        %1183 = vmatpush1.msra.mxu0 0.0
        %1184 = vmatprep.subr.mxu0 0.0
        %1185 = vmatpush1.msra.mxu0 0.0
        %1186 = vmatprep.subr.mxu0 0.0
        %1187 = vmatpush1.msra.mxu0 0.0
        %1188 = vmatprep.subr.mxu0 0.0
        %1189 = vmatpush1.msra.mxu0 0.0
        %1190 = vmatprep.subr.mxu0 0.0
        %1191 = vmatpush1.msra.mxu0 0.0
        %1192 = vmatprep.subr.mxu0 0.0
        %1193 = vmatpush1.msra.mxu0 0.0
        %1194 = vmatprep.subr.mxu0 0.0
        %1195 = vmatpush1.msra.mxu0 0.0
        %1196 = vmatprep.subr.mxu0 0.0
        %1197 = vmatpush1.msra.mxu0 0.0
        %1198 = vmatprep.subr.mxu0 0.0
        %1199 = vmatpush1.msra.mxu0 0.0
        %1200 = vmatprep.subr.mxu0 0.0
        %1201 = vmatpush1.msra.mxu0 0.0
        %1202 = vmatprep.subr.mxu0 0.0
        %1203 = vmatpush1.msra.mxu0 0.0
        %1204 = vmatprep.subr.mxu0 0.0
        %1205 = vmatpush1.msra.mxu0 0.0
        %1206 = vmatprep.subr.mxu0 0.0
        %1207 = vmatpush1.msra.mxu0 0.0
        %1208 = vmatprep.subr.mxu0 0.0
        %1209 = vmatpush1.msra.mxu0 0.0
        %1210 = vmatprep.subr.mxu0 0.0
        %1211 = vmatpush1.msra.mxu0 0.0
        %1212 = vmatprep.subr.mxu0 0.0
        %1213 = vmatpush1.msra.mxu0 0.0
        %1214 = vmatprep.subr.mxu0 0.0
        %1215 = vmatpush1.msra.mxu0 0.0
        %1216 = vmatprep.subr.mxu0 0.0
        %1217 = vmatpush1.msra.mxu0 0.0
        %1218 = vmatprep.subr.mxu0 0.0
        %1219 = vmatpush1.msra.mxu0 0.0
        %1220 = vmatprep.subr.mxu0 0.0
        %1221 = vmatpush1.msra.mxu0 0.0
        %1222 = vmatprep.subr.mxu0 0.0
        %1223 = vmatpush1.msra.mxu0 0.0
        %1224 = vmatprep.subr.mxu0 0.0
        %1225 = vmatpush1.msra.mxu0 0.0
        %1226 = vmatprep.subr.mxu0 0.0
        %1227 = vmatpush1.msra.mxu0 0.0
        %1228 = vmatprep.subr.mxu0 0.0
        %1229 = vmatpush1.msra.mxu0 0.0
        %1230 = vmatprep.subr.mxu0 0.0
        %1231 = vmatpush1.msra.mxu0 0.0
        %1232 = vmatprep.subr.mxu0 0.0
        %1233 = vmatpush1.msra.mxu0 0.0
        %1234 = vmatprep.subr.mxu0 0.0
        %1235 = vmatpush1.msra.mxu0 0.0
        %1236 = vmatprep.subr.mxu0 0.0
        %1237 = vmatpush1.msra.mxu0 0.0
        %1238 = vmatprep.subr.mxu0 0.0
        %1239 = vmatpush1.msra.mxu0 0.0
        %1240 = vmatprep.mubr.f32.mxu0 0.0
        %1241 = vmatmul.mubr.f32.gmra.mrb[0].mxu0 %v1174
        %v1242 = vpop.f32.mrb[0].mxu0
        %v1243 = vadd.f32 0.0, %v1242
        %v1244 = vpop.f32.mrb[0].mxu0
        %1245 = vdwg.mxu0
        %v1246 = vmul.f32 %v1243, %v1167
        %v1247 = vld [vmem:[%s3 + $0x2] sm:$0x1]
        %v1248 = vlaneseq
        %v1249 = vshrl.u32 %v1248, 7
        %v1250 = vsub.s32 0, %v1249
        %v1251 = vrot.slane %v1247, %v1250
        %v1252 = vadd.f32 %v1246, %v1251
        %1254 = vrot.lane.b32.xlu0 %v1252, 120
        %v1255 = vpop.permute.xlu0 %1254
        %v1256 = vsel %vm450, %v1252, 0
        %v1258 = vsel %vm450, %v1255, 0
        %1260 = vmatprep.subr.mxu0 0.0
        %1261 = vmatpush1.xpose.msra.mxu0 %v1258
        %1262 = vmatprep.subr.mxu0 0.0
        %1263 = vmatpush1.xpose.msra.mxu0 0.0
        %1264 = vmatprep.subr.mxu0 0.0
        %1265 = vmatpush1.xpose.msra.mxu0 0.0
        %1266 = vmatprep.subr.mxu0 0.0
        %1267 = vmatpush1.xpose.msra.mxu0 0.0
        %1268 = vmatprep.subr.mxu0 0.0
        %1269 = vmatpush1.xpose.msra.mxu0 0.0
        %1270 = vmatprep.subr.mxu0 0.0
        %1271 = vmatpush1.xpose.msra.mxu0 0.0
        %1272 = vmatprep.subr.mxu0 0.0
        %1273 = vmatpush1.xpose.msra.mxu0 0.0
        %1274 = vmatprep.subr.mxu0 0.0
        %1275 = vmatpush1.xpose.msra.mxu0 0.0
        %1276 = vmatprep.subr.mxu0 0.0
        %1277 = vmatpush1.xpose.msra.mxu0 0.0
        %1278 = vmatprep.subr.mxu0 0.0
        %1279 = vmatpush1.xpose.msra.mxu0 0.0
        %1280 = vmatprep.subr.mxu0 0.0
        %1281 = vmatpush1.xpose.msra.mxu0 0.0
        %1282 = vmatprep.subr.mxu0 0.0
        %1283 = vmatpush1.xpose.msra.mxu0 0.0
        %1284 = vmatprep.subr.mxu0 0.0
        %1285 = vmatpush1.xpose.msra.mxu0 0.0
        %1286 = vmatprep.subr.mxu0 0.0
        %1287 = vmatpush1.xpose.msra.mxu0 0.0
        %1288 = vmatprep.subr.mxu0 0.0
        %1289 = vmatpush1.xpose.msra.mxu0 0.0
        %1290 = vmatprep.subr.mxu0 0.0
        %1291 = vmatpush1.xpose.msra.mxu0 0.0
        %1292 = vmatprep.subr.mxu0 0.0
        %1293 = vmatpush1.xpose.msra.mxu0 0.0
        %1294 = vmatprep.subr.mxu0 0.0
        %1295 = vmatpush1.xpose.msra.mxu0 0.0
        %1296 = vmatprep.subr.mxu0 0.0
        %1297 = vmatpush1.xpose.msra.mxu0 0.0
        %1298 = vmatprep.subr.mxu0 0.0
        %1299 = vmatpush1.xpose.msra.mxu0 0.0
        %1300 = vmatprep.subr.mxu0 0.0
        %1301 = vmatpush1.xpose.msra.mxu0 0.0
        %1302 = vmatprep.subr.mxu0 0.0
        %1303 = vmatpush1.xpose.msra.mxu0 0.0
        %1304 = vmatprep.subr.mxu0 0.0
        %1305 = vmatpush1.xpose.msra.mxu0 0.0
        %1306 = vmatprep.subr.mxu0 0.0
        %1307 = vmatpush1.xpose.msra.mxu0 0.0
        %1308 = vmatprep.subr.mxu0 0.0
        %1309 = vmatpush1.xpose.msra.mxu0 0.0
        %1310 = vmatprep.subr.mxu0 0.0
        %1311 = vmatpush1.xpose.msra.mxu0 0.0
        %1312 = vmatprep.subr.mxu0 0.0
        %1313 = vmatpush1.xpose.msra.mxu0 0.0
        %1314 = vmatprep.subr.mxu0 0.0
        %1315 = vmatpush1.xpose.msra.mxu0 0.0
        %1316 = vmatprep.subr.mxu0 0.0
        %1317 = vmatpush1.xpose.msra.mxu0 0.0
        %1318 = vmatprep.subr.mxu0 0.0
        %1319 = vmatpush1.xpose.msra.mxu0 0.0
        %1320 = vmatprep.subr.mxu0 0.0
        %1321 = vmatpush1.xpose.msra.mxu0 0.0
        %1322 = vmatprep.subr.mxu0 0.0
        %1323 = vmatpush1.xpose.msra.mxu0 0.0
        %1324 = vmatprep.mubr.f32.mxu0 0.0
        %1325 = vmatmul.mubr.f32.gmra.mrb[0].mxu0 %v1256
        %v1326 = vpop.f32.mrb[0].mxu0
        %v1327 = vadd.f32 0.0, %v1326
        %v1328 = vpop.f32.mrb[0].mxu0
        %1329 = vdwg.mxu0
        %1330 = vmatprep.subr.mxu0 0.0
        %1331 = vmatpush1.xpose.msra.mxu0 %v1256
        %1332 = vmatprep.subr.mxu0 0.0
        %1333 = vmatpush1.xpose.msra.mxu0 0.0
        %1334 = vmatprep.subr.mxu0 0.0
        %1335 = vmatpush1.xpose.msra.mxu0 0.0
        %1336 = vmatprep.subr.mxu0 0.0
        %1337 = vmatpush1.xpose.msra.mxu0 0.0
        %1338 = vmatprep.subr.mxu0 0.0
        %1339 = vmatpush1.xpose.msra.mxu0 0.0
        %1340 = vmatprep.subr.mxu0 0.0
        %1341 = vmatpush1.xpose.msra.mxu0 0.0
        %1342 = vmatprep.subr.mxu0 0.0
        %1343 = vmatpush1.xpose.msra.mxu0 0.0
        %1344 = vmatprep.subr.mxu0 0.0
        %1345 = vmatpush1.xpose.msra.mxu0 0.0
        %1346 = vmatprep.subr.mxu0 0.0
        %1347 = vmatpush1.xpose.msra.mxu0 0.0
        %1348 = vmatprep.subr.mxu0 0.0
        %1349 = vmatpush1.xpose.msra.mxu0 0.0
        %1350 = vmatprep.subr.mxu0 0.0
        %1351 = vmatpush1.xpose.msra.mxu0 0.0
        %1352 = vmatprep.subr.mxu0 0.0
        %1353 = vmatpush1.xpose.msra.mxu0 0.0
        %1354 = vmatprep.subr.mxu0 0.0
        %1355 = vmatpush1.xpose.msra.mxu0 0.0
        %1356 = vmatprep.subr.mxu0 0.0
        %1357 = vmatpush1.xpose.msra.mxu0 0.0
        %1358 = vmatprep.subr.mxu0 0.0
        %1359 = vmatpush1.xpose.msra.mxu0 0.0
        %1360 = vmatprep.subr.mxu0 0.0
        %1361 = vmatpush1.xpose.msra.mxu0 0.0
        %1362 = vmatprep.subr.mxu0 0.0
        %1363 = vmatpush1.xpose.msra.mxu0 0.0
        %1364 = vmatprep.subr.mxu0 0.0
        %1365 = vmatpush1.xpose.msra.mxu0 0.0
        %1366 = vmatprep.subr.mxu0 0.0
        %1367 = vmatpush1.xpose.msra.mxu0 0.0
        %1368 = vmatprep.subr.mxu0 0.0
        %1369 = vmatpush1.xpose.msra.mxu0 0.0
        %1370 = vmatprep.subr.mxu0 0.0
        %1371 = vmatpush1.xpose.msra.mxu0 0.0
        %1372 = vmatprep.subr.mxu0 0.0
        %1373 = vmatpush1.xpose.msra.mxu0 0.0
        %1374 = vmatprep.subr.mxu0 0.0
        %1375 = vmatpush1.xpose.msra.mxu0 0.0
        %1376 = vmatprep.subr.mxu0 0.0
        %1377 = vmatpush1.xpose.msra.mxu0 0.0
        %1378 = vmatprep.subr.mxu0 0.0
        %1379 = vmatpush1.xpose.msra.mxu0 0.0
        %1380 = vmatprep.subr.mxu0 0.0
        %1381 = vmatpush1.xpose.msra.mxu0 0.0
        %1382 = vmatprep.subr.mxu0 0.0
        %1383 = vmatpush1.xpose.msra.mxu0 0.0
        %1384 = vmatprep.subr.mxu0 0.0
        %1385 = vmatpush1.xpose.msra.mxu0 0.0
        %1386 = vmatprep.subr.mxu0 0.0
        %1387 = vmatpush1.xpose.msra.mxu0 0.0
        %1388 = vmatprep.subr.mxu0 0.0
        %1389 = vmatpush1.xpose.msra.mxu0 0.0
        %1390 = vmatprep.subr.mxu0 0.0
        %1391 = vmatpush1.xpose.msra.mxu0 0.0
        %1392 = vmatprep.subr.mxu0 0.0
        %1393 = vmatpush1.xpose.msra.mxu0 0.0
        %1394 = vmatprep.mubr.f32.mxu0 0.0
        %1395 = vmatmul.mubr.f32.gmra.mrb[0].mxu0 %v1258
        %v1396 = vpop.f32.mrb[0].mxu0
        %v1397 = vadd.f32 0.0, %v1396
        %v1398 = vpop.f32.mrb[0].mxu0
        %1399 = vdwg.mxu0
        %v1400 = vmul.f32 %v1327, 0.35355338
        %v1401 = vtanh.pop %v1400
        %v1402 = vmul.f32 %v1397, 0.35355338
        %v1403 = vtanh.pop %v1402
        %v1404 = vadd.f32 %v1401, %v1403
        %1405 = vrot.lane.b32.xlu0 %v1252, 124
        %v1406 = vpop.permute.xlu0 %1405
        %1407 = vrot.lane.b32.xlu0 %v1252, 116
        %v1408 = vpop.permute.xlu0 %1407
        %v1409 = vsel %vm450, %v1406, 0
        %v1411 = vsel %vm450, %v1408, 0
        %1413 = vmatprep.subr.mxu0 0.0
        %1414 = vmatpush1.xpose.msra.mxu0 %v1411
        %1415 = vmatprep.subr.mxu0 0.0
        %1416 = vmatpush1.xpose.msra.mxu0 0.0
        %1417 = vmatprep.subr.mxu0 0.0
        %1418 = vmatpush1.xpose.msra.mxu0 0.0
        %1419 = vmatprep.subr.mxu0 0.0
        %1420 = vmatpush1.xpose.msra.mxu0 0.0
        %1421 = vmatprep.subr.mxu0 0.0
        %1422 = vmatpush1.xpose.msra.mxu0 0.0
        %1423 = vmatprep.subr.mxu0 0.0
        %1424 = vmatpush1.xpose.msra.mxu0 0.0
        %1425 = vmatprep.subr.mxu0 0.0
        %1426 = vmatpush1.xpose.msra.mxu0 0.0
        %1427 = vmatprep.subr.mxu0 0.0
        %1428 = vmatpush1.xpose.msra.mxu0 0.0
        %1429 = vmatprep.subr.mxu0 0.0
        %1430 = vmatpush1.xpose.msra.mxu0 0.0
        %1431 = vmatprep.subr.mxu0 0.0
        %1432 = vmatpush1.xpose.msra.mxu0 0.0
        %1433 = vmatprep.subr.mxu0 0.0
        %1434 = vmatpush1.xpose.msra.mxu0 0.0
        %1435 = vmatprep.subr.mxu0 0.0
        %1436 = vmatpush1.xpose.msra.mxu0 0.0
        %1437 = vmatprep.subr.mxu0 0.0
        %1438 = vmatpush1.xpose.msra.mxu0 0.0
        %1439 = vmatprep.subr.mxu0 0.0
        %1440 = vmatpush1.xpose.msra.mxu0 0.0
        %1441 = vmatprep.subr.mxu0 0.0
        %1442 = vmatpush1.xpose.msra.mxu0 0.0
        %1443 = vmatprep.subr.mxu0 0.0
        %1444 = vmatpush1.xpose.msra.mxu0 0.0
        %1445 = vmatprep.subr.mxu0 0.0
        %1446 = vmatpush1.xpose.msra.mxu0 0.0
        %1447 = vmatprep.subr.mxu0 0.0
        %1448 = vmatpush1.xpose.msra.mxu0 0.0
        %1449 = vmatprep.subr.mxu0 0.0
        %1450 = vmatpush1.xpose.msra.mxu0 0.0
        %1451 = vmatprep.subr.mxu0 0.0
        %1452 = vmatpush1.xpose.msra.mxu0 0.0
        %1453 = vmatprep.subr.mxu0 0.0
        %1454 = vmatpush1.xpose.msra.mxu0 0.0
        %1455 = vmatprep.subr.mxu0 0.0
        %1456 = vmatpush1.xpose.msra.mxu0 0.0
        %1457 = vmatprep.subr.mxu0 0.0
        %1458 = vmatpush1.xpose.msra.mxu0 0.0
        %1459 = vmatprep.subr.mxu0 0.0
        %1460 = vmatpush1.xpose.msra.mxu0 0.0
        %1461 = vmatprep.subr.mxu0 0.0
        %1462 = vmatpush1.xpose.msra.mxu0 0.0
        %1463 = vmatprep.subr.mxu0 0.0
        %1464 = vmatpush1.xpose.msra.mxu0 0.0
        %1465 = vmatprep.subr.mxu0 0.0
        %1466 = vmatpush1.xpose.msra.mxu0 0.0
        %1467 = vmatprep.subr.mxu0 0.0
        %1468 = vmatpush1.xpose.msra.mxu0 0.0
        %1469 = vmatprep.subr.mxu0 0.0
        %1470 = vmatpush1.xpose.msra.mxu0 0.0
        %1471 = vmatprep.subr.mxu0 0.0
        %1472 = vmatpush1.xpose.msra.mxu0 0.0
        %1473 = vmatprep.subr.mxu0 0.0
        %1474 = vmatpush1.xpose.msra.mxu0 0.0
        %1475 = vmatprep.subr.mxu0 0.0
        %1476 = vmatpush1.xpose.msra.mxu0 0.0
        %1477 = vmatprep.mubr.f32.mxu0 0.0
        %1478 = vmatmul.mubr.f32.gmra.mrb[0].mxu0 %v1409
        %v1479 = vpop.f32.mrb[0].mxu0
        %v1480 = vadd.f32 0.0, %v1479
        %v1481 = vpop.f32.mrb[0].mxu0
        %1482 = vdwg.mxu0
        %1483 = vmatprep.subr.mxu0 0.0
        %1484 = vmatpush1.xpose.msra.mxu0 %v1409
        %1485 = vmatprep.subr.mxu0 0.0
        %1486 = vmatpush1.xpose.msra.mxu0 0.0
        %1487 = vmatprep.subr.mxu0 0.0
        %1488 = vmatpush1.xpose.msra.mxu0 0.0
        %1489 = vmatprep.subr.mxu0 0.0
        %1490 = vmatpush1.xpose.msra.mxu0 0.0
        %1491 = vmatprep.subr.mxu0 0.0
        %1492 = vmatpush1.xpose.msra.mxu0 0.0
        %1493 = vmatprep.subr.mxu0 0.0
        %1494 = vmatpush1.xpose.msra.mxu0 0.0
        %1495 = vmatprep.subr.mxu0 0.0
        %1496 = vmatpush1.xpose.msra.mxu0 0.0
        %1497 = vmatprep.subr.mxu0 0.0
        %1498 = vmatpush1.xpose.msra.mxu0 0.0
        %1499 = vmatprep.subr.mxu0 0.0
        %1500 = vmatpush1.xpose.msra.mxu0 0.0
        %1501 = vmatprep.subr.mxu0 0.0
        %1502 = vmatpush1.xpose.msra.mxu0 0.0
        %1503 = vmatprep.subr.mxu0 0.0
        %1504 = vmatpush1.xpose.msra.mxu0 0.0
        %1505 = vmatprep.subr.mxu0 0.0
        %1506 = vmatpush1.xpose.msra.mxu0 0.0
        %1507 = vmatprep.subr.mxu0 0.0
        %1508 = vmatpush1.xpose.msra.mxu0 0.0
        %1509 = vmatprep.subr.mxu0 0.0
        %1510 = vmatpush1.xpose.msra.mxu0 0.0
        %1511 = vmatprep.subr.mxu0 0.0
        %1512 = vmatpush1.xpose.msra.mxu0 0.0
        %1513 = vmatprep.subr.mxu0 0.0
        %1514 = vmatpush1.xpose.msra.mxu0 0.0
        %1515 = vmatprep.subr.mxu0 0.0
        %1516 = vmatpush1.xpose.msra.mxu0 0.0
        %1517 = vmatprep.subr.mxu0 0.0
        %1518 = vmatpush1.xpose.msra.mxu0 0.0
        %1519 = vmatprep.subr.mxu0 0.0
        %1520 = vmatpush1.xpose.msra.mxu0 0.0
        %1521 = vmatprep.subr.mxu0 0.0
        %1522 = vmatpush1.xpose.msra.mxu0 0.0
        %1523 = vmatprep.subr.mxu0 0.0
        %1524 = vmatpush1.xpose.msra.mxu0 0.0
        %1525 = vmatprep.subr.mxu0 0.0
        %1526 = vmatpush1.xpose.msra.mxu0 0.0
        %1527 = vmatprep.subr.mxu0 0.0
        %1528 = vmatpush1.xpose.msra.mxu0 0.0
        %1529 = vmatprep.subr.mxu0 0.0
        %1530 = vmatpush1.xpose.msra.mxu0 0.0
        %1531 = vmatprep.subr.mxu0 0.0
        %1532 = vmatpush1.xpose.msra.mxu0 0.0
        %1533 = vmatprep.subr.mxu0 0.0
        %1534 = vmatpush1.xpose.msra.mxu0 0.0
        %1535 = vmatprep.subr.mxu0 0.0
        %1536 = vmatpush1.xpose.msra.mxu0 0.0
        %1537 = vmatprep.subr.mxu0 0.0
        %1538 = vmatpush1.xpose.msra.mxu0 0.0
        %1539 = vmatprep.subr.mxu0 0.0
        %1540 = vmatpush1.xpose.msra.mxu0 0.0
        %1541 = vmatprep.subr.mxu0 0.0
        %1542 = vmatpush1.xpose.msra.mxu0 0.0
        %1543 = vmatprep.subr.mxu0 0.0
        %1544 = vmatpush1.xpose.msra.mxu0 0.0
        %1545 = vmatprep.subr.mxu0 0.0
        %1546 = vmatpush1.xpose.msra.mxu0 0.0
        %1547 = vmatprep.mubr.f32.mxu0 0.0
        %1548 = vmatmul.mubr.f32.gmra.mrb[0].mxu0 %v1411
        %v1549 = vpop.f32.mrb[0].mxu0
        %v1550 = vadd.f32 0.0, %v1549
        %v1551 = vpop.f32.mrb[0].mxu0
        %1552 = vdwg.mxu0
        %v1553 = vmul.f32 %v1480, 0.35355338
        %v1554 = vtanh.pop %v1553
        %v1555 = vmul.f32 %v1550, 0.35355338
        %v1556 = vtanh.pop %v1555
        %v1557 = vadd.f32 %v1554, %v1556
        %v1558 = vadd.f32 %v1404, %v1557
        %v1559 = vmul.f32 %v1558, 0.25
        %s1560 = scalar_lea.vmem %s296, 16
        %1561 = vst.msk [vmem:[%s1560] sm:$0xff] %vm301, %v1559
        %s1562 = scalar_lea.vmem %s287, 24
        %v1563 = vld [vmem:[%s1562] sm:$0xff]
        %v1564 = vmul.f32 %v1563, %v358
        %v1565 = vadd.f32 %v1564, %v355
        %v1566 = vsel %vm301, %v1565, 0.0
        %1567 = vadd.xlane.f32.xlu0 %v1566
        %v1568 = vpop.xlane.xlu0 %1567
        %v1569 = vmax.f32 %v1568, 1.0
        %v1570 = vrsqrt.pop %v1569
        %v1571 = vmul.f32 %v344, %v1570
        %1573 = vrot.lane.b32.xlu0 %v1571, 56
        %v1574 = vpop.permute.xlu0 %1573
        %v1577 = vsel %vm301, %v1565, 0
        %1579 = vmatprep.subr.mxu0 0.0
        %1580 = vmatpush1.msra.mxu0 %v1574
        %1581 = vmatprep.subr.mxu0 0.0
        %1582 = vmatpush1.msra.mxu0 0.0
        %1583 = vmatprep.subr.mxu0 0.0
        %1584 = vmatpush1.msra.mxu0 0.0
        %1585 = vmatprep.subr.mxu0 0.0
        %1586 = vmatpush1.msra.mxu0 0.0
        %1587 = vmatprep.subr.mxu0 0.0
        %1588 = vmatpush1.msra.mxu0 0.0
        %1589 = vmatprep.subr.mxu0 0.0
        %1590 = vmatpush1.msra.mxu0 0.0
        %1591 = vmatprep.subr.mxu0 0.0
        %1592 = vmatpush1.msra.mxu0 0.0
        %1593 = vmatprep.subr.mxu0 0.0
        %1594 = vmatpush1.msra.mxu0 0.0
        %1595 = vmatprep.subr.mxu0 0.0
        %1596 = vmatpush1.msra.mxu0 0.0
        %1597 = vmatprep.subr.mxu0 0.0
        %1598 = vmatpush1.msra.mxu0 0.0
        %1599 = vmatprep.subr.mxu0 0.0
        %1600 = vmatpush1.msra.mxu0 0.0
        %1601 = vmatprep.subr.mxu0 0.0
        %1602 = vmatpush1.msra.mxu0 0.0
        %1603 = vmatprep.subr.mxu0 0.0
        %1604 = vmatpush1.msra.mxu0 0.0
        %1605 = vmatprep.subr.mxu0 0.0
        %1606 = vmatpush1.msra.mxu0 0.0
        %1607 = vmatprep.subr.mxu0 0.0
        %1608 = vmatpush1.msra.mxu0 0.0
        %1609 = vmatprep.subr.mxu0 0.0
        %1610 = vmatpush1.msra.mxu0 0.0
        %1611 = vmatprep.subr.mxu0 0.0
        %1612 = vmatpush1.msra.mxu0 0.0
        %1613 = vmatprep.subr.mxu0 0.0
        %1614 = vmatpush1.msra.mxu0 0.0
        %1615 = vmatprep.subr.mxu0 0.0
        %1616 = vmatpush1.msra.mxu0 0.0
        %1617 = vmatprep.subr.mxu0 0.0
        %1618 = vmatpush1.msra.mxu0 0.0
        %1619 = vmatprep.subr.mxu0 0.0
        %1620 = vmatpush1.msra.mxu0 0.0
        %1621 = vmatprep.subr.mxu0 0.0
        %1622 = vmatpush1.msra.mxu0 0.0
        %1623 = vmatprep.subr.mxu0 0.0
        %1624 = vmatpush1.msra.mxu0 0.0
        %1625 = vmatprep.subr.mxu0 0.0
        %1626 = vmatpush1.msra.mxu0 0.0
        %1627 = vmatprep.subr.mxu0 0.0
        %1628 = vmatpush1.msra.mxu0 0.0
        %1629 = vmatprep.subr.mxu0 0.0
        %1630 = vmatpush1.msra.mxu0 0.0
        %1631 = vmatprep.subr.mxu0 0.0
        %1632 = vmatpush1.msra.mxu0 0.0
        %1633 = vmatprep.subr.mxu0 0.0
        %1634 = vmatpush1.msra.mxu0 0.0
        %1635 = vmatprep.subr.mxu0 0.0
        %1636 = vmatpush1.msra.mxu0 0.0
        %1637 = vmatprep.subr.mxu0 0.0
        %1638 = vmatpush1.msra.mxu0 0.0
        %1639 = vmatprep.subr.mxu0 0.0
        %1640 = vmatpush1.msra.mxu0 0.0
        %1641 = vmatprep.subr.mxu0 0.0
        %1642 = vmatpush1.msra.mxu0 0.0
        %1643 = vmatprep.mubr.f32.mxu0 0.0
        %1644 = vmatmul.mubr.f32.gmra.mrb[0].mxu0 %v1577
        %v1645 = vpop.f32.mrb[0].mxu0
        %v1646 = vadd.f32 0.0, %v1645
        %v1647 = vpop.f32.mrb[0].mxu0
        %1648 = vdwg.mxu0
        %v1649 = vmul.f32 %v1646, %v1570
        %v1650 = vld [vmem:[%s3 + $0x3] sm:$0x1]
        %v1651 = vlaneseq
        %v1652 = vshrl.u32 %v1651, 7
        %v1653 = vsub.s32 0, %v1652
        %v1654 = vrot.slane %v1650, %v1653
        %v1655 = vadd.f32 %v1649, %v1654
        %1657 = vrot.lane.b32.xlu0 %v1655, 120
        %v1658 = vpop.permute.xlu0 %1657
        %v1659 = vsel %vm450, %v1655, 0
        %v1661 = vsel %vm450, %v1658, 0
        %1663 = vmatprep.subr.mxu0 0.0
        %1664 = vmatpush1.xpose.msra.mxu0 %v1661
        %1665 = vmatprep.subr.mxu0 0.0
        %1666 = vmatpush1.xpose.msra.mxu0 0.0
        %1667 = vmatprep.subr.mxu0 0.0
        %1668 = vmatpush1.xpose.msra.mxu0 0.0
        %1669 = vmatprep.subr.mxu0 0.0
        %1670 = vmatpush1.xpose.msra.mxu0 0.0
        %1671 = vmatprep.subr.mxu0 0.0
        %1672 = vmatpush1.xpose.msra.mxu0 0.0
        %1673 = vmatprep.subr.mxu0 0.0
        %1674 = vmatpush1.xpose.msra.mxu0 0.0
        %1675 = vmatprep.subr.mxu0 0.0
        %1676 = vmatpush1.xpose.msra.mxu0 0.0
        %1677 = vmatprep.subr.mxu0 0.0
        %1678 = vmatpush1.xpose.msra.mxu0 0.0
        %1679 = vmatprep.subr.mxu0 0.0
        %1680 = vmatpush1.xpose.msra.mxu0 0.0
        %1681 = vmatprep.subr.mxu0 0.0
        %1682 = vmatpush1.xpose.msra.mxu0 0.0
        %1683 = vmatprep.subr.mxu0 0.0
        %1684 = vmatpush1.xpose.msra.mxu0 0.0
        %1685 = vmatprep.subr.mxu0 0.0
        %1686 = vmatpush1.xpose.msra.mxu0 0.0
        %1687 = vmatprep.subr.mxu0 0.0
        %1688 = vmatpush1.xpose.msra.mxu0 0.0
        %1689 = vmatprep.subr.mxu0 0.0
        %1690 = vmatpush1.xpose.msra.mxu0 0.0
        %1691 = vmatprep.subr.mxu0 0.0
        %1692 = vmatpush1.xpose.msra.mxu0 0.0
        %1693 = vmatprep.subr.mxu0 0.0
        %1694 = vmatpush1.xpose.msra.mxu0 0.0
        %1695 = vmatprep.subr.mxu0 0.0
        %1696 = vmatpush1.xpose.msra.mxu0 0.0
        %1697 = vmatprep.subr.mxu0 0.0
        %1698 = vmatpush1.xpose.msra.mxu0 0.0
        %1699 = vmatprep.subr.mxu0 0.0
        %1700 = vmatpush1.xpose.msra.mxu0 0.0
        %1701 = vmatprep.subr.mxu0 0.0
        %1702 = vmatpush1.xpose.msra.mxu0 0.0
        %1703 = vmatprep.subr.mxu0 0.0
        %1704 = vmatpush1.xpose.msra.mxu0 0.0
        %1705 = vmatprep.subr.mxu0 0.0
        %1706 = vmatpush1.xpose.msra.mxu0 0.0
        %1707 = vmatprep.subr.mxu0 0.0
        %1708 = vmatpush1.xpose.msra.mxu0 0.0
        %1709 = vmatprep.subr.mxu0 0.0
        %1710 = vmatpush1.xpose.msra.mxu0 0.0
        %1711 = vmatprep.subr.mxu0 0.0
        %1712 = vmatpush1.xpose.msra.mxu0 0.0
        %1713 = vmatprep.subr.mxu0 0.0
        %1714 = vmatpush1.xpose.msra.mxu0 0.0
        %1715 = vmatprep.subr.mxu0 0.0
        %1716 = vmatpush1.xpose.msra.mxu0 0.0
        %1717 = vmatprep.subr.mxu0 0.0
        %1718 = vmatpush1.xpose.msra.mxu0 0.0
        %1719 = vmatprep.subr.mxu0 0.0
        %1720 = vmatpush1.xpose.msra.mxu0 0.0
        %1721 = vmatprep.subr.mxu0 0.0
        %1722 = vmatpush1.xpose.msra.mxu0 0.0
        %1723 = vmatprep.subr.mxu0 0.0
        %1724 = vmatpush1.xpose.msra.mxu0 0.0
        %1725 = vmatprep.subr.mxu0 0.0
        %1726 = vmatpush1.xpose.msra.mxu0 0.0
        %1727 = vmatprep.mubr.f32.mxu0 0.0
        %1728 = vmatmul.mubr.f32.gmra.mrb[0].mxu0 %v1659
        %v1729 = vpop.f32.mrb[0].mxu0
        %v1730 = vadd.f32 0.0, %v1729
        %v1731 = vpop.f32.mrb[0].mxu0
        %1732 = vdwg.mxu0
        %1733 = vmatprep.subr.mxu0 0.0
        %1734 = vmatpush1.xpose.msra.mxu0 %v1659
        %1735 = vmatprep.subr.mxu0 0.0
        %1736 = vmatpush1.xpose.msra.mxu0 0.0
        %1737 = vmatprep.subr.mxu0 0.0
        %1738 = vmatpush1.xpose.msra.mxu0 0.0
        %1739 = vmatprep.subr.mxu0 0.0
        %1740 = vmatpush1.xpose.msra.mxu0 0.0
        %1741 = vmatprep.subr.mxu0 0.0
        %1742 = vmatpush1.xpose.msra.mxu0 0.0
        %1743 = vmatprep.subr.mxu0 0.0
        %1744 = vmatpush1.xpose.msra.mxu0 0.0
        %1745 = vmatprep.subr.mxu0 0.0
        %1746 = vmatpush1.xpose.msra.mxu0 0.0
        %1747 = vmatprep.subr.mxu0 0.0
        %1748 = vmatpush1.xpose.msra.mxu0 0.0
        %1749 = vmatprep.subr.mxu0 0.0
        %1750 = vmatpush1.xpose.msra.mxu0 0.0
        %1751 = vmatprep.subr.mxu0 0.0
        %1752 = vmatpush1.xpose.msra.mxu0 0.0
        %1753 = vmatprep.subr.mxu0 0.0
        %1754 = vmatpush1.xpose.msra.mxu0 0.0
        %1755 = vmatprep.subr.mxu0 0.0
        %1756 = vmatpush1.xpose.msra.mxu0 0.0
        %1757 = vmatprep.subr.mxu0 0.0
        %1758 = vmatpush1.xpose.msra.mxu0 0.0
        %1759 = vmatprep.subr.mxu0 0.0
        %1760 = vmatpush1.xpose.msra.mxu0 0.0
        %1761 = vmatprep.subr.mxu0 0.0
        %1762 = vmatpush1.xpose.msra.mxu0 0.0
        %1763 = vmatprep.subr.mxu0 0.0
        %1764 = vmatpush1.xpose.msra.mxu0 0.0
        %1765 = vmatprep.subr.mxu0 0.0
        %1766 = vmatpush1.xpose.msra.mxu0 0.0
        %1767 = vmatprep.subr.mxu0 0.0
        %1768 = vmatpush1.xpose.msra.mxu0 0.0
        %1769 = vmatprep.subr.mxu0 0.0
        %1770 = vmatpush1.xpose.msra.mxu0 0.0
        %1771 = vmatprep.subr.mxu0 0.0
        %1772 = vmatpush1.xpose.msra.mxu0 0.0
        %1773 = vmatprep.subr.mxu0 0.0
        %1774 = vmatpush1.xpose.msra.mxu0 0.0
        %1775 = vmatprep.subr.mxu0 0.0
        %1776 = vmatpush1.xpose.msra.mxu0 0.0
        %1777 = vmatprep.subr.mxu0 0.0
        %1778 = vmatpush1.xpose.msra.mxu0 0.0
        %1779 = vmatprep.subr.mxu0 0.0
        %1780 = vmatpush1.xpose.msra.mxu0 0.0
        %1781 = vmatprep.subr.mxu0 0.0
        %1782 = vmatpush1.xpose.msra.mxu0 0.0
        %1783 = vmatprep.subr.mxu0 0.0
        %1784 = vmatpush1.xpose.msra.mxu0 0.0
        %1785 = vmatprep.subr.mxu0 0.0
        %1786 = vmatpush1.xpose.msra.mxu0 0.0
        %1787 = vmatprep.subr.mxu0 0.0
        %1788 = vmatpush1.xpose.msra.mxu0 0.0
        %1789 = vmatprep.subr.mxu0 0.0
        %1790 = vmatpush1.xpose.msra.mxu0 0.0
        %1791 = vmatprep.subr.mxu0 0.0
        %1792 = vmatpush1.xpose.msra.mxu0 0.0
        %1793 = vmatprep.subr.mxu0 0.0
        %1794 = vmatpush1.xpose.msra.mxu0 0.0
        %1795 = vmatprep.subr.mxu0 0.0
        %1796 = vmatpush1.xpose.msra.mxu0 0.0
        %1797 = vmatprep.mubr.f32.mxu0 0.0
        %1798 = vmatmul.mubr.f32.gmra.mrb[0].mxu0 %v1661
        %v1799 = vpop.f32.mrb[0].mxu0
        %v1800 = vadd.f32 0.0, %v1799
        %v1801 = vpop.f32.mrb[0].mxu0
        %1802 = vdwg.mxu0
        %v1803 = vmul.f32 %v1730, 0.35355338
        %v1804 = vtanh.pop %v1803
        %v1805 = vmul.f32 %v1800, 0.35355338
        %v1806 = vtanh.pop %v1805
        %v1807 = vadd.f32 %v1804, %v1806
        %1808 = vrot.lane.b32.xlu0 %v1655, 124
        %v1809 = vpop.permute.xlu0 %1808
        %1810 = vrot.lane.b32.xlu0 %v1655, 116
        %v1811 = vpop.permute.xlu0 %1810
        %v1812 = vsel %vm450, %v1809, 0
        %v1814 = vsel %vm450, %v1811, 0
        %1816 = vmatprep.subr.mxu0 0.0
        %1817 = vmatpush1.xpose.msra.mxu0 %v1814
        %1818 = vmatprep.subr.mxu0 0.0
        %1819 = vmatpush1.xpose.msra.mxu0 0.0
        %1820 = vmatprep.subr.mxu0 0.0
        %1821 = vmatpush1.xpose.msra.mxu0 0.0
        %1822 = vmatprep.subr.mxu0 0.0
        %1823 = vmatpush1.xpose.msra.mxu0 0.0
        %1824 = vmatprep.subr.mxu0 0.0
        %1825 = vmatpush1.xpose.msra.mxu0 0.0
        %1826 = vmatprep.subr.mxu0 0.0
        %1827 = vmatpush1.xpose.msra.mxu0 0.0
        %1828 = vmatprep.subr.mxu0 0.0
        %1829 = vmatpush1.xpose.msra.mxu0 0.0
        %1830 = vmatprep.subr.mxu0 0.0
        %1831 = vmatpush1.xpose.msra.mxu0 0.0
        %1832 = vmatprep.subr.mxu0 0.0
        %1833 = vmatpush1.xpose.msra.mxu0 0.0
        %1834 = vmatprep.subr.mxu0 0.0
        %1835 = vmatpush1.xpose.msra.mxu0 0.0
        %1836 = vmatprep.subr.mxu0 0.0
        %1837 = vmatpush1.xpose.msra.mxu0 0.0
        %1838 = vmatprep.subr.mxu0 0.0
        %1839 = vmatpush1.xpose.msra.mxu0 0.0
        %1840 = vmatprep.subr.mxu0 0.0
        %1841 = vmatpush1.xpose.msra.mxu0 0.0
        %1842 = vmatprep.subr.mxu0 0.0
        %1843 = vmatpush1.xpose.msra.mxu0 0.0
        %1844 = vmatprep.subr.mxu0 0.0
        %1845 = vmatpush1.xpose.msra.mxu0 0.0
        %1846 = vmatprep.subr.mxu0 0.0
        %1847 = vmatpush1.xpose.msra.mxu0 0.0
        %1848 = vmatprep.subr.mxu0 0.0
        %1849 = vmatpush1.xpose.msra.mxu0 0.0
        %1850 = vmatprep.subr.mxu0 0.0
        %1851 = vmatpush1.xpose.msra.mxu0 0.0
        %1852 = vmatprep.subr.mxu0 0.0
        %1853 = vmatpush1.xpose.msra.mxu0 0.0
        %1854 = vmatprep.subr.mxu0 0.0
        %1855 = vmatpush1.xpose.msra.mxu0 0.0
        %1856 = vmatprep.subr.mxu0 0.0
        %1857 = vmatpush1.xpose.msra.mxu0 0.0
        %1858 = vmatprep.subr.mxu0 0.0
        %1859 = vmatpush1.xpose.msra.mxu0 0.0
        %1860 = vmatprep.subr.mxu0 0.0
        %1861 = vmatpush1.xpose.msra.mxu0 0.0
        %1862 = vmatprep.subr.mxu0 0.0
        %1863 = vmatpush1.xpose.msra.mxu0 0.0
        %1864 = vmatprep.subr.mxu0 0.0
        %1865 = vmatpush1.xpose.msra.mxu0 0.0
        %1866 = vmatprep.subr.mxu0 0.0
        %1867 = vmatpush1.xpose.msra.mxu0 0.0
        %1868 = vmatprep.subr.mxu0 0.0
        %1869 = vmatpush1.xpose.msra.mxu0 0.0
        %1870 = vmatprep.subr.mxu0 0.0
        %1871 = vmatpush1.xpose.msra.mxu0 0.0
        %1872 = vmatprep.subr.mxu0 0.0
        %1873 = vmatpush1.xpose.msra.mxu0 0.0
        %1874 = vmatprep.subr.mxu0 0.0
        %1875 = vmatpush1.xpose.msra.mxu0 0.0
        %1876 = vmatprep.subr.mxu0 0.0
        %1877 = vmatpush1.xpose.msra.mxu0 0.0
        %1878 = vmatprep.subr.mxu0 0.0
        %1879 = vmatpush1.xpose.msra.mxu0 0.0
        %1880 = vmatprep.mubr.f32.mxu0 0.0
        %1881 = vmatmul.mubr.f32.gmra.mrb[0].mxu0 %v1812
        %v1882 = vpop.f32.mrb[0].mxu0
        %v1883 = vadd.f32 0.0, %v1882
        %v1884 = vpop.f32.mrb[0].mxu0
        %1885 = vdwg.mxu0
        %1886 = vmatprep.subr.mxu0 0.0
        %1887 = vmatpush1.xpose.msra.mxu0 %v1812
        %1888 = vmatprep.subr.mxu0 0.0
        %1889 = vmatpush1.xpose.msra.mxu0 0.0
        %1890 = vmatprep.subr.mxu0 0.0
        %1891 = vmatpush1.xpose.msra.mxu0 0.0
        %1892 = vmatprep.subr.mxu0 0.0
        %1893 = vmatpush1.xpose.msra.mxu0 0.0
        %1894 = vmatprep.subr.mxu0 0.0
        %1895 = vmatpush1.xpose.msra.mxu0 0.0
        %1896 = vmatprep.subr.mxu0 0.0
        %1897 = vmatpush1.xpose.msra.mxu0 0.0
        %1898 = vmatprep.subr.mxu0 0.0
        %1899 = vmatpush1.xpose.msra.mxu0 0.0
        %1900 = vmatprep.subr.mxu0 0.0
        %1901 = vmatpush1.xpose.msra.mxu0 0.0
        %1902 = vmatprep.subr.mxu0 0.0
        %1903 = vmatpush1.xpose.msra.mxu0 0.0
        %1904 = vmatprep.subr.mxu0 0.0
        %1905 = vmatpush1.xpose.msra.mxu0 0.0
        %1906 = vmatprep.subr.mxu0 0.0
        %1907 = vmatpush1.xpose.msra.mxu0 0.0
        %1908 = vmatprep.subr.mxu0 0.0
        %1909 = vmatpush1.xpose.msra.mxu0 0.0
        %1910 = vmatprep.subr.mxu0 0.0
        %1911 = vmatpush1.xpose.msra.mxu0 0.0
        %1912 = vmatprep.subr.mxu0 0.0
        %1913 = vmatpush1.xpose.msra.mxu0 0.0
        %1914 = vmatprep.subr.mxu0 0.0
        %1915 = vmatpush1.xpose.msra.mxu0 0.0
        %1916 = vmatprep.subr.mxu0 0.0
        %1917 = vmatpush1.xpose.msra.mxu0 0.0
        %1918 = vmatprep.subr.mxu0 0.0
        %1919 = vmatpush1.xpose.msra.mxu0 0.0
        %1920 = vmatprep.subr.mxu0 0.0
        %1921 = vmatpush1.xpose.msra.mxu0 0.0
        %1922 = vmatprep.subr.mxu0 0.0
        %1923 = vmatpush1.xpose.msra.mxu0 0.0
        %1924 = vmatprep.subr.mxu0 0.0
        %1925 = vmatpush1.xpose.msra.mxu0 0.0
        %1926 = vmatprep.subr.mxu0 0.0
        %1927 = vmatpush1.xpose.msra.mxu0 0.0
        %1928 = vmatprep.subr.mxu0 0.0
        %1929 = vmatpush1.xpose.msra.mxu0 0.0
        %1930 = vmatprep.subr.mxu0 0.0
        %1931 = vmatpush1.xpose.msra.mxu0 0.0
        %1932 = vmatprep.subr.mxu0 0.0
        %1933 = vmatpush1.xpose.msra.mxu0 0.0
        %1934 = vmatprep.subr.mxu0 0.0
        %1935 = vmatpush1.xpose.msra.mxu0 0.0
        %1936 = vmatprep.subr.mxu0 0.0
        %1937 = vmatpush1.xpose.msra.mxu0 0.0
        %1938 = vmatprep.subr.mxu0 0.0
        %1939 = vmatpush1.xpose.msra.mxu0 0.0
        %1940 = vmatprep.subr.mxu0 0.0
        %1941 = vmatpush1.xpose.msra.mxu0 0.0
        %1942 = vmatprep.subr.mxu0 0.0
        %1943 = vmatpush1.xpose.msra.mxu0 0.0
        %1944 = vmatprep.subr.mxu0 0.0
        %1945 = vmatpush1.xpose.msra.mxu0 0.0
        %1946 = vmatprep.subr.mxu0 0.0
        %1947 = vmatpush1.xpose.msra.mxu0 0.0
        %1948 = vmatprep.subr.mxu0 0.0
        %1949 = vmatpush1.xpose.msra.mxu0 0.0
        %1950 = vmatprep.mubr.f32.mxu0 0.0
        %1951 = vmatmul.mubr.f32.gmra.mrb[0].mxu0 %v1814
        %v1952 = vpop.f32.mrb[0].mxu0
        %v1953 = vadd.f32 0.0, %v1952
        %v1954 = vpop.f32.mrb[0].mxu0
        %1955 = vdwg.mxu0
        %v1956 = vmul.f32 %v1883, 0.35355338
        %v1957 = vtanh.pop %v1956
        %v1958 = vmul.f32 %v1953, 0.35355338
        %v1959 = vtanh.pop %v1958
        %v1960 = vadd.f32 %v1957, %v1959
        %v1961 = vadd.f32 %v1807, %v1960
        %v1962 = vmul.f32 %v1961, 0.25
        %s1963 = scalar_lea.vmem %s296, 24
        %1964 = vst.msk [vmem:[%s1963] sm:$0xff] %vm301, %v1962
        %1965 = vrot.lane.b32.xlu0 %v446, 112
        %v1966 = vpop.permute.xlu0 %1965
        %1969 = vrot.lane.b32.xlu0 %v1655, 8
        %v1970 = vpop.permute.xlu0 %1969
        %v1972 = vsel %vm301, %v1966, %v852
        %vm1973 = vcmask 130048
        %v1974 = vsel %vm1973, %v1972, %v1252
        %vm1975 = vcmask 195584
        %v1976 = vsel %vm1975, %v1974, %v1970
        %1978 = vset.pattern.permute.xlu0 0
        %1979 = vperm.xlu0 %1978, %v356
        %v1980 = vpop.permute.xlu0 %1979
        %v1982 = vmul.f32 %v1976, %v1980
        %vm1983 = vcmask 261120
        %1984 = vst.msk [vmem:[%s278] sm:$0xff] %vm1983, %v1982
        %p1985 = scmp.lt.s32.totalorder %s21, 1
        %s1986 = scalar_select %p1985, %s21, 1
        %s1987 = smul.addr %s1986, 4
        %s1988 = smul.addr %s1987, 8
        %s1989 = scalar_lea.vmem %s5, %s1988
        %s1990 = sand.u32 %s175, 1
        %s1991 = scalar_lea.sflag [#allocation3], %s1990
        %s1992 = sand.u32 %s175, 1
        %s1993 = smul.addr %s1992, 8
        %s1994 = scalar_lea.vmem [#allocation2], %s1993
        // Predicated region
        $region41: #{_lambda_.17} parent=39 // pred_check
          %p1995 = pneg %p159
        $region42: #{_lambda_.17} parent=39 // pred_check_branch
          %1997 = sbr.rel (%p1995) target = $region44
        $region43: #{_lambda_.17} parent=39 // pred_region
          _
        $region44: #{_lambda_.17} parent=39 // pred_fallthru
          _
        // Predicated region
        $region45: #{_lambda_.17} parent=39 // pred_check
          %p1998 = pneg %p185
        $region46: #{_lambda_.17} parent=39 // pred_check_branch
          %2000 = sbr.rel (%p1998) target = $region48
        $region47: #{_lambda_.17} parent=39 // pred_region
          %s2002 = ssub.s32 128, 128
          %2003 = vsyncadd %s1991, %s2002
          %s2004 = smul.addr %s21, 128
          %s2005 = scalar_lea.hbm %s6, %s2004
          %s2007 = sshll.u32 %s1994, 4
          %s2008 = int_to_ptr.vmem [resolvable:$true] %s2007
          %2010 = dma.vmem_to_hbm [thread:$0]  %s2008, 128, %s2005, %s1991
        $region48: #{_lambda_.17} parent=39 // pred_fallthru
          _
      $region40: #{_lambda_.17} parent=5 // pred_fallthru
        _
      %p2011 = scmp.le.s32.totalorder 2, %s16
      // Predicated region
      $region49: #{_lambda_.17} parent=5 // pred_check
        %p2012 = pneg %p2011
      $region50: #{_lambda_.17} parent=5 // pred_check_branch
        %2014 = sbr.rel (%p2012) target = $region52
      $region51: #{_lambda_.17} parent=5 // pred_region
        %s2015 = ssub.s32 %s16, 2
        // Predicated region
        $region53: #{_lambda_.17} parent=51 // pred_check
          %p2016 = pneg %p165
        $region54: #{_lambda_.17} parent=51 // pred_check_branch
          %2018 = sbr.rel (%p2016) target = $region56
        $region55: #{_lambda_.17} parent=51 // pred_region
          %p2019 = scmp.lt.s32.totalorder %s22, 1
          %s2020 = scalar_select %p2019, %s22, 1
          %s2021 = smul.addr %s2020, 4
          %s2022 = smul.addr %s2021, 8
          %s2023 = scalar_lea.vmem %s5, %s2022
        $region56: #{_lambda_.17} parent=51 // pred_fallthru
          _
        // Predicated region
        $region57: #{_lambda_.17} parent=51 // pred_check
          %p2024 = pneg %p191
        $region58: #{_lambda_.17} parent=51 // pred_check_branch
          %2026 = sbr.rel (%p2024) target = $region60
        $region59: #{_lambda_.17} parent=51 // pred_region
          %s2027 = sand.u32 %s176, 1
          %s2028 = scalar_lea.sflag [#allocation3], %s2027
          %s2029 = sand.u32 %s176, 1
          %s2030 = smul.addr %s2029, 8
          %s2031 = scalar_lea.vmem [#allocation2], %s2030
          %2032 = dma.done %s2028, 128
        $region60: #{_lambda_.17} parent=51 // pred_fallthru
          _
      $region52: #{_lambda_.17} parent=5 // pred_fallthru
        _
    $region6: #{_lambda_.17} parent=1 // loop_footer
      %s20 = sadd.s32 1, %s16
    $region7: #{_lambda_.17} parent=1 // loop_footer_branch
      %15 = sbr.rel target = $region3
    $region8: #{_lambda_.17} parent=1 // loop_exit
      _
    %2033 = vsyncpa [#allocation3], 1
    %s2034 = scalar_lea.sflag [#allocation3], 1
    %2035 = vsyncpa %s2034, 1

// kernel: _lambda_.19
$region0: #{_lambda_.19}
  #allocation0 [shape = 'u32[]', space=smem, size = 0x4, offset = 0x4, fixed_abs, tag = 'smem constant byte address 0x4 - core index']
  #allocation1 [shape = 'u32[144,128]{1,0:T(1,128)}', space=vmem, size = 0x12000, scoped, tag = 'internal scratch']
  #allocation2 [shape = 'f32[1,1]{1,0:T(1,128)S(1)}', space=vmem, size = 0x200, scoped, tag = 'scoped memory for _lambda_.19']
  %s0 = inlined_call_operand.vmem [shape: f32[2,2,64], index: 0, kind: input, shape index: {}]
  %s1 = inlined_call_operand.vmem [shape: f32[2,4,64], index: 1, kind: input, shape index: {}]
  %s2 = inlined_call_operand.vmem [shape: f32[2,4,64], index: 2, kind: input, shape index: {}]
  %s3 = inlined_call_operand.vmem [shape: f32[2,2,64], index: 3, kind: input, shape index: {}]
  %s4 = inlined_call_operand.vmem [shape: f32[24,12], index: 4, kind: input, shape index: {}]
  %s5 = inlined_call_operand.vmem [shape: f32[24,1], index: 5, kind: input, shape index: {}]
  %s6 = inlined_call_operand.vmem [shape: f32[24,24], index: 6, kind: input, shape index: {}]
  %s7 = inlined_call_operand.vmem [shape: f32[24,1], index: 7, kind: input, shape index: {}]
  %s8 = inlined_call_operand.vmem [shape: f32[1,24], index: 8, kind: input, shape index: {}]
  %s9 = inlined_call_operand.<no memory space> [shape: f32[1,1], index: 9, kind: input, shape index: {}]
  %s10 = inlined_call_operand.vmem [shape: f32[2,1,64], index: 10, kind: output, shape index: {}]
  %s11 = sld [smem:[#allocation0]]
  $region73: #{_lambda_.19} parent=0
    _
  %s13 = ssub.s32 1, %s11
  %s14 = scalar_select 0, %s13, %s11
  %v15 = vstv %s9
  %16 = vst [vmem:[#allocation2] sm:$0x1] %v15
  loop: start=0, step=1, limit=4
  $region2: #{_lambda_.19} parent=0 // loop_pre_header
    _
  $region3: #{_lambda_.19} parent=0 // loop_header
    %s18 = sphi 0, %s22
    %p19 = scmp.ge.s32.totalorder %s18, 4
    %s28 = sphi 0, %s30
    %s31 = sphi 0, %s28
    %s32 = sphi 0, %s31
    %s48 = sphi 0, %s32
    %s54 = sphi 0, %s56
    %s57 = sphi 0, %s54
    %s58 = sphi 0, %s57
    %s74 = sphi 0, %s58
    %s80 = sphi 0, %s82
    %s83 = sphi 0, %s80
    %s84 = sphi 0, %s83
    %s100 = sphi 0, %s84
    %s106 = sphi 0, %s108
    %s109 = sphi 0, %s106
    %s110 = sphi 0, %s109
    %s126 = sphi 0, %s110
    %s130 = sphi 0, %s130
    %s132 = sphi 0, %s130
    %s133 = sphi 0, %s132
    %s147 = sphi 0, %s133
    %s151 = sphi 0, %s151
    %s153 = sphi 0, %s151
    %s154 = sphi 0, %s153
    %s168 = sphi 0, %s154
    %s172 = sphi 0, %s172
    %s174 = sphi 0, %s172
    %s175 = sphi 0, %s174
    %s189 = sphi 0, %s175
    %s193 = sphi 0, %s193
    %s195 = sphi 0, %s193
    %s196 = sphi 0, %s195
    %s210 = sphi 0, %s196
    %s214 = sphi 0, %s214
    %s216 = sphi 0, %s214
    %s217 = sphi 0, %s216
    %s231 = sphi 0, %s217
    %s235 = sphi 0, %s235
    %s237 = sphi 0, %s235
    %s238 = sphi 0, %s237
    %s252 = sphi 0, %s238
    %s258 = sphi 0, %s260
    %s261 = sphi 0, %s258
    %s262 = sphi 0, %s261
    %s278 = sphi 0, %s262
  $region4: #{_lambda_.19} parent=0 // loop_header_branch
    %21 = sbr.rel (%p19) target = $region8
  $region5: #{_lambda_.19} parent=0 // loop_body
    %s23 = ssub.s32 %s18, 1
    %s24 = ssub.s32 %s18, 2
    %s25 = sadd.s32 %s18, 1
    %s26 = ssub.s32 %s18, %s25
    %p27 = scmp.eq.s32.totalorder %s26, 0
    %s29 = sadd.s32 %s28, 1
    %s30 = scalar_select %p27, %s28, %s29
    %p33 = pneg %p27
    %p34 = scmp.eq.s32.totalorder %s18, 1
    %p35 = por %p33, %p34
    %p36 = scmp.ne.s32.totalorder %s28, %s31
    %p37 = scmp.eq.s32.totalorder %s18, 0
    %p38 = por %p36, %p37
    %p39 = scmp.ne.s32.totalorder %s28, %s31
    %p40 = scmp.eq.s32.totalorder %s23, 1
    %p41 = por %p39, %p40
    %p42 = scmp.ne.s32.totalorder %s31, %s32
    %p43 = scmp.eq.s32.totalorder %s23, 0
    %p44 = por %p42, %p43
    %p45 = scmp.ne.s32.totalorder %s31, %s32
    %p46 = scmp.eq.s32.totalorder %s24, 1
    %p47 = por %p45, %p46
    %p49 = scmp.ne.s32.totalorder %s32, %s48
    %p50 = scmp.eq.s32.totalorder %s24, 0
    %p51 = por %p49, %p50
    %s52 = ssub.s32 %s18, %s25
    %p53 = scmp.eq.s32.totalorder %s52, 0
    %s55 = sadd.s32 %s54, 1
    %s56 = scalar_select %p53, %s54, %s55
    %p59 = pneg %p53
    %p60 = scmp.eq.s32.totalorder %s18, 1
    %p61 = por %p59, %p60
    %p62 = scmp.ne.s32.totalorder %s54, %s57
    %p63 = scmp.eq.s32.totalorder %s18, 0
    %p64 = por %p62, %p63
    %p65 = scmp.ne.s32.totalorder %s54, %s57
    %p66 = scmp.eq.s32.totalorder %s23, 1
    %p67 = por %p65, %p66
    %p68 = scmp.ne.s32.totalorder %s57, %s58
    %p69 = scmp.eq.s32.totalorder %s23, 0
    %p70 = por %p68, %p69
    %p71 = scmp.ne.s32.totalorder %s57, %s58
    %p72 = scmp.eq.s32.totalorder %s24, 1
    %p73 = por %p71, %p72
    %p75 = scmp.ne.s32.totalorder %s58, %s74
    %p76 = scmp.eq.s32.totalorder %s24, 0
    %p77 = por %p75, %p76
    %s78 = ssub.s32 %s18, %s25
    %p79 = scmp.eq.s32.totalorder %s78, 0
    %s81 = sadd.s32 %s80, 1
    %s82 = scalar_select %p79, %s80, %s81
    %p85 = pneg %p79
    %p86 = scmp.eq.s32.totalorder %s18, 1
    %p87 = por %p85, %p86
    %p88 = scmp.ne.s32.totalorder %s80, %s83
    %p89 = scmp.eq.s32.totalorder %s18, 0
    %p90 = por %p88, %p89
    %p91 = scmp.ne.s32.totalorder %s80, %s83
    %p92 = scmp.eq.s32.totalorder %s23, 1
    %p93 = por %p91, %p92
    %p94 = scmp.ne.s32.totalorder %s83, %s84
    %p95 = scmp.eq.s32.totalorder %s23, 0
    %p96 = por %p94, %p95
    %p97 = scmp.ne.s32.totalorder %s83, %s84
    %p98 = scmp.eq.s32.totalorder %s24, 1
    %p99 = por %p97, %p98
    %p101 = scmp.ne.s32.totalorder %s84, %s100
    %p102 = scmp.eq.s32.totalorder %s24, 0
    %p103 = por %p101, %p102
    %s104 = ssub.s32 %s18, %s25
    %p105 = scmp.eq.s32.totalorder %s104, 0
    %s107 = sadd.s32 %s106, 1
    %s108 = scalar_select %p105, %s106, %s107
    %p111 = pneg %p105
    %p112 = scmp.eq.s32.totalorder %s18, 1
    %p113 = por %p111, %p112
    %p114 = scmp.ne.s32.totalorder %s106, %s109
    %p115 = scmp.eq.s32.totalorder %s18, 0
    %p116 = por %p114, %p115
    %p117 = scmp.ne.s32.totalorder %s106, %s109
    %p118 = scmp.eq.s32.totalorder %s23, 1
    %p119 = por %p117, %p118
    %p120 = scmp.ne.s32.totalorder %s109, %s110
    %p121 = scmp.eq.s32.totalorder %s23, 0
    %p122 = por %p120, %p121
    %p123 = scmp.ne.s32.totalorder %s109, %s110
    %p124 = scmp.eq.s32.totalorder %s24, 1
    %p125 = por %p123, %p124
    %p127 = scmp.ne.s32.totalorder %s110, %s126
    %p128 = scmp.eq.s32.totalorder %s24, 0
    %p129 = por %p127, %p128
    %s131 = sadd.s32 %s130, 1
    %p134 = scmp.eq.s32.totalorder %s18, 1
    %p135 = scmp.ne.s32.totalorder %s130, %s132
    %p136 = scmp.eq.s32.totalorder %s18, 0
    %p137 = por %p135, %p136
    %p138 = scmp.ne.s32.totalorder %s130, %s132
    %p139 = scmp.eq.s32.totalorder %s23, 1
    %p140 = por %p138, %p139
    %p141 = scmp.ne.s32.totalorder %s132, %s133
    %p142 = scmp.eq.s32.totalorder %s23, 0
    %p143 = por %p141, %p142
    %p144 = scmp.ne.s32.totalorder %s132, %s133
    %p145 = scmp.eq.s32.totalorder %s24, 1
    %p146 = por %p144, %p145
    %p148 = scmp.ne.s32.totalorder %s133, %s147
    %p149 = scmp.eq.s32.totalorder %s24, 0
    %p150 = por %p148, %p149
    %s152 = sadd.s32 %s151, 1
    %p155 = scmp.eq.s32.totalorder %s18, 1
    %p156 = scmp.ne.s32.totalorder %s151, %s153
    %p157 = scmp.eq.s32.totalorder %s18, 0
    %p158 = por %p156, %p157
    %p159 = scmp.ne.s32.totalorder %s151, %s153
    %p160 = scmp.eq.s32.totalorder %s23, 1
    %p161 = por %p159, %p160
    %p162 = scmp.ne.s32.totalorder %s153, %s154
    %p163 = scmp.eq.s32.totalorder %s23, 0
    %p164 = por %p162, %p163
    %p165 = scmp.ne.s32.totalorder %s153, %s154
    %p166 = scmp.eq.s32.totalorder %s24, 1
    %p167 = por %p165, %p166
    %p169 = scmp.ne.s32.totalorder %s154, %s168
    %p170 = scmp.eq.s32.totalorder %s24, 0
    %p171 = por %p169, %p170
    %s173 = sadd.s32 %s172, 1
    %p176 = scmp.eq.s32.totalorder %s18, 1
    %p177 = scmp.ne.s32.totalorder %s172, %s174
    %p178 = scmp.eq.s32.totalorder %s18, 0
    %p179 = por %p177, %p178
    %p180 = scmp.ne.s32.totalorder %s172, %s174
    %p181 = scmp.eq.s32.totalorder %s23, 1
    %p182 = por %p180, %p181
    %p183 = scmp.ne.s32.totalorder %s174, %s175
    %p184 = scmp.eq.s32.totalorder %s23, 0
    %p185 = por %p183, %p184
    %p186 = scmp.ne.s32.totalorder %s174, %s175
    %p187 = scmp.eq.s32.totalorder %s24, 1
    %p188 = por %p186, %p187
    %p190 = scmp.ne.s32.totalorder %s175, %s189
    %p191 = scmp.eq.s32.totalorder %s24, 0
    %p192 = por %p190, %p191
    %s194 = sadd.s32 %s193, 1
    %p197 = scmp.eq.s32.totalorder %s18, 1
    %p198 = scmp.ne.s32.totalorder %s193, %s195
    %p199 = scmp.eq.s32.totalorder %s18, 0
    %p200 = por %p198, %p199
    %p201 = scmp.ne.s32.totalorder %s193, %s195
    %p202 = scmp.eq.s32.totalorder %s23, 1
    %p203 = por %p201, %p202
    %p204 = scmp.ne.s32.totalorder %s195, %s196
    %p205 = scmp.eq.s32.totalorder %s23, 0
    %p206 = por %p204, %p205
    %p207 = scmp.ne.s32.totalorder %s195, %s196
    %p208 = scmp.eq.s32.totalorder %s24, 1
    %p209 = por %p207, %p208
    %p211 = scmp.ne.s32.totalorder %s196, %s210
    %p212 = scmp.eq.s32.totalorder %s24, 0
    %p213 = por %p211, %p212
    %s215 = sadd.s32 %s214, 1
    %p218 = scmp.eq.s32.totalorder %s18, 1
    %p219 = scmp.ne.s32.totalorder %s214, %s216
    %p220 = scmp.eq.s32.totalorder %s18, 0
    %p221 = por %p219, %p220
    %p222 = scmp.ne.s32.totalorder %s214, %s216
    %p223 = scmp.eq.s32.totalorder %s23, 1
    %p224 = por %p222, %p223
    %p225 = scmp.ne.s32.totalorder %s216, %s217
    %p226 = scmp.eq.s32.totalorder %s23, 0
    %p227 = por %p225, %p226
    %p228 = scmp.ne.s32.totalorder %s216, %s217
    %p229 = scmp.eq.s32.totalorder %s24, 1
    %p230 = por %p228, %p229
    %p232 = scmp.ne.s32.totalorder %s217, %s231
    %p233 = scmp.eq.s32.totalorder %s24, 0
    %p234 = por %p232, %p233
    %s236 = sadd.s32 %s235, 1
    %p239 = scmp.eq.s32.totalorder %s18, 1
    %p240 = scmp.ne.s32.totalorder %s235, %s237
    %p241 = scmp.eq.s32.totalorder %s18, 0
    %p242 = por %p240, %p241
    %p243 = scmp.ne.s32.totalorder %s235, %s237
    %p244 = scmp.eq.s32.totalorder %s23, 1
    %p245 = por %p243, %p244
    %p246 = scmp.ne.s32.totalorder %s237, %s238
    %p247 = scmp.eq.s32.totalorder %s23, 0
    %p248 = por %p246, %p247
    %p249 = scmp.ne.s32.totalorder %s237, %s238
    %p250 = scmp.eq.s32.totalorder %s24, 1
    %p251 = por %p249, %p250
    %p253 = scmp.ne.s32.totalorder %s238, %s252
    %p254 = scmp.eq.s32.totalorder %s24, 0
    %p255 = por %p253, %p254
    %s256 = ssub.s32 %s18, %s25
    %p257 = scmp.eq.s32.totalorder %s256, 0
    %s259 = sadd.s32 %s258, 1
    %s260 = scalar_select %p257, %s258, %s259
    %p263 = pneg %p257
    %p264 = scmp.eq.s32.totalorder %s18, 1
    %p265 = por %p263, %p264
    %p266 = scmp.ne.s32.totalorder %s258, %s261
    %p267 = scmp.eq.s32.totalorder %s18, 0
    %p268 = por %p266, %p267
    %p269 = scmp.ne.s32.totalorder %s258, %s261
    %p270 = scmp.eq.s32.totalorder %s23, 1
    %p271 = por %p269, %p270
    %p272 = scmp.ne.s32.totalorder %s261, %s262
    %p273 = scmp.eq.s32.totalorder %s23, 0
    %p274 = por %p272, %p273
    %p275 = scmp.ne.s32.totalorder %s261, %s262
    %p276 = scmp.eq.s32.totalorder %s24, 1
    %p277 = por %p275, %p276
    %p279 = scmp.ne.s32.totalorder %s262, %s278
    %p280 = scmp.eq.s32.totalorder %s24, 0
    %p281 = por %p279, %p280
    %p282 = scmp.le.s32.totalorder 1, %s18
    %p283 = scmp.lt.s32.totalorder %s18, 3
    %p284 = pnand %p282, %p283
    %p285 = pneg %p284
    // Predicated region
    $region9: #{_lambda_.19} parent=5 // pred_check
      _
    $region10: #{_lambda_.19} parent=5 // pred_check_branch
      %287 = sbr.rel (%p284) target = $region12
    $region11: #{_lambda_.19} parent=5 // pred_region
      %s288 = ssub.s32 %s18, 1
      // Predicated region
      $region13: #{_lambda_.19} parent=11 // pred_check
        %p289 = pneg %p143
      $region14: #{_lambda_.19} parent=11 // pred_check_branch
        %291 = sbr.rel (%p289) target = $region16
      $region15: #{_lambda_.19} parent=11 // pred_region
        _
      $region16: #{_lambda_.19} parent=11 // pred_fallthru
        _
      // Predicated region
      $region17: #{_lambda_.19} parent=11 // pred_check
        %p292 = pneg %p164
      $region18: #{_lambda_.19} parent=11 // pred_check_branch
        %294 = sbr.rel (%p292) target = $region20
      $region19: #{_lambda_.19} parent=11 // pred_region
        _
      $region20: #{_lambda_.19} parent=11 // pred_fallthru
        _
      // Predicated region
      $region21: #{_lambda_.19} parent=11 // pred_check
        %p295 = pneg %p185
      $region22: #{_lambda_.19} parent=11 // pred_check_branch
        %297 = sbr.rel (%p295) target = $region24
      $region23: #{_lambda_.19} parent=11 // pred_region
        _
      $region24: #{_lambda_.19} parent=11 // pred_fallthru
        _
      // Predicated region
      $region25: #{_lambda_.19} parent=11 // pred_check
        %p298 = pneg %p206
      $region26: #{_lambda_.19} parent=11 // pred_check_branch
        %300 = sbr.rel (%p298) target = $region28
      $region27: #{_lambda_.19} parent=11 // pred_region
        _
      $region28: #{_lambda_.19} parent=11 // pred_fallthru
        _
      // Predicated region
      $region29: #{_lambda_.19} parent=11 // pred_check
        %p301 = pneg %p227
      $region30: #{_lambda_.19} parent=11 // pred_check_branch
        %303 = sbr.rel (%p301) target = $region32
      $region31: #{_lambda_.19} parent=11 // pred_region
        _
      $region32: #{_lambda_.19} parent=11 // pred_fallthru
        _
      // Predicated region
      $region33: #{_lambda_.19} parent=11 // pred_check
        %p304 = pneg %p248
      $region34: #{_lambda_.19} parent=11 // pred_check_branch
        %306 = sbr.rel (%p304) target = $region36
      $region35: #{_lambda_.19} parent=11 // pred_region
        _
      $region36: #{_lambda_.19} parent=11 // pred_fallthru
        _
    $region12: #{_lambda_.19} parent=5 // pred_fallthru
      _
    %p307 = scmp.lt.s32.totalorder %s18, 2
    // Predicated region
    $region37: #{_lambda_.19} parent=5 // pred_check
      %p308 = pneg %p307
    $region38: #{_lambda_.19} parent=5 // pred_check_branch
      %310 = sbr.rel (%p308) target = $region40
    $region39: #{_lambda_.19} parent=5 // pred_region
      // Predicated region
      $region41: #{_lambda_.19} parent=39 // pred_check
        %p311 = pneg %p38
      $region42: #{_lambda_.19} parent=39 // pred_check_branch
        %313 = sbr.rel (%p311) target = $region44
      $region43: #{_lambda_.19} parent=39 // pred_region
        %p314 = scmp.lt.s32.totalorder %s18, 1
        %s315 = scalar_select %p314, %s18, 1
        %s316 = smul.addr %s315, 2
        %s317 = scalar_lea.vmem %s0, %s316
      $region44: #{_lambda_.19} parent=39 // pred_fallthru
        _
      // Predicated region
      $region45: #{_lambda_.19} parent=39 // pred_check
        %p318 = pneg %p64
      $region46: #{_lambda_.19} parent=39 // pred_check_branch
        %320 = sbr.rel (%p318) target = $region48
      $region47: #{_lambda_.19} parent=39 // pred_region
        %p321 = scmp.lt.s32.totalorder %s18, 1
        %s322 = scalar_select %p321, %s18, 1
        %s323 = smul.addr %s322, 4
        %s324 = scalar_lea.vmem %s1, %s323
      $region48: #{_lambda_.19} parent=39 // pred_fallthru
        _
      // Predicated region
      $region49: #{_lambda_.19} parent=39 // pred_check
        %p325 = pneg %p90
      $region50: #{_lambda_.19} parent=39 // pred_check_branch
        %327 = sbr.rel (%p325) target = $region52
      $region51: #{_lambda_.19} parent=39 // pred_region
        %p328 = scmp.lt.s32.totalorder %s18, 1
        %s329 = scalar_select %p328, %s18, 1
        %s330 = smul.addr %s329, 4
        %s331 = scalar_lea.vmem %s2, %s330
      $region52: #{_lambda_.19} parent=39 // pred_fallthru
        _
      // Predicated region
      $region53: #{_lambda_.19} parent=39 // pred_check
        %p332 = pneg %p116
      $region54: #{_lambda_.19} parent=39 // pred_check_branch
        %334 = sbr.rel (%p332) target = $region56
      $region55: #{_lambda_.19} parent=39 // pred_region
        %p335 = scmp.lt.s32.totalorder %s18, 1
        %s336 = scalar_select %p335, %s18, 1
        %s337 = smul.addr %s336, 2
        %s338 = scalar_lea.vmem %s3, %s337
      $region56: #{_lambda_.19} parent=39 // pred_fallthru
        _
    $region40: #{_lambda_.19} parent=5 // pred_fallthru
      _
    %p339 = scmp.le.s32.totalorder 1, %s18
    %p340 = scmp.lt.s32.totalorder %s18, 3
    %p341 = pnand %p339, %p340
    %p342 = pneg %p341
    // Predicated region
    $region57: #{_lambda_.19} parent=5 // pred_check
      _
    $region58: #{_lambda_.19} parent=5 // pred_check_branch
      %344 = sbr.rel (%p341) target = $region60
    $region59: #{_lambda_.19} parent=5 // pred_region
      %s345 = ssub.s32 %s18, 1
      %p346 = scmp.lt.s32.totalorder %s23, 1
      %s347 = scalar_select %p346, %s23, 1
      %s348 = smul.addr %s347, 2
      %s349 = scalar_lea.vmem %s0, %s348
      %p350 = pneg %p44
      %p351 = pneg %p41
      %p352 = scmp.lt.s32.totalorder %s23, 1
      %s353 = scalar_select %p352, %s23, 1
      %s354 = smul.addr %s353, 4
      %s355 = scalar_lea.vmem %s1, %s354
      %p356 = pneg %p70
      %p357 = pneg %p67
      %p358 = scmp.lt.s32.totalorder %s23, 1
      %s359 = scalar_select %p358, %s23, 1
      %s360 = smul.addr %s359, 4
      %s361 = scalar_lea.vmem %s2, %s360
      %p362 = pneg %p96
      %p363 = pneg %p93
      %p364 = scmp.lt.s32.totalorder %s23, 1
      %s365 = scalar_select %p364, %s23, 1
      %s366 = smul.addr %s365, 2
      %s367 = scalar_lea.vmem %s3, %s366
      %p368 = pneg %p122
      %p369 = pneg %p119
      %p370 = pneg %p143
      %p371 = pneg %p140
      %p372 = pneg %p164
      %p373 = pneg %p161
      %p374 = pneg %p185
      %p375 = pneg %p182
      %p376 = pneg %p206
      %p377 = pneg %p203
      %p378 = pneg %p227
      %p379 = pneg %p224
      %p380 = pneg %p248
      %p381 = pneg %p245
      %p382 = pneg %p274
      %p383 = pneg %p271
      %p384 = scmp.lt.s32.totalorder %s23, 1
      %s385 = scalar_select %p384, %s23, 1
      %s386 = scalar_lea.vmem %s10, %s385
      %p387 = scmp.lt.s32.totalorder %s23, 1
      %s388 = scalar_select %p387, %s23, 1
      %s389 = smul.addr %s388, 2
      %s390 = scalar_lea.vmem %s0, %s389
      %p391 = scmp.lt.s32.totalorder %s23, 1
      %s392 = scalar_select %p391, %s23, 1
      %s393 = smul.addr %s392, 4
      %s394 = scalar_lea.vmem %s1, %s393
      %p395 = scmp.lt.s32.totalorder %s23, 1
      %s396 = scalar_select %p395, %s23, 1
      %s397 = smul.addr %s396, 4
      %s398 = scalar_lea.vmem %s2, %s397
      %p399 = scmp.lt.s32.totalorder %s23, 1
      %s400 = scalar_select %p399, %s23, 1
      %s401 = smul.addr %s400, 2
      %s402 = scalar_lea.vmem %s3, %s401
      %p403 = scmp.lt.s32.totalorder %s23, 1
      %s404 = scalar_select %p403, %s23, 1
      %s405 = scalar_lea.vmem %s10, %s404
      %v406 = vld [vmem:[%s390] sm:$0x3]
      %v407 = vld [vmem:[%s394] sm:$0xf]
      %v408 = vld [vmem:[%s398] sm:$0xf]
      %v409 = vld [vmem:[%s402] sm:$0x3]
      %v411 = vrot.slane %v407, 6
      %v414 = vrot.slane %v408, 2
      %v417 = vrot.slane %v409, 6
      %vm419 = vcmask 1041408
      %v420 = vsel %vm419, %v406, %v411
      %vm421 = vcmask 1045504
      %v422 = vsel %vm421, %v420, %v414
      %v423 = vsel %vm419, %v414, %v417
      %v424 = vld [vmem:[%s4] sm:$0xff]
      %v425 = vld [vmem:[%s4 + $0x8] sm:$0xff]
      %v426 = vld [vmem:[%s4 + $0x10] sm:$0xff]
      %v427 = vld [vmem:[%s5] sm:$0xff]
      %v428 = vld [vmem:[%s5 + $0x8] sm:$0xff]
      %v429 = vld [vmem:[%s5 + $0x10] sm:$0xff]
      %431 = vset.pattern.permute.xlu0 0
      %432 = vperm.xlu0 %431, %v427
      %v433 = vpop.permute.xlu0 %432
      %436 = vset.pattern.permute.xlu0 0
      %437 = vperm.xlu0 %436, %v428
      %v438 = vpop.permute.xlu0 %437
      %441 = vset.pattern.permute.xlu0 0
      %442 = vperm.xlu0 %441, %v429
      %v443 = vpop.permute.xlu0 %442
      %vm445 = vcmask 97280
      %v447 = vsel %vm445, %v424, 0
      %v450 = vsel %vm445, %v425, 0
      %v453 = vsel %vm445, %v426, 0
      %vm455 = vcmask 1043456
      %v457 = vsel %vm455, %v423, 0
      %459 = vmatprep.subr.mxu0 0.0
      %460 = vmatpush1.msra.mxu0 %v422
      %461 = vmatprep.subr.mxu0 0.0
      %462 = vmatpush1.msra.mxu0 %v457
      %463 = vmatprep.subr.mxu0 0.0
      %464 = vmatpush1.msra.mxu0 0.0
      %465 = vmatprep.subr.mxu0 0.0
      %466 = vmatpush1.msra.mxu0 0.0
      %467 = vmatprep.subr.mxu0 0.0
      %468 = vmatpush1.msra.mxu0 0.0
      %469 = vmatprep.subr.mxu0 0.0
      %470 = vmatpush1.msra.mxu0 0.0
      %471 = vmatprep.subr.mxu0 0.0
      %472 = vmatpush1.msra.mxu0 0.0
      %473 = vmatprep.subr.mxu0 0.0
      %474 = vmatpush1.msra.mxu0 0.0
      %475 = vmatprep.subr.mxu0 0.0
      %476 = vmatpush1.msra.mxu0 0.0
      %477 = vmatprep.subr.mxu0 0.0
      %478 = vmatpush1.msra.mxu0 0.0
      %479 = vmatprep.subr.mxu0 0.0
      %480 = vmatpush1.msra.mxu0 0.0
      %481 = vmatprep.subr.mxu0 0.0
      %482 = vmatpush1.msra.mxu0 0.0
      %483 = vmatprep.subr.mxu0 0.0
      %484 = vmatpush1.msra.mxu0 0.0
      %485 = vmatprep.subr.mxu0 0.0
      %486 = vmatpush1.msra.mxu0 0.0
      %487 = vmatprep.subr.mxu0 0.0
      %488 = vmatpush1.msra.mxu0 0.0
      %489 = vmatprep.subr.mxu0 0.0
      %490 = vmatpush1.msra.mxu0 0.0
      %491 = vmatprep.subr.mxu0 0.0
      %492 = vmatpush1.msra.mxu0 0.0
      %493 = vmatprep.subr.mxu0 0.0
      %494 = vmatpush1.msra.mxu0 0.0
      %495 = vmatprep.subr.mxu0 0.0
      %496 = vmatpush1.msra.mxu0 0.0
      %497 = vmatprep.subr.mxu0 0.0
      %498 = vmatpush1.msra.mxu0 0.0
      %499 = vmatprep.subr.mxu0 0.0
      %500 = vmatpush1.msra.mxu0 0.0
      %501 = vmatprep.subr.mxu0 0.0
      %502 = vmatpush1.msra.mxu0 0.0
      %503 = vmatprep.subr.mxu0 0.0
      %504 = vmatpush1.msra.mxu0 0.0
      %505 = vmatprep.subr.mxu0 0.0
      %506 = vmatpush1.msra.mxu0 0.0
      %507 = vmatprep.subr.mxu0 0.0
      %508 = vmatpush1.msra.mxu0 0.0
      %509 = vmatprep.subr.mxu0 0.0
      %510 = vmatpush1.msra.mxu0 0.0
      %511 = vmatprep.subr.mxu0 0.0
      %512 = vmatpush1.msra.mxu0 0.0
      %513 = vmatprep.subr.mxu0 0.0
      %514 = vmatpush1.msra.mxu0 0.0
      %515 = vmatprep.subr.mxu0 0.0
      %516 = vmatpush1.msra.mxu0 0.0
      %517 = vmatprep.subr.mxu0 0.0
      %518 = vmatpush1.msra.mxu0 0.0
      %519 = vmatprep.subr.mxu0 0.0
      %520 = vmatpush1.msra.mxu0 0.0
      %521 = vmatprep.subr.mxu0 0.0
      %522 = vmatpush1.msra.mxu0 0.0
      %523 = vmatprep.mubr.f32.mxu0 0.0
      %524 = vmatmul.mubr.f32.gmra.mrb[0].mxu0 %v447
      %v525 = vpop.f32.mrb[0].mxu0
      %v526 = vadd.f32 %v433, %v525
      %v527 = vpop.f32.mrb[0].mxu0
      %528 = vmatprep.mubr.f32.mxu0 0.0
      %529 = vmatmul.mubr.f32.gmra.mrb[0].mxu0 %v450
      %v530 = vpop.f32.mrb[0].mxu0
      %v531 = vadd.f32 %v438, %v530
      %v532 = vpop.f32.mrb[0].mxu0
      %533 = vmatprep.mubr.f32.mxu0 0.0
      %534 = vmatmul.mubr.f32.gmra.mrb[0].mxu0 %v453
      %v535 = vpop.f32.mrb[0].mxu0
      %v536 = vadd.f32 %v443, %v535
      %v537 = vpop.f32.mrb[0].mxu0
      %538 = vdwg.mxu0
      %vm539 = vcmp.gt.f32.partialorder %v526, 0.0
      %vm540 = vcmp.gt.f32.partialorder %v531, 0.0
      %vm541 = vcmp.gt.f32.partialorder %v536, 0.0
      %v542 = vmul.f32 %v526, 1.442695
      %v543 = vpow.pop %v542
      %v544 = vmul.f32 %v531, 1.442695
      %v545 = vpow.pop %v544
      %v546 = vmul.f32 %v536, 1.442695
      %v547 = vpow.pop %v546
      %v548 = vsub.f32 %v543, 1.0
      %v549 = vsub.f32 %v545, 1.0
      %v550 = vsub.f32 %v547, 1.0
      %v551 = vsel %vm539, %v526, %v548
      %v552 = vsel %vm540, %v531, %v549
      %v553 = vsel %vm541, %v536, %v550
      %v554 = vld [vmem:[%s6] sm:$0xff]
      %v555 = vld [vmem:[%s6 + $0x8] sm:$0xff]
      %v556 = vld [vmem:[%s6 + $0x10] sm:$0xff]
      %v557 = vld [vmem:[%s7] sm:$0xff]
      %v558 = vld [vmem:[%s7 + $0x8] sm:$0xff]
      %v559 = vld [vmem:[%s7 + $0x10] sm:$0xff]
      %561 = vset.pattern.permute.xlu0 0
      %562 = vperm.xlu0 %561, %v557
      %v563 = vpop.permute.xlu0 %562
      %566 = vset.pattern.permute.xlu0 0
      %567 = vperm.xlu0 %566, %v558
      %v568 = vpop.permute.xlu0 %567
      %571 = vset.pattern.permute.xlu0 0
      %572 = vperm.xlu0 %571, %v559
      %v573 = vpop.permute.xlu0 %572
      %vm575 = vcmask 195584
      %v577 = vsel %vm575, %v554, 0
      %v580 = vsel %vm575, %v555, 0
      %v583 = vsel %vm575, %v556, 0
      %585 = vmatprep.subr.mxu0 0.0
      %586 = vmatpush1.msra.mxu0 %v551
      %587 = vmatprep.subr.mxu0 0.0
      %588 = vmatpush1.msra.mxu0 %v552
      %589 = vmatprep.subr.mxu0 0.0
      %590 = vmatpush1.msra.mxu0 %v553
      %591 = vmatprep.subr.mxu0 0.0
      %592 = vmatpush1.msra.mxu0 0.0
      %593 = vmatprep.subr.mxu0 0.0
      %594 = vmatpush1.msra.mxu0 0.0
      %595 = vmatprep.subr.mxu0 0.0
      %596 = vmatpush1.msra.mxu0 0.0
      %597 = vmatprep.subr.mxu0 0.0
      %598 = vmatpush1.msra.mxu0 0.0
      %599 = vmatprep.subr.mxu0 0.0
      %600 = vmatpush1.msra.mxu0 0.0
      %601 = vmatprep.subr.mxu0 0.0
      %602 = vmatpush1.msra.mxu0 0.0
      %603 = vmatprep.subr.mxu0 0.0
      %604 = vmatpush1.msra.mxu0 0.0
      %605 = vmatprep.subr.mxu0 0.0
      %606 = vmatpush1.msra.mxu0 0.0
      %607 = vmatprep.subr.mxu0 0.0
      %608 = vmatpush1.msra.mxu0 0.0
      %609 = vmatprep.subr.mxu0 0.0
      %610 = vmatpush1.msra.mxu0 0.0
      %611 = vmatprep.subr.mxu0 0.0
      %612 = vmatpush1.msra.mxu0 0.0
      %613 = vmatprep.subr.mxu0 0.0
      %614 = vmatpush1.msra.mxu0 0.0
      %615 = vmatprep.subr.mxu0 0.0
      %616 = vmatpush1.msra.mxu0 0.0
      %617 = vmatprep.subr.mxu0 0.0
      %618 = vmatpush1.msra.mxu0 0.0
      %619 = vmatprep.subr.mxu0 0.0
      %620 = vmatpush1.msra.mxu0 0.0
      %621 = vmatprep.subr.mxu0 0.0
      %622 = vmatpush1.msra.mxu0 0.0
      %623 = vmatprep.subr.mxu0 0.0
      %624 = vmatpush1.msra.mxu0 0.0
      %625 = vmatprep.subr.mxu0 0.0
      %626 = vmatpush1.msra.mxu0 0.0
      %627 = vmatprep.subr.mxu0 0.0
      %628 = vmatpush1.msra.mxu0 0.0
      %629 = vmatprep.subr.mxu0 0.0
      %630 = vmatpush1.msra.mxu0 0.0
      %631 = vmatprep.subr.mxu0 0.0
      %632 = vmatpush1.msra.mxu0 0.0
      %633 = vmatprep.subr.mxu0 0.0
      %634 = vmatpush1.msra.mxu0 0.0
      %635 = vmatprep.subr.mxu0 0.0
      %636 = vmatpush1.msra.mxu0 0.0
      %637 = vmatprep.subr.mxu0 0.0
      %638 = vmatpush1.msra.mxu0 0.0
      %639 = vmatprep.subr.mxu0 0.0
      %640 = vmatpush1.msra.mxu0 0.0
      %641 = vmatprep.subr.mxu0 0.0
      %642 = vmatpush1.msra.mxu0 0.0
      %643 = vmatprep.subr.mxu0 0.0
      %644 = vmatpush1.msra.mxu0 0.0
      %645 = vmatprep.subr.mxu0 0.0
      %646 = vmatpush1.msra.mxu0 0.0
      %647 = vmatprep.subr.mxu0 0.0
      %648 = vmatpush1.msra.mxu0 0.0
      %649 = vmatprep.mubr.f32.mxu0 0.0
      %650 = vmatmul.mubr.f32.gmra.mrb[0].mxu0 %v577
      %v651 = vpop.f32.mrb[0].mxu0
      %v652 = vadd.f32 %v563, %v651
      %v653 = vpop.f32.mrb[0].mxu0
      %654 = vmatprep.mubr.f32.mxu0 0.0
      %655 = vmatmul.mubr.f32.gmra.mrb[0].mxu0 %v580
      %v656 = vpop.f32.mrb[0].mxu0
      %v657 = vadd.f32 %v568, %v656
      %v658 = vpop.f32.mrb[0].mxu0
      %659 = vmatprep.mubr.f32.mxu0 0.0
      %660 = vmatmul.mubr.f32.gmra.mrb[0].mxu0 %v583
      %v661 = vpop.f32.mrb[0].mxu0
      %v662 = vadd.f32 %v573, %v661
      %v663 = vpop.f32.mrb[0].mxu0
      %664 = vdwg.mxu0
      %vm665 = vcmp.gt.f32.partialorder %v652, 0.0
      %vm666 = vcmp.gt.f32.partialorder %v657, 0.0
      %vm667 = vcmp.gt.f32.partialorder %v662, 0.0
      %v668 = vmul.f32 %v652, 1.442695
      %v669 = vpow.pop %v668
      %v670 = vmul.f32 %v657, 1.442695
      %v671 = vpow.pop %v670
      %v672 = vmul.f32 %v662, 1.442695
      %v673 = vpow.pop %v672
      %v674 = vsub.f32 %v669, 1.0
      %v675 = vsub.f32 %v671, 1.0
      %v676 = vsub.f32 %v673, 1.0
      %v677 = vsel %vm665, %v652, %v674
      %v678 = vsel %vm666, %v657, %v675
      %v679 = vsel %vm667, %v662, %v676
      %v680 = vld [vmem:[%s8] sm:$0x1]
      %v681 = vld [vmem:[#allocation2] sm:$0x1]
      %683 = vset.pattern.permute.xlu0 0
      %684 = vperm.xlu0 %683, %v681
      %v685 = vpop.permute.xlu0 %684
      %v687 = vlaneseq
      %v688 = vshrl.u32 %v687, 7
      %v689 = vsub.s32 0, %v688
      %v690 = vrot.slane %v685, %v689
      %v692 = vsel %vm575, %v680, 0
      %694 = vmatprep.subr.mxu0 0.0
      %695 = vmatpush1.msra.mxu0 %v677
      %696 = vmatprep.subr.mxu0 0.0
      %697 = vmatpush1.msra.mxu0 %v678
      %698 = vmatprep.subr.mxu0 0.0
      %699 = vmatpush1.msra.mxu0 %v679
      %700 = vmatprep.subr.mxu0 0.0
      %701 = vmatpush1.msra.mxu0 0.0
      %702 = vmatprep.subr.mxu0 0.0
      %703 = vmatpush1.msra.mxu0 0.0
      %704 = vmatprep.subr.mxu0 0.0
      %705 = vmatpush1.msra.mxu0 0.0
      %706 = vmatprep.subr.mxu0 0.0
      %707 = vmatpush1.msra.mxu0 0.0
      %708 = vmatprep.subr.mxu0 0.0
      %709 = vmatpush1.msra.mxu0 0.0
      %710 = vmatprep.subr.mxu0 0.0
      %711 = vmatpush1.msra.mxu0 0.0
      %712 = vmatprep.subr.mxu0 0.0
      %713 = vmatpush1.msra.mxu0 0.0
      %714 = vmatprep.subr.mxu0 0.0
      %715 = vmatpush1.msra.mxu0 0.0
      %716 = vmatprep.subr.mxu0 0.0
      %717 = vmatpush1.msra.mxu0 0.0
      %718 = vmatprep.subr.mxu0 0.0
      %719 = vmatpush1.msra.mxu0 0.0
      %720 = vmatprep.subr.mxu0 0.0
      %721 = vmatpush1.msra.mxu0 0.0
      %722 = vmatprep.subr.mxu0 0.0
      %723 = vmatpush1.msra.mxu0 0.0
      %724 = vmatprep.subr.mxu0 0.0
      %725 = vmatpush1.msra.mxu0 0.0
      %726 = vmatprep.subr.mxu0 0.0
      %727 = vmatpush1.msra.mxu0 0.0
      %728 = vmatprep.subr.mxu0 0.0
      %729 = vmatpush1.msra.mxu0 0.0
      %730 = vmatprep.subr.mxu0 0.0
      %731 = vmatpush1.msra.mxu0 0.0
      %732 = vmatprep.subr.mxu0 0.0
      %733 = vmatpush1.msra.mxu0 0.0
      %734 = vmatprep.subr.mxu0 0.0
      %735 = vmatpush1.msra.mxu0 0.0
      %736 = vmatprep.subr.mxu0 0.0
      %737 = vmatpush1.msra.mxu0 0.0
      %738 = vmatprep.subr.mxu0 0.0
      %739 = vmatpush1.msra.mxu0 0.0
      %740 = vmatprep.subr.mxu0 0.0
      %741 = vmatpush1.msra.mxu0 0.0
      %742 = vmatprep.subr.mxu0 0.0
      %743 = vmatpush1.msra.mxu0 0.0
      %744 = vmatprep.subr.mxu0 0.0
      %745 = vmatpush1.msra.mxu0 0.0
      %746 = vmatprep.subr.mxu0 0.0
      %747 = vmatpush1.msra.mxu0 0.0
      %748 = vmatprep.subr.mxu0 0.0
      %749 = vmatpush1.msra.mxu0 0.0
      %750 = vmatprep.subr.mxu0 0.0
      %751 = vmatpush1.msra.mxu0 0.0
      %752 = vmatprep.subr.mxu0 0.0
      %753 = vmatpush1.msra.mxu0 0.0
      %754 = vmatprep.subr.mxu0 0.0
      %755 = vmatpush1.msra.mxu0 0.0
      %756 = vmatprep.subr.mxu0 0.0
      %757 = vmatpush1.msra.mxu0 0.0
      %758 = vmatprep.mubr.f32.mxu0 0.0
      %759 = vmatmul.mubr.f32.gmra.mrb[0].mxu0 %v692
      %v760 = vpop.f32.mrb[0].mxu0
      %v761 = vadd.f32 %v690, %v760
      %v762 = vpop.f32.mrb[0].mxu0
      %763 = vdwg.mxu0
      %vm764 = vcmask 516096
      %765 = vst.msk [vmem:[%s405] sm:$0x1] %vm764, %v761
      %p766 = scmp.lt.s32.totalorder %s23, 1
      %s767 = scalar_select %p766, %s23, 1
      %s768 = scalar_lea.vmem %s10, %s767
      // Predicated region
      $region61: #{_lambda_.19} parent=59 // pred_check
        %p769 = pneg %p271
      $region62: #{_lambda_.19} parent=59 // pred_check_branch
        %771 = sbr.rel (%p769) target = $region64
      $region63: #{_lambda_.19} parent=59 // pred_region
        _
      $region64: #{_lambda_.19} parent=59 // pred_fallthru
        _
    $region60: #{_lambda_.19} parent=5 // pred_fallthru
      _
    %p772 = scmp.le.s32.totalorder 2, %s18
    // Predicated region
    $region65: #{_lambda_.19} parent=5 // pred_check
      %p773 = pneg %p772
    $region66: #{_lambda_.19} parent=5 // pred_check_branch
      %775 = sbr.rel (%p773) target = $region68
    $region67: #{_lambda_.19} parent=5 // pred_region
      %s776 = ssub.s32 %s18, 2
      // Predicated region
      $region69: #{_lambda_.19} parent=67 // pred_check
        %p777 = pneg %p277
      $region70: #{_lambda_.19} parent=67 // pred_check_branch
        %779 = sbr.rel (%p777) target = $region72
      $region71: #{_lambda_.19} parent=67 // pred_region
        %p780 = scmp.lt.s32.totalorder %s24, 1
        %s781 = scalar_select %p780, %s24, 1
        %s782 = scalar_lea.vmem %s10, %s781
      $region72: #{_lambda_.19} parent=67 // pred_fallthru
        _
    $region68: #{_lambda_.19} parent=5 // pred_fallthru
      _
  $region6: #{_lambda_.19} parent=0 // loop_footer
    %s22 = sadd.s32 1, %s18
  $region7: #{_lambda_.19} parent=0 // loop_footer_branch
    %17 = sbr.rel target = $region3
  $region8: #{_lambda_.19} parent=0 // loop_exit
    _

</llo_original>
